<compile_context>
chip_gen: v5e
topology: v5e:2x2
jax: 0.10.0
libtpu: 0.0.40
codegen_flags: <defaults>
</compile_context>

<pallas_src>
import functools

import jax
import jax.numpy as jnp
import numpy as np
from jax.experimental import pallas as pl
from jax.experimental.pallas import tpu as pltpu

LANE = 128          # pad matmul N (out-channel) dim to the full vreg lane width
K_ALIGN = 16        # pad contraction dim to bf16 sublane packing
TM_MAX = 512        # pixel rows per grid step (fits v7x 64 MiB VMEM with margin)
B_TILE_MAX = 128    # images per grid step in the fused conv3+FC kernel

# fixed architecture of the PyTorch CNN module
C1, C2, C3, NCLS, HW3 = 6, 16, 120, 10, 7 * 7


def _round_up(x, m):
    return (x + m - 1) // m * m


def _choose_tile(m):
    tm = min(TM_MAX, _round_up(m, 16))
    return tm, _round_up(m, tm)


# ----------------------------- Pallas kernels ------------------------------ #

def _matmul_max_bias_kernel(p_ref, w_ref, b_ref, o_ref, *, n_corners):
    """o = relu( max_c(p[c] @ w) + b ) on one (TM, LANE) output tile.

    p_ref: (G, TM, Kp) bf16  -- G = 4 pool-window corners
    w_ref: (Kp, LANE) bf16   -- resident in VMEM across the grid
    b_ref: (1, LANE)  f32
    o_ref: (TM, LANE)        -- lane-dense output tile
    """
    w = w_ref[...]
    acc = jnp.dot(p_ref[0], w, preferred_element_type=jnp.float32)
    for c in range(1, n_corners):
        acc = jnp.maximum(
            acc, jnp.dot(p_ref[c], w, preferred_element_type=jnp.float32))
    acc = jnp.maximum(acc + b_ref[...], 0.0)
    o_ref[...] = acc.astype(o_ref.dtype)


def matmul_max_bias(patches, w, b, *, out_dtype):
    """patches: (G, M, Kp) bf16, w: (Kp, LANE) bf16, b: (1, LANE) f32.

    M is pre-padded to a multiple of the tile; a 1-D parallel grid streams
    M-tiles (double-buffered DMA) while the weight stays resident.
    """
    G, M, Kp = patches.shape
    Np = w.shape[1]
    tm = min(TM_MAX, M)
    assert M % tm == 0 and tm % 16 == 0
    kernel = functools.partial(_matmul_max_bias_kernel, n_corners=G)
    return pl.pallas_call(
        kernel,
        out_shape=jax.ShapeDtypeStruct((M, Np), out_dtype),
        grid=(M // tm,),
        in_specs=[
            pl.BlockSpec((G, tm, Kp), lambda i: (0, i, 0)),
            pl.BlockSpec((Kp, Np), lambda i: (0, 0)),
            pl.BlockSpec((1, Np), lambda i: (0, 0)),
        ],
        out_specs=pl.BlockSpec((tm, Np), lambda i: (i, 0)),
        compiler_params=pltpu.CompilerParams(
            dimension_semantics=("parallel",),
            vmem_limit_bytes=32 * 1024 * 1024,
        ),
    )(patches, w, b)


def _conv3_fc_kernel(p_ref, w3_ref, b3_ref, wfc_ref, bfc_ref, o_ref):
    """Fused conv3(+bias+ReLU) + final Linear for one batch tile.

    p_ref:   (HW3, B_tile, K3p) bf16  -- conv3 im2col patches, spatial-major
    w3_ref:  (K3p, LANE) bf16         -- conv3 weight
    b3_ref:  (1, LANE)  f32
    wfc_ref: (HW3, LANE, LANE) bf16   -- FC weight folded to (s, cin, class)
    bfc_ref: (1, LANE)  f32
    o_ref:   (B_tile, LANE) f32       -- lane-dense logits tile
    """
    b_tile = o_ref.shape[0]
    hw = p_ref.shape[0]
    w3 = w3_ref[...]
    b3 = b3_ref[...]
    acc = jnp.zeros((b_tile, o_ref.shape[1]), jnp.float32) + bfc_ref[...]
    for s in range(hw):                      # static unroll: 49 x (2 matmuls)
        a = jnp.dot(p_ref[s], w3, preferred_element_type=jnp.float32) + b3
        a = jnp.maximum(a, 0.0).astype(jnp.bfloat16)
        acc = acc + jnp.dot(a, wfc_ref[s], preferred_element_type=jnp.float32)
    o_ref[...] = acc.astype(o_ref.dtype)


def conv3_fc(patches, w3, b3, wfc, bfc, *, b_tile):
    """patches: (HW3, B_pad, K3p) bf16 -> logits (B_pad, LANE) f32."""
    HW, B_pad, K3p = patches.shape
    assert B_pad % b_tile == 0 and b_tile % 8 == 0
    return pl.pallas_call(
        _conv3_fc_kernel,
        out_shape=jax.ShapeDtypeStruct((B_pad, LANE), jnp.float32),
        grid=(B_pad // b_tile,),
        in_specs=[
            pl.BlockSpec((HW, b_tile, K3p), lambda i: (0, i, 0)),
            pl.BlockSpec((K3p, LANE), lambda i: (0, 0)),
            pl.BlockSpec((1, LANE), lambda i: (0, 0)),
            pl.BlockSpec((HW, LANE, LANE), lambda i: (0, 0, 0)),
            pl.BlockSpec((1, LANE), lambda i: (0, 0)),
        ],
        out_specs=pl.BlockSpec((b_tile, LANE), lambda i: (i, 0)),
        compiler_params=pltpu.CompilerParams(
            dimension_semantics=("parallel",),
            vmem_limit_bytes=32 * 1024 * 1024,
        ),
    )(patches, w3, b3, wfc, bfc)


# ------------------------------- glue (JAX) -------------------------------- #

def _pooled_conv_patches(x_nhwc, k):
    """im2col patches split per 2x2 pool-window corner (G=4 groups).

    Returns ((4, M_pad, Kp) bf16 patches, true row count M).
    Column order is (kh, kw, cin), matching the weight reshape.
    """
    N, H, W, C = x_nhwc.shape
    pad = k // 2
    xp = jnp.pad(x_nhwc, ((0, 0), (pad, pad), (pad, pad), (0, 0)))
    Ho, Wo = H // 2, W // 2
    groups = []
    for dh in range(2):
        for dw in range(2):
            cols = []
            for kh in range(k):
                for kw in range(k):
                    h0, w0 = dh + kh, dw + kw
                    cols.append(xp[:, h0:h0 + 2 * (Ho - 1) + 1:2,
                                   w0:w0 + 2 * (Wo - 1) + 1:2, :])
            groups.append(
                jnp.concatenate(cols, axis=-1).reshape(N * Ho * Wo, k * k * C))
    p = jnp.stack(groups, axis=0)                       # (4, M, k*k*C)
    G, M, kkc = p.shape
    kp = _round_up(kkc, K_ALIGN)
    _, m_pad = _choose_tile(M)
    p = jnp.pad(p, ((0, 0), (0, m_pad - M), (0, kp - kkc))).astype(jnp.bfloat16)
    return p, M


def _conv3_patches(x_nhwc, k):
    """Spatial-major im2col patches for the fused conv3+FC kernel.

    Returns ((HW3, B_pad, K3p) bf16 patches, batch tile size).
    """
    N, H, W, C = x_nhwc.shape
    pad = k // 2
    xp = jnp.pad(x_nhwc, ((0, 0), (pad, pad), (pad, pad), (0, 0)))
    cols = []
    for kh in range(k):
        for kw in range(k):
            cols.append(xp[:, kh:kh + H, kw:kw + W, :])
    p = jnp.concatenate(cols, axis=-1).reshape(N, H * W, k * k * C)
    p = jnp.transpose(p, (1, 0, 2))                     # (H*W, N, kkc)
    kkc = k * k * C
    kp = _round_up(kkc, K_ALIGN)
    b_tile = min(B_TILE_MAX, _round_up(N, 8))
    b_pad = _round_up(N, b_tile)
    p = jnp.pad(p, ((0, 0), (0, b_pad - N), (0, kp - kkc))).astype(jnp.bfloat16)
    return p, b_tile


def _prep_conv(w_pt, b):
    """PyTorch (Cout,Cin,K,K) weight -> padded (Kp, LANE) bf16 + (1, LANE) f32 bias."""
    cout, cin, k, _ = w_pt.shape
    kkc = k * k * cin
    kp = _round_up(kkc, K_ALIGN)
    w2d = jnp.transpose(w_pt, (2, 3, 1, 0)).reshape(kkc, cout)   # (kh,kw,cin) rows
    w2d = jnp.pad(w2d, ((0, kp - kkc), (0, LANE - cout))).astype(jnp.bfloat16)
    b2d = jnp.pad(b, (0, LANE - cout)).reshape(1, LANE).astype(jnp.float32)
    return w2d, b2d


def _prep_fc(w_out, b_out):
    """Fold the NCHW flatten order and the LANE channel padding of conv3's
    output into a 3-D FC weight (spatial, channel_pad, class_pad)."""
    w3 = w_out.reshape(NCLS, C3, HW3)                  # [class, channel, h*w]
    w3 = jnp.transpose(w3, (2, 1, 0))                  # [h*w, channel, class]
    w3 = jnp.pad(w3, ((0, 0), (0, LANE - C3), (0, LANE - NCLS)))
    w_fc = w3.astype(jnp.bfloat16)                     # (HW3, LANE, LANE)
    b_fc = jnp.pad(b_out, (0, LANE - NCLS)).reshape(1, LANE).astype(jnp.float32)
    return w_fc, b_fc


def prepare_params(p):
    """One-time weight repacking (hoisted out of the forward)."""
    w1, b1 = _prep_conv(p["w1"], p["b1"])
    w2, b2 = _prep_conv(p["w2"], p["b2"])
    w3, b3 = _prep_conv(p["w3"], p["b3"])
    w_fc, b_fc = _prep_fc(p["w_out"], p["b_out"])
    return {"w1": w1, "b1": b1, "w2": w2, "b2": b2, "w3": w3, "b3": b3,
            "w_fc": w_fc, "b_fc": b_fc}


def cnn_forward(x_nchw, pp):
    N, _, H, W = x_nchw.shape
    assert (H // 4) * (W // 4) == HW3, "spatial size fixed at 28 by the Linear layer"
    x = jnp.transpose(x_nchw, (0, 2, 3, 1)).astype(jnp.bfloat16)   # NHWC bf16

    # conv1 + ReLU + 2x2 maxpool (fused): (N,28,28,1) -> (N,14,14,6)
    p, m = _pooled_conv_patches(x, 5)
    y = matmul_max_bias(p, pp["w1"], pp["b1"], out_dtype=jnp.bfloat16)
    x = y[:m, :C1].reshape(N, H // 2, W // 2, C1)

    # conv2 + ReLU + 2x2 maxpool (fused): -> (N,7,7,16)
    p, m = _pooled_conv_patches(x, 5)
    y = matmul_max_bias(p, pp["w2"], pp["b2"], out_dtype=jnp.bfloat16)
    x = y[:m, :C2].reshape(N, H // 4, W // 4, C2)

    # conv3 + ReLU + final Linear, fused into one kernel -> (N, 10)
    p3, b_tile = _conv3_patches(x, 5)
    logits = conv3_fc(p3, pp["w3"], pp["b3"], pp["w_fc"], pp["b_fc"],
                      b_tile=b_tile)
    return logits[:N, :NCLS]


def init_params(key):
    ks = jax.random.split(key, 8)
    s = 0.05
    return {
        "w1": jax.random.normal(ks[0], (6, 1, 5, 5), jnp.float32) * s,
        "b1": jax.random.normal(ks[1], (6,), jnp.float32) * s,
        "w2": jax.random.normal(ks[2], (16, 6, 5, 5), jnp.float32) * s,
        "b2": jax.random.normal(ks[3], (16,), jnp.float32) * s,
        "w3": jax.random.normal(ks[4], (120, 16, 5, 5), jnp.float32) * s,
        "b3": jax.random.normal(ks[5], (120,), jnp.float32) * s,
        "w_out": jax.random.normal(ks[6], (10, 120 * 7 * 7), jnp.float32) * s,
        "b_out": jax.random.normal(ks[7], (10,), jnp.float32) * s,
    }


# --------------------------- pure-JAX reference ----------------------------- #

def reference_forward(x_nchw, p):
    x = jnp.transpose(x_nchw, (0, 2, 3, 1))

    def conv(x, w, b):
        wt = jnp.transpose(w, (2, 3, 1, 0))  # HWIO
        y = jax.lax.conv_general_dilated(
            x, wt, window_strides=(1, 1), padding=((2, 2), (2, 2)),
            dimension_numbers=("NHWC", "HWIO", "NHWC"))
        return jnp.maximum(y + b.reshape(1, 1, 1, -1), 0.0)

    def pool(x):
        return jax.lax.reduce_window(x, -jnp.inf, jax.lax.max,
                                     (1, 2, 2, 1), (1, 2, 2, 1), "VALID")

    x = pool(conv(x, p["w1"], p["b1"]))
    x = pool(conv(x, p["w2"], p["b2"]))
    x = conv(x, p["w3"], p["b3"])
    flat = jnp.transpose(x, (0, 3, 1, 2)).reshape(x.shape[0], -1)
    return flat @ p["w_out"].T + p["b_out"]


if __name__ == "__main__":
    key = jax.random.PRNGKey(0)
    kx, kp = jax.random.split(key)
    # MNIST-shaped input (spatial size fixed at 28 by the 120*7*7 Linear layer).
    x = jax.random.normal(kx, (2, 1, 28, 28), jnp.float32)
    params = init_params(kp)
    prepped = prepare_params(params)          # weight repack hoisted (one time)

    fwd = jax.jit(cnn_forward)
    out = jax.block_until_ready(fwd(x, prepped))
    ref = jax.block_until_ready(reference_forward(x, params))

    assert out.shape == (2, 10)
    # bf16 MXU inputs / bf16 intermediate activations with f32 accumulation:
    # tolerance sized for ~1% compounded rounding vs the f32 reference.
    np.testing.assert_allclose(np.asarray(out), np.asarray(ref),
                               rtol=3e-2, atol=3e-2)
    print("KERNEL_OK")
</pallas_src>

<mosaic_0001>
module attributes {stable_mosaic.version = 11 : i64} {
  func.func @_matmul_max_bias_kernel(%arg0: i32, %arg1: memref<4x400x32xbf16, #tpu.memory_space<vmem>>, %arg2: memref<32x128xbf16, #tpu.memory_space<vmem>>, %arg3: memref<1x128xf32, #tpu.memory_space<vmem>>, %arg4: memref<400x128xbf16, #tpu.memory_space<vmem>>) attributes {dimension_semantics = [#tpu.dimension_semantics<parallel>], iteration_bounds = array<i64: 1>, scalar_prefetch = 0 : i64, scratch_operands = 0 : i64, tpu.core_type = #tpu.core_type<tc>, window_params = [{transform_indices = @transform_0, window_bounds = array<i64: 4, 400, 32>}, {pipeline_mode = #tpu.pipeline_mode<synchronous>, transform_indices = @transform_1, window_bounds = array<i64: 32, 128>}, {pipeline_mode = #tpu.pipeline_mode<synchronous>, transform_indices = @transform_2, window_bounds = array<i64: 1, 128>}, {transform_indices = @transform_3, window_bounds = array<i64: 400, 128>}]} {
    %c0 = arith.constant 0 : index
    %c0_0 = arith.constant 0 : index
    %0 = vector.load %arg2[%c0, %c0_0] : memref<32x128xbf16, #tpu.memory_space<vmem>>, vector<32x128xbf16>
    %c0_1 = arith.constant 0 : index
    %c0_2 = arith.constant 0 : index
    %c0_3 = arith.constant 0 : index
    %1 = vector.load %arg1[%c0_1, %c0_2, %c0_3] : memref<4x400x32xbf16, #tpu.memory_space<vmem>>, vector<1x400x32xbf16>
    %2 = vector.shape_cast %1 : vector<1x400x32xbf16> to vector<400x32xbf16>
    %cst = arith.constant dense<0.000000e+00> : vector<400x128xf32>
    %3 = tpu.matmul %2, %0, %cst {dimension_numbers = #tpu.dot_dimension_numbers<[1], [0], [0], [1], [0, 0, 1, 1], [], []>} : vector<400x32xbf16>, vector<32x128xbf16>, vector<400x128xf32> -> vector<400x128xf32>
    %c1 = arith.constant 1 : index
    %c0_4 = arith.constant 0 : index
    %c0_5 = arith.constant 0 : index
    %4 = vector.load %arg1[%c1, %c0_4, %c0_5] : memref<4x400x32xbf16, #tpu.memory_space<vmem>>, vector<1x400x32xbf16>
    %5 = vector.shape_cast %4 : vector<1x400x32xbf16> to vector<400x32xbf16>
    %cst_6 = arith.constant dense<0.000000e+00> : vector<400x128xf32>
    %6 = tpu.matmul %5, %0, %cst_6 {dimension_numbers = #tpu.dot_dimension_numbers<[1], [0], [0], [1], [0, 0, 1, 1], [], []>} : vector<400x32xbf16>, vector<32x128xbf16>, vector<400x128xf32> -> vector<400x128xf32>
    %7 = arith.maximumf %3, %6 : vector<400x128xf32>
    %c2 = arith.constant 2 : index
    %c0_7 = arith.constant 0 : index
    %c0_8 = arith.constant 0 : index
    %8 = vector.load %arg1[%c2, %c0_7, %c0_8] : memref<4x400x32xbf16, #tpu.memory_space<vmem>>, vector<1x400x32xbf16>
    %9 = vector.shape_cast %8 : vector<1x400x32xbf16> to vector<400x32xbf16>
    %cst_9 = arith.constant dense<0.000000e+00> : vector<400x128xf32>
    %10 = tpu.matmul %9, %0, %cst_9 {dimension_numbers = #tpu.dot_dimension_numbers<[1], [0], [0], [1], [0, 0, 1, 1], [], []>} : vector<400x32xbf16>, vector<32x128xbf16>, vector<400x128xf32> -> vector<400x128xf32>
    %11 = arith.maximumf %7, %10 : vector<400x128xf32>
    %c3 = arith.constant 3 : index
    %c0_10 = arith.constant 0 : index
    %c0_11 = arith.constant 0 : index
    %12 = vector.load %arg1[%c3, %c0_10, %c0_11] : memref<4x400x32xbf16, #tpu.memory_space<vmem>>, vector<1x400x32xbf16>
    %13 = vector.shape_cast %12 : vector<1x400x32xbf16> to vector<400x32xbf16>
    %cst_12 = arith.constant dense<0.000000e+00> : vector<400x128xf32>
    %14 = tpu.matmul %13, %0, %cst_12 {dimension_numbers = #tpu.dot_dimension_numbers<[1], [0], [0], [1], [0, 0, 1, 1], [], []>} : vector<400x32xbf16>, vector<32x128xbf16>, vector<400x128xf32> -> vector<400x128xf32>
    %15 = arith.maximumf %11, %14 : vector<400x128xf32>
    %c0_13 = arith.constant 0 : index
    %c0_14 = arith.constant 0 : index
    %16 = vector.load %arg3[%c0_13, %c0_14] : memref<1x128xf32, #tpu.memory_space<vmem>>, vector<1x128xf32>
    %17 = vector.broadcast %16 : vector<1x128xf32> to vector<400x128xf32>
    %18 = arith.addf %15, %17 : vector<400x128xf32>
    %cst_15 = arith.constant 0.000000e+00 : f32
    %19 = vector.broadcast %cst_15 : f32 to vector<400x128xf32>
    %20 = arith.maximumf %18, %19 : vector<400x128xf32>
    %21 = arith.truncf %20 : vector<400x128xf32> to vector<400x128xbf16>
    %c0_16 = arith.constant 0 : index
    %c0_17 = arith.constant 0 : index
    %22 = vector.load %arg4[%c0_16, %c0_17] : memref<400x128xbf16, #tpu.memory_space<vmem>>, vector<400x128xbf16>
    tpu.vector_store %arg4[%c0_16, %c0_17], %21 {strides = array<i32>} : memref<400x128xbf16, #tpu.memory_space<vmem>>, vector<400x128xbf16>,
    return
  }
  func.func @transform_0(%arg0: i32) -> (i32, i32, i32) {
    %c0_i32 = arith.constant 0 : i32
    %c0_i32_0 = arith.constant 0 : i32
    %c0_i32_1 = arith.constant 0 : i32
    return %c0_i32, %arg0, %c0_i32_0 : i32, i32, i32
  }
  func.func @transform_1(%arg0: i32) -> (i32, i32) {
    %c0_i32 = arith.constant 0 : i32
    %c0_i32_0 = arith.constant 0 : i32
    %c0_i32_1 = arith.constant 0 : i32
    return %c0_i32, %c0_i32_0 : i32, i32
  }
  func.func @transform_2(%arg0: i32) -> (i32, i32) {
    %c0_i32 = arith.constant 0 : i32
    %c0_i32_0 = arith.constant 0 : i32
    %c0_i32_1 = arith.constant 0 : i32
    return %c0_i32, %c0_i32_0 : i32, i32
  }
  func.func @transform_3(%arg0: i32) -> (i32, i32) {
    %c0_i32 = arith.constant 0 : i32
    %c0_i32_0 = arith.constant 0 : i32
    return %arg0, %c0_i32 : i32, i32
  }
}

module attributes {stable_mosaic.version = 11 : i64} {
  func.func @_matmul_max_bias_kernel(%arg0: i32, %arg1: memref<4x112x160xbf16, #tpu.memory_space<vmem>>, %arg2: memref<160x128xbf16, #tpu.memory_space<vmem>>, %arg3: memref<1x128xf32, #tpu.memory_space<vmem>>, %arg4: memref<112x128xbf16, #tpu.memory_space<vmem>>) attributes {dimension_semantics = [#tpu.dimension_semantics<parallel>], iteration_bounds = array<i64: 1>, scalar_prefetch = 0 : i64, scratch_operands = 0 : i64, tpu.core_type = #tpu.core_type<tc>, window_params = [{transform_indices = @transform_0, window_bounds = array<i64: 4, 112, 160>}, {pipeline_mode = #tpu.pipeline_mode<synchronous>, transform_indices = @transform_1, window_bounds = array<i64: 160, 128>}, {pipeline_mode = #tpu.pipeline_mode<synchronous>, transform_indices = @transform_2, window_bounds = array<i64: 1, 128>}, {transform_indices = @transform_3, window_bounds = array<i64: 112, 128>}]} {
    %c0 = arith.constant 0 : index
    %c0_0 = arith.constant 0 : index
    %0 = vector.load %arg2[%c0, %c0_0] : memref<160x128xbf16, #tpu.memory_space<vmem>>, vector<160x128xbf16>
    %c0_1 = arith.constant 0 : index
    %c0_2 = arith.constant 0 : index
    %c0_3 = arith.constant 0 : index
    %1 = vector.load %arg1[%c0_1, %c0_2, %c0_3] : memref<4x112x160xbf16, #tpu.memory_space<vmem>>, vector<1x112x160xbf16>
    %2 = vector.shape_cast %1 : vector<1x112x160xbf16> to vector<112x160xbf16>
    %cst = arith.constant dense<0.000000e+00> : vector<112x128xf32>
    %3 = tpu.matmul %2, %0, %cst {dimension_numbers = #tpu.dot_dimension_numbers<[1], [0], [0], [1], [0, 0, 1, 1], [], []>} : vector<112x160xbf16>, vector<160x128xbf16>, vector<112x128xf32> -> vector<112x128xf32>
    %c1 = arith.constant 1 : index
    %c0_4 = arith.constant 0 : index
    %c0_5 = arith.constant 0 : index
    %4 = vector.load %arg1[%c1, %c0_4, %c0_5] : memref<4x112x160xbf16, #tpu.memory_space<vmem>>, vector<1x112x160xbf16>
    %5 = vector.shape_cast %4 : vector<1x112x160xbf16> to vector<112x160xbf16>
    %cst_6 = arith.constant dense<0.000000e+00> : vector<112x128xf32>
    %6 = tpu.matmul %5, %0, %cst_6 {dimension_numbers = #tpu.dot_dimension_numbers<[1], [0], [0], [1], [0, 0, 1, 1], [], []>} : vector<112x160xbf16>, vector<160x128xbf16>, vector<112x128xf32> -> vector<112x128xf32>
    %7 = arith.maximumf %3, %6 : vector<112x128xf32>
    %c2 = arith.constant 2 : index
    %c0_7 = arith.constant 0 : index
    %c0_8 = arith.constant 0 : index
    %8 = vector.load %arg1[%c2, %c0_7, %c0_8] : memref<4x112x160xbf16, #tpu.memory_space<vmem>>, vector<1x112x160xbf16>
    %9 = vector.shape_cast %8 : vector<1x112x160xbf16> to vector<112x160xbf16>
    %cst_9 = arith.constant dense<0.000000e+00> : vector<112x128xf32>
    %10 = tpu.matmul %9, %0, %cst_9 {dimension_numbers = #tpu.dot_dimension_numbers<[1], [0], [0], [1], [0, 0, 1, 1], [], []>} : vector<112x160xbf16>, vector<160x128xbf16>, vector<112x128xf32> -> vector<112x128xf32>
    %11 = arith.maximumf %7, %10 : vector<112x128xf32>
    %c3 = arith.constant 3 : index
    %c0_10 = arith.constant 0 : index
    %c0_11 = arith.constant 0 : index
    %12 = vector.load %arg1[%c3, %c0_10, %c0_11] : memref<4x112x160xbf16, #tpu.memory_space<vmem>>, vector<1x112x160xbf16>
    %13 = vector.shape_cast %12 : vector<1x112x160xbf16> to vector<112x160xbf16>
    %cst_12 = arith.constant dense<0.000000e+00> : vector<112x128xf32>
    %14 = tpu.matmul %13, %0, %cst_12 {dimension_numbers = #tpu.dot_dimension_numbers<[1], [0], [0], [1], [0, 0, 1, 1], [], []>} : vector<112x160xbf16>, vector<160x128xbf16>, vector<112x128xf32> -> vector<112x128xf32>
    %15 = arith.maximumf %11, %14 : vector<112x128xf32>
    %c0_13 = arith.constant 0 : index
    %c0_14 = arith.constant 0 : index
    %16 = vector.load %arg3[%c0_13, %c0_14] : memref<1x128xf32, #tpu.memory_space<vmem>>, vector<1x128xf32>
    %17 = vector.broadcast %16 : vector<1x128xf32> to vector<112x128xf32>
    %18 = arith.addf %15, %17 : vector<112x128xf32>
    %cst_15 = arith.constant 0.000000e+00 : f32
    %19 = vector.broadcast %cst_15 : f32 to vector<112x128xf32>
    %20 = arith.maximumf %18, %19 : vector<112x128xf32>
    %21 = arith.truncf %20 : vector<112x128xf32> to vector<112x128xbf16>
    %c0_16 = arith.constant 0 : index
    %c0_17 = arith.constant 0 : index
    %22 = vector.load %arg4[%c0_16, %c0_17] : memref<112x128xbf16, #tpu.memory_space<vmem>>, vector<112x128xbf16>
    tpu.vector_store %arg4[%c0_16, %c0_17], %21 {strides = array<i32>} : memref<112x128xbf16, #tpu.memory_space<vmem>>, vector<112x128xbf16>,
    return
  }
  func.func @transform_0(%arg0: i32) -> (i32, i32, i32) {
    %c0_i32 = arith.constant 0 : i32
    %c0_i32_0 = arith.constant 0 : i32
    %c0_i32_1 = arith.constant 0 : i32
    return %c0_i32, %arg0, %c0_i32_0 : i32, i32, i32
  }
  func.func @transform_1(%arg0: i32) -> (i32, i32) {
    %c0_i32 = arith.constant 0 : i32
    %c0_i32_0 = arith.constant 0 : i32
    %c0_i32_1 = arith.constant 0 : i32
    return %c0_i32, %c0_i32_0 : i32, i32
  }
  func.func @transform_2(%arg0: i32) -> (i32, i32) {
    %c0_i32 = arith.constant 0 : i32
    %c0_i32_0 = arith.constant 0 : i32
    %c0_i32_1 = arith.constant 0 : i32
    return %c0_i32, %c0_i32_0 : i32, i32
  }
  func.func @transform_3(%arg0: i32) -> (i32, i32) {
    %c0_i32 = arith.constant 0 : i32
    %c0_i32_0 = arith.constant 0 : i32
    return %arg0, %c0_i32 : i32, i32
  }
}

module attributes {stable_mosaic.version = 11 : i64} {
  func.func @_conv3_fc_kernel(%arg0: i32, %arg1: memref<49x8x400xbf16, #tpu.memory_space<vmem>>, %arg2: memref<400x128xbf16, #tpu.memory_space<vmem>>, %arg3: memref<1x128xf32, #tpu.memory_space<vmem>>, %arg4: memref<49x128x128xbf16, #tpu.memory_space<vmem>>, %arg5: memref<1x128xf32, #tpu.memory_space<vmem>>, %arg6: memref<8x128xf32, #tpu.memory_space<vmem>>) attributes {dimension_semantics = [#tpu.dimension_semantics<parallel>], iteration_bounds = array<i64: 1>, scalar_prefetch = 0 : i64, scratch_operands = 0 : i64, tpu.core_type = #tpu.core_type<tc>, window_params = [{transform_indices = @transform_0, window_bounds = array<i64: 49, 8, 400>}, {pipeline_mode = #tpu.pipeline_mode<synchronous>, transform_indices = @transform_1, window_bounds = array<i64: 400, 128>}, {pipeline_mode = #tpu.pipeline_mode<synchronous>, transform_indices = @transform_2, window_bounds = array<i64: 1, 128>}, {pipeline_mode = #tpu.pipeline_mode<synchronous>, transform_indices = @transform_3, window_bounds = array<i64: 49, 128, 128>}, {pipeline_mode = #tpu.pipeline_mode<synchronous>, transform_indices = @transform_4, window_bounds = array<i64: 1, 128>}, {transform_indices = @transform_5, window_bounds = array<i64: 8, 128>}]} {
    %c0 = arith.constant 0 : index
    %c0_0 = arith.constant 0 : index
    %0 = vector.load %arg2[%c0, %c0_0] : memref<400x128xbf16, #tpu.memory_space<vmem>>, vector<400x128xbf16>
    %c0_1 = arith.constant 0 : index
    %c0_2 = arith.constant 0 : index
    %1 = vector.load %arg3[%c0_1, %c0_2] : memref<1x128xf32, #tpu.memory_space<vmem>>, vector<1x128xf32>
    %cst = arith.constant 0.000000e+00 : f32
    %2 = vector.broadcast %cst : f32 to vector<8x128xf32>
    %c0_3 = arith.constant 0 : index
    %c0_4 = arith.constant 0 : index
    %3 = vector.load %arg5[%c0_3, %c0_4] : memref<1x128xf32, #tpu.memory_space<vmem>>, vector<1x128xf32>
    %4 = vector.broadcast %3 : vector<1x128xf32> to vector<8x128xf32>
    %5 = arith.addf %2, %4 : vector<8x128xf32>
    %c0_5 = arith.constant 0 : index
    %c0_6 = arith.constant 0 : index
    %c0_7 = arith.constant 0 : index
    %6 = vector.load %arg1[%c0_5, %c0_6, %c0_7] : memref<49x8x400xbf16, #tpu.memory_space<vmem>>, vector<1x8x400xbf16>
    %7 = vector.shape_cast %6 : vector<1x8x400xbf16> to vector<8x400xbf16>
    %cst_8 = arith.constant dense<0.000000e+00> : vector<8x128xf32>
    %8 = tpu.matmul %7, %0, %cst_8 {dimension_numbers = #tpu.dot_dimension_numbers<[1], [0], [0], [1], [0, 0, 1, 1], [], []>} : vector<8x400xbf16>, vector<400x128xbf16>, vector<8x128xf32> -> vector<8x128xf32>
    %9 = vector.broadcast %1 : vector<1x128xf32> to vector<8x128xf32>
    %10 = arith.addf %8, %9 : vector<8x128xf32>
    %cst_9 = arith.constant 0.000000e+00 : f32
    %11 = vector.broadcast %cst_9 : f32 to vector<8x128xf32>
    %12 = arith.maximumf %10, %11 : vector<8x128xf32>
    %13 = arith.truncf %12 : vector<8x128xf32> to vector<8x128xbf16>
    %c0_10 = arith.constant 0 : index
    %c0_11 = arith.constant 0 : index
    %c0_12 = arith.constant 0 : index
    %14 = vector.load %arg4[%c0_10, %c0_11, %c0_12] : memref<49x128x128xbf16, #tpu.memory_space<vmem>>, vector<1x128x128xbf16>
    %15 = vector.shape_cast %14 : vector<1x128x128xbf16> to vector<128x128xbf16>
    %cst_13 = arith.constant dense<0.000000e+00> : vector<8x128xf32>
    %16 = tpu.matmul %13, %15, %cst_13 {dimension_numbers = #tpu.dot_dimension_numbers<[1], [0], [0], [1], [0, 0, 1, 1], [], []>} : vector<8x128xbf16>, vector<128x128xbf16>, vector<8x128xf32> -> vector<8x128xf32>
    %17 = arith.addf %5, %16 : vector<8x128xf32>
    %c1 = arith.constant 1 : index
    %c0_14 = arith.constant 0 : index
    %c0_15 = arith.constant 0 : index
    %18 = vector.load %arg1[%c1, %c0_14, %c0_15] : memref<49x8x400xbf16, #tpu.memory_space<vmem>>, vector<1x8x400xbf16>
    %19 = vector.shape_cast %18 : vector<1x8x400xbf16> to vector<8x400xbf16>
    %cst_16 = arith.constant dense<0.000000e+00> : vector<8x128xf32>
    %20 = tpu.matmul %19, %0, %cst_16 {dimension_numbers = #tpu.dot_dimension_numbers<[1], [0], [0], [1], [0, 0, 1, 1], [], []>} : vector<8x400xbf16>, vector<400x128xbf16>, vector<8x128xf32> -> vector<8x128xf32>
    %21 = vector.broadcast %1 : vector<1x128xf32> to vector<8x128xf32>
    %22 = arith.addf %20, %21 : vector<8x128xf32>
    %cst_17 = arith.constant 0.000000e+00 : f32
    %23 = vector.broadcast %cst_17 : f32 to vector<8x128xf32>
    %24 = arith.maximumf %22, %23 : vector<8x128xf32>
    %25 = arith.truncf %24 : vector<8x128xf32> to vector<8x128xbf16>
    %c1_18 = arith.constant 1 : index
    %c0_19 = arith.constant 0 : index
    %c0_20 = arith.constant 0 : index
    %26 = vector.load %arg4[%c1_18, %c0_19, %c0_20] : memref<49x128x128xbf16, #tpu.memory_space<vmem>>, vector<1x128x128xbf16>
    %27 = vector.shape_cast %26 : vector<1x128x128xbf16> to vector<128x128xbf16>
    %cst_21 = arith.constant dense<0.000000e+00> : vector<8x128xf32>
    %28 = tpu.matmul %25, %27, %cst_21 {dimension_numbers = #tpu.dot_dimension_numbers<[1], [0], [0], [1], [0, 0, 1, 1], [], []>} : vector<8x128xbf16>, vector<128x128xbf16>, vector<8x128xf32> -> vector<8x128xf32>
    %29 = arith.addf %17, %28 : vector<8x128xf32>
    %c2 = arith.constant 2 : index
    %c0_22 = arith.constant 0 : index
    %c0_23 = arith.constant 0 : index
    %30 = vector.load %arg1[%c2, %c0_22, %c0_23] : memref<49x8x400xbf16, #tpu.memory_space<vmem>>, vector<1x8x400xbf16>
    %31 = vector.shape_cast %30 : vector<1x8x400xbf16> to vector<8x400xbf16>
    %cst_24 = arith.constant dense<0.000000e+00> : vector<8x128xf32>
    %32 = tpu.matmul %31, %0, %cst_24 {dimension_numbers = #tpu.dot_dimension_numbers<[1], [0], [0], [1], [0, 0, 1, 1], [], []>} : vector<8x400xbf16>, vector<400x128xbf16>, vector<8x128xf32> -> vector<8x128xf32>
    %33 = vector.broadcast %1 : vector<1x128xf32> to vector<8x128xf32>
    %34 = arith.addf %32, %33 : vector<8x128xf32>
    %cst_25 = arith.constant 0.000000e+00 : f32
    %35 = vector.broadcast %cst_25 : f32 to vector<8x128xf32>
    %36 = arith.maximumf %34, %35 : vector<8x128xf32>
    %37 = arith.truncf %36 : vector<8x128xf32> to vector<8x128xbf16>
    %c2_26 = arith.constant 2 : index
    %c0_27 = arith.constant 0 : index
    %c0_28 = arith.constant 0 : index
    %38 = vector.load %arg4[%c2_26, %c0_27, %c0_28] : memref<49x128x128xbf16, #tpu.memory_space<vmem>>, vector<1x128x128xbf16>
    %39 = vector.shape_cast %38 : vector<1x128x128xbf16> to vector<128x128xbf16>
    %cst_29 = arith.constant dense<0.000000e+00> : vector<8x128xf32>
    %40 = tpu.matmul %37, %39, %cst_29 {dimension_numbers = #tpu.dot_dimension_numbers<[1], [0], [0], [1], [0, 0, 1, 1], [], []>} : vector<8x128xbf16>, vector<128x128xbf16>, vector<8x128xf32> -> vector<8x128xf32>
    %41 = arith.addf %29, %40 : vector<8x128xf32>
    %c3 = arith.constant 3 : index
    %c0_30 = arith.constant 0 : index
    %c0_31 = arith.constant 0 : index
    %42 = vector.load %arg1[%c3, %c0_30, %c0_31] : memref<49x8x400xbf16, #tpu.memory_space<vmem>>, vector<1x8x400xbf16>
    %43 = vector.shape_cast %42 : vector<1x8x400xbf16> to vector<8x400xbf16>
    %cst_32 = arith.constant dense<0.000000e+00> : vector<8x128xf32>
    %44 = tpu.matmul %43, %0, %cst_32 {dimension_numbers = #tpu.dot_dimension_numbers<[1], [0], [0], [1], [0, 0, 1, 1], [], []>} : vector<8x400xbf16>, vector<400x128xbf16>, vector<8x128xf32> -> vector<8x128xf32>
    %45 = vector.broadcast %1 : vector<1x128xf32> to vector<8x128xf32>
    %46 = arith.addf %44, %45 : vector<8x128xf32>
    %cst_33 = arith.constant 0.000000e+00 : f32
    %47 = vector.broadcast %cst_33 : f32 to vector<8x128xf32>
    %48 = arith.maximumf %46, %47 : vector<8x128xf32>
    %49 = arith.truncf %48 : vector<8x128xf32> to vector<8x128xbf16>
    %c3_34 = arith.constant 3 : index
    %c0_35 = arith.constant 0 : index
    %c0_36 = arith.constant 0 : index
    %50 = vector.load %arg4[%c3_34, %c0_35, %c0_36] : memref<49x128x128xbf16, #tpu.memory_space<vmem>>, vector<1x128x128xbf16>
    %51 = vector.shape_cast %50 : vector<1x128x128xbf16> to vector<128x128xbf16>
    %cst_37 = arith.constant dense<0.000000e+00> : vector<8x128xf32>
    %52 = tpu.matmul %49, %51, %cst_37 {dimension_numbers = #tpu.dot_dimension_numbers<[1], [0], [0], [1], [0, 0, 1, 1], [], []>} : vector<8x128xbf16>, vector<128x128xbf16>, vector<8x128xf32> -> vector<8x128xf32>
    %53 = arith.addf %41, %52 : vector<8x128xf32>
    %c4 = arith.constant 4 : index
    %c0_38 = arith.constant 0 : index
    %c0_39 = arith.constant 0 : index
    %54 = vector.load %arg1[%c4, %c0_38, %c0_39] : memref<49x8x400xbf16, #tpu.memory_space<vmem>>, vector<1x8x400xbf16>
    %55 = vector.shape_cast %54 : vector<1x8x400xbf16> to vector<8x400xbf16>
    %cst_40 = arith.constant dense<0.000000e+00> : vector<8x128xf32>
    %56 = tpu.matmul %55, %0, %cst_40 {dimension_numbers = #tpu.dot_dimension_numbers<[1], [0], [0], [1], [0, 0, 1, 1], [], []>} : vector<8x400xbf16>, vector<400x128xbf16>, vector<8x128xf32> -> vector<8x128xf32>
    %57 = vector.broadcast %1 : vector<1x128xf32> to vector<8x128xf32>
    %58 = arith.addf %56, %57 : vector<8x128xf32>
    %cst_41 = arith.constant 0.000000e+00 : f32
    %59 = vector.broadcast %cst_41 : f32 to vector<8x128xf32>
    %60 = arith.maximumf %58, %59 : vector<8x128xf32>
    %61 = arith.truncf %60 : vector<8x128xf32> to vector<8x128xbf16>
    %c4_42 = arith.constant 4 : index
    %c0_43 = arith.constant 0 : index
    %c0_44 = arith.constant 0 : index
    %62 = vector.load %arg4[%c4_42, %c0_43, %c0_44] : memref<49x128x128xbf16, #tpu.memory_space<vmem>>, vector<1x128x128xbf16>
    %63 = vector.shape_cast %62 : vector<1x128x128xbf16> to vector<128x128xbf16>
    %cst_45 = arith.constant dense<0.000000e+00> : vector<8x128xf32>
    %64 = tpu.matmul %61, %63, %cst_45 {dimension_numbers = #tpu.dot_dimension_numbers<[1], [0], [0], [1], [0, 0, 1, 1], [], []>} : vector<8x128xbf16>, vector<128x128xbf16>, vector<8x128xf32> -> vector<8x128xf32>
    %65 = arith.addf %53, %64 : vector<8x128xf32>
    %c5 = arith.constant 5 : index
    %c0_46 = arith.constant 0 : index
    %c0_47 = arith.constant 0 : index
    %66 = vector.load %arg1[%c5, %c0_46, %c0_47] : memref<49x8x400xbf16, #tpu.memory_space<vmem>>, vector<1x8x400xbf16>
    %67 = vector.shape_cast %66 : vector<1x8x400xbf16> to vector<8x400xbf16>
    %cst_48 = arith.constant dense<0.000000e+00> : vector<8x128xf32>
    %68 = tpu.matmul %67, %0, %cst_48 {dimension_numbers = #tpu.dot_dimension_numbers<[1], [0], [0], [1], [0, 0, 1, 1], [], []>} : vector<8x400xbf16>, vector<400x128xbf16>, vector<8x128xf32> -> vector<8x128xf32>
    %69 = vector.broadcast %1 : vector<1x128xf32> to vector<8x128xf32>
    %70 = arith.addf %68, %69 : vector<8x128xf32>
    %cst_49 = arith.constant 0.000000e+00 : f32
    %71 = vector.broadcast %cst_49 : f32 to vector<8x128xf32>
    %72 = arith.maximumf %70, %71 : vector<8x128xf32>
    %73 = arith.truncf %72 : vector<8x128xf32> to vector<8x128xbf16>
    %c5_50 = arith.constant 5 : index
    %c0_51 = arith.constant 0 : index
    %c0_52 = arith.constant 0 : index
    %74 = vector.load %arg4[%c5_50, %c0_51, %c0_52] : memref<49x128x128xbf16, #tpu.memory_space<vmem>>, vector<1x128x128xbf16>
    %75 = vector.shape_cast %74 : vector<1x128x128xbf16> to vector<128x128xbf16>
    %cst_53 = arith.constant dense<0.000000e+00> : vector<8x128xf32>
    %76 = tpu.matmul %73, %75, %cst_53 {dimension_numbers = #tpu.dot_dimension_numbers<[1], [0], [0], [1], [0, 0, 1, 1], [], []>} : vector<8x128xbf16>, vector<128x128xbf16>, vector<8x128xf32> -> vector<8x128xf32>
    %77 = arith.addf %65, %76 : vector<8x128xf32>
    %c6 = arith.constant 6 : index
    %c0_54 = arith.constant 0 : index
    %c0_55 = arith.constant 0 : index
    %78 = vector.load %arg1[%c6, %c0_54, %c0_55] : memref<49x8x400xbf16, #tpu.memory_space<vmem>>, vector<1x8x400xbf16>
    %79 = vector.shape_cast %78 : vector<1x8x400xbf16> to vector<8x400xbf16>
    %cst_56 = arith.constant dense<0.000000e+00> : vector<8x128xf32>
    %80 = tpu.matmul %79, %0, %cst_56 {dimension_numbers = #tpu.dot_dimension_numbers<[1], [0], [0], [1], [0, 0, 1, 1], [], []>} : vector<8x400xbf16>, vector<400x128xbf16>, vector<8x128xf32> -> vector<8x128xf32>
    %81 = vector.broadcast %1 : vector<1x128xf32> to vector<8x128xf32>
    %82 = arith.addf %80, %81 : vector<8x128xf32>
    %cst_57 = arith.constant 0.000000e+00 : f32
    %83 = vector.broadcast %cst_57 : f32 to vector<8x128xf32>
    %84 = arith.maximumf %82, %83 : vector<8x128xf32>
    %85 = arith.truncf %84 : vector<8x128xf32> to vector<8x128xbf16>
    %c6_58 = arith.constant 6 : index
    %c0_59 = arith.constant 0 : index
    %c0_60 = arith.constant 0 : index
    %86 = vector.load %arg4[%c6_58, %c0_59, %c0_60] : memref<49x128x128xbf16, #tpu.memory_space<vmem>>, vector<1x128x128xbf16>
    %87 = vector.shape_cast %86 : vector<1x128x128xbf16> to vector<128x128xbf16>
    %cst_61 = arith.constant dense<0.000000e+00> : vector<8x128xf32>
    %88 = tpu.matmul %85, %87, %cst_61 {dimension_numbers = #tpu.dot_dimension_numbers<[1], [0], [0], [1], [0, 0, 1, 1], [], []>} : vector<8x128xbf16>, vector<128x128xbf16>, vector<8x128xf32> -> vector<8x128xf32>
    %89 = arith.addf %77, %88 : vector<8x128xf32>
    %c7 = arith.constant 7 : index
    %c0_62 = arith.constant 0 : index
    %c0_63 = arith.constant 0 : index
    %90 = vector.load %arg1[%c7, %c0_62, %c0_63] : memref<49x8x400xbf16, #tpu.memory_space<vmem>>, vector<1x8x400xbf16>
    %91 = vector.shape_cast %90 : vector<1x8x400xbf16> to vector<8x400xbf16>
    %cst_64 = arith.constant dense<0.000000e+00> : vector<8x128xf32>
    %92 = tpu.matmul %91, %0, %cst_64 {dimension_numbers = #tpu.dot_dimension_numbers<[1], [0], [0], [1], [0, 0, 1, 1], [], []>} : vector<8x400xbf16>, vector<400x128xbf16>, vector<8x128xf32> -> vector<8x128xf32>
    %93 = vector.broadcast %1 : vector<1x128xf32> to vector<8x128xf32>
    %94 = arith.addf %92, %93 : vector<8x128xf32>
    %cst_65 = arith.constant 0.000000e+00 : f32
    %95 = vector.broadcast %cst_65 : f32 to vector<8x128xf32>
    %96 = arith.maximumf %94, %95 : vector<8x128xf32>
    %97 = arith.truncf %96 : vector<8x128xf32> to vector<8x128xbf16>
    %c7_66 = arith.constant 7 : index
    %c0_67 = arith.constant 0 : index
    %c0_68 = arith.constant 0 : index
    %98 = vector.load %arg4[%c7_66, %c0_67, %c0_68] : memref<49x128x128xbf16, #tpu.memory_space<vmem>>, vector<1x128x128xbf16>
    %99 = vector.shape_cast %98 : vector<1x128x128xbf16> to vector<128x128xbf16>
    %cst_69 = arith.constant dense<0.000000e+00> : vector<8x128xf32>
    %100 = tpu.matmul %97, %99, %cst_69 {dimension_numbers = #tpu.dot_dimension_numbers<[1], [0], [0], [1], [0, 0, 1, 1], [], []>} : vector<8x128xbf16>, vector<128x128xbf16>, vector<8x128xf32> -> vector<8x128xf32>
    %101 = arith.addf %89, %100 : vector<8x128xf32>
    %c8 = arith.constant 8 : index
    %c0_70 = arith.constant 0 : index
    %c0_71 = arith.constant 0 : index
    %102 = vector.load %arg1[%c8, %c0_70, %c0_71] : memref<49x8x400xbf16, #tpu.memory_space<vmem>>, vector<1x8x400xbf16>
    %103 = vector.shape_cast %102 : vector<1x8x400xbf16> to vector<8x400xbf16>
    %cst_72 = arith.constant dense<0.000000e+00> : vector<8x128xf32>
    %104 = tpu.matmul %103, %0, %cst_72 {dimension_numbers = #tpu.dot_dimension_numbers<[1], [0], [0], [1], [0, 0, 1, 1], [], []>} : vector<8x400xbf16>, vector<400x128xbf16>, vector<8x128xf32> -> vector<8x128xf32>
    %105 = vector.broadcast %1 : vector<1x128xf32> to vector<8x128xf32>
    %106 = arith.addf %104, %105 : vector<8x128xf32>
    %cst_73 = arith.constant 0.000000e+00 : f32
    %107 = vector.broadcast %cst_73 : f32 to vector<8x128xf32>
    %108 = arith.maximumf %106, %107 : vector<8x128xf32>
    %109 = arith.truncf %108 : vector<8x128xf32> to vector<8x128xbf16>
    %c8_74 = arith.constant 8 : index
    %c0_75 = arith.constant 0 : index
    %c0_76 = arith.constant 0 : index
    %110 = vector.load %arg4[%c8_74, %c0_75, %c0_76] : memref<49x128x128xbf16, #tpu.memory_space<vmem>>, vector<1x128x128xbf16>
    %111 = vector.shape_cast %110 : vector<1x128x128xbf16> to vector<128x128xbf16>
    %cst_77 = arith.constant dense<0.000000e+00> : vector<8x128xf32>
    %112 = tpu.matmul %109, %111, %cst_77 {dimension_numbers = #tpu.dot_dimension_numbers<[1], [0], [0], [1], [0, 0, 1, 1], [], []>} : vector<8x128xbf16>, vector<128x128xbf16>, vector<8x128xf32> -> vector<8x128xf32>
    %113 = arith.addf %101, %112 : vector<8x128xf32>
    %c9 = arith.constant 9 : index
    %c0_78 = arith.constant 0 : index
    %c0_79 = arith.constant 0 : index
    %114 = vector.load %arg1[%c9, %c0_78, %c0_79] : memref<49x8x400xbf16, #tpu.memory_space<vmem>>, vector<1x8x400xbf16>
    %115 = vector.shape_cast %114 : vector<1x8x400xbf16> to vector<8x400xbf16>
    %cst_80 = arith.constant dense<0.000000e+00> : vector<8x128xf32>
    %116 = tpu.matmul %115, %0, %cst_80 {dimension_numbers = #tpu.dot_dimension_numbers<[1], [0], [0], [1], [0, 0, 1, 1], [], []>} : vector<8x400xbf16>, vector<400x128xbf16>, vector<8x128xf32> -> vector<8x128xf32>
    %117 = vector.broadcast %1 : vector<1x128xf32> to vector<8x128xf32>
    %118 = arith.addf %116, %117 : vector<8x128xf32>
    %cst_81 = arith.constant 0.000000e+00 : f32
    %119 = vector.broadcast %cst_81 : f32 to vector<8x128xf32>
    %120 = arith.maximumf %118, %119 : vector<8x128xf32>
    %121 = arith.truncf %120 : vector<8x128xf32> to vector<8x128xbf16>
    %c9_82 = arith.constant 9 : index
    %c0_83 = arith.constant 0 : index
    %c0_84 = arith.constant 0 : index
    %122 = vector.load %arg4[%c9_82, %c0_83, %c0_84] : memref<49x128x128xbf16, #tpu.memory_space<vmem>>, vector<1x128x128xbf16>
    %123 = vector.shape_cast %122 : vector<1x128x128xbf16> to vector<128x128xbf16>
    %cst_85 = arith.constant dense<0.000000e+00> : vector<8x128xf32>
    %124 = tpu.matmul %121, %123, %cst_85 {dimension_numbers = #tpu.dot_dimension_numbers<[1], [0], [0], [1], [0, 0, 1, 1], [], []>} : vector<8x128xbf16>, vector<128x128xbf16>, vector<8x128xf32> -> vector<8x128xf32>
    %125 = arith.addf %113, %124 : vector<8x128xf32>
    %c10 = arith.constant 10 : index
    %c0_86 = arith.constant 0 : index
    %c0_87 = arith.constant 0 : index
    %126 = vector.load %arg1[%c10, %c0_86, %c0_87] : memref<49x8x400xbf16, #tpu.memory_space<vmem>>, vector<1x8x400xbf16>
    %127 = vector.shape_cast %126 : vector<1x8x400xbf16> to vector<8x400xbf16>
    %cst_88 = arith.constant dense<0.000000e+00> : vector<8x128xf32>
    %128 = tpu.matmul %127, %0, %cst_88 {dimension_numbers = #tpu.dot_dimension_numbers<[1], [0], [0], [1], [0, 0, 1, 1], [], []>} : vector<8x400xbf16>, vector<400x128xbf16>, vector<8x128xf32> -> vector<8x128xf32>
    %129 = vector.broadcast %1 : vector<1x128xf32> to vector<8x128xf32>
    %130 = arith.addf %128, %129 : vector<8x128xf32>
    %cst_89 = arith.constant 0.000000e+00 : f32
    %131 = vector.broadcast %cst_89 : f32 to vector<8x128xf32>
    %132 = arith.maximumf %130, %131 : vector<8x128xf32>
    %133 = arith.truncf %132 : vector<8x128xf32> to vector<8x128xbf16>
    %c10_90 = arith.constant 10 : index
    %c0_91 = arith.constant 0 : index
    %c0_92 = arith.constant 0 : index
    %134 = vector.load %arg4[%c10_90, %c0_91, %c0_92] : memref<49x128x128xbf16, #tpu.memory_space<vmem>>, vector<1x128x128xbf16>
    %135 = vector.shape_cast %134 : vector<1x128x128xbf16> to vector<128x128xbf16>
    %cst_93 = arith.constant dense<0.000000e+00> : vector<8x128xf32>
    %136 = tpu.matmul %133, %135, %cst_93 {dimension_numbers = #tpu.dot_dimension_numbers<[1], [0], [0], [1], [0, 0, 1, 1], [], []>} : vector<8x128xbf16>, vector<128x128xbf16>, vector<8x128xf32> -> vector<8x128xf32>
    %137 = arith.addf %125, %136 : vector<8x128xf32>
    %c11 = arith.constant 11 : index
    %c0_94 = arith.constant 0 : index
    %c0_95 = arith.constant 0 : index
    %138 = vector.load %arg1[%c11, %c0_94, %c0_95] : memref<49x8x400xbf16, #tpu.memory_space<vmem>>, vector<1x8x400xbf16>
    %139 = vector.shape_cast %138 : vector<1x8x400xbf16> to vector<8x400xbf16>
    %cst_96 = arith.constant dense<0.000000e+00> : vector<8x128xf32>
    %140 = tpu.matmul %139, %0, %cst_96 {dimension_numbers = #tpu.dot_dimension_numbers<[1], [0], [0], [1], [0, 0, 1, 1], [], []>} : vector<8x400xbf16>, vector<400x128xbf16>, vector<8x128xf32> -> vector<8x128xf32>
    %141 = vector.broadcast %1 : vector<1x128xf32> to vector<8x128xf32>
    %142 = arith.addf %140, %141 : vector<8x128xf32>
    %cst_97 = arith.constant 0.000000e+00 : f32
    %143 = vector.broadcast %cst_97 : f32 to vector<8x128xf32>
    %144 = arith.maximumf %142, %143 : vector<8x128xf32>
    %145 = arith.truncf %144 : vector<8x128xf32> to vector<8x128xbf16>
    %c11_98 = arith.constant 11 : index
    %c0_99 = arith.constant 0 : index
    %c0_100 = arith.constant 0 : index
    %146 = vector.load %arg4[%c11_98, %c0_99, %c0_100] : memref<49x128x128xbf16, #tpu.memory_space<vmem>>, vector<1x128x128xbf16>
    %147 = vector.shape_cast %146 : vector<1x128x128xbf16> to vector<128x128xbf16>
    %cst_101 = arith.constant dense<0.000000e+00> : vector<8x128xf32>
    %148 = tpu.matmul %145, %147, %cst_101 {dimension_numbers = #tpu.dot_dimension_numbers<[1], [0], [0], [1], [0, 0, 1, 1], [], []>} : vector<8x128xbf16>, vector<128x128xbf16>, vector<8x128xf32> -> vector<8x128xf32>
    %149 = arith.addf %137, %148 : vector<8x128xf32>
    %c12 = arith.constant 12 : index
    %c0_102 = arith.constant 0 : index
    %c0_103 = arith.constant 0 : index
    %150 = vector.load %arg1[%c12, %c0_102, %c0_103] : memref<49x8x400xbf16, #tpu.memory_space<vmem>>, vector<1x8x400xbf16>
    %151 = vector.shape_cast %150 : vector<1x8x400xbf16> to vector<8x400xbf16>
    %cst_104 = arith.constant dense<0.000000e+00> : vector<8x128xf32>
    %152 = tpu.matmul %151, %0, %cst_104 {dimension_numbers = #tpu.dot_dimension_numbers<[1], [0], [0], [1], [0, 0, 1, 1], [], []>} : vector<8x400xbf16>, vector<400x128xbf16>, vector<8x128xf32> -> vector<8x128xf32>
    %153 = vector.broadcast %1 : vector<1x128xf32> to vector<8x128xf32>
    %154 = arith.addf %152, %153 : vector<8x128xf32>
    %cst_105 = arith.constant 0.000000e+00 : f32
    %155 = vector.broadcast %cst_105 : f32 to vector<8x128xf32>
    %156 = arith.maximumf %154, %155 : vector<8x128xf32>
    %157 = arith.truncf %156 : vector<8x128xf32> to vector<8x128xbf16>
    %c12_106 = arith.constant 12 : index
    %c0_107 = arith.constant 0 : index
    %c0_108 = arith.constant 0 : index
    %158 = vector.load %arg4[%c12_106, %c0_107, %c0_108] : memref<49x128x128xbf16, #tpu.memory_space<vmem>>, vector<1x128x128xbf16>
    %159 = vector.shape_cast %158 : vector<1x128x128xbf16> to vector<128x128xbf16>
    %cst_109 = arith.constant dense<0.000000e+00> : vector<8x128xf32>
    %160 = tpu.matmul %157, %159, %cst_109 {dimension_numbers = #tpu.dot_dimension_numbers<[1], [0], [0], [1], [0, 0, 1, 1], [], []>} : vector<8x128xbf16>, vector<128x128xbf16>, vector<8x128xf32> -> vector<8x128xf32>
    %161 = arith.addf %149, %160 : vector<8x128xf32>
    %c13 = arith.constant 13 : index
    %c0_110 = arith.constant 0 : index
    %c0_111 = arith.constant 0 : index
    %162 = vector.load %arg1[%c13, %c0_110, %c0_111] : memref<49x8x400xbf16, #tpu.memory_space<vmem>>, vector<1x8x400xbf16>
    %163 = vector.shape_cast %162 : vector<1x8x400xbf16> to vector<8x400xbf16>
    %cst_112 = arith.constant dense<0.000000e+00> : vector<8x128xf32>
    %164 = tpu.matmul %163, %0, %cst_112 {dimension_numbers = #tpu.dot_dimension_numbers<[1], [0], [0], [1], [0, 0, 1, 1], [], []>} : vector<8x400xbf16>, vector<400x128xbf16>, vector<8x128xf32> -> vector<8x128xf32>
    %165 = vector.broadcast %1 : vector<1x128xf32> to vector<8x128xf32>
    %166 = arith.addf %164, %165 : vector<8x128xf32>
    %cst_113 = arith.constant 0.000000e+00 : f32
    %167 = vector.broadcast %cst_113 : f32 to vector<8x128xf32>
    %168 = arith.maximumf %166, %167 : vector<8x128xf32>
    %169 = arith.truncf %168 : vector<8x128xf32> to vector<8x128xbf16>
    %c13_114 = arith.constant 13 : index
    %c0_115 = arith.constant 0 : index
    %c0_116 = arith.constant 0 : index
    %170 = vector.load %arg4[%c13_114, %c0_115, %c0_116] : memref<49x128x128xbf16, #tpu.memory_space<vmem>>, vector<1x128x128xbf16>
    %171 = vector.shape_cast %170 : vector<1x128x128xbf16> to vector<128x128xbf16>
    %cst_117 = arith.constant dense<0.000000e+00> : vector<8x128xf32>
    %172 = tpu.matmul %169, %171, %cst_117 {dimension_numbers = #tpu.dot_dimension_numbers<[1], [0], [0], [1], [0, 0, 1, 1], [], []>} : vector<8x128xbf16>, vector<128x128xbf16>, vector<8x128xf32> -> vector<8x128xf32>
    %173 = arith.addf %161, %172 : vector<8x128xf32>
    %c14 = arith.constant 14 : index
    %c0_118 = arith.constant 0 : index
    %c0_119 = arith.constant 0 : index
    %174 = vector.load %arg1[%c14, %c0_118, %c0_119] : memref<49x8x400xbf16, #tpu.memory_space<vmem>>, vector<1x8x400xbf16>
    %175 = vector.shape_cast %174 : vector<1x8x400xbf16> to vector<8x400xbf16>
    %cst_120 = arith.constant dense<0.000000e+00> : vector<8x128xf32>
    %176 = tpu.matmul %175, %0, %cst_120 {dimension_numbers = #tpu.dot_dimension_numbers<[1], [0], [0], [1], [0, 0, 1, 1], [], []>} : vector<8x400xbf16>, vector<400x128xbf16>, vector<8x128xf32> -> vector<8x128xf32>
    %177 = vector.broadcast %1 : vector<1x128xf32> to vector<8x128xf32>
    %178 = arith.addf %176, %177 : vector<8x128xf32>
    %cst_121 = arith.constant 0.000000e+00 : f32
    %179 = vector.broadcast %cst_121 : f32 to vector<8x128xf32>
    %180 = arith.maximumf %178, %179 : vector<8x128xf32>
    %181 = arith.truncf %180 : vector<8x128xf32> to vector<8x128xbf16>
    %c14_122 = arith.constant 14 : index
    %c0_123 = arith.constant 0 : index
    %c0_124 = arith.constant 0 : index
    %182 = vector.load %arg4[%c14_122, %c0_123, %c0_124] : memref<49x128x128xbf16, #tpu.memory_space<vmem>>, vector<1x128x128xbf16>
    %183 = vector.shape_cast %182 : vector<1x128x128xbf16> to vector<128x128xbf16>
    %cst_125 = arith.constant dense<0.000000e+00> : vector<8x128xf32>
    %184 = tpu.matmul %181, %183, %cst_125 {dimension_numbers = #tpu.dot_dimension_numbers<[1], [0], [0], [1], [0, 0, 1, 1], [], []>} : vector<8x128xbf16>, vector<128x128xbf16>, vector<8x128xf32> -> vector<8x128xf32>
    %185 = arith.addf %173, %184 : vector<8x128xf32>
    %c15 = arith.constant 15 : index
    %c0_126 = arith.constant 0 : index
    %c0_127 = arith.constant 0 : index
    %186 = vector.load %arg1[%c15, %c0_126, %c0_127] : memref<49x8x400xbf16, #tpu.memory_space<vmem>>, vector<1x8x400xbf16>
    %187 = vector.shape_cast %186 : vector<1x8x400xbf16> to vector<8x400xbf16>
    %cst_128 = arith.constant dense<0.000000e+00> : vector<8x128xf32>
    %188 = tpu.matmul %187, %0, %cst_128 {dimension_numbers = #tpu.dot_dimension_numbers<[1], [0], [0], [1], [0, 0, 1, 1], [], []>} : vector<8x400xbf16>, vector<400x128xbf16>, vector<8x128xf32> -> vector<8x128xf32>
    %189 = vector.broadcast %1 : vector<1x128xf32> to vector<8x128xf32>
    %190 = arith.addf %188, %189 : vector<8x128xf32>
    %cst_129 = arith.constant 0.000000e+00 : f32
    %191 = vector.broadcast %cst_129 : f32 to vector<8x128xf32>
    %192 = arith.maximumf %190, %191 : vector<8x128xf32>
    %193 = arith.truncf %192 : vector<8x128xf32> to vector<8x128xbf16>
    %c15_130 = arith.constant 15 : index
    %c0_131 = arith.constant 0 : index
    %c0_132 = arith.constant 0 : index
    %194 = vector.load %arg4[%c15_130, %c0_131, %c0_132] : memref<49x128x128xbf16, #tpu.memory_space<vmem>>, vector<1x128x128xbf16>
    %195 = vector.shape_cast %194 : vector<1x128x128xbf16> to vector<128x128xbf16>
    %cst_133 = arith.constant dense<0.000000e+00> : vector<8x128xf32>
    %196 = tpu.matmul %193, %195, %cst_133 {dimension_numbers = #tpu.dot_dimension_numbers<[1], [0], [0], [1], [0, 0, 1, 1], [], []>} : vector<8x128xbf16>, vector<128x128xbf16>, vector<8x128xf32> -> vector<8x128xf32>
    %197 = arith.addf %185, %196 : vector<8x128xf32>
    %c16 = arith.constant 16 : index
    %c0_134 = arith.constant 0 : index
    %c0_135 = arith.constant 0 : index
    %198 = vector.load %arg1[%c16, %c0_134, %c0_135] : memref<49x8x400xbf16, #tpu.memory_space<vmem>>, vector<1x8x400xbf16>
    %199 = vector.shape_cast %198 : vector<1x8x400xbf16> to vector<8x400xbf16>
    %cst_136 = arith.constant dense<0.000000e+00> : vector<8x128xf32>
    %200 = tpu.matmul %199, %0, %cst_136 {dimension_numbers = #tpu.dot_dimension_numbers<[1], [0], [0], [1], [0, 0, 1, 1], [], []>} : vector<8x400xbf16>, vector<400x128xbf16>, vector<8x128xf32> -> vector<8x128xf32>
    %201 = vector.broadcast %1 : vector<1x128xf32> to vector<8x128xf32>
    %202 = arith.addf %200, %201 : vector<8x128xf32>
    %cst_137 = arith.constant 0.000000e+00 : f32
    %203 = vector.broadcast %cst_137 : f32 to vector<8x128xf32>
    %204 = arith.maximumf %202, %203 : vector<8x128xf32>
    %205 = arith.truncf %204 : vector<8x128xf32> to vector<8x128xbf16>
    %c16_138 = arith.constant 16 : index
    %c0_139 = arith.constant 0 : index
    %c0_140 = arith.constant 0 : index
    %206 = vector.load %arg4[%c16_138, %c0_139, %c0_140] : memref<49x128x128xbf16, #tpu.memory_space<vmem>>, vector<1x128x128xbf16>
    %207 = vector.shape_cast %206 : vector<1x128x128xbf16> to vector<128x128xbf16>
    %cst_141 = arith.constant dense<0.000000e+00> : vector<8x128xf32>
    %208 = tpu.matmul %205, %207, %cst_141 {dimension_numbers = #tpu.dot_dimension_numbers<[1], [0], [0], [1], [0, 0, 1, 1], [], []>} : vector<8x128xbf16>, vector<128x128xbf16>, vector<8x128xf32> -> vector<8x128xf32>
    %209 = arith.addf %197, %208 : vector<8x128xf32>
    %c17 = arith.constant 17 : index
    %c0_142 = arith.constant 0 : index
    %c0_143 = arith.constant 0 : index
    %210 = vector.load %arg1[%c17, %c0_142, %c0_143] : memref<49x8x400xbf16, #tpu.memory_space<vmem>>, vector<1x8x400xbf16>
    %211 = vector.shape_cast %210 : vector<1x8x400xbf16> to vector<8x400xbf16>
    %cst_144 = arith.constant dense<0.000000e+00> : vector<8x128xf32>
    %212 = tpu.matmul %211, %0, %cst_144 {dimension_numbers = #tpu.dot_dimension_numbers<[1], [0], [0], [1], [0, 0, 1, 1], [], []>} : vector<8x400xbf16>, vector<400x128xbf16>, vector<8x128xf32> -> vector<8x128xf32>
    %213 = vector.broadcast %1 : vector<1x128xf32> to vector<8x128xf32>
    %214 = arith.addf %212, %213 : vector<8x128xf32>
    %cst_145 = arith.constant 0.000000e+00 : f32
    %215 = vector.broadcast %cst_145 : f32 to vector<8x128xf32>
    %216 = arith.maximumf %214, %215 : vector<8x128xf32>
    %217 = arith.truncf %216 : vector<8x128xf32> to vector<8x128xbf16>
    %c17_146 = arith.constant 17 : index
    %c0_147 = arith.constant 0 : index
    %c0_148 = arith.constant 0 : index
    %218 = vector.load %arg4[%c17_146, %c0_147, %c0_148] : memref<49x128x128xbf16, #tpu.memory_space<vmem>>, vector<1x128x128xbf16>
    %219 = vector.shape_cast %218 : vector<1x128x128xbf16> to vector<128x128xbf16>
    %cst_149 = arith.constant dense<0.000000e+00> : vector<8x128xf32>
    %220 = tpu.matmul %217, %219, %cst_149 {dimension_numbers = #tpu.dot_dimension_numbers<[1], [0], [0], [1], [0, 0, 1, 1], [], []>} : vector<8x128xbf16>, vector<128x128xbf16>, vector<8x128xf32> -> vector<8x128xf32>
    %221 = arith.addf %209, %220 : vector<8x128xf32>
    %c18 = arith.constant 18 : index
    %c0_150 = arith.constant 0 : index
    %c0_151 = arith.constant 0 : index
    %222 = vector.load %arg1[%c18, %c0_150, %c0_151] : memref<49x8x400xbf16, #tpu.memory_space<vmem>>, vector<1x8x400xbf16>
    %223 = vector.shape_cast %222 : vector<1x8x400xbf16> to vector<8x400xbf16>
    %cst_152 = arith.constant dense<0.000000e+00> : vector<8x128xf32>
    %224 = tpu.matmul %223, %0, %cst_152 {dimension_numbers = #tpu.dot_dimension_numbers<[1], [0], [0], [1], [0, 0, 1, 1], [], []>} : vector<8x400xbf16>, vector<400x128xbf16>, vector<8x128xf32> -> vector<8x128xf32>
    %225 = vector.broadcast %1 : vector<1x128xf32> to vector<8x128xf32>
    %226 = arith.addf %224, %225 : vector<8x128xf32>
    %cst_153 = arith.constant 0.000000e+00 : f32
    %227 = vector.broadcast %cst_153 : f32 to vector<8x128xf32>
    %228 = arith.maximumf %226, %227 : vector<8x128xf32>
    %229 = arith.truncf %228 : vector<8x128xf32> to vector<8x128xbf16>
    %c18_154 = arith.constant 18 : index
    %c0_155 = arith.constant 0 : index
    %c0_156 = arith.constant 0 : index
    %230 = vector.load %arg4[%c18_154, %c0_155, %c0_156] : memref<49x128x128xbf16, #tpu.memory_space<vmem>>, vector<1x128x128xbf16>
    %231 = vector.shape_cast %230 : vector<1x128x128xbf16> to vector<128x128xbf16>
    %cst_157 = arith.constant dense<0.000000e+00> : vector<8x128xf32>
    %232 = tpu.matmul %229, %231, %cst_157 {dimension_numbers = #tpu.dot_dimension_numbers<[1], [0], [0], [1], [0, 0, 1, 1], [], []>} : vector<8x128xbf16>, vector<128x128xbf16>, vector<8x128xf32> -> vector<8x128xf32>
    %233 = arith.addf %221, %232 : vector<8x128xf32>
    %c19 = arith.constant 19 : index
    %c0_158 = arith.constant 0 : index
    %c0_159 = arith.constant 0 : index
    %234 = vector.load %arg1[%c19, %c0_158, %c0_159] : memref<49x8x400xbf16, #tpu.memory_space<vmem>>, vector<1x8x400xbf16>
    %235 = vector.shape_cast %234 : vector<1x8x400xbf16> to vector<8x400xbf16>
    %cst_160 = arith.constant dense<0.000000e+00> : vector<8x128xf32>
    %236 = tpu.matmul %235, %0, %cst_160 {dimension_numbers = #tpu.dot_dimension_numbers<[1], [0], [0], [1], [0, 0, 1, 1], [], []>} : vector<8x400xbf16>, vector<400x128xbf16>, vector<8x128xf32> -> vector<8x128xf32>
    %237 = vector.broadcast %1 : vector<1x128xf32> to vector<8x128xf32>
    %238 = arith.addf %236, %237 : vector<8x128xf32>
    %cst_161 = arith.constant 0.000000e+00 : f32
    %239 = vector.broadcast %cst_161 : f32 to vector<8x128xf32>
    %240 = arith.maximumf %238, %239 : vector<8x128xf32>
    %241 = arith.truncf %240 : vector<8x128xf32> to vector<8x128xbf16>
    %c19_162 = arith.constant 19 : index
    %c0_163 = arith.constant 0 : index
    %c0_164 = arith.constant 0 : index
    %242 = vector.load %arg4[%c19_162, %c0_163, %c0_164] : memref<49x128x128xbf16, #tpu.memory_space<vmem>>, vector<1x128x128xbf16>
    %243 = vector.shape_cast %242 : vector<1x128x128xbf16> to vector<128x128xbf16>
    %cst_165 = arith.constant dense<0.000000e+00> : vector<8x128xf32>
    %244 = tpu.matmul %241, %243, %cst_165 {dimension_numbers = #tpu.dot_dimension_numbers<[1], [0], [0], [1], [0, 0, 1, 1], [], []>} : vector<8x128xbf16>, vector<128x128xbf16>, vector<8x128xf32> -> vector<8x128xf32>
    %245 = arith.addf %233, %244 : vector<8x128xf32>
    %c20 = arith.constant 20 : index
    %c0_166 = arith.constant 0 : index
    %c0_167 = arith.constant 0 : index
    %246 = vector.load %arg1[%c20, %c0_166, %c0_167] : memref<49x8x400xbf16, #tpu.memory_space<vmem>>, vector<1x8x400xbf16>
    %247 = vector.shape_cast %246 : vector<1x8x400xbf16> to vector<8x400xbf16>
    %cst_168 = arith.constant dense<0.000000e+00> : vector<8x128xf32>
    %248 = tpu.matmul %247, %0, %cst_168 {dimension_numbers = #tpu.dot_dimension_numbers<[1], [0], [0], [1], [0, 0, 1, 1], [], []>} : vector<8x400xbf16>, vector<400x128xbf16>, vector<8x128xf32> -> vector<8x128xf32>
    %249 = vector.broadcast %1 : vector<1x128xf32> to vector<8x128xf32>
    %250 = arith.addf %248, %249 : vector<8x128xf32>
    %cst_169 = arith.constant 0.000000e+00 : f32
    %251 = vector.broadcast %cst_169 : f32 to vector<8x128xf32>
    %252 = arith.maximumf %250, %251 : vector<8x128xf32>
    %253 = arith.truncf %252 : vector<8x128xf32> to vector<8x128xbf16>
    %c20_170 = arith.constant 20 : index
    %c0_171 = arith.constant 0 : index
    %c0_172 = arith.constant 0 : index
    %254 = vector.load %arg4[%c20_170, %c0_171, %c0_172] : memref<49x128x128xbf16, #tpu.memory_space<vmem>>, vector<1x128x128xbf16>
    %255 = vector.shape_cast %254 : vector<1x128x128xbf16> to vector<128x128xbf16>
    %cst_173 = arith.constant dense<0.000000e+00> : vector<8x128xf32>
    %256 = tpu.matmul %253, %255, %cst_173 {dimension_numbers = #tpu.dot_dimension_numbers<[1], [0], [0], [1], [0, 0, 1, 1], [], []>} : vector<8x128xbf16>, vector<128x128xbf16>, vector<8x128xf32> -> vector<8x128xf32>
    %257 = arith.addf %245, %256 : vector<8x128xf32>
    %c21 = arith.constant 21 : index
    %c0_174 = arith.constant 0 : index
    %c0_175 = arith.constant 0 : index
    %258 = vector.load %arg1[%c21, %c0_174, %c0_175] : memref<49x8x400xbf16, #tpu.memory_space<vmem>>, vector<1x8x400xbf16>
    %259 = vector.shape_cast %258 : vector<1x8x400xbf16> to vector<8x400xbf16>
    %cst_176 = arith.constant dense<0.000000e+00> : vector<8x128xf32>
    %260 = tpu.matmul %259, %0, %cst_176 {dimension_numbers = #tpu.dot_dimension_numbers<[1], [0], [0], [1], [0, 0, 1, 1], [], []>} : vector<8x400xbf16>, vector<400x128xbf16>, vector<8x128xf32> -> vector<8x128xf32>
    %261 = vector.broadcast %1 : vector<1x128xf32> to vector<8x128xf32>
    %262 = arith.addf %260, %261 : vector<8x128xf32>
    %cst_177 = arith.constant 0.000000e+00 : f32
    %263 = vector.broadcast %cst_177 : f32 to vector<8x128xf32>
    %264 = arith.maximumf %262, %263 : vector<8x128xf32>
    %265 = arith.truncf %264 : vector<8x128xf32> to vector<8x128xbf16>
    %c21_178 = arith.constant 21 : index
    %c0_179 = arith.constant 0 : index
    %c0_180 = arith.constant 0 : index
    %266 = vector.load %arg4[%c21_178, %c0_179, %c0_180] : memref<49x128x128xbf16, #tpu.memory_space<vmem>>, vector<1x128x128xbf16>
    %267 = vector.shape_cast %266 : vector<1x128x128xbf16> to vector<128x128xbf16>
    %cst_181 = arith.constant dense<0.000000e+00> : vector<8x128xf32>
    %268 = tpu.matmul %265, %267, %cst_181 {dimension_numbers = #tpu.dot_dimension_numbers<[1], [0], [0], [1], [0, 0, 1, 1], [], []>} : vector<8x128xbf16>, vector<128x128xbf16>, vector<8x128xf32> -> vector<8x128xf32>
    %269 = arith.addf %257, %268 : vector<8x128xf32>
    %c22 = arith.constant 22 : index
    %c0_182 = arith.constant 0 : index
    %c0_183 = arith.constant 0 : index
    %270 = vector.load %arg1[%c22, %c0_182, %c0_183] : memref<49x8x400xbf16, #tpu.memory_space<vmem>>, vector<1x8x400xbf16>
    %271 = vector.shape_cast %270 : vector<1x8x400xbf16> to vector<8x400xbf16>
    %cst_184 = arith.constant dense<0.000000e+00> : vector<8x128xf32>
    %272 = tpu.matmul %271, %0, %cst_184 {dimension_numbers = #tpu.dot_dimension_numbers<[1], [0], [0], [1], [0, 0, 1, 1], [], []>} : vector<8x400xbf16>, vector<400x128xbf16>, vector<8x128xf32> -> vector<8x128xf32>
    %273 = vector.broadcast %1 : vector<1x128xf32> to vector<8x128xf32>
    %274 = arith.addf %272, %273 : vector<8x128xf32>
    %cst_185 = arith.constant 0.000000e+00 : f32
    %275 = vector.broadcast %cst_185 : f32 to vector<8x128xf32>
    %276 = arith.maximumf %274, %275 : vector<8x128xf32>
    %277 = arith.truncf %276 : vector<8x128xf32> to vector<8x128xbf16>
    %c22_186 = arith.constant 22 : index
    %c0_187 = arith.constant 0 : index
    %c0_188 = arith.constant 0 : index
    %278 = vector.load %arg4[%c22_186, %c0_187, %c0_188] : memref<49x128x128xbf16, #tpu.memory_space<vmem>>, vector<1x128x128xbf16>
    %279 = vector.shape_cast %278 : vector<1x128x128xbf16> to vector<128x128xbf16>
    %cst_189 = arith.constant dense<0.000000e+00> : vector<8x128xf32>
    %280 = tpu.matmul %277, %279, %cst_189 {dimension_numbers = #tpu.dot_dimension_numbers<[1], [0], [0], [1], [0, 0, 1, 1], [], []>} : vector<8x128xbf16>, vector<128x128xbf16>, vector<8x128xf32> -> vector<8x128xf32>
    %281 = arith.addf %269, %280 : vector<8x128xf32>
    %c23 = arith.constant 23 : index
    %c0_190 = arith.constant 0 : index
    %c0_191 = arith.constant 0 : index
    %282 = vector.load %arg1[%c23, %c0_190, %c0_191] : memref<49x8x400xbf16, #tpu.memory_space<vmem>>, vector<1x8x400xbf16>
    %283 = vector.shape_cast %282 : vector<1x8x400xbf16> to vector<8x400xbf16>
    %cst_192 = arith.constant dense<0.000000e+00> : vector<8x128xf32>
    %284 = tpu.matmul %283, %0, %cst_192 {dimension_numbers = #tpu.dot_dimension_numbers<[1], [0], [0], [1], [0, 0, 1, 1], [], []>} : vector<8x400xbf16>, vector<400x128xbf16>, vector<8x128xf32> -> vector<8x128xf32>
    %285 = vector.broadcast %1 : vector<1x128xf32> to vector<8x128xf32>
    %286 = arith.addf %284, %285 : vector<8x128xf32>
    %cst_193 = arith.constant 0.000000e+00 : f32
    %287 = vector.broadcast %cst_193 : f32 to vector<8x128xf32>
    %288 = arith.maximumf %286, %287 : vector<8x128xf32>
    %289 = arith.truncf %288 : vector<8x128xf32> to vector<8x128xbf16>
    %c23_194 = arith.constant 23 : index
    %c0_195 = arith.constant 0 : index
    %c0_196 = arith.constant 0 : index
    %290 = vector.load %arg4[%c23_194, %c0_195, %c0_196] : memref<49x128x128xbf16, #tpu.memory_space<vmem>>, vector<1x128x128xbf16>
    %291 = vector.shape_cast %290 : vector<1x128x128xbf16> to vector<128x128xbf16>
    %cst_197 = arith.constant dense<0.000000e+00> : vector<8x128xf32>
    %292 = tpu.matmul %289, %291, %cst_197 {dimension_numbers = #tpu.dot_dimension_numbers<[1], [0], [0], [1], [0, 0, 1, 1], [], []>} : vector<8x128xbf16>, vector<128x128xbf16>, vector<8x128xf32> -> vector<8x128xf32>
    %293 = arith.addf %281, %292 : vector<8x128xf32>
    %c24 = arith.constant 24 : index
    %c0_198 = arith.constant 0 : index
    %c0_199 = arith.constant 0 : index
    %294 = vector.load %arg1[%c24, %c0_198, %c0_199] : memref<49x8x400xbf16, #tpu.memory_space<vmem>>, vector<1x8x400xbf16>
    %295 = vector.shape_cast %294 : vector<1x8x400xbf16> to vector<8x400xbf16>
    %cst_200 = arith.constant dense<0.000000e+00> : vector<8x128xf32>
    %296 = tpu.matmul %295, %0, %cst_200 {dimension_numbers = #tpu.dot_dimension_numbers<[1], [0], [0], [1], [0, 0, 1, 1], [], []>} : vector<8x400xbf16>, vector<400x128xbf16>, vector<8x128xf32> -> vector<8x128xf32>
    %297 = vector.broadcast %1 : vector<1x128xf32> to vector<8x128xf32>
    %298 = arith.addf %296, %297 : vector<8x128xf32>
    %cst_201 = arith.constant 0.000000e+00 : f32
    %299 = vector.broadcast %cst_201 : f32 to vector<8x128xf32>
    %300 = arith.maximumf %298, %299 : vector<8x128xf32>
    %301 = arith.truncf %300 : vector<8x128xf32> to vector<8x128xbf16>
    %c24_202 = arith.constant 24 : index
    %c0_203 = arith.constant 0 : index
    %c0_204 = arith.constant 0 : index
    %302 = vector.load %arg4[%c24_202, %c0_203, %c0_204] : memref<49x128x128xbf16, #tpu.memory_space<vmem>>, vector<1x128x128xbf16>
    %303 = vector.shape_cast %302 : vector<1x128x128xbf16> to vector<128x128xbf16>
    %cst_205 = arith.constant dense<0.000000e+00> : vector<8x128xf32>
    %304 = tpu.matmul %301, %303, %cst_205 {dimension_numbers = #tpu.dot_dimension_numbers<[1], [0], [0], [1], [0, 0, 1, 1], [], []>} : vector<8x128xbf16>, vector<128x128xbf16>, vector<8x128xf32> -> vector<8x128xf32>
    %305 = arith.addf %293, %304 : vector<8x128xf32>
    %c25 = arith.constant 25 : index
    %c0_206 = arith.constant 0 : index
    %c0_207 = arith.constant 0 : index
    %306 = vector.load %arg1[%c25, %c0_206, %c0_207] : memref<49x8x400xbf16, #tpu.memory_space<vmem>>, vector<1x8x400xbf16>
    %307 = vector.shape_cast %306 : vector<1x8x400xbf16> to vector<8x400xbf16>
    %cst_208 = arith.constant dense<0.000000e+00> : vector<8x128xf32>
    %308 = tpu.matmul %307, %0, %cst_208 {dimension_numbers = #tpu.dot_dimension_numbers<[1], [0], [0], [1], [0, 0, 1, 1], [], []>} : vector<8x400xbf16>, vector<400x128xbf16>, vector<8x128xf32> -> vector<8x128xf32>
    %309 = vector.broadcast %1 : vector<1x128xf32> to vector<8x128xf32>
    %310 = arith.addf %308, %309 : vector<8x128xf32>
    %cst_209 = arith.constant 0.000000e+00 : f32
    %311 = vector.broadcast %cst_209 : f32 to vector<8x128xf32>
    %312 = arith.maximumf %310, %311 : vector<8x128xf32>
    %313 = arith.truncf %312 : vector<8x128xf32> to vector<8x128xbf16>
    %c25_210 = arith.constant 25 : index
    %c0_211 = arith.constant 0 : index
    %c0_212 = arith.constant 0 : index
    %314 = vector.load %arg4[%c25_210, %c0_211, %c0_212] : memref<49x128x128xbf16, #tpu.memory_space<vmem>>, vector<1x128x128xbf16>
    %315 = vector.shape_cast %314 : vector<1x128x128xbf16> to vector<128x128xbf16>
    %cst_213 = arith.constant dense<0.000000e+00> : vector<8x128xf32>
    %316 = tpu.matmul %313, %315, %cst_213 {dimension_numbers = #tpu.dot_dimension_numbers<[1], [0], [0], [1], [0, 0, 1, 1], [], []>} : vector<8x128xbf16>, vector<128x128xbf16>, vector<8x128xf32> -> vector<8x128xf32>
    %317 = arith.addf %305, %316 : vector<8x128xf32>
    %c26 = arith.constant 26 : index
    %c0_214 = arith.constant 0 : index
    %c0_215 = arith.constant 0 : index
    %318 = vector.load %arg1[%c26, %c0_214, %c0_215] : memref<49x8x400xbf16, #tpu.memory_space<vmem>>, vector<1x8x400xbf16>
    %319 = vector.shape_cast %318 : vector<1x8x400xbf16> to vector<8x400xbf16>
    %cst_216 = arith.constant dense<0.000000e+00> : vector<8x128xf32>
    %320 = tpu.matmul %319, %0, %cst_216 {dimension_numbers = #tpu.dot_dimension_numbers<[1], [0], [0], [1], [0, 0, 1, 1], [], []>} : vector<8x400xbf16>, vector<400x128xbf16>, vector<8x128xf32> -> vector<8x128xf32>
    %321 = vector.broadcast %1 : vector<1x128xf32> to vector<8x128xf32>
    %322 = arith.addf %320, %321 : vector<8x128xf32>
    %cst_217 = arith.constant 0.000000e+00 : f32
    %323 = vector.broadcast %cst_217 : f32 to vector<8x128xf32>
    %324 = arith.maximumf %322, %323 : vector<8x128xf32>
    %325 = arith.truncf %324 : vector<8x128xf32> to vector<8x128xbf16>
    %c26_218 = arith.constant 26 : index
    %c0_219 = arith.constant 0 : index
    %c0_220 = arith.constant 0 : index
    %326 = vector.load %arg4[%c26_218, %c0_219, %c0_220] : memref<49x128x128xbf16, #tpu.memory_space<vmem>>, vector<1x128x128xbf16>
    %327 = vector.shape_cast %326 : vector<1x128x128xbf16> to vector<128x128xbf16>
    %cst_221 = arith.constant dense<0.000000e+00> : vector<8x128xf32>
    %328 = tpu.matmul %325, %327, %cst_221 {dimension_numbers = #tpu.dot_dimension_numbers<[1], [0], [0], [1], [0, 0, 1, 1], [], []>} : vector<8x128xbf16>, vector<128x128xbf16>, vector<8x128xf32> -> vector<8x128xf32>
    %329 = arith.addf %317, %328 : vector<8x128xf32>
    %c27 = arith.constant 27 : index
    %c0_222 = arith.constant 0 : index
    %c0_223 = arith.constant 0 : index
    %330 = vector.load %arg1[%c27, %c0_222, %c0_223] : memref<49x8x400xbf16, #tpu.memory_space<vmem>>, vector<1x8x400xbf16>
    %331 = vector.shape_cast %330 : vector<1x8x400xbf16> to vector<8x400xbf16>
    %cst_224 = arith.constant dense<0.000000e+00> : vector<8x128xf32>
    %332 = tpu.matmul %331, %0, %cst_224 {dimension_numbers = #tpu.dot_dimension_numbers<[1], [0], [0], [1], [0, 0, 1, 1], [], []>} : vector<8x400xbf16>, vector<400x128xbf16>, vector<8x128xf32> -> vector<8x128xf32>
    %333 = vector.broadcast %1 : vector<1x128xf32> to vector<8x128xf32>
    %334 = arith.addf %332, %333 : vector<8x128xf32>
    %cst_225 = arith.constant 0.000000e+00 : f32
    %335 = vector.broadcast %cst_225 : f32 to vector<8x128xf32>
    %336 = arith.maximumf %334, %335 : vector<8x128xf32>
    %337 = arith.truncf %336 : vector<8x128xf32> to vector<8x128xbf16>
    %c27_226 = arith.constant 27 : index
    %c0_227 = arith.constant 0 : index
    %c0_228 = arith.constant 0 : index
    %338 = vector.load %arg4[%c27_226, %c0_227, %c0_228] : memref<49x128x128xbf16, #tpu.memory_space<vmem>>, vector<1x128x128xbf16>
    %339 = vector.shape_cast %338 : vector<1x128x128xbf16> to vector<128x128xbf16>
    %cst_229 = arith.constant dense<0.000000e+00> : vector<8x128xf32>
    %340 = tpu.matmul %337, %339, %cst_229 {dimension_numbers = #tpu.dot_dimension_numbers<[1], [0], [0], [1], [0, 0, 1, 1], [], []>} : vector<8x128xbf16>, vector<128x128xbf16>, vector<8x128xf32> -> vector<8x128xf32>
    %341 = arith.addf %329, %340 : vector<8x128xf32>
    %c28 = arith.constant 28 : index
    %c0_230 = arith.constant 0 : index
    %c0_231 = arith.constant 0 : index
    %342 = vector.load %arg1[%c28, %c0_230, %c0_231] : memref<49x8x400xbf16, #tpu.memory_space<vmem>>, vector<1x8x400xbf16>
    %343 = vector.shape_cast %342 : vector<1x8x400xbf16> to vector<8x400xbf16>
    %cst_232 = arith.constant dense<0.000000e+00> : vector<8x128xf32>
    %344 = tpu.matmul %343, %0, %cst_232 {dimension_numbers = #tpu.dot_dimension_numbers<[1], [0], [0], [1], [0, 0, 1, 1], [], []>} : vector<8x400xbf16>, vector<400x128xbf16>, vector<8x128xf32> -> vector<8x128xf32>
    %345 = vector.broadcast %1 : vector<1x128xf32> to vector<8x128xf32>
    %346 = arith.addf %344, %345 : vector<8x128xf32>
    %cst_233 = arith.constant 0.000000e+00 : f32
    %347 = vector.broadcast %cst_233 : f32 to vector<8x128xf32>
    %348 = arith.maximumf %346, %347 : vector<8x128xf32>
    %349 = arith.truncf %348 : vector<8x128xf32> to vector<8x128xbf16>
    %c28_234 = arith.constant 28 : index
    %c0_235 = arith.constant 0 : index
    %c0_236 = arith.constant 0 : index
    %350 = vector.load %arg4[%c28_234, %c0_235, %c0_236] : memref<49x128x128xbf16, #tpu.memory_space<vmem>>, vector<1x128x128xbf16>
    %351 = vector.shape_cast %350 : vector<1x128x128xbf16> to vector<128x128xbf16>
    %cst_237 = arith.constant dense<0.000000e+00> : vector<8x128xf32>
    %352 = tpu.matmul %349, %351, %cst_237 {dimension_numbers = #tpu.dot_dimension_numbers<[1], [0], [0], [1], [0, 0, 1, 1], [], []>} : vector<8x128xbf16>, vector<128x128xbf16>, vector<8x128xf32> -> vector<8x128xf32>
    %353 = arith.addf %341, %352 : vector<8x128xf32>
    %c29 = arith.constant 29 : index
    %c0_238 = arith.constant 0 : index
    %c0_239 = arith.constant 0 : index
    %354 = vector.load %arg1[%c29, %c0_238, %c0_239] : memref<49x8x400xbf16, #tpu.memory_space<vmem>>, vector<1x8x400xbf16>
    %355 = vector.shape_cast %354 : vector<1x8x400xbf16> to vector<8x400xbf16>
    %cst_240 = arith.constant dense<0.000000e+00> : vector<8x128xf32>
    %356 = tpu.matmul %355, %0, %cst_240 {dimension_numbers = #tpu.dot_dimension_numbers<[1], [0], [0], [1], [0, 0, 1, 1], [], []>} : vector<8x400xbf16>, vector<400x128xbf16>, vector<8x128xf32> -> vector<8x128xf32>
    %357 = vector.broadcast %1 : vector<1x128xf32> to vector<8x128xf32>
    %358 = arith.addf %356, %357 : vector<8x128xf32>
    %cst_241 = arith.constant 0.000000e+00 : f32
    %359 = vector.broadcast %cst_241 : f32 to vector<8x128xf32>
    %360 = arith.maximumf %358, %359 : vector<8x128xf32>
    %361 = arith.truncf %360 : vector<8x128xf32> to vector<8x128xbf16>
    %c29_242 = arith.constant 29 : index
    %c0_243 = arith.constant 0 : index
    %c0_244 = arith.constant 0 : index
    %362 = vector.load %arg4[%c29_242, %c0_243, %c0_244] : memref<49x128x128xbf16, #tpu.memory_space<vmem>>, vector<1x128x128xbf16>
    %363 = vector.shape_cast %362 : vector<1x128x128xbf16> to vector<128x128xbf16>
    %cst_245 = arith.constant dense<0.000000e+00> : vector<8x128xf32>
    %364 = tpu.matmul %361, %363, %cst_245 {dimension_numbers = #tpu.dot_dimension_numbers<[1], [0], [0], [1], [0, 0, 1, 1], [], []>} : vector<8x128xbf16>, vector<128x128xbf16>, vector<8x128xf32> -> vector<8x128xf32>
    %365 = arith.addf %353, %364 : vector<8x128xf32>
    %c30 = arith.constant 30 : index
    %c0_246 = arith.constant 0 : index
    %c0_247 = arith.constant 0 : index
    %366 = vector.load %arg1[%c30, %c0_246, %c0_247] : memref<49x8x400xbf16, #tpu.memory_space<vmem>>, vector<1x8x400xbf16>
    %367 = vector.shape_cast %366 : vector<1x8x400xbf16> to vector<8x400xbf16>
    %cst_248 = arith.constant dense<0.000000e+00> : vector<8x128xf32>
    %368 = tpu.matmul %367, %0, %cst_248 {dimension_numbers = #tpu.dot_dimension_numbers<[1], [0], [0], [1], [0, 0, 1, 1], [], []>} : vector<8x400xbf16>, vector<400x128xbf16>, vector<8x128xf32> -> vector<8x128xf32>
    %369 = vector.broadcast %1 : vector<1x128xf32> to vector<8x128xf32>
    %370 = arith.addf %368, %369 : vector<8x128xf32>
    %cst_249 = arith.constant 0.000000e+00 : f32
    %371 = vector.broadcast %cst_249 : f32 to vector<8x128xf32>
    %372 = arith.maximumf %370, %371 : vector<8x128xf32>
    %373 = arith.truncf %372 : vector<8x128xf32> to vector<8x128xbf16>
    %c30_250 = arith.constant 30 : index
    %c0_251 = arith.constant 0 : index
    %c0_252 = arith.constant 0 : index
    %374 = vector.load %arg4[%c30_250, %c0_251, %c0_252] : memref<49x128x128xbf16, #tpu.memory_space<vmem>>, vector<1x128x128xbf16>
    %375 = vector.shape_cast %374 : vector<1x128x128xbf16> to vector<128x128xbf16>
    %cst_253 = arith.constant dense<0.000000e+00> : vector<8x128xf32>
    %376 = tpu.matmul %373, %375, %cst_253 {dimension_numbers = #tpu.dot_dimension_numbers<[1], [0], [0], [1], [0, 0, 1, 1], [], []>} : vector<8x128xbf16>, vector<128x128xbf16>, vector<8x128xf32> -> vector<8x128xf32>
    %377 = arith.addf %365, %376 : vector<8x128xf32>
    %c31 = arith.constant 31 : index
    %c0_254 = arith.constant 0 : index
    %c0_255 = arith.constant 0 : index
    %378 = vector.load %arg1[%c31, %c0_254, %c0_255] : memref<49x8x400xbf16, #tpu.memory_space<vmem>>, vector<1x8x400xbf16>
    %379 = vector.shape_cast %378 : vector<1x8x400xbf16> to vector<8x400xbf16>
    %cst_256 = arith.constant dense<0.000000e+00> : vector<8x128xf32>
    %380 = tpu.matmul %379, %0, %cst_256 {dimension_numbers = #tpu.dot_dimension_numbers<[1], [0], [0], [1], [0, 0, 1, 1], [], []>} : vector<8x400xbf16>, vector<400x128xbf16>, vector<8x128xf32> -> vector<8x128xf32>
    %381 = vector.broadcast %1 : vector<1x128xf32> to vector<8x128xf32>
    %382 = arith.addf %380, %381 : vector<8x128xf32>
    %cst_257 = arith.constant 0.000000e+00 : f32
    %383 = vector.broadcast %cst_257 : f32 to vector<8x128xf32>
    %384 = arith.maximumf %382, %383 : vector<8x128xf32>
    %385 = arith.truncf %384 : vector<8x128xf32> to vector<8x128xbf16>
    %c31_258 = arith.constant 31 : index
    %c0_259 = arith.constant 0 : index
    %c0_260 = arith.constant 0 : index
    %386 = vector.load %arg4[%c31_258, %c0_259, %c0_260] : memref<49x128x128xbf16, #tpu.memory_space<vmem>>, vector<1x128x128xbf16>
    %387 = vector.shape_cast %386 : vector<1x128x128xbf16> to vector<128x128xbf16>
    %cst_261 = arith.constant dense<0.000000e+00> : vector<8x128xf32>
    %388 = tpu.matmul %385, %387, %cst_261 {dimension_numbers = #tpu.dot_dimension_numbers<[1], [0], [0], [1], [0, 0, 1, 1], [], []>} : vector<8x128xbf16>, vector<128x128xbf16>, vector<8x128xf32> -> vector<8x128xf32>
    %389 = arith.addf %377, %388 : vector<8x128xf32>
    %c32 = arith.constant 32 : index
    %c0_262 = arith.constant 0 : index
    %c0_263 = arith.constant 0 : index
    %390 = vector.load %arg1[%c32, %c0_262, %c0_263] : memref<49x8x400xbf16, #tpu.memory_space<vmem>>, vector<1x8x400xbf16>
    %391 = vector.shape_cast %390 : vector<1x8x400xbf16> to vector<8x400xbf16>
    %cst_264 = arith.constant dense<0.000000e+00> : vector<8x128xf32>
    %392 = tpu.matmul %391, %0, %cst_264 {dimension_numbers = #tpu.dot_dimension_numbers<[1], [0], [0], [1], [0, 0, 1, 1], [], []>} : vector<8x400xbf16>, vector<400x128xbf16>, vector<8x128xf32> -> vector<8x128xf32>
    %393 = vector.broadcast %1 : vector<1x128xf32> to vector<8x128xf32>
    %394 = arith.addf %392, %393 : vector<8x128xf32>
    %cst_265 = arith.constant 0.000000e+00 : f32
    %395 = vector.broadcast %cst_265 : f32 to vector<8x128xf32>
    %396 = arith.maximumf %394, %395 : vector<8x128xf32>
    %397 = arith.truncf %396 : vector<8x128xf32> to vector<8x128xbf16>
    %c32_266 = arith.constant 32 : index
    %c0_267 = arith.constant 0 : index
    %c0_268 = arith.constant 0 : index
    %398 = vector.load %arg4[%c32_266, %c0_267, %c0_268] : memref<49x128x128xbf16, #tpu.memory_space<vmem>>, vector<1x128x128xbf16>
    %399 = vector.shape_cast %398 : vector<1x128x128xbf16> to vector<128x128xbf16>
    %cst_269 = arith.constant dense<0.000000e+00> : vector<8x128xf32>
    %400 = tpu.matmul %397, %399, %cst_269 {dimension_numbers = #tpu.dot_dimension_numbers<[1], [0], [0], [1], [0, 0, 1, 1], [], []>} : vector<8x128xbf16>, vector<128x128xbf16>, vector<8x128xf32> -> vector<8x128xf32>
    %401 = arith.addf %389, %400 : vector<8x128xf32>
    %c33 = arith.constant 33 : index
    %c0_270 = arith.constant 0 : index
    %c0_271 = arith.constant 0 : index
    %402 = vector.load %arg1[%c33, %c0_270, %c0_271] : memref<49x8x400xbf16, #tpu.memory_space<vmem>>, vector<1x8x400xbf16>
    %403 = vector.shape_cast %402 : vector<1x8x400xbf16> to vector<8x400xbf16>
    %cst_272 = arith.constant dense<0.000000e+00> : vector<8x128xf32>
    %404 = tpu.matmul %403, %0, %cst_272 {dimension_numbers = #tpu.dot_dimension_numbers<[1], [0], [0], [1], [0, 0, 1, 1], [], []>} : vector<8x400xbf16>, vector<400x128xbf16>, vector<8x128xf32> -> vector<8x128xf32>
    %405 = vector.broadcast %1 : vector<1x128xf32> to vector<8x128xf32>
    %406 = arith.addf %404, %405 : vector<8x128xf32>
    %cst_273 = arith.constant 0.000000e+00 : f32
    %407 = vector.broadcast %cst_273 : f32 to vector<8x128xf32>
    %408 = arith.maximumf %406, %407 : vector<8x128xf32>
    %409 = arith.truncf %408 : vector<8x128xf32> to vector<8x128xbf16>
    %c33_274 = arith.constant 33 : index
    %c0_275 = arith.constant 0 : index
    %c0_276 = arith.constant 0 : index
    %410 = vector.load %arg4[%c33_274, %c0_275, %c0_276] : memref<49x128x128xbf16, #tpu.memory_space<vmem>>, vector<1x128x128xbf16>
    %411 = vector.shape_cast %410 : vector<1x128x128xbf16> to vector<128x128xbf16>
    %cst_277 = arith.constant dense<0.000000e+00> : vector<8x128xf32>
    %412 = tpu.matmul %409, %411, %cst_277 {dimension_numbers = #tpu.dot_dimension_numbers<[1], [0], [0], [1], [0, 0, 1, 1], [], []>} : vector<8x128xbf16>, vector<128x128xbf16>, vector<8x128xf32> -> vector<8x128xf32>
    %413 = arith.addf %401, %412 : vector<8x128xf32>
    %c34 = arith.constant 34 : index
    %c0_278 = arith.constant 0 : index
    %c0_279 = arith.constant 0 : index
    %414 = vector.load %arg1[%c34, %c0_278, %c0_279] : memref<49x8x400xbf16, #tpu.memory_space<vmem>>, vector<1x8x400xbf16>
    %415 = vector.shape_cast %414 : vector<1x8x400xbf16> to vector<8x400xbf16>
    %cst_280 = arith.constant dense<0.000000e+00> : vector<8x128xf32>
    %416 = tpu.matmul %415, %0, %cst_280 {dimension_numbers = #tpu.dot_dimension_numbers<[1], [0], [0], [1], [0, 0, 1, 1], [], []>} : vector<8x400xbf16>, vector<400x128xbf16>, vector<8x128xf32> -> vector<8x128xf32>
    %417 = vector.broadcast %1 : vector<1x128xf32> to vector<8x128xf32>
    %418 = arith.addf %416, %417 : vector<8x128xf32>
    %cst_281 = arith.constant 0.000000e+00 : f32
    %419 = vector.broadcast %cst_281 : f32 to vector<8x128xf32>
    %420 = arith.maximumf %418, %419 : vector<8x128xf32>
    %421 = arith.truncf %420 : vector<8x128xf32> to vector<8x128xbf16>
    %c34_282 = arith.constant 34 : index
    %c0_283 = arith.constant 0 : index
    %c0_284 = arith.constant 0 : index
    %422 = vector.load %arg4[%c34_282, %c0_283, %c0_284] : memref<49x128x128xbf16, #tpu.memory_space<vmem>>, vector<1x128x128xbf16>
    %423 = vector.shape_cast %422 : vector<1x128x128xbf16> to vector<128x128xbf16>
    %cst_285 = arith.constant dense<0.000000e+00> : vector<8x128xf32>
    %424 = tpu.matmul %421, %423, %cst_285 {dimension_numbers = #tpu.dot_dimension_numbers<[1], [0], [0], [1], [0, 0, 1, 1], [], []>} : vector<8x128xbf16>, vector<128x128xbf16>, vector<8x128xf32> -> vector<8x128xf32>
    %425 = arith.addf %413, %424 : vector<8x128xf32>
    %c35 = arith.constant 35 : index
    %c0_286 = arith.constant 0 : index
    %c0_287 = arith.constant 0 : index
    %426 = vector.load %arg1[%c35, %c0_286, %c0_287] : memref<49x8x400xbf16, #tpu.memory_space<vmem>>, vector<1x8x400xbf16>
    %427 = vector.shape_cast %426 : vector<1x8x400xbf16> to vector<8x400xbf16>
    %cst_288 = arith.constant dense<0.000000e+00> : vector<8x128xf32>
    %428 = tpu.matmul %427, %0, %cst_288 {dimension_numbers = #tpu.dot_dimension_numbers<[1], [0], [0], [1], [0, 0, 1, 1], [], []>} : vector<8x400xbf16>, vector<400x128xbf16>, vector<8x128xf32> -> vector<8x128xf32>
    %429 = vector.broadcast %1 : vector<1x128xf32> to vector<8x128xf32>
    %430 = arith.addf %428, %429 : vector<8x128xf32>
    %cst_289 = arith.constant 0.000000e+00 : f32
    %431 = vector.broadcast %cst_289 : f32 to vector<8x128xf32>
    %432 = arith.maximumf %430, %431 : vector<8x128xf32>
    %433 = arith.truncf %432 : vector<8x128xf32> to vector<8x128xbf16>
    %c35_290 = arith.constant 35 : index
    %c0_291 = arith.constant 0 : index
    %c0_292 = arith.constant 0 : index
    %434 = vector.load %arg4[%c35_290, %c0_291, %c0_292] : memref<49x128x128xbf16, #tpu.memory_space<vmem>>, vector<1x128x128xbf16>
    %435 = vector.shape_cast %434 : vector<1x128x128xbf16> to vector<128x128xbf16>
    %cst_293 = arith.constant dense<0.000000e+00> : vector<8x128xf32>
    %436 = tpu.matmul %433, %435, %cst_293 {dimension_numbers = #tpu.dot_dimension_numbers<[1], [0], [0], [1], [0, 0, 1, 1], [], []>} : vector<8x128xbf16>, vector<128x128xbf16>, vector<8x128xf32> -> vector<8x128xf32>
    %437 = arith.addf %425, %436 : vector<8x128xf32>
    %c36 = arith.constant 36 : index
    %c0_294 = arith.constant 0 : index
    %c0_295 = arith.constant 0 : index
    %438 = vector.load %arg1[%c36, %c0_294, %c0_295] : memref<49x8x400xbf16, #tpu.memory_space<vmem>>, vector<1x8x400xbf16>
    %439 = vector.shape_cast %438 : vector<1x8x400xbf16> to vector<8x400xbf16>
    %cst_296 = arith.constant dense<0.000000e+00> : vector<8x128xf32>
    %440 = tpu.matmul %439, %0, %cst_296 {dimension_numbers = #tpu.dot_dimension_numbers<[1], [0], [0], [1], [0, 0, 1, 1], [], []>} : vector<8x400xbf16>, vector<400x128xbf16>, vector<8x128xf32> -> vector<8x128xf32>
    %441 = vector.broadcast %1 : vector<1x128xf32> to vector<8x128xf32>
    %442 = arith.addf %440, %441 : vector<8x128xf32>
    %cst_297 = arith.constant 0.000000e+00 : f32
    %443 = vector.broadcast %cst_297 : f32 to vector<8x128xf32>
    %444 = arith.maximumf %442, %443 : vector<8x128xf32>
    %445 = arith.truncf %444 : vector<8x128xf32> to vector<8x128xbf16>
    %c36_298 = arith.constant 36 : index
    %c0_299 = arith.constant 0 : index
    %c0_300 = arith.constant 0 : index
    %446 = vector.load %arg4[%c36_298, %c0_299, %c0_300] : memref<49x128x128xbf16, #tpu.memory_space<vmem>>, vector<1x128x128xbf16>
    %447 = vector.shape_cast %446 : vector<1x128x128xbf16> to vector<128x128xbf16>
    %cst_301 = arith.constant dense<0.000000e+00> : vector<8x128xf32>
    %448 = tpu.matmul %445, %447, %cst_301 {dimension_numbers = #tpu.dot_dimension_numbers<[1], [0], [0], [1], [0, 0, 1, 1], [], []>} : vector<8x128xbf16>, vector<128x128xbf16>, vector<8x128xf32> -> vector<8x128xf32>
    %449 = arith.addf %437, %448 : vector<8x128xf32>
    %c37 = arith.constant 37 : index
    %c0_302 = arith.constant 0 : index
    %c0_303 = arith.constant 0 : index
    %450 = vector.load %arg1[%c37, %c0_302, %c0_303] : memref<49x8x400xbf16, #tpu.memory_space<vmem>>, vector<1x8x400xbf16>
    %451 = vector.shape_cast %450 : vector<1x8x400xbf16> to vector<8x400xbf16>
    %cst_304 = arith.constant dense<0.000000e+00> : vector<8x128xf32>
    %452 = tpu.matmul %451, %0, %cst_304 {dimension_numbers = #tpu.dot_dimension_numbers<[1], [0], [0], [1], [0, 0, 1, 1], [], []>} : vector<8x400xbf16>, vector<400x128xbf16>, vector<8x128xf32> -> vector<8x128xf32>
    %453 = vector.broadcast %1 : vector<1x128xf32> to vector<8x128xf32>
    %454 = arith.addf %452, %453 : vector<8x128xf32>
    %cst_305 = arith.constant 0.000000e+00 : f32
    %455 = vector.broadcast %cst_305 : f32 to vector<8x128xf32>
    %456 = arith.maximumf %454, %455 : vector<8x128xf32>
    %457 = arith.truncf %456 : vector<8x128xf32> to vector<8x128xbf16>
    %c37_306 = arith.constant 37 : index
    %c0_307 = arith.constant 0 : index
    %c0_308 = arith.constant 0 : index
    %458 = vector.load %arg4[%c37_306, %c0_307, %c0_308] : memref<49x128x128xbf16, #tpu.memory_space<vmem>>, vector<1x128x128xbf16>
    %459 = vector.shape_cast %458 : vector<1x128x128xbf16> to vector<128x128xbf16>
    %cst_309 = arith.constant dense<0.000000e+00> : vector<8x128xf32>
    %460 = tpu.matmul %457, %459, %cst_309 {dimension_numbers = #tpu.dot_dimension_numbers<[1], [0], [0], [1], [0, 0, 1, 1], [], []>} : vector<8x128xbf16>, vector<128x128xbf16>, vector<8x128xf32> -> vector<8x128xf32>
    %461 = arith.addf %449, %460 : vector<8x128xf32>
    %c38 = arith.constant 38 : index
    %c0_310 = arith.constant 0 : index
    %c0_311 = arith.constant 0 : index
    %462 = vector.load %arg1[%c38, %c0_310, %c0_311] : memref<49x8x400xbf16, #tpu.memory_space<vmem>>, vector<1x8x400xbf16>
    %463 = vector.shape_cast %462 : vector<1x8x400xbf16> to vector<8x400xbf16>
    %cst_312 = arith.constant dense<0.000000e+00> : vector<8x128xf32>
    %464 = tpu.matmul %463, %0, %cst_312 {dimension_numbers = #tpu.dot_dimension_numbers<[1], [0], [0], [1], [0, 0, 1, 1], [], []>} : vector<8x400xbf16>, vector<400x128xbf16>, vector<8x128xf32> -> vector<8x128xf32>
    %465 = vector.broadcast %1 : vector<1x128xf32> to vector<8x128xf32>
    %466 = arith.addf %464, %465 : vector<8x128xf32>
    %cst_313 = arith.constant 0.000000e+00 : f32
    %467 = vector.broadcast %cst_313 : f32 to vector<8x128xf32>
    %468 = arith.maximumf %466, %467 : vector<8x128xf32>
    %469 = arith.truncf %468 : vector<8x128xf32> to vector<8x128xbf16>
    %c38_314 = arith.constant 38 : index
    %c0_315 = arith.constant 0 : index
    %c0_316 = arith.constant 0 : index
    %470 = vector.load %arg4[%c38_314, %c0_315, %c0_316] : memref<49x128x128xbf16, #tpu.memory_space<vmem>>, vector<1x128x128xbf16>
    %471 = vector.shape_cast %470 : vector<1x128x128xbf16> to vector<128x128xbf16>
    %cst_317 = arith.constant dense<0.000000e+00> : vector<8x128xf32>
    %472 = tpu.matmul %469, %471, %cst_317 {dimension_numbers = #tpu.dot_dimension_numbers<[1], [0], [0], [1], [0, 0, 1, 1], [], []>} : vector<8x128xbf16>, vector<128x128xbf16>, vector<8x128xf32> -> vector<8x128xf32>
    %473 = arith.addf %461, %472 : vector<8x128xf32>
    %c39 = arith.constant 39 : index
    %c0_318 = arith.constant 0 : index
    %c0_319 = arith.constant 0 : index
    %474 = vector.load %arg1[%c39, %c0_318, %c0_319] : memref<49x8x400xbf16, #tpu.memory_space<vmem>>, vector<1x8x400xbf16>
    %475 = vector.shape_cast %474 : vector<1x8x400xbf16> to vector<8x400xbf16>
    %cst_320 = arith.constant dense<0.000000e+00> : vector<8x128xf32>
    %476 = tpu.matmul %475, %0, %cst_320 {dimension_numbers = #tpu.dot_dimension_numbers<[1], [0], [0], [1], [0, 0, 1, 1], [], []>} : vector<8x400xbf16>, vector<400x128xbf16>, vector<8x128xf32> -> vector<8x128xf32>
    %477 = vector.broadcast %1 : vector<1x128xf32> to vector<8x128xf32>
    %478 = arith.addf %476, %477 : vector<8x128xf32>
    %cst_321 = arith.constant 0.000000e+00 : f32
    %479 = vector.broadcast %cst_321 : f32 to vector<8x128xf32>
    %480 = arith.maximumf %478, %479 : vector<8x128xf32>
    %481 = arith.truncf %480 : vector<8x128xf32> to vector<8x128xbf16>
    %c39_322 = arith.constant 39 : index
    %c0_323 = arith.constant 0 : index
    %c0_324 = arith.constant 0 : index
    %482 = vector.load %arg4[%c39_322, %c0_323, %c0_324] : memref<49x128x128xbf16, #tpu.memory_space<vmem>>, vector<1x128x128xbf16>
    %483 = vector.shape_cast %482 : vector<1x128x128xbf16> to vector<128x128xbf16>
    %cst_325 = arith.constant dense<0.000000e+00> : vector<8x128xf32>
    %484 = tpu.matmul %481, %483, %cst_325 {dimension_numbers = #tpu.dot_dimension_numbers<[1], [0], [0], [1], [0, 0, 1, 1], [], []>} : vector<8x128xbf16>, vector<128x128xbf16>, vector<8x128xf32> -> vector<8x128xf32>
    %485 = arith.addf %473, %484 : vector<8x128xf32>
    %c40 = arith.constant 40 : index
    %c0_326 = arith.constant 0 : index
    %c0_327 = arith.constant 0 : index
    %486 = vector.load %arg1[%c40, %c0_326, %c0_327] : memref<49x8x400xbf16, #tpu.memory_space<vmem>>, vector<1x8x400xbf16>
    %487 = vector.shape_cast %486 : vector<1x8x400xbf16> to vector<8x400xbf16>
    %cst_328 = arith.constant dense<0.000000e+00> : vector<8x128xf32>
    %488 = tpu.matmul %487, %0, %cst_328 {dimension_numbers = #tpu.dot_dimension_numbers<[1], [0], [0], [1], [0, 0, 1, 1], [], []>} : vector<8x400xbf16>, vector<400x128xbf16>, vector<8x128xf32> -> vector<8x128xf32>
    %489 = vector.broadcast %1 : vector<1x128xf32> to vector<8x128xf32>
    %490 = arith.addf %488, %489 : vector<8x128xf32>
    %cst_329 = arith.constant 0.000000e+00 : f32
    %491 = vector.broadcast %cst_329 : f32 to vector<8x128xf32>
    %492 = arith.maximumf %490, %491 : vector<8x128xf32>
    %493 = arith.truncf %492 : vector<8x128xf32> to vector<8x128xbf16>
    %c40_330 = arith.constant 40 : index
    %c0_331 = arith.constant 0 : index
    %c0_332 = arith.constant 0 : index
    %494 = vector.load %arg4[%c40_330, %c0_331, %c0_332] : memref<49x128x128xbf16, #tpu.memory_space<vmem>>, vector<1x128x128xbf16>
    %495 = vector.shape_cast %494 : vector<1x128x128xbf16> to vector<128x128xbf16>
    %cst_333 = arith.constant dense<0.000000e+00> : vector<8x128xf32>
    %496 = tpu.matmul %493, %495, %cst_333 {dimension_numbers = #tpu.dot_dimension_numbers<[1], [0], [0], [1], [0, 0, 1, 1], [], []>} : vector<8x128xbf16>, vector<128x128xbf16>, vector<8x128xf32> -> vector<8x128xf32>
    %497 = arith.addf %485, %496 : vector<8x128xf32>
    %c41 = arith.constant 41 : index
    %c0_334 = arith.constant 0 : index
    %c0_335 = arith.constant 0 : index
    %498 = vector.load %arg1[%c41, %c0_334, %c0_335] : memref<49x8x400xbf16, #tpu.memory_space<vmem>>, vector<1x8x400xbf16>
    %499 = vector.shape_cast %498 : vector<1x8x400xbf16> to vector<8x400xbf16>
    %cst_336 = arith.constant dense<0.000000e+00> : vector<8x128xf32>
    %500 = tpu.matmul %499, %0, %cst_336 {dimension_numbers = #tpu.dot_dimension_numbers<[1], [0], [0], [1], [0, 0, 1, 1], [], []>} : vector<8x400xbf16>, vector<400x128xbf16>, vector<8x128xf32> -> vector<8x128xf32>
    %501 = vector.broadcast %1 : vector<1x128xf32> to vector<8x128xf32>
    %502 = arith.addf %500, %501 : vector<8x128xf32>
    %cst_337 = arith.constant 0.000000e+00 : f32
    %503 = vector.broadcast %cst_337 : f32 to vector<8x128xf32>
    %504 = arith.maximumf %502, %503 : vector<8x128xf32>
    %505 = arith.truncf %504 : vector<8x128xf32> to vector<8x128xbf16>
    %c41_338 = arith.constant 41 : index
    %c0_339 = arith.constant 0 : index
    %c0_340 = arith.constant 0 : index
    %506 = vector.load %arg4[%c41_338, %c0_339, %c0_340] : memref<49x128x128xbf16, #tpu.memory_space<vmem>>, vector<1x128x128xbf16>
    %507 = vector.shape_cast %506 : vector<1x128x128xbf16> to vector<128x128xbf16>
    %cst_341 = arith.constant dense<0.000000e+00> : vector<8x128xf32>
    %508 = tpu.matmul %505, %507, %cst_341 {dimension_numbers = #tpu.dot_dimension_numbers<[1], [0], [0], [1], [0, 0, 1, 1], [], []>} : vector<8x128xbf16>, vector<128x128xbf16>, vector<8x128xf32> -> vector<8x128xf32>
    %509 = arith.addf %497, %508 : vector<8x128xf32>
    %c42 = arith.constant 42 : index
    %c0_342 = arith.constant 0 : index
    %c0_343 = arith.constant 0 : index
    %510 = vector.load %arg1[%c42, %c0_342, %c0_343] : memref<49x8x400xbf16, #tpu.memory_space<vmem>>, vector<1x8x400xbf16>
    %511 = vector.shape_cast %510 : vector<1x8x400xbf16> to vector<8x400xbf16>
    %cst_344 = arith.constant dense<0.000000e+00> : vector<8x128xf32>
    %512 = tpu.matmul %511, %0, %cst_344 {dimension_numbers = #tpu.dot_dimension_numbers<[1], [0], [0], [1], [0, 0, 1, 1], [], []>} : vector<8x400xbf16>, vector<400x128xbf16>, vector<8x128xf32> -> vector<8x128xf32>
    %513 = vector.broadcast %1 : vector<1x128xf32> to vector<8x128xf32>
    %514 = arith.addf %512, %513 : vector<8x128xf32>
    %cst_345 = arith.constant 0.000000e+00 : f32
    %515 = vector.broadcast %cst_345 : f32 to vector<8x128xf32>
    %516 = arith.maximumf %514, %515 : vector<8x128xf32>
    %517 = arith.truncf %516 : vector<8x128xf32> to vector<8x128xbf16>
    %c42_346 = arith.constant 42 : index
    %c0_347 = arith.constant 0 : index
    %c0_348 = arith.constant 0 : index
    %518 = vector.load %arg4[%c42_346, %c0_347, %c0_348] : memref<49x128x128xbf16, #tpu.memory_space<vmem>>, vector<1x128x128xbf16>
    %519 = vector.shape_cast %518 : vector<1x128x128xbf16> to vector<128x128xbf16>
    %cst_349 = arith.constant dense<0.000000e+00> : vector<8x128xf32>
    %520 = tpu.matmul %517, %519, %cst_349 {dimension_numbers = #tpu.dot_dimension_numbers<[1], [0], [0], [1], [0, 0, 1, 1], [], []>} : vector<8x128xbf16>, vector<128x128xbf16>, vector<8x128xf32> -> vector<8x128xf32>
    %521 = arith.addf %509, %520 : vector<8x128xf32>
    %c43 = arith.constant 43 : index
    %c0_350 = arith.constant 0 : index
    %c0_351 = arith.constant 0 : index
    %522 = vector.load %arg1[%c43, %c0_350, %c0_351] : memref<49x8x400xbf16, #tpu.memory_space<vmem>>, vector<1x8x400xbf16>
    %523 = vector.shape_cast %522 : vector<1x8x400xbf16> to vector<8x400xbf16>
    %cst_352 = arith.constant dense<0.000000e+00> : vector<8x128xf32>
    %524 = tpu.matmul %523, %0, %cst_352 {dimension_numbers = #tpu.dot_dimension_numbers<[1], [0], [0], [1], [0, 0, 1, 1], [], []>} : vector<8x400xbf16>, vector<400x128xbf16>, vector<8x128xf32> -> vector<8x128xf32>
    %525 = vector.broadcast %1 : vector<1x128xf32> to vector<8x128xf32>
    %526 = arith.addf %524, %525 : vector<8x128xf32>
    %cst_353 = arith.constant 0.000000e+00 : f32
    %527 = vector.broadcast %cst_353 : f32 to vector<8x128xf32>
    %528 = arith.maximumf %526, %527 : vector<8x128xf32>
    %529 = arith.truncf %528 : vector<8x128xf32> to vector<8x128xbf16>
    %c43_354 = arith.constant 43 : index
    %c0_355 = arith.constant 0 : index
    %c0_356 = arith.constant 0 : index
    %530 = vector.load %arg4[%c43_354, %c0_355, %c0_356] : memref<49x128x128xbf16, #tpu.memory_space<vmem>>, vector<1x128x128xbf16>
    %531 = vector.shape_cast %530 : vector<1x128x128xbf16> to vector<128x128xbf16>
    %cst_357 = arith.constant dense<0.000000e+00> : vector<8x128xf32>
    %532 = tpu.matmul %529, %531, %cst_357 {dimension_numbers = #tpu.dot_dimension_numbers<[1], [0], [0], [1], [0, 0, 1, 1], [], []>} : vector<8x128xbf16>, vector<128x128xbf16>, vector<8x128xf32> -> vector<8x128xf32>
    %533 = arith.addf %521, %532 : vector<8x128xf32>
    %c44 = arith.constant 44 : index
    %c0_358 = arith.constant 0 : index
    %c0_359 = arith.constant 0 : index
    %534 = vector.load %arg1[%c44, %c0_358, %c0_359] : memref<49x8x400xbf16, #tpu.memory_space<vmem>>, vector<1x8x400xbf16>
    %535 = vector.shape_cast %534 : vector<1x8x400xbf16> to vector<8x400xbf16>
    %cst_360 = arith.constant dense<0.000000e+00> : vector<8x128xf32>
    %536 = tpu.matmul %535, %0, %cst_360 {dimension_numbers = #tpu.dot_dimension_numbers<[1], [0], [0], [1], [0, 0, 1, 1], [], []>} : vector<8x400xbf16>, vector<400x128xbf16>, vector<8x128xf32> -> vector<8x128xf32>
    %537 = vector.broadcast %1 : vector<1x128xf32> to vector<8x128xf32>
    %538 = arith.addf %536, %537 : vector<8x128xf32>
    %cst_361 = arith.constant 0.000000e+00 : f32
    %539 = vector.broadcast %cst_361 : f32 to vector<8x128xf32>
    %540 = arith.maximumf %538, %539 : vector<8x128xf32>
    %541 = arith.truncf %540 : vector<8x128xf32> to vector<8x128xbf16>
    %c44_362 = arith.constant 44 : index
    %c0_363 = arith.constant 0 : index
    %c0_364 = arith.constant 0 : index
    %542 = vector.load %arg4[%c44_362, %c0_363, %c0_364] : memref<49x128x128xbf16, #tpu.memory_space<vmem>>, vector<1x128x128xbf16>
    %543 = vector.shape_cast %542 : vector<1x128x128xbf16> to vector<128x128xbf16>
    %cst_365 = arith.constant dense<0.000000e+00> : vector<8x128xf32>
    %544 = tpu.matmul %541, %543, %cst_365 {dimension_numbers = #tpu.dot_dimension_numbers<[1], [0], [0], [1], [0, 0, 1, 1], [], []>} : vector<8x128xbf16>, vector<128x128xbf16>, vector<8x128xf32> -> vector<8x128xf32>
    %545 = arith.addf %533, %544 : vector<8x128xf32>
    %c45 = arith.constant 45 : index
    %c0_366 = arith.constant 0 : index
    %c0_367 = arith.constant 0 : index
    %546 = vector.load %arg1[%c45, %c0_366, %c0_367] : memref<49x8x400xbf16, #tpu.memory_space<vmem>>, vector<1x8x400xbf16>
    %547 = vector.shape_cast %546 : vector<1x8x400xbf16> to vector<8x400xbf16>
    %cst_368 = arith.constant dense<0.000000e+00> : vector<8x128xf32>
    %548 = tpu.matmul %547, %0, %cst_368 {dimension_numbers = #tpu.dot_dimension_numbers<[1], [0], [0], [1], [0, 0, 1, 1], [], []>} : vector<8x400xbf16>, vector<400x128xbf16>, vector<8x128xf32> -> vector<8x128xf32>
    %549 = vector.broadcast %1 : vector<1x128xf32> to vector<8x128xf32>
    %550 = arith.addf %548, %549 : vector<8x128xf32>
    %cst_369 = arith.constant 0.000000e+00 : f32
    %551 = vector.broadcast %cst_369 : f32 to vector<8x128xf32>
    %552 = arith.maximumf %550, %551 : vector<8x128xf32>
    %553 = arith.truncf %552 : vector<8x128xf32> to vector<8x128xbf16>
    %c45_370 = arith.constant 45 : index
    %c0_371 = arith.constant 0 : index
    %c0_372 = arith.constant 0 : index
    %554 = vector.load %arg4[%c45_370, %c0_371, %c0_372] : memref<49x128x128xbf16, #tpu.memory_space<vmem>>, vector<1x128x128xbf16>
    %555 = vector.shape_cast %554 : vector<1x128x128xbf16> to vector<128x128xbf16>
    %cst_373 = arith.constant dense<0.000000e+00> : vector<8x128xf32>
    %556 = tpu.matmul %553, %555, %cst_373 {dimension_numbers = #tpu.dot_dimension_numbers<[1], [0], [0], [1], [0, 0, 1, 1], [], []>} : vector<8x128xbf16>, vector<128x128xbf16>, vector<8x128xf32> -> vector<8x128xf32>
    %557 = arith.addf %545, %556 : vector<8x128xf32>
    %c46 = arith.constant 46 : index
    %c0_374 = arith.constant 0 : index
    %c0_375 = arith.constant 0 : index
    %558 = vector.load %arg1[%c46, %c0_374, %c0_375] : memref<49x8x400xbf16, #tpu.memory_space<vmem>>, vector<1x8x400xbf16>
    %559 = vector.shape_cast %558 : vector<1x8x400xbf16> to vector<8x400xbf16>
    %cst_376 = arith.constant dense<0.000000e+00> : vector<8x128xf32>
    %560 = tpu.matmul %559, %0, %cst_376 {dimension_numbers = #tpu.dot_dimension_numbers<[1], [0], [0], [1], [0, 0, 1, 1], [], []>} : vector<8x400xbf16>, vector<400x128xbf16>, vector<8x128xf32> -> vector<8x128xf32>
    %561 = vector.broadcast %1 : vector<1x128xf32> to vector<8x128xf32>
    %562 = arith.addf %560, %561 : vector<8x128xf32>
    %cst_377 = arith.constant 0.000000e+00 : f32
    %563 = vector.broadcast %cst_377 : f32 to vector<8x128xf32>
    %564 = arith.maximumf %562, %563 : vector<8x128xf32>
    %565 = arith.truncf %564 : vector<8x128xf32> to vector<8x128xbf16>
    %c46_378 = arith.constant 46 : index
    %c0_379 = arith.constant 0 : index
    %c0_380 = arith.constant 0 : index
    %566 = vector.load %arg4[%c46_378, %c0_379, %c0_380] : memref<49x128x128xbf16, #tpu.memory_space<vmem>>, vector<1x128x128xbf16>
    %567 = vector.shape_cast %566 : vector<1x128x128xbf16> to vector<128x128xbf16>
    %cst_381 = arith.constant dense<0.000000e+00> : vector<8x128xf32>
    %568 = tpu.matmul %565, %567, %cst_381 {dimension_numbers = #tpu.dot_dimension_numbers<[1], [0], [0], [1], [0, 0, 1, 1], [], []>} : vector<8x128xbf16>, vector<128x128xbf16>, vector<8x128xf32> -> vector<8x128xf32>
    %569 = arith.addf %557, %568 : vector<8x128xf32>
    %c47 = arith.constant 47 : index
    %c0_382 = arith.constant 0 : index
    %c0_383 = arith.constant 0 : index
    %570 = vector.load %arg1[%c47, %c0_382, %c0_383] : memref<49x8x400xbf16, #tpu.memory_space<vmem>>, vector<1x8x400xbf16>
    %571 = vector.shape_cast %570 : vector<1x8x400xbf16> to vector<8x400xbf16>
    %cst_384 = arith.constant dense<0.000000e+00> : vector<8x128xf32>
    %572 = tpu.matmul %571, %0, %cst_384 {dimension_numbers = #tpu.dot_dimension_numbers<[1], [0], [0], [1], [0, 0, 1, 1], [], []>} : vector<8x400xbf16>, vector<400x128xbf16>, vector<8x128xf32> -> vector<8x128xf32>
    %573 = vector.broadcast %1 : vector<1x128xf32> to vector<8x128xf32>
    %574 = arith.addf %572, %573 : vector<8x128xf32>
    %cst_385 = arith.constant 0.000000e+00 : f32
    %575 = vector.broadcast %cst_385 : f32 to vector<8x128xf32>
    %576 = arith.maximumf %574, %575 : vector<8x128xf32>
    %577 = arith.truncf %576 : vector<8x128xf32> to vector<8x128xbf16>
    %c47_386 = arith.constant 47 : index
    %c0_387 = arith.constant 0 : index
    %c0_388 = arith.constant 0 : index
    %578 = vector.load %arg4[%c47_386, %c0_387, %c0_388] : memref<49x128x128xbf16, #tpu.memory_space<vmem>>, vector<1x128x128xbf16>
    %579 = vector.shape_cast %578 : vector<1x128x128xbf16> to vector<128x128xbf16>
    %cst_389 = arith.constant dense<0.000000e+00> : vector<8x128xf32>
    %580 = tpu.matmul %577, %579, %cst_389 {dimension_numbers = #tpu.dot_dimension_numbers<[1], [0], [0], [1], [0, 0, 1, 1], [], []>} : vector<8x128xbf16>, vector<128x128xbf16>, vector<8x128xf32> -> vector<8x128xf32>
    %581 = arith.addf %569, %580 : vector<8x128xf32>
    %c48 = arith.constant 48 : index
    %c0_390 = arith.constant 0 : index
    %c0_391 = arith.constant 0 : index
    %582 = vector.load %arg1[%c48, %c0_390, %c0_391] : memref<49x8x400xbf16, #tpu.memory_space<vmem>>, vector<1x8x400xbf16>
    %583 = vector.shape_cast %582 : vector<1x8x400xbf16> to vector<8x400xbf16>
    %cst_392 = arith.constant dense<0.000000e+00> : vector<8x128xf32>
    %584 = tpu.matmul %583, %0, %cst_392 {dimension_numbers = #tpu.dot_dimension_numbers<[1], [0], [0], [1], [0, 0, 1, 1], [], []>} : vector<8x400xbf16>, vector<400x128xbf16>, vector<8x128xf32> -> vector<8x128xf32>
    %585 = vector.broadcast %1 : vector<1x128xf32> to vector<8x128xf32>
    %586 = arith.addf %584, %585 : vector<8x128xf32>
    %cst_393 = arith.constant 0.000000e+00 : f32
    %587 = vector.broadcast %cst_393 : f32 to vector<8x128xf32>
    %588 = arith.maximumf %586, %587 : vector<8x128xf32>
    %589 = arith.truncf %588 : vector<8x128xf32> to vector<8x128xbf16>
    %c48_394 = arith.constant 48 : index
    %c0_395 = arith.constant 0 : index
    %c0_396 = arith.constant 0 : index
    %590 = vector.load %arg4[%c48_394, %c0_395, %c0_396] : memref<49x128x128xbf16, #tpu.memory_space<vmem>>, vector<1x128x128xbf16>
    %591 = vector.shape_cast %590 : vector<1x128x128xbf16> to vector<128x128xbf16>
    %cst_397 = arith.constant dense<0.000000e+00> : vector<8x128xf32>
    %592 = tpu.matmul %589, %591, %cst_397 {dimension_numbers = #tpu.dot_dimension_numbers<[1], [0], [0], [1], [0, 0, 1, 1], [], []>} : vector<8x128xbf16>, vector<128x128xbf16>, vector<8x128xf32> -> vector<8x128xf32>
    %593 = arith.addf %581, %592 : vector<8x128xf32>
    %c0_398 = arith.constant 0 : index
    %c0_399 = arith.constant 0 : index
    %594 = vector.load %arg6[%c0_398, %c0_399] : memref<8x128xf32, #tpu.memory_space<vmem>>, vector<8x128xf32>
    tpu.vector_store %arg6[%c0_398, %c0_399], %593 {strides = array<i32>} : memref<8x128xf32, #tpu.memory_space<vmem>>, vector<8x128xf32>,
    return
  }
  func.func @transform_0(%arg0: i32) -> (i32, i32, i32) {
    %c0_i32 = arith.constant 0 : i32
    %c0_i32_0 = arith.constant 0 : i32
    %c0_i32_1 = arith.constant 0 : i32
    return %c0_i32, %arg0, %c0_i32_0 : i32, i32, i32
  }
  func.func @transform_1(%arg0: i32) -> (i32, i32) {
    %c0_i32 = arith.constant 0 : i32
    %c0_i32_0 = arith.constant 0 : i32
    %c0_i32_1 = arith.constant 0 : i32
    return %c0_i32, %c0_i32_0 : i32, i32
  }
  func.func @transform_2(%arg0: i32) -> (i32, i32) {
    %c0_i32 = arith.constant 0 : i32
    %c0_i32_0 = arith.constant 0 : i32
    %c0_i32_1 = arith.constant 0 : i32
    return %c0_i32, %c0_i32_0 : i32, i32
  }
  func.func @transform_3(%arg0: i32) -> (i32, i32, i32) {
    %c0_i32 = arith.constant 0 : i32
    %c0_i32_0 = arith.constant 0 : i32
    %c0_i32_1 = arith.constant 0 : i32
    %c0_i32_2 = arith.constant 0 : i32
    return %c0_i32, %c0_i32_0, %c0_i32_1 : i32, i32, i32
  }
  func.func @transform_4(%arg0: i32) -> (i32, i32) {
    %c0_i32 = arith.constant 0 : i32
    %c0_i32_0 = arith.constant 0 : i32
    %c0_i32_1 = arith.constant 0 : i32
    return %c0_i32, %c0_i32_0 : i32, i32
  }
  func.func @transform_5(%arg0: i32) -> (i32, i32) {
    %c0_i32 = arith.constant 0 : i32
    %c0_i32_0 = arith.constant 0 : i32
    return %arg0, %c0_i32 : i32, i32
  }
}

</mosaic_0001>

<llo_original>
// kernel: cnn_forward.3
$region0: #{cnn_forward.3}
  #allocation0 [shape = 'u32[]', space=smem, size = 0x4, offset = 0x4, fixed_abs, tag = 'smem constant byte address 0x4 - core index']
  #allocation1 [shape = 'u32[72,128]{1,0:T(1,128)}', space=vmem, size = 0x9000, scoped, tag = 'internal scratch']
  %s0 = inlined_call_operand.vmem [shape: bf16[4,400,32], index: 0, kind: input, shape index: {}]
  %s1 = inlined_call_operand.vmem [shape: bf16[32,128], index: 1, kind: input, shape index: {}]
  %s2 = inlined_call_operand.vmem [shape: f32[1,128], index: 2, kind: input, shape index: {}]
  %s3 = inlined_call_operand.vmem [shape: bf16[400,128], index: 3, kind: output, shape index: {}]
  %s4 = sld [smem:[#allocation0]]
  $region22: #{cnn_forward.3} parent=0
    _
  %s6 = ssub.s32 1, %s4
  %s7 = scalar_select 0, %s6, %s4
  // Predicated region
  $region2: #{cnn_forward.3} parent=0 // pred_check
    _
  $region3: #{cnn_forward.3} parent=0 // pred_check_branch
    %9 = sbr.rel (0) target = $region5
  $region4: #{cnn_forward.3} parent=0 // pred_region
    _
  $region5: #{cnn_forward.3} parent=0 // pred_fallthru
    _
  // Predicated region
  $region6: #{cnn_forward.3} parent=0 // pred_check
    _
  $region7: #{cnn_forward.3} parent=0 // pred_check_branch
    %11 = sbr.rel (0) target = $region9
  $region8: #{cnn_forward.3} parent=0 // pred_region
    _
  $region9: #{cnn_forward.3} parent=0 // pred_fallthru
    _
  // Predicated region
  $region10: #{cnn_forward.3} parent=0 // pred_check
    _
  $region11: #{cnn_forward.3} parent=0 // pred_check_branch
    %13 = sbr.rel (0) target = $region13
  $region12: #{cnn_forward.3} parent=0 // pred_region
    _
  $region13: #{cnn_forward.3} parent=0 // pred_fallthru
    _
  %v15 = vld [vmem:[%s1] sm:$0xf]
  %v16 = vld [vmem:[%s1 + $0x4] sm:$0xf]
  %v17 = vld [vmem:[%s1 + $0x8] sm:$0xf]
  %v18 = vld [vmem:[%s1 + $0xc] sm:$0xf]
  %v19 = vld [vmem:[%s0] sm:$0xf]
  %v20 = vld [vmem:[%s0 + $0x4] sm:$0xf]
  %v21 = vld [vmem:[%s0 + $0x8] sm:$0xf]
  %v22 = vld [vmem:[%s0 + $0xc] sm:$0xf]
  %v23 = vld [vmem:[%s0 + $0x10] sm:$0xf]
  %v24 = vld [vmem:[%s0 + $0x14] sm:$0xf]
  %v25 = vld [vmem:[%s0 + $0x18] sm:$0xf]
  %v26 = vld [vmem:[%s0 + $0x1c] sm:$0xf]
  %v27 = vld [vmem:[%s0 + $0x20] sm:$0xf]
  %v28 = vld [vmem:[%s0 + $0x24] sm:$0xf]
  %v29 = vld [vmem:[%s0 + $0x28] sm:$0xf]
  %v30 = vld [vmem:[%s0 + $0x2c] sm:$0xf]
  %v31 = vld [vmem:[%s0 + $0x30] sm:$0xf]
  %v32 = vld [vmem:[%s0 + $0x34] sm:$0xf]
  %v33 = vld [vmem:[%s0 + $0x38] sm:$0xf]
  %v34 = vld [vmem:[%s0 + $0x3c] sm:$0xf]
  %v35 = vld [vmem:[%s0 + $0x40] sm:$0xf]
  %v36 = vld [vmem:[%s0 + $0x44] sm:$0xf]
  %v37 = vld [vmem:[%s0 + $0x48] sm:$0xf]
  %v38 = vld [vmem:[%s0 + $0x4c] sm:$0xf]
  %v39 = vld [vmem:[%s0 + $0x50] sm:$0xf]
  %v40 = vld [vmem:[%s0 + $0x54] sm:$0xf]
  %v41 = vld [vmem:[%s0 + $0x58] sm:$0xf]
  %v42 = vld [vmem:[%s0 + $0x5c] sm:$0xf]
  %v43 = vld [vmem:[%s0 + $0x60] sm:$0xf]
  %v44 = vld [vmem:[%s0 + $0x64] sm:$0xf]
  %v45 = vld [vmem:[%s0 + $0x68] sm:$0xf]
  %v46 = vld [vmem:[%s0 + $0x6c] sm:$0xf]
  %v47 = vld [vmem:[%s0 + $0x70] sm:$0xf]
  %v48 = vld [vmem:[%s0 + $0x74] sm:$0xf]
  %v49 = vld [vmem:[%s0 + $0x78] sm:$0xf]
  %v50 = vld [vmem:[%s0 + $0x7c] sm:$0xf]
  %v51 = vld [vmem:[%s0 + $0x80] sm:$0xf]
  %v52 = vld [vmem:[%s0 + $0x84] sm:$0xf]
  %v53 = vld [vmem:[%s0 + $0x88] sm:$0xf]
  %v54 = vld [vmem:[%s0 + $0x8c] sm:$0xf]
  %v55 = vld [vmem:[%s0 + $0x90] sm:$0xf]
  %v56 = vld [vmem:[%s0 + $0x94] sm:$0xf]
  %v57 = vld [vmem:[%s0 + $0x98] sm:$0xf]
  %v58 = vld [vmem:[%s0 + $0x9c] sm:$0xf]
  %v59 = vld [vmem:[%s0 + $0xa0] sm:$0xf]
  %v60 = vld [vmem:[%s0 + $0xa4] sm:$0xf]
  %v61 = vld [vmem:[%s0 + $0xa8] sm:$0xf]
  %v62 = vld [vmem:[%s0 + $0xac] sm:$0xf]
  %v63 = vld [vmem:[%s0 + $0xb0] sm:$0xf]
  %v64 = vld [vmem:[%s0 + $0xb4] sm:$0xf]
  %v65 = vld [vmem:[%s0 + $0xb8] sm:$0xf]
  %v66 = vld [vmem:[%s0 + $0xbc] sm:$0xf]
  %v67 = vld [vmem:[%s0 + $0xc0] sm:$0xf]
  %v68 = vld [vmem:[%s0 + $0xc4] sm:$0xf]
  %v119 = vunpack.c.l.b16 %v19
  %v120 = vunpack.c.l.b16 %v20
  %v121 = vunpack.c.l.b16 %v21
  %v122 = vunpack.c.l.b16 %v22
  %v123 = vunpack.c.l.b16 %v23
  %v124 = vunpack.c.l.b16 %v24
  %v125 = vunpack.c.l.b16 %v25
  %v126 = vunpack.c.l.b16 %v26
  %v127 = vunpack.c.l.b16 %v27
  %v128 = vunpack.c.l.b16 %v28
  %v129 = vunpack.c.l.b16 %v29
  %v130 = vunpack.c.l.b16 %v30
  %v131 = vunpack.c.l.b16 %v31
  %v132 = vunpack.c.l.b16 %v32
  %v133 = vunpack.c.l.b16 %v33
  %v134 = vunpack.c.l.b16 %v34
  %v135 = vunpack.c.l.b16 %v35
  %v136 = vunpack.c.l.b16 %v36
  %v137 = vunpack.c.l.b16 %v37
  %v138 = vunpack.c.l.b16 %v38
  %v139 = vunpack.c.l.b16 %v39
  %v140 = vunpack.c.l.b16 %v40
  %v141 = vunpack.c.l.b16 %v41
  %v142 = vunpack.c.l.b16 %v42
  %v143 = vunpack.c.l.b16 %v43
  %v144 = vunpack.c.l.b16 %v44
  %v145 = vunpack.c.l.b16 %v45
  %v146 = vunpack.c.l.b16 %v46
  %v147 = vunpack.c.l.b16 %v47
  %v148 = vunpack.c.l.b16 %v48
  %v149 = vunpack.c.l.b16 %v49
  %v150 = vunpack.c.l.b16 %v50
  %v151 = vunpack.c.l.b16 %v51
  %v152 = vunpack.c.l.b16 %v52
  %v153 = vunpack.c.l.b16 %v53
  %v154 = vunpack.c.l.b16 %v54
  %v155 = vunpack.c.l.b16 %v55
  %v156 = vunpack.c.l.b16 %v56
  %v157 = vunpack.c.l.b16 %v57
  %v158 = vunpack.c.l.b16 %v58
  %v159 = vunpack.c.l.b16 %v59
  %v160 = vunpack.c.l.b16 %v60
  %v161 = vunpack.c.l.b16 %v61
  %v162 = vunpack.c.l.b16 %v62
  %v163 = vunpack.c.l.b16 %v63
  %v164 = vunpack.c.l.b16 %v64
  %v165 = vunpack.c.l.b16 %v65
  %v166 = vunpack.c.l.b16 %v66
  %v167 = vunpack.c.l.b16 %v67
  %v168 = vunpack.c.l.b16 %v68
  %v169 = vpack.c.b16 %v120, %v119
  %v170 = vpack.c.b16 %v122, %v121
  %v171 = vpack.c.b16 %v124, %v123
  %v172 = vpack.c.b16 %v126, %v125
  %v173 = vpack.c.b16 %v128, %v127
  %v174 = vpack.c.b16 %v130, %v129
  %v175 = vpack.c.b16 %v132, %v131
  %v176 = vpack.c.b16 %v134, %v133
  %v177 = vpack.c.b16 %v136, %v135
  %v178 = vpack.c.b16 %v138, %v137
  %v179 = vpack.c.b16 %v140, %v139
  %v180 = vpack.c.b16 %v142, %v141
  %v181 = vpack.c.b16 %v144, %v143
  %v182 = vpack.c.b16 %v146, %v145
  %v183 = vpack.c.b16 %v148, %v147
  %v184 = vpack.c.b16 %v150, %v149
  %v185 = vpack.c.b16 %v152, %v151
  %v186 = vpack.c.b16 %v154, %v153
  %v187 = vpack.c.b16 %v156, %v155
  %v188 = vpack.c.b16 %v158, %v157
  %v189 = vpack.c.b16 %v160, %v159
  %v190 = vpack.c.b16 %v162, %v161
  %v191 = vpack.c.b16 %v164, %v163
  %v192 = vpack.c.b16 %v166, %v165
  %v193 = vpack.c.b16 %v168, %v167
  %v198 = vunpack.c.l.b16 %v15
  %v199 = vunpack.c.l.b16 %v16
  %v200 = vunpack.c.l.b16 %v17
  %v201 = vunpack.c.l.b16 %v18
  %v202 = vpack.c.b16 %v199, %v198
  %v203 = vpack.c.b16 %v201, %v200
  %vm206 = vcmask 261120
  %v208 = vsel %vm206, %v169, 0
  %v211 = vsel %vm206, %v170, 0
  %v214 = vsel %vm206, %v171, 0
  %v217 = vsel %vm206, %v172, 0
  %v220 = vsel %vm206, %v173, 0
  %v223 = vsel %vm206, %v174, 0
  %v226 = vsel %vm206, %v175, 0
  %v229 = vsel %vm206, %v176, 0
  %v232 = vsel %vm206, %v177, 0
  %v235 = vsel %vm206, %v178, 0
  %v238 = vsel %vm206, %v179, 0
  %v241 = vsel %vm206, %v180, 0
  %v244 = vsel %vm206, %v181, 0
  %v247 = vsel %vm206, %v182, 0
  %v250 = vsel %vm206, %v183, 0
  %v253 = vsel %vm206, %v184, 0
  %v256 = vsel %vm206, %v185, 0
  %v259 = vsel %vm206, %v186, 0
  %v262 = vsel %vm206, %v187, 0
  %v265 = vsel %vm206, %v188, 0
  %v268 = vsel %vm206, %v189, 0
  %v271 = vsel %vm206, %v190, 0
  %v274 = vsel %vm206, %v191, 0
  %v277 = vsel %vm206, %v192, 0
  %v280 = vsel %vm206, %v193, 0
  %282 = vmatpush.bf16.msra.mxu0 0
  %283 = vmatpush.bf16.msra.mxu0 0
  %284 = vmatpush.bf16.msra.mxu0 0
  %285 = vmatpush.bf16.msra.mxu0 0
  %286 = vmatpush.bf16.msra.mxu0 0
  %287 = vmatpush.bf16.msra.mxu0 0
  %288 = vmatpush.bf16.msra.mxu0 %v203
  %289 = vmatpush.bf16.msra.mxu0 %v202
  %290 = vmatmul.bf16.gmra.mxu0 %v208
  %v291 = vpop.f32.mrf.mxu0
  %v292 = vadd.f32 0.0, %v291
  %v293 = vpop.f32.mrf.mxu0
  %v294 = vadd.f32 0.0, %v293
  %295 = vmatmul.bf16.gmra.mxu0 %v211
  %v296 = vpop.f32.mrf.mxu0
  %v297 = vadd.f32 0.0, %v296
  %v298 = vpop.f32.mrf.mxu0
  %v299 = vadd.f32 0.0, %v298
  %300 = vmatmul.bf16.gmra.mxu0 %v214
  %v301 = vpop.f32.mrf.mxu0
  %v302 = vadd.f32 0.0, %v301
  %v303 = vpop.f32.mrf.mxu0
  %v304 = vadd.f32 0.0, %v303
  %305 = vmatmul.bf16.gmra.mxu0 %v217
  %v306 = vpop.f32.mrf.mxu0
  %v307 = vadd.f32 0.0, %v306
  %v308 = vpop.f32.mrf.mxu0
  %v309 = vadd.f32 0.0, %v308
  %310 = vmatmul.bf16.gmra.mxu0 %v220
  %v311 = vpop.f32.mrf.mxu0
  %v312 = vadd.f32 0.0, %v311
  %v313 = vpop.f32.mrf.mxu0
  %v314 = vadd.f32 0.0, %v313
  %315 = vmatmul.bf16.gmra.mxu0 %v223
  %v316 = vpop.f32.mrf.mxu0
  %v317 = vadd.f32 0.0, %v316
  %v318 = vpop.f32.mrf.mxu0
  %v319 = vadd.f32 0.0, %v318
  %320 = vmatmul.bf16.gmra.mxu0 %v226
  %v321 = vpop.f32.mrf.mxu0
  %v322 = vadd.f32 0.0, %v321
  %v323 = vpop.f32.mrf.mxu0
  %v324 = vadd.f32 0.0, %v323
  %325 = vmatmul.bf16.gmra.mxu0 %v229
  %v326 = vpop.f32.mrf.mxu0
  %v327 = vadd.f32 0.0, %v326
  %v328 = vpop.f32.mrf.mxu0
  %v329 = vadd.f32 0.0, %v328
  %330 = vmatmul.bf16.gmra.mxu0 %v232
  %v331 = vpop.f32.mrf.mxu0
  %v332 = vadd.f32 0.0, %v331
  %v333 = vpop.f32.mrf.mxu0
  %v334 = vadd.f32 0.0, %v333
  %335 = vmatmul.bf16.gmra.mxu0 %v235
  %v336 = vpop.f32.mrf.mxu0
  %v337 = vadd.f32 0.0, %v336
  %v338 = vpop.f32.mrf.mxu0
  %v339 = vadd.f32 0.0, %v338
  %340 = vmatmul.bf16.gmra.mxu0 %v238
  %v341 = vpop.f32.mrf.mxu0
  %v342 = vadd.f32 0.0, %v341
  %v343 = vpop.f32.mrf.mxu0
  %v344 = vadd.f32 0.0, %v343
  %345 = vmatmul.bf16.gmra.mxu0 %v241
  %v346 = vpop.f32.mrf.mxu0
  %v347 = vadd.f32 0.0, %v346
  %v348 = vpop.f32.mrf.mxu0
  %v349 = vadd.f32 0.0, %v348
  %350 = vmatmul.bf16.gmra.mxu0 %v244
  %v351 = vpop.f32.mrf.mxu0
  %v352 = vadd.f32 0.0, %v351
  %v353 = vpop.f32.mrf.mxu0
  %v354 = vadd.f32 0.0, %v353
  %355 = vmatmul.bf16.gmra.mxu0 %v247
  %v356 = vpop.f32.mrf.mxu0
  %v357 = vadd.f32 0.0, %v356
  %v358 = vpop.f32.mrf.mxu0
  %v359 = vadd.f32 0.0, %v358
  %360 = vmatmul.bf16.gmra.mxu0 %v250
  %v361 = vpop.f32.mrf.mxu0
  %v362 = vadd.f32 0.0, %v361
  %v363 = vpop.f32.mrf.mxu0
  %v364 = vadd.f32 0.0, %v363
  %365 = vmatmul.bf16.gmra.mxu0 %v253
  %v366 = vpop.f32.mrf.mxu0
  %v367 = vadd.f32 0.0, %v366
  %v368 = vpop.f32.mrf.mxu0
  %v369 = vadd.f32 0.0, %v368
  %370 = vmatmul.bf16.gmra.mxu0 %v256
  %v371 = vpop.f32.mrf.mxu0
  %v372 = vadd.f32 0.0, %v371
  %v373 = vpop.f32.mrf.mxu0
  %v374 = vadd.f32 0.0, %v373
  %375 = vmatmul.bf16.gmra.mxu0 %v259
  %v376 = vpop.f32.mrf.mxu0
  %v377 = vadd.f32 0.0, %v376
  %v378 = vpop.f32.mrf.mxu0
  %v379 = vadd.f32 0.0, %v378
  %380 = vmatmul.bf16.gmra.mxu0 %v262
  %v381 = vpop.f32.mrf.mxu0
  %v382 = vadd.f32 0.0, %v381
  %v383 = vpop.f32.mrf.mxu0
  %v384 = vadd.f32 0.0, %v383
  %385 = vmatmul.bf16.gmra.mxu0 %v265
  %v386 = vpop.f32.mrf.mxu0
  %v387 = vadd.f32 0.0, %v386
  %v388 = vpop.f32.mrf.mxu0
  %v389 = vadd.f32 0.0, %v388
  %390 = vmatmul.bf16.gmra.mxu0 %v268
  %v391 = vpop.f32.mrf.mxu0
  %v392 = vadd.f32 0.0, %v391
  %v393 = vpop.f32.mrf.mxu0
  %v394 = vadd.f32 0.0, %v393
  %395 = vmatmul.bf16.gmra.mxu0 %v271
  %v396 = vpop.f32.mrf.mxu0
  %v397 = vadd.f32 0.0, %v396
  %v398 = vpop.f32.mrf.mxu0
  %v399 = vadd.f32 0.0, %v398
  %400 = vmatmul.bf16.gmra.mxu0 %v274
  %v401 = vpop.f32.mrf.mxu0
  %v402 = vadd.f32 0.0, %v401
  %v403 = vpop.f32.mrf.mxu0
  %v404 = vadd.f32 0.0, %v403
  %405 = vmatmul.bf16.gmra.mxu0 %v277
  %v406 = vpop.f32.mrf.mxu0
  %v407 = vadd.f32 0.0, %v406
  %v408 = vpop.f32.mrf.mxu0
  %v409 = vadd.f32 0.0, %v408
  %410 = vmatmul.bf16.gmra.mxu0 %v280
  %v411 = vpop.f32.mrf.mxu0
  %v412 = vadd.f32 0.0, %v411
  %v413 = vpop.f32.mrf.mxu0
  %v414 = vadd.f32 0.0, %v413
  %415 = vdwg.mxu0
  %s416 = scalar_lea.vmem %s0, 200
  %v417 = vld [vmem:[%s416] sm:$0xf]
  %v418 = vld [vmem:[%s416 + $0x4] sm:$0xf]
  %v419 = vld [vmem:[%s416 + $0x8] sm:$0xf]
  %v420 = vld [vmem:[%s416 + $0xc] sm:$0xf]
  %v421 = vld [vmem:[%s416 + $0x10] sm:$0xf]
  %v422 = vld [vmem:[%s416 + $0x14] sm:$0xf]
  %v423 = vld [vmem:[%s416 + $0x18] sm:$0xf]
  %v424 = vld [vmem:[%s416 + $0x1c] sm:$0xf]
  %v425 = vld [vmem:[%s416 + $0x20] sm:$0xf]
  %v426 = vld [vmem:[%s416 + $0x24] sm:$0xf]
  %v427 = vld [vmem:[%s416 + $0x28] sm:$0xf]
  %v428 = vld [vmem:[%s416 + $0x2c] sm:$0xf]
  %v429 = vld [vmem:[%s416 + $0x30] sm:$0xf]
  %v430 = vld [vmem:[%s416 + $0x34] sm:$0xf]
  %v431 = vld [vmem:[%s416 + $0x38] sm:$0xf]
  %v432 = vld [vmem:[%s416 + $0x3c] sm:$0xf]
  %v433 = vld [vmem:[%s416 + $0x40] sm:$0xf]
  %v434 = vld [vmem:[%s416 + $0x44] sm:$0xf]
  %v435 = vld [vmem:[%s416 + $0x48] sm:$0xf]
  %v436 = vld [vmem:[%s416 + $0x4c] sm:$0xf]
  %v437 = vld [vmem:[%s416 + $0x50] sm:$0xf]
  %v438 = vld [vmem:[%s416 + $0x54] sm:$0xf]
  %v439 = vld [vmem:[%s416 + $0x58] sm:$0xf]
  %v440 = vld [vmem:[%s416 + $0x5c] sm:$0xf]
  %v441 = vld [vmem:[%s416 + $0x60] sm:$0xf]
  %v442 = vld [vmem:[%s416 + $0x64] sm:$0xf]
  %v443 = vld [vmem:[%s416 + $0x68] sm:$0xf]
  %v444 = vld [vmem:[%s416 + $0x6c] sm:$0xf]
  %v445 = vld [vmem:[%s416 + $0x70] sm:$0xf]
  %v446 = vld [vmem:[%s416 + $0x74] sm:$0xf]
  %v447 = vld [vmem:[%s416 + $0x78] sm:$0xf]
  %v448 = vld [vmem:[%s416 + $0x7c] sm:$0xf]
  %v449 = vld [vmem:[%s416 + $0x80] sm:$0xf]
  %v450 = vld [vmem:[%s416 + $0x84] sm:$0xf]
  %v451 = vld [vmem:[%s416 + $0x88] sm:$0xf]
  %v452 = vld [vmem:[%s416 + $0x8c] sm:$0xf]
  %v453 = vld [vmem:[%s416 + $0x90] sm:$0xf]
  %v454 = vld [vmem:[%s416 + $0x94] sm:$0xf]
  %v455 = vld [vmem:[%s416 + $0x98] sm:$0xf]
  %v456 = vld [vmem:[%s416 + $0x9c] sm:$0xf]
  %v457 = vld [vmem:[%s416 + $0xa0] sm:$0xf]
  %v458 = vld [vmem:[%s416 + $0xa4] sm:$0xf]
  %v459 = vld [vmem:[%s416 + $0xa8] sm:$0xf]
  %v460 = vld [vmem:[%s416 + $0xac] sm:$0xf]
  %v461 = vld [vmem:[%s416 + $0xb0] sm:$0xf]
  %v462 = vld [vmem:[%s416 + $0xb4] sm:$0xf]
  %v463 = vld [vmem:[%s416 + $0xb8] sm:$0xf]
  %v464 = vld [vmem:[%s416 + $0xbc] sm:$0xf]
  %v465 = vld [vmem:[%s416 + $0xc0] sm:$0xf]
  %v466 = vld [vmem:[%s416 + $0xc4] sm:$0xf]
  %v517 = vunpack.c.l.b16 %v417
  %v518 = vunpack.c.l.b16 %v418
  %v519 = vunpack.c.l.b16 %v419
  %v520 = vunpack.c.l.b16 %v420
  %v521 = vunpack.c.l.b16 %v421
  %v522 = vunpack.c.l.b16 %v422
  %v523 = vunpack.c.l.b16 %v423
  %v524 = vunpack.c.l.b16 %v424
  %v525 = vunpack.c.l.b16 %v425
  %v526 = vunpack.c.l.b16 %v426
  %v527 = vunpack.c.l.b16 %v427
  %v528 = vunpack.c.l.b16 %v428
  %v529 = vunpack.c.l.b16 %v429
  %v530 = vunpack.c.l.b16 %v430
  %v531 = vunpack.c.l.b16 %v431
  %v532 = vunpack.c.l.b16 %v432
  %v533 = vunpack.c.l.b16 %v433
  %v534 = vunpack.c.l.b16 %v434
  %v535 = vunpack.c.l.b16 %v435
  %v536 = vunpack.c.l.b16 %v436
  %v537 = vunpack.c.l.b16 %v437
  %v538 = vunpack.c.l.b16 %v438
  %v539 = vunpack.c.l.b16 %v439
  %v540 = vunpack.c.l.b16 %v440
  %v541 = vunpack.c.l.b16 %v441
  %v542 = vunpack.c.l.b16 %v442
  %v543 = vunpack.c.l.b16 %v443
  %v544 = vunpack.c.l.b16 %v444
  %v545 = vunpack.c.l.b16 %v445
  %v546 = vunpack.c.l.b16 %v446
  %v547 = vunpack.c.l.b16 %v447
  %v548 = vunpack.c.l.b16 %v448
  %v549 = vunpack.c.l.b16 %v449
  %v550 = vunpack.c.l.b16 %v450
  %v551 = vunpack.c.l.b16 %v451
  %v552 = vunpack.c.l.b16 %v452
  %v553 = vunpack.c.l.b16 %v453
  %v554 = vunpack.c.l.b16 %v454
  %v555 = vunpack.c.l.b16 %v455
  %v556 = vunpack.c.l.b16 %v456
  %v557 = vunpack.c.l.b16 %v457
  %v558 = vunpack.c.l.b16 %v458
  %v559 = vunpack.c.l.b16 %v459
  %v560 = vunpack.c.l.b16 %v460
  %v561 = vunpack.c.l.b16 %v461
  %v562 = vunpack.c.l.b16 %v462
  %v563 = vunpack.c.l.b16 %v463
  %v564 = vunpack.c.l.b16 %v464
  %v565 = vunpack.c.l.b16 %v465
  %v566 = vunpack.c.l.b16 %v466
  %v567 = vpack.c.b16 %v518, %v517
  %v568 = vpack.c.b16 %v520, %v519
  %v569 = vpack.c.b16 %v522, %v521
  %v570 = vpack.c.b16 %v524, %v523
  %v571 = vpack.c.b16 %v526, %v525
  %v572 = vpack.c.b16 %v528, %v527
  %v573 = vpack.c.b16 %v530, %v529
  %v574 = vpack.c.b16 %v532, %v531
  %v575 = vpack.c.b16 %v534, %v533
  %v576 = vpack.c.b16 %v536, %v535
  %v577 = vpack.c.b16 %v538, %v537
  %v578 = vpack.c.b16 %v540, %v539
  %v579 = vpack.c.b16 %v542, %v541
  %v580 = vpack.c.b16 %v544, %v543
  %v581 = vpack.c.b16 %v546, %v545
  %v582 = vpack.c.b16 %v548, %v547
  %v583 = vpack.c.b16 %v550, %v549
  %v584 = vpack.c.b16 %v552, %v551
  %v585 = vpack.c.b16 %v554, %v553
  %v586 = vpack.c.b16 %v556, %v555
  %v587 = vpack.c.b16 %v558, %v557
  %v588 = vpack.c.b16 %v560, %v559
  %v589 = vpack.c.b16 %v562, %v561
  %v590 = vpack.c.b16 %v564, %v563
  %v591 = vpack.c.b16 %v566, %v565
  %v593 = vsel %vm206, %v567, 0
  %v596 = vsel %vm206, %v568, 0
  %v599 = vsel %vm206, %v569, 0
  %v602 = vsel %vm206, %v570, 0
  %v605 = vsel %vm206, %v571, 0
  %v608 = vsel %vm206, %v572, 0
  %v611 = vsel %vm206, %v573, 0
  %v614 = vsel %vm206, %v574, 0
  %v617 = vsel %vm206, %v575, 0
  %v620 = vsel %vm206, %v576, 0
  %v623 = vsel %vm206, %v577, 0
  %v626 = vsel %vm206, %v578, 0
  %v629 = vsel %vm206, %v579, 0
  %v632 = vsel %vm206, %v580, 0
  %v635 = vsel %vm206, %v581, 0
  %v638 = vsel %vm206, %v582, 0
  %v641 = vsel %vm206, %v583, 0
  %v644 = vsel %vm206, %v584, 0
  %v647 = vsel %vm206, %v585, 0
  %v650 = vsel %vm206, %v586, 0
  %v653 = vsel %vm206, %v587, 0
  %v656 = vsel %vm206, %v588, 0
  %v659 = vsel %vm206, %v589, 0
  %v662 = vsel %vm206, %v590, 0
  %v665 = vsel %vm206, %v591, 0
  %667 = vmatpush.bf16.msra.mxu0 0
  %668 = vmatpush.bf16.msra.mxu0 0
  %669 = vmatpush.bf16.msra.mxu0 0
  %670 = vmatpush.bf16.msra.mxu0 0
  %671 = vmatpush.bf16.msra.mxu0 0
  %672 = vmatpush.bf16.msra.mxu0 0
  %673 = vmatpush.bf16.msra.mxu0 %v203
  %674 = vmatpush.bf16.msra.mxu0 %v202
  %675 = vmatmul.bf16.gmra.mxu0 %v593
  %v676 = vpop.f32.mrf.mxu0
  %v677 = vadd.f32 0.0, %v676
  %v678 = vpop.f32.mrf.mxu0
  %v679 = vadd.f32 0.0, %v678
  %680 = vmatmul.bf16.gmra.mxu0 %v596
  %v681 = vpop.f32.mrf.mxu0
  %v682 = vadd.f32 0.0, %v681
  %v683 = vpop.f32.mrf.mxu0
  %v684 = vadd.f32 0.0, %v683
  %685 = vmatmul.bf16.gmra.mxu0 %v599
  %v686 = vpop.f32.mrf.mxu0
  %v687 = vadd.f32 0.0, %v686
  %v688 = vpop.f32.mrf.mxu0
  %v689 = vadd.f32 0.0, %v688
  %690 = vmatmul.bf16.gmra.mxu0 %v602
  %v691 = vpop.f32.mrf.mxu0
  %v692 = vadd.f32 0.0, %v691
  %v693 = vpop.f32.mrf.mxu0
  %v694 = vadd.f32 0.0, %v693
  %695 = vmatmul.bf16.gmra.mxu0 %v605
  %v696 = vpop.f32.mrf.mxu0
  %v697 = vadd.f32 0.0, %v696
  %v698 = vpop.f32.mrf.mxu0
  %v699 = vadd.f32 0.0, %v698
  %700 = vmatmul.bf16.gmra.mxu0 %v608
  %v701 = vpop.f32.mrf.mxu0
  %v702 = vadd.f32 0.0, %v701
  %v703 = vpop.f32.mrf.mxu0
  %v704 = vadd.f32 0.0, %v703
  %705 = vmatmul.bf16.gmra.mxu0 %v611
  %v706 = vpop.f32.mrf.mxu0
  %v707 = vadd.f32 0.0, %v706
  %v708 = vpop.f32.mrf.mxu0
  %v709 = vadd.f32 0.0, %v708
  %710 = vmatmul.bf16.gmra.mxu0 %v614
  %v711 = vpop.f32.mrf.mxu0
  %v712 = vadd.f32 0.0, %v711
  %v713 = vpop.f32.mrf.mxu0
  %v714 = vadd.f32 0.0, %v713
  %715 = vmatmul.bf16.gmra.mxu0 %v617
  %v716 = vpop.f32.mrf.mxu0
  %v717 = vadd.f32 0.0, %v716
  %v718 = vpop.f32.mrf.mxu0
  %v719 = vadd.f32 0.0, %v718
  %720 = vmatmul.bf16.gmra.mxu0 %v620
  %v721 = vpop.f32.mrf.mxu0
  %v722 = vadd.f32 0.0, %v721
  %v723 = vpop.f32.mrf.mxu0
  %v724 = vadd.f32 0.0, %v723
  %725 = vmatmul.bf16.gmra.mxu0 %v623
  %v726 = vpop.f32.mrf.mxu0
  %v727 = vadd.f32 0.0, %v726
  %v728 = vpop.f32.mrf.mxu0
  %v729 = vadd.f32 0.0, %v728
  %730 = vmatmul.bf16.gmra.mxu0 %v626
  %v731 = vpop.f32.mrf.mxu0
  %v732 = vadd.f32 0.0, %v731
  %v733 = vpop.f32.mrf.mxu0
  %v734 = vadd.f32 0.0, %v733
  %735 = vmatmul.bf16.gmra.mxu0 %v629
  %v736 = vpop.f32.mrf.mxu0
  %v737 = vadd.f32 0.0, %v736
  %v738 = vpop.f32.mrf.mxu0
  %v739 = vadd.f32 0.0, %v738
  %740 = vmatmul.bf16.gmra.mxu0 %v632
  %v741 = vpop.f32.mrf.mxu0
  %v742 = vadd.f32 0.0, %v741
  %v743 = vpop.f32.mrf.mxu0
  %v744 = vadd.f32 0.0, %v743
  %745 = vmatmul.bf16.gmra.mxu0 %v635
  %v746 = vpop.f32.mrf.mxu0
  %v747 = vadd.f32 0.0, %v746
  %v748 = vpop.f32.mrf.mxu0
  %v749 = vadd.f32 0.0, %v748
  %750 = vmatmul.bf16.gmra.mxu0 %v638
  %v751 = vpop.f32.mrf.mxu0
  %v752 = vadd.f32 0.0, %v751
  %v753 = vpop.f32.mrf.mxu0
  %v754 = vadd.f32 0.0, %v753
  %755 = vmatmul.bf16.gmra.mxu0 %v641
  %v756 = vpop.f32.mrf.mxu0
  %v757 = vadd.f32 0.0, %v756
  %v758 = vpop.f32.mrf.mxu0
  %v759 = vadd.f32 0.0, %v758
  %760 = vmatmul.bf16.gmra.mxu0 %v644
  %v761 = vpop.f32.mrf.mxu0
  %v762 = vadd.f32 0.0, %v761
  %v763 = vpop.f32.mrf.mxu0
  %v764 = vadd.f32 0.0, %v763
  %765 = vmatmul.bf16.gmra.mxu0 %v647
  %v766 = vpop.f32.mrf.mxu0
  %v767 = vadd.f32 0.0, %v766
  %v768 = vpop.f32.mrf.mxu0
  %v769 = vadd.f32 0.0, %v768
  %770 = vmatmul.bf16.gmra.mxu0 %v650
  %v771 = vpop.f32.mrf.mxu0
  %v772 = vadd.f32 0.0, %v771
  %v773 = vpop.f32.mrf.mxu0
  %v774 = vadd.f32 0.0, %v773
  %775 = vmatmul.bf16.gmra.mxu0 %v653
  %v776 = vpop.f32.mrf.mxu0
  %v777 = vadd.f32 0.0, %v776
  %v778 = vpop.f32.mrf.mxu0
  %v779 = vadd.f32 0.0, %v778
  %780 = vmatmul.bf16.gmra.mxu0 %v656
  %v781 = vpop.f32.mrf.mxu0
  %v782 = vadd.f32 0.0, %v781
  %v783 = vpop.f32.mrf.mxu0
  %v784 = vadd.f32 0.0, %v783
  %785 = vmatmul.bf16.gmra.mxu0 %v659
  %v786 = vpop.f32.mrf.mxu0
  %v787 = vadd.f32 0.0, %v786
  %v788 = vpop.f32.mrf.mxu0
  %v789 = vadd.f32 0.0, %v788
  %790 = vmatmul.bf16.gmra.mxu0 %v662
  %v791 = vpop.f32.mrf.mxu0
  %v792 = vadd.f32 0.0, %v791
  %v793 = vpop.f32.mrf.mxu0
  %v794 = vadd.f32 0.0, %v793
  %795 = vmatmul.bf16.gmra.mxu0 %v665
  %v796 = vpop.f32.mrf.mxu0
  %v797 = vadd.f32 0.0, %v796
  %v798 = vpop.f32.mrf.mxu0
  %v799 = vadd.f32 0.0, %v798
  %800 = vdwg.mxu0
  %v801 = vmax.f32 %v292, %v677
  %v802 = vmax.f32 %v294, %v679
  %v803 = vmax.f32 %v297, %v682
  %v804 = vmax.f32 %v299, %v684
  %v805 = vmax.f32 %v302, %v687
  %v806 = vmax.f32 %v304, %v689
  %v807 = vmax.f32 %v307, %v692
  %v808 = vmax.f32 %v309, %v694
  %v809 = vmax.f32 %v312, %v697
  %v810 = vmax.f32 %v314, %v699
  %v811 = vmax.f32 %v317, %v702
  %v812 = vmax.f32 %v319, %v704
  %v813 = vmax.f32 %v322, %v707
  %v814 = vmax.f32 %v324, %v709
  %v815 = vmax.f32 %v327, %v712
  %v816 = vmax.f32 %v329, %v714
  %v817 = vmax.f32 %v332, %v717
  %v818 = vmax.f32 %v334, %v719
  %v819 = vmax.f32 %v337, %v722
  %v820 = vmax.f32 %v339, %v724
  %v821 = vmax.f32 %v342, %v727
  %v822 = vmax.f32 %v344, %v729
  %v823 = vmax.f32 %v347, %v732
  %v824 = vmax.f32 %v349, %v734
  %v825 = vmax.f32 %v352, %v737
  %v826 = vmax.f32 %v354, %v739
  %v827 = vmax.f32 %v357, %v742
  %v828 = vmax.f32 %v359, %v744
  %v829 = vmax.f32 %v362, %v747
  %v830 = vmax.f32 %v364, %v749
  %v831 = vmax.f32 %v367, %v752
  %v832 = vmax.f32 %v369, %v754
  %v833 = vmax.f32 %v372, %v757
  %v834 = vmax.f32 %v374, %v759
  %v835 = vmax.f32 %v377, %v762
  %v836 = vmax.f32 %v379, %v764
  %v837 = vmax.f32 %v382, %v767
  %v838 = vmax.f32 %v384, %v769
  %v839 = vmax.f32 %v387, %v772
  %v840 = vmax.f32 %v389, %v774
  %v841 = vmax.f32 %v392, %v777
  %v842 = vmax.f32 %v394, %v779
  %v843 = vmax.f32 %v397, %v782
  %v844 = vmax.f32 %v399, %v784
  %v845 = vmax.f32 %v402, %v787
  %v846 = vmax.f32 %v404, %v789
  %v847 = vmax.f32 %v407, %v792
  %v848 = vmax.f32 %v409, %v794
  %v849 = vmax.f32 %v412, %v797
  %v850 = vmax.f32 %v414, %v799
  %s851 = scalar_lea.vmem %s0, 400
  %v852 = vld [vmem:[%s851] sm:$0xf]
  %v853 = vld [vmem:[%s851 + $0x4] sm:$0xf]
  %v854 = vld [vmem:[%s851 + $0x8] sm:$0xf]
  %v855 = vld [vmem:[%s851 + $0xc] sm:$0xf]
  %v856 = vld [vmem:[%s851 + $0x10] sm:$0xf]
  %v857 = vld [vmem:[%s851 + $0x14] sm:$0xf]
  %v858 = vld [vmem:[%s851 + $0x18] sm:$0xf]
  %v859 = vld [vmem:[%s851 + $0x1c] sm:$0xf]
  %v860 = vld [vmem:[%s851 + $0x20] sm:$0xf]
  %v861 = vld [vmem:[%s851 + $0x24] sm:$0xf]
  %v862 = vld [vmem:[%s851 + $0x28] sm:$0xf]
  %v863 = vld [vmem:[%s851 + $0x2c] sm:$0xf]
  %v864 = vld [vmem:[%s851 + $0x30] sm:$0xf]
  %v865 = vld [vmem:[%s851 + $0x34] sm:$0xf]
  %v866 = vld [vmem:[%s851 + $0x38] sm:$0xf]
  %v867 = vld [vmem:[%s851 + $0x3c] sm:$0xf]
  %v868 = vld [vmem:[%s851 + $0x40] sm:$0xf]
  %v869 = vld [vmem:[%s851 + $0x44] sm:$0xf]
  %v870 = vld [vmem:[%s851 + $0x48] sm:$0xf]
  %v871 = vld [vmem:[%s851 + $0x4c] sm:$0xf]
  %v872 = vld [vmem:[%s851 + $0x50] sm:$0xf]
  %v873 = vld [vmem:[%s851 + $0x54] sm:$0xf]
  %v874 = vld [vmem:[%s851 + $0x58] sm:$0xf]
  %v875 = vld [vmem:[%s851 + $0x5c] sm:$0xf]
  %v876 = vld [vmem:[%s851 + $0x60] sm:$0xf]
  %v877 = vld [vmem:[%s851 + $0x64] sm:$0xf]
  %v878 = vld [vmem:[%s851 + $0x68] sm:$0xf]
  %v879 = vld [vmem:[%s851 + $0x6c] sm:$0xf]
  %v880 = vld [vmem:[%s851 + $0x70] sm:$0xf]
  %v881 = vld [vmem:[%s851 + $0x74] sm:$0xf]
  %v882 = vld [vmem:[%s851 + $0x78] sm:$0xf]
  %v883 = vld [vmem:[%s851 + $0x7c] sm:$0xf]
  %v884 = vld [vmem:[%s851 + $0x80] sm:$0xf]
  %v885 = vld [vmem:[%s851 + $0x84] sm:$0xf]
  %v886 = vld [vmem:[%s851 + $0x88] sm:$0xf]
  %v887 = vld [vmem:[%s851 + $0x8c] sm:$0xf]
  %v888 = vld [vmem:[%s851 + $0x90] sm:$0xf]
  %v889 = vld [vmem:[%s851 + $0x94] sm:$0xf]
  %v890 = vld [vmem:[%s851 + $0x98] sm:$0xf]
  %v891 = vld [vmem:[%s851 + $0x9c] sm:$0xf]
  %v892 = vld [vmem:[%s851 + $0xa0] sm:$0xf]
  %v893 = vld [vmem:[%s851 + $0xa4] sm:$0xf]
  %v894 = vld [vmem:[%s851 + $0xa8] sm:$0xf]
  %v895 = vld [vmem:[%s851 + $0xac] sm:$0xf]
  %v896 = vld [vmem:[%s851 + $0xb0] sm:$0xf]
  %v897 = vld [vmem:[%s851 + $0xb4] sm:$0xf]
  %v898 = vld [vmem:[%s851 + $0xb8] sm:$0xf]
  %v899 = vld [vmem:[%s851 + $0xbc] sm:$0xf]
  %v900 = vld [vmem:[%s851 + $0xc0] sm:$0xf]
  %v901 = vld [vmem:[%s851 + $0xc4] sm:$0xf]
  %v952 = vunpack.c.l.b16 %v852
  %v953 = vunpack.c.l.b16 %v853
  %v954 = vunpack.c.l.b16 %v854
  %v955 = vunpack.c.l.b16 %v855
  %v956 = vunpack.c.l.b16 %v856
  %v957 = vunpack.c.l.b16 %v857
  %v958 = vunpack.c.l.b16 %v858
  %v959 = vunpack.c.l.b16 %v859
  %v960 = vunpack.c.l.b16 %v860
  %v961 = vunpack.c.l.b16 %v861
  %v962 = vunpack.c.l.b16 %v862
  %v963 = vunpack.c.l.b16 %v863
  %v964 = vunpack.c.l.b16 %v864
  %v965 = vunpack.c.l.b16 %v865
  %v966 = vunpack.c.l.b16 %v866
  %v967 = vunpack.c.l.b16 %v867
  %v968 = vunpack.c.l.b16 %v868
  %v969 = vunpack.c.l.b16 %v869
  %v970 = vunpack.c.l.b16 %v870
  %v971 = vunpack.c.l.b16 %v871
  %v972 = vunpack.c.l.b16 %v872
  %v973 = vunpack.c.l.b16 %v873
  %v974 = vunpack.c.l.b16 %v874
  %v975 = vunpack.c.l.b16 %v875
  %v976 = vunpack.c.l.b16 %v876
  %v977 = vunpack.c.l.b16 %v877
  %v978 = vunpack.c.l.b16 %v878
  %v979 = vunpack.c.l.b16 %v879
  %v980 = vunpack.c.l.b16 %v880
  %v981 = vunpack.c.l.b16 %v881
  %v982 = vunpack.c.l.b16 %v882
  %v983 = vunpack.c.l.b16 %v883
  %v984 = vunpack.c.l.b16 %v884
  %v985 = vunpack.c.l.b16 %v885
  %v986 = vunpack.c.l.b16 %v886
  %v987 = vunpack.c.l.b16 %v887
  %v988 = vunpack.c.l.b16 %v888
  %v989 = vunpack.c.l.b16 %v889
  %v990 = vunpack.c.l.b16 %v890
  %v991 = vunpack.c.l.b16 %v891
  %v992 = vunpack.c.l.b16 %v892
  %v993 = vunpack.c.l.b16 %v893
  %v994 = vunpack.c.l.b16 %v894
  %v995 = vunpack.c.l.b16 %v895
  %v996 = vunpack.c.l.b16 %v896
  %v997 = vunpack.c.l.b16 %v897
  %v998 = vunpack.c.l.b16 %v898
  %v999 = vunpack.c.l.b16 %v899
  %v1000 = vunpack.c.l.b16 %v900
  %v1001 = vunpack.c.l.b16 %v901
  %v1002 = vpack.c.b16 %v953, %v952
  %v1003 = vpack.c.b16 %v955, %v954
  %v1004 = vpack.c.b16 %v957, %v956
  %v1005 = vpack.c.b16 %v959, %v958
  %v1006 = vpack.c.b16 %v961, %v960
  %v1007 = vpack.c.b16 %v963, %v962
  %v1008 = vpack.c.b16 %v965, %v964
  %v1009 = vpack.c.b16 %v967, %v966
  %v1010 = vpack.c.b16 %v969, %v968
  %v1011 = vpack.c.b16 %v971, %v970
  %v1012 = vpack.c.b16 %v973, %v972
  %v1013 = vpack.c.b16 %v975, %v974
  %v1014 = vpack.c.b16 %v977, %v976
  %v1015 = vpack.c.b16 %v979, %v978
  %v1016 = vpack.c.b16 %v981, %v980
  %v1017 = vpack.c.b16 %v983, %v982
  %v1018 = vpack.c.b16 %v985, %v984
  %v1019 = vpack.c.b16 %v987, %v986
  %v1020 = vpack.c.b16 %v989, %v988
  %v1021 = vpack.c.b16 %v991, %v990
  %v1022 = vpack.c.b16 %v993, %v992
  %v1023 = vpack.c.b16 %v995, %v994
  %v1024 = vpack.c.b16 %v997, %v996
  %v1025 = vpack.c.b16 %v999, %v998
  %v1026 = vpack.c.b16 %v1001, %v1000
  %v1028 = vsel %vm206, %v1002, 0
  %v1031 = vsel %vm206, %v1003, 0
  %v1034 = vsel %vm206, %v1004, 0
  %v1037 = vsel %vm206, %v1005, 0
  %v1040 = vsel %vm206, %v1006, 0
  %v1043 = vsel %vm206, %v1007, 0
  %v1046 = vsel %vm206, %v1008, 0
  %v1049 = vsel %vm206, %v1009, 0
  %v1052 = vsel %vm206, %v1010, 0
  %v1055 = vsel %vm206, %v1011, 0
  %v1058 = vsel %vm206, %v1012, 0
  %v1061 = vsel %vm206, %v1013, 0
  %v1064 = vsel %vm206, %v1014, 0
  %v1067 = vsel %vm206, %v1015, 0
  %v1070 = vsel %vm206, %v1016, 0
  %v1073 = vsel %vm206, %v1017, 0
  %v1076 = vsel %vm206, %v1018, 0
  %v1079 = vsel %vm206, %v1019, 0
  %v1082 = vsel %vm206, %v1020, 0
  %v1085 = vsel %vm206, %v1021, 0
  %v1088 = vsel %vm206, %v1022, 0
  %v1091 = vsel %vm206, %v1023, 0
  %v1094 = vsel %vm206, %v1024, 0
  %v1097 = vsel %vm206, %v1025, 0
  %v1100 = vsel %vm206, %v1026, 0
  %1102 = vmatpush.bf16.msra.mxu0 0
  %1103 = vmatpush.bf16.msra.mxu0 0
  %1104 = vmatpush.bf16.msra.mxu0 0
  %1105 = vmatpush.bf16.msra.mxu0 0
  %1106 = vmatpush.bf16.msra.mxu0 0
  %1107 = vmatpush.bf16.msra.mxu0 0
  %1108 = vmatpush.bf16.msra.mxu0 %v203
  %1109 = vmatpush.bf16.msra.mxu0 %v202
  %1110 = vmatmul.bf16.gmra.mxu0 %v1028
  %v1111 = vpop.f32.mrf.mxu0
  %v1112 = vadd.f32 0.0, %v1111
  %v1113 = vpop.f32.mrf.mxu0
  %v1114 = vadd.f32 0.0, %v1113
  %1115 = vmatmul.bf16.gmra.mxu0 %v1031
  %v1116 = vpop.f32.mrf.mxu0
  %v1117 = vadd.f32 0.0, %v1116
  %v1118 = vpop.f32.mrf.mxu0
  %v1119 = vadd.f32 0.0, %v1118
  %1120 = vmatmul.bf16.gmra.mxu0 %v1034
  %v1121 = vpop.f32.mrf.mxu0
  %v1122 = vadd.f32 0.0, %v1121
  %v1123 = vpop.f32.mrf.mxu0
  %v1124 = vadd.f32 0.0, %v1123
  %1125 = vmatmul.bf16.gmra.mxu0 %v1037
  %v1126 = vpop.f32.mrf.mxu0
  %v1127 = vadd.f32 0.0, %v1126
  %v1128 = vpop.f32.mrf.mxu0
  %v1129 = vadd.f32 0.0, %v1128
  %1130 = vmatmul.bf16.gmra.mxu0 %v1040
  %v1131 = vpop.f32.mrf.mxu0
  %v1132 = vadd.f32 0.0, %v1131
  %v1133 = vpop.f32.mrf.mxu0
  %v1134 = vadd.f32 0.0, %v1133
  %1135 = vmatmul.bf16.gmra.mxu0 %v1043
  %v1136 = vpop.f32.mrf.mxu0
  %v1137 = vadd.f32 0.0, %v1136
  %v1138 = vpop.f32.mrf.mxu0
  %v1139 = vadd.f32 0.0, %v1138
  %1140 = vmatmul.bf16.gmra.mxu0 %v1046
  %v1141 = vpop.f32.mrf.mxu0
  %v1142 = vadd.f32 0.0, %v1141
  %v1143 = vpop.f32.mrf.mxu0
  %v1144 = vadd.f32 0.0, %v1143
  %1145 = vmatmul.bf16.gmra.mxu0 %v1049
  %v1146 = vpop.f32.mrf.mxu0
  %v1147 = vadd.f32 0.0, %v1146
  %v1148 = vpop.f32.mrf.mxu0
  %v1149 = vadd.f32 0.0, %v1148
  %1150 = vmatmul.bf16.gmra.mxu0 %v1052
  %v1151 = vpop.f32.mrf.mxu0
  %v1152 = vadd.f32 0.0, %v1151
  %v1153 = vpop.f32.mrf.mxu0
  %v1154 = vadd.f32 0.0, %v1153
  %1155 = vmatmul.bf16.gmra.mxu0 %v1055
  %v1156 = vpop.f32.mrf.mxu0
  %v1157 = vadd.f32 0.0, %v1156
  %v1158 = vpop.f32.mrf.mxu0
  %v1159 = vadd.f32 0.0, %v1158
  %1160 = vmatmul.bf16.gmra.mxu0 %v1058
  %v1161 = vpop.f32.mrf.mxu0
  %v1162 = vadd.f32 0.0, %v1161
  %v1163 = vpop.f32.mrf.mxu0
  %v1164 = vadd.f32 0.0, %v1163
  %1165 = vmatmul.bf16.gmra.mxu0 %v1061
  %v1166 = vpop.f32.mrf.mxu0
  %v1167 = vadd.f32 0.0, %v1166
  %v1168 = vpop.f32.mrf.mxu0
  %v1169 = vadd.f32 0.0, %v1168
  %1170 = vmatmul.bf16.gmra.mxu0 %v1064
  %v1171 = vpop.f32.mrf.mxu0
  %v1172 = vadd.f32 0.0, %v1171
  %v1173 = vpop.f32.mrf.mxu0
  %v1174 = vadd.f32 0.0, %v1173
  %1175 = vmatmul.bf16.gmra.mxu0 %v1067
  %v1176 = vpop.f32.mrf.mxu0
  %v1177 = vadd.f32 0.0, %v1176
  %v1178 = vpop.f32.mrf.mxu0
  %v1179 = vadd.f32 0.0, %v1178
  %1180 = vmatmul.bf16.gmra.mxu0 %v1070
  %v1181 = vpop.f32.mrf.mxu0
  %v1182 = vadd.f32 0.0, %v1181
  %v1183 = vpop.f32.mrf.mxu0
  %v1184 = vadd.f32 0.0, %v1183
  %1185 = vmatmul.bf16.gmra.mxu0 %v1073
  %v1186 = vpop.f32.mrf.mxu0
  %v1187 = vadd.f32 0.0, %v1186
  %v1188 = vpop.f32.mrf.mxu0
  %v1189 = vadd.f32 0.0, %v1188
  %1190 = vmatmul.bf16.gmra.mxu0 %v1076
  %v1191 = vpop.f32.mrf.mxu0
  %v1192 = vadd.f32 0.0, %v1191
  %v1193 = vpop.f32.mrf.mxu0
  %v1194 = vadd.f32 0.0, %v1193
  %1195 = vmatmul.bf16.gmra.mxu0 %v1079
  %v1196 = vpop.f32.mrf.mxu0
  %v1197 = vadd.f32 0.0, %v1196
  %v1198 = vpop.f32.mrf.mxu0
  %v1199 = vadd.f32 0.0, %v1198
  %1200 = vmatmul.bf16.gmra.mxu0 %v1082
  %v1201 = vpop.f32.mrf.mxu0
  %v1202 = vadd.f32 0.0, %v1201
  %v1203 = vpop.f32.mrf.mxu0
  %v1204 = vadd.f32 0.0, %v1203
  %1205 = vmatmul.bf16.gmra.mxu0 %v1085
  %v1206 = vpop.f32.mrf.mxu0
  %v1207 = vadd.f32 0.0, %v1206
  %v1208 = vpop.f32.mrf.mxu0
  %v1209 = vadd.f32 0.0, %v1208
  %1210 = vmatmul.bf16.gmra.mxu0 %v1088
  %v1211 = vpop.f32.mrf.mxu0
  %v1212 = vadd.f32 0.0, %v1211
  %v1213 = vpop.f32.mrf.mxu0
  %v1214 = vadd.f32 0.0, %v1213
  %1215 = vmatmul.bf16.gmra.mxu0 %v1091
  %v1216 = vpop.f32.mrf.mxu0
  %v1217 = vadd.f32 0.0, %v1216
  %v1218 = vpop.f32.mrf.mxu0
  %v1219 = vadd.f32 0.0, %v1218
  %1220 = vmatmul.bf16.gmra.mxu0 %v1094
  %v1221 = vpop.f32.mrf.mxu0
  %v1222 = vadd.f32 0.0, %v1221
  %v1223 = vpop.f32.mrf.mxu0
  %v1224 = vadd.f32 0.0, %v1223
  %1225 = vmatmul.bf16.gmra.mxu0 %v1097
  %v1226 = vpop.f32.mrf.mxu0
  %v1227 = vadd.f32 0.0, %v1226
  %v1228 = vpop.f32.mrf.mxu0
  %v1229 = vadd.f32 0.0, %v1228
  %1230 = vmatmul.bf16.gmra.mxu0 %v1100
  %v1231 = vpop.f32.mrf.mxu0
  %v1232 = vadd.f32 0.0, %v1231
  %v1233 = vpop.f32.mrf.mxu0
  %v1234 = vadd.f32 0.0, %v1233
  %1235 = vdwg.mxu0
  %v1236 = vmax.f32 %v801, %v1112
  %v1237 = vmax.f32 %v802, %v1114
  %v1238 = vmax.f32 %v803, %v1117
  %v1239 = vmax.f32 %v804, %v1119
  %v1240 = vmax.f32 %v805, %v1122
  %v1241 = vmax.f32 %v806, %v1124
  %v1242 = vmax.f32 %v807, %v1127
  %v1243 = vmax.f32 %v808, %v1129
  %v1244 = vmax.f32 %v809, %v1132
  %v1245 = vmax.f32 %v810, %v1134
  %v1246 = vmax.f32 %v811, %v1137
  %v1247 = vmax.f32 %v812, %v1139
  %v1248 = vmax.f32 %v813, %v1142
  %v1249 = vmax.f32 %v814, %v1144
  %v1250 = vmax.f32 %v815, %v1147
  %v1251 = vmax.f32 %v816, %v1149
  %v1252 = vmax.f32 %v817, %v1152
  %v1253 = vmax.f32 %v818, %v1154
  %v1254 = vmax.f32 %v819, %v1157
  %v1255 = vmax.f32 %v820, %v1159
  %v1256 = vmax.f32 %v821, %v1162
  %v1257 = vmax.f32 %v822, %v1164
  %v1258 = vmax.f32 %v823, %v1167
  %v1259 = vmax.f32 %v824, %v1169
  %v1260 = vmax.f32 %v825, %v1172
  %v1261 = vmax.f32 %v826, %v1174
  %v1262 = vmax.f32 %v827, %v1177
  %v1263 = vmax.f32 %v828, %v1179
  %v1264 = vmax.f32 %v829, %v1182
  %v1265 = vmax.f32 %v830, %v1184
  %v1266 = vmax.f32 %v831, %v1187
  %v1267 = vmax.f32 %v832, %v1189
  %v1268 = vmax.f32 %v833, %v1192
  %v1269 = vmax.f32 %v834, %v1194
  %v1270 = vmax.f32 %v835, %v1197
  %v1271 = vmax.f32 %v836, %v1199
  %v1272 = vmax.f32 %v837, %v1202
  %v1273 = vmax.f32 %v838, %v1204
  %v1274 = vmax.f32 %v839, %v1207
  %v1275 = vmax.f32 %v840, %v1209
  %v1276 = vmax.f32 %v841, %v1212
  %v1277 = vmax.f32 %v842, %v1214
  %v1278 = vmax.f32 %v843, %v1217
  %v1279 = vmax.f32 %v844, %v1219
  %v1280 = vmax.f32 %v845, %v1222
  %v1281 = vmax.f32 %v846, %v1224
  %v1282 = vmax.f32 %v847, %v1227
  %v1283 = vmax.f32 %v848, %v1229
  %v1284 = vmax.f32 %v849, %v1232
  %v1285 = vmax.f32 %v850, %v1234
  %s1286 = scalar_lea.vmem %s0, 600
  %v1287 = vld [vmem:[%s1286] sm:$0xf]
  %v1288 = vld [vmem:[%s1286 + $0x4] sm:$0xf]
  %v1289 = vld [vmem:[%s1286 + $0x8] sm:$0xf]
  %v1290 = vld [vmem:[%s1286 + $0xc] sm:$0xf]
  %v1291 = vld [vmem:[%s1286 + $0x10] sm:$0xf]
  %v1292 = vld [vmem:[%s1286 + $0x14] sm:$0xf]
  %v1293 = vld [vmem:[%s1286 + $0x18] sm:$0xf]
  %v1294 = vld [vmem:[%s1286 + $0x1c] sm:$0xf]
  %v1295 = vld [vmem:[%s1286 + $0x20] sm:$0xf]
  %v1296 = vld [vmem:[%s1286 + $0x24] sm:$0xf]
  %v1297 = vld [vmem:[%s1286 + $0x28] sm:$0xf]
  %v1298 = vld [vmem:[%s1286 + $0x2c] sm:$0xf]
  %v1299 = vld [vmem:[%s1286 + $0x30] sm:$0xf]
  %v1300 = vld [vmem:[%s1286 + $0x34] sm:$0xf]
  %v1301 = vld [vmem:[%s1286 + $0x38] sm:$0xf]
  %v1302 = vld [vmem:[%s1286 + $0x3c] sm:$0xf]
  %v1303 = vld [vmem:[%s1286 + $0x40] sm:$0xf]
  %v1304 = vld [vmem:[%s1286 + $0x44] sm:$0xf]
  %v1305 = vld [vmem:[%s1286 + $0x48] sm:$0xf]
  %v1306 = vld [vmem:[%s1286 + $0x4c] sm:$0xf]
  %v1307 = vld [vmem:[%s1286 + $0x50] sm:$0xf]
  %v1308 = vld [vmem:[%s1286 + $0x54] sm:$0xf]
  %v1309 = vld [vmem:[%s1286 + $0x58] sm:$0xf]
  %v1310 = vld [vmem:[%s1286 + $0x5c] sm:$0xf]
  %v1311 = vld [vmem:[%s1286 + $0x60] sm:$0xf]
  %v1312 = vld [vmem:[%s1286 + $0x64] sm:$0xf]
  %v1313 = vld [vmem:[%s1286 + $0x68] sm:$0xf]
  %v1314 = vld [vmem:[%s1286 + $0x6c] sm:$0xf]
  %v1315 = vld [vmem:[%s1286 + $0x70] sm:$0xf]
  %v1316 = vld [vmem:[%s1286 + $0x74] sm:$0xf]
  %v1317 = vld [vmem:[%s1286 + $0x78] sm:$0xf]
  %v1318 = vld [vmem:[%s1286 + $0x7c] sm:$0xf]
  %v1319 = vld [vmem:[%s1286 + $0x80] sm:$0xf]
  %v1320 = vld [vmem:[%s1286 + $0x84] sm:$0xf]
  %v1321 = vld [vmem:[%s1286 + $0x88] sm:$0xf]
  %v1322 = vld [vmem:[%s1286 + $0x8c] sm:$0xf]
  %v1323 = vld [vmem:[%s1286 + $0x90] sm:$0xf]
  %v1324 = vld [vmem:[%s1286 + $0x94] sm:$0xf]
  %v1325 = vld [vmem:[%s1286 + $0x98] sm:$0xf]
  %v1326 = vld [vmem:[%s1286 + $0x9c] sm:$0xf]
  %v1327 = vld [vmem:[%s1286 + $0xa0] sm:$0xf]
  %v1328 = vld [vmem:[%s1286 + $0xa4] sm:$0xf]
  %v1329 = vld [vmem:[%s1286 + $0xa8] sm:$0xf]
  %v1330 = vld [vmem:[%s1286 + $0xac] sm:$0xf]
  %v1331 = vld [vmem:[%s1286 + $0xb0] sm:$0xf]
  %v1332 = vld [vmem:[%s1286 + $0xb4] sm:$0xf]
  %v1333 = vld [vmem:[%s1286 + $0xb8] sm:$0xf]
  %v1334 = vld [vmem:[%s1286 + $0xbc] sm:$0xf]
  %v1335 = vld [vmem:[%s1286 + $0xc0] sm:$0xf]
  %v1336 = vld [vmem:[%s1286 + $0xc4] sm:$0xf]
  %v1387 = vunpack.c.l.b16 %v1287
  %v1388 = vunpack.c.l.b16 %v1288
  %v1389 = vunpack.c.l.b16 %v1289
  %v1390 = vunpack.c.l.b16 %v1290
  %v1391 = vunpack.c.l.b16 %v1291
  %v1392 = vunpack.c.l.b16 %v1292
  %v1393 = vunpack.c.l.b16 %v1293
  %v1394 = vunpack.c.l.b16 %v1294
  %v1395 = vunpack.c.l.b16 %v1295
  %v1396 = vunpack.c.l.b16 %v1296
  %v1397 = vunpack.c.l.b16 %v1297
  %v1398 = vunpack.c.l.b16 %v1298
  %v1399 = vunpack.c.l.b16 %v1299
  %v1400 = vunpack.c.l.b16 %v1300
  %v1401 = vunpack.c.l.b16 %v1301
  %v1402 = vunpack.c.l.b16 %v1302
  %v1403 = vunpack.c.l.b16 %v1303
  %v1404 = vunpack.c.l.b16 %v1304
  %v1405 = vunpack.c.l.b16 %v1305
  %v1406 = vunpack.c.l.b16 %v1306
  %v1407 = vunpack.c.l.b16 %v1307
  %v1408 = vunpack.c.l.b16 %v1308
  %v1409 = vunpack.c.l.b16 %v1309
  %v1410 = vunpack.c.l.b16 %v1310
  %v1411 = vunpack.c.l.b16 %v1311
  %v1412 = vunpack.c.l.b16 %v1312
  %v1413 = vunpack.c.l.b16 %v1313
  %v1414 = vunpack.c.l.b16 %v1314
  %v1415 = vunpack.c.l.b16 %v1315
  %v1416 = vunpack.c.l.b16 %v1316
  %v1417 = vunpack.c.l.b16 %v1317
  %v1418 = vunpack.c.l.b16 %v1318
  %v1419 = vunpack.c.l.b16 %v1319
  %v1420 = vunpack.c.l.b16 %v1320
  %v1421 = vunpack.c.l.b16 %v1321
  %v1422 = vunpack.c.l.b16 %v1322
  %v1423 = vunpack.c.l.b16 %v1323
  %v1424 = vunpack.c.l.b16 %v1324
  %v1425 = vunpack.c.l.b16 %v1325
  %v1426 = vunpack.c.l.b16 %v1326
  %v1427 = vunpack.c.l.b16 %v1327
  %v1428 = vunpack.c.l.b16 %v1328
  %v1429 = vunpack.c.l.b16 %v1329
  %v1430 = vunpack.c.l.b16 %v1330
  %v1431 = vunpack.c.l.b16 %v1331
  %v1432 = vunpack.c.l.b16 %v1332
  %v1433 = vunpack.c.l.b16 %v1333
  %v1434 = vunpack.c.l.b16 %v1334
  %v1435 = vunpack.c.l.b16 %v1335
  %v1436 = vunpack.c.l.b16 %v1336
  %v1437 = vpack.c.b16 %v1388, %v1387
  %v1438 = vpack.c.b16 %v1390, %v1389
  %v1439 = vpack.c.b16 %v1392, %v1391
  %v1440 = vpack.c.b16 %v1394, %v1393
  %v1441 = vpack.c.b16 %v1396, %v1395
  %v1442 = vpack.c.b16 %v1398, %v1397
  %v1443 = vpack.c.b16 %v1400, %v1399
  %v1444 = vpack.c.b16 %v1402, %v1401
  %v1445 = vpack.c.b16 %v1404, %v1403
  %v1446 = vpack.c.b16 %v1406, %v1405
  %v1447 = vpack.c.b16 %v1408, %v1407
  %v1448 = vpack.c.b16 %v1410, %v1409
  %v1449 = vpack.c.b16 %v1412, %v1411
  %v1450 = vpack.c.b16 %v1414, %v1413
  %v1451 = vpack.c.b16 %v1416, %v1415
  %v1452 = vpack.c.b16 %v1418, %v1417
  %v1453 = vpack.c.b16 %v1420, %v1419
  %v1454 = vpack.c.b16 %v1422, %v1421
  %v1455 = vpack.c.b16 %v1424, %v1423
  %v1456 = vpack.c.b16 %v1426, %v1425
  %v1457 = vpack.c.b16 %v1428, %v1427
  %v1458 = vpack.c.b16 %v1430, %v1429
  %v1459 = vpack.c.b16 %v1432, %v1431
  %v1460 = vpack.c.b16 %v1434, %v1433
  %v1461 = vpack.c.b16 %v1436, %v1435
  %v1463 = vsel %vm206, %v1437, 0
  %v1466 = vsel %vm206, %v1438, 0
  %v1469 = vsel %vm206, %v1439, 0
  %v1472 = vsel %vm206, %v1440, 0
  %v1475 = vsel %vm206, %v1441, 0
  %v1478 = vsel %vm206, %v1442, 0
  %v1481 = vsel %vm206, %v1443, 0
  %v1484 = vsel %vm206, %v1444, 0
  %v1487 = vsel %vm206, %v1445, 0
  %v1490 = vsel %vm206, %v1446, 0
  %v1493 = vsel %vm206, %v1447, 0
  %v1496 = vsel %vm206, %v1448, 0
  %v1499 = vsel %vm206, %v1449, 0
  %v1502 = vsel %vm206, %v1450, 0
  %v1505 = vsel %vm206, %v1451, 0
  %v1508 = vsel %vm206, %v1452, 0
  %v1511 = vsel %vm206, %v1453, 0
  %v1514 = vsel %vm206, %v1454, 0
  %v1517 = vsel %vm206, %v1455, 0
  %v1520 = vsel %vm206, %v1456, 0
  %v1523 = vsel %vm206, %v1457, 0
  %v1526 = vsel %vm206, %v1458, 0
  %v1529 = vsel %vm206, %v1459, 0
  %v1532 = vsel %vm206, %v1460, 0
  %v1535 = vsel %vm206, %v1461, 0
  %1537 = vmatpush.bf16.msra.mxu0 0
  %1538 = vmatpush.bf16.msra.mxu0 0
  %1539 = vmatpush.bf16.msra.mxu0 0
  %1540 = vmatpush.bf16.msra.mxu0 0
  %1541 = vmatpush.bf16.msra.mxu0 0
  %1542 = vmatpush.bf16.msra.mxu0 0
  %1543 = vmatpush.bf16.msra.mxu0 %v203
  %1544 = vmatpush.bf16.msra.mxu0 %v202
  %1545 = vmatmul.bf16.gmra.mxu0 %v1463
  %v1546 = vpop.f32.mrf.mxu0
  %v1547 = vadd.f32 0.0, %v1546
  %v1548 = vpop.f32.mrf.mxu0
  %v1549 = vadd.f32 0.0, %v1548
  %1550 = vmatmul.bf16.gmra.mxu0 %v1466
  %v1551 = vpop.f32.mrf.mxu0
  %v1552 = vadd.f32 0.0, %v1551
  %v1553 = vpop.f32.mrf.mxu0
  %v1554 = vadd.f32 0.0, %v1553
  %1555 = vmatmul.bf16.gmra.mxu0 %v1469
  %v1556 = vpop.f32.mrf.mxu0
  %v1557 = vadd.f32 0.0, %v1556
  %v1558 = vpop.f32.mrf.mxu0
  %v1559 = vadd.f32 0.0, %v1558
  %1560 = vmatmul.bf16.gmra.mxu0 %v1472
  %v1561 = vpop.f32.mrf.mxu0
  %v1562 = vadd.f32 0.0, %v1561
  %v1563 = vpop.f32.mrf.mxu0
  %v1564 = vadd.f32 0.0, %v1563
  %1565 = vmatmul.bf16.gmra.mxu0 %v1475
  %v1566 = vpop.f32.mrf.mxu0
  %v1567 = vadd.f32 0.0, %v1566
  %v1568 = vpop.f32.mrf.mxu0
  %v1569 = vadd.f32 0.0, %v1568
  %1570 = vmatmul.bf16.gmra.mxu0 %v1478
  %v1571 = vpop.f32.mrf.mxu0
  %v1572 = vadd.f32 0.0, %v1571
  %v1573 = vpop.f32.mrf.mxu0
  %v1574 = vadd.f32 0.0, %v1573
  %1575 = vmatmul.bf16.gmra.mxu0 %v1481
  %v1576 = vpop.f32.mrf.mxu0
  %v1577 = vadd.f32 0.0, %v1576
  %v1578 = vpop.f32.mrf.mxu0
  %v1579 = vadd.f32 0.0, %v1578
  %1580 = vmatmul.bf16.gmra.mxu0 %v1484
  %v1581 = vpop.f32.mrf.mxu0
  %v1582 = vadd.f32 0.0, %v1581
  %v1583 = vpop.f32.mrf.mxu0
  %v1584 = vadd.f32 0.0, %v1583
  %1585 = vmatmul.bf16.gmra.mxu0 %v1487
  %v1586 = vpop.f32.mrf.mxu0
  %v1587 = vadd.f32 0.0, %v1586
  %v1588 = vpop.f32.mrf.mxu0
  %v1589 = vadd.f32 0.0, %v1588
  %1590 = vmatmul.bf16.gmra.mxu0 %v1490
  %v1591 = vpop.f32.mrf.mxu0
  %v1592 = vadd.f32 0.0, %v1591
  %v1593 = vpop.f32.mrf.mxu0
  %v1594 = vadd.f32 0.0, %v1593
  %1595 = vmatmul.bf16.gmra.mxu0 %v1493
  %v1596 = vpop.f32.mrf.mxu0
  %v1597 = vadd.f32 0.0, %v1596
  %v1598 = vpop.f32.mrf.mxu0
  %v1599 = vadd.f32 0.0, %v1598
  %1600 = vmatmul.bf16.gmra.mxu0 %v1496
  %v1601 = vpop.f32.mrf.mxu0
  %v1602 = vadd.f32 0.0, %v1601
  %v1603 = vpop.f32.mrf.mxu0
  %v1604 = vadd.f32 0.0, %v1603
  %1605 = vmatmul.bf16.gmra.mxu0 %v1499
  %v1606 = vpop.f32.mrf.mxu0
  %v1607 = vadd.f32 0.0, %v1606
  %v1608 = vpop.f32.mrf.mxu0
  %v1609 = vadd.f32 0.0, %v1608
  %1610 = vmatmul.bf16.gmra.mxu0 %v1502
  %v1611 = vpop.f32.mrf.mxu0
  %v1612 = vadd.f32 0.0, %v1611
  %v1613 = vpop.f32.mrf.mxu0
  %v1614 = vadd.f32 0.0, %v1613
  %1615 = vmatmul.bf16.gmra.mxu0 %v1505
  %v1616 = vpop.f32.mrf.mxu0
  %v1617 = vadd.f32 0.0, %v1616
  %v1618 = vpop.f32.mrf.mxu0
  %v1619 = vadd.f32 0.0, %v1618
  %1620 = vmatmul.bf16.gmra.mxu0 %v1508
  %v1621 = vpop.f32.mrf.mxu0
  %v1622 = vadd.f32 0.0, %v1621
  %v1623 = vpop.f32.mrf.mxu0
  %v1624 = vadd.f32 0.0, %v1623
  %1625 = vmatmul.bf16.gmra.mxu0 %v1511
  %v1626 = vpop.f32.mrf.mxu0
  %v1627 = vadd.f32 0.0, %v1626
  %v1628 = vpop.f32.mrf.mxu0
  %v1629 = vadd.f32 0.0, %v1628
  %1630 = vmatmul.bf16.gmra.mxu0 %v1514
  %v1631 = vpop.f32.mrf.mxu0
  %v1632 = vadd.f32 0.0, %v1631
  %v1633 = vpop.f32.mrf.mxu0
  %v1634 = vadd.f32 0.0, %v1633
  %1635 = vmatmul.bf16.gmra.mxu0 %v1517
  %v1636 = vpop.f32.mrf.mxu0
  %v1637 = vadd.f32 0.0, %v1636
  %v1638 = vpop.f32.mrf.mxu0
  %v1639 = vadd.f32 0.0, %v1638
  %1640 = vmatmul.bf16.gmra.mxu0 %v1520
  %v1641 = vpop.f32.mrf.mxu0
  %v1642 = vadd.f32 0.0, %v1641
  %v1643 = vpop.f32.mrf.mxu0
  %v1644 = vadd.f32 0.0, %v1643
  %1645 = vmatmul.bf16.gmra.mxu0 %v1523
  %v1646 = vpop.f32.mrf.mxu0
  %v1647 = vadd.f32 0.0, %v1646
  %v1648 = vpop.f32.mrf.mxu0
  %v1649 = vadd.f32 0.0, %v1648
  %1650 = vmatmul.bf16.gmra.mxu0 %v1526
  %v1651 = vpop.f32.mrf.mxu0
  %v1652 = vadd.f32 0.0, %v1651
  %v1653 = vpop.f32.mrf.mxu0
  %v1654 = vadd.f32 0.0, %v1653
  %1655 = vmatmul.bf16.gmra.mxu0 %v1529
  %v1656 = vpop.f32.mrf.mxu0
  %v1657 = vadd.f32 0.0, %v1656
  %v1658 = vpop.f32.mrf.mxu0
  %v1659 = vadd.f32 0.0, %v1658
  %1660 = vmatmul.bf16.gmra.mxu0 %v1532
  %v1661 = vpop.f32.mrf.mxu0
  %v1662 = vadd.f32 0.0, %v1661
  %v1663 = vpop.f32.mrf.mxu0
  %v1664 = vadd.f32 0.0, %v1663
  %1665 = vmatmul.bf16.gmra.mxu0 %v1535
  %v1666 = vpop.f32.mrf.mxu0
  %v1667 = vadd.f32 0.0, %v1666
  %v1668 = vpop.f32.mrf.mxu0
  %v1669 = vadd.f32 0.0, %v1668
  %1670 = vdwg.mxu0
  %v1671 = vmax.f32 %v1236, %v1547
  %v1672 = vmax.f32 %v1237, %v1549
  %v1673 = vmax.f32 %v1238, %v1552
  %v1674 = vmax.f32 %v1239, %v1554
  %v1675 = vmax.f32 %v1240, %v1557
  %v1676 = vmax.f32 %v1241, %v1559
  %v1677 = vmax.f32 %v1242, %v1562
  %v1678 = vmax.f32 %v1243, %v1564
  %v1679 = vmax.f32 %v1244, %v1567
  %v1680 = vmax.f32 %v1245, %v1569
  %v1681 = vmax.f32 %v1246, %v1572
  %v1682 = vmax.f32 %v1247, %v1574
  %v1683 = vmax.f32 %v1248, %v1577
  %v1684 = vmax.f32 %v1249, %v1579
  %v1685 = vmax.f32 %v1250, %v1582
  %v1686 = vmax.f32 %v1251, %v1584
  %v1687 = vmax.f32 %v1252, %v1587
  %v1688 = vmax.f32 %v1253, %v1589
  %v1689 = vmax.f32 %v1254, %v1592
  %v1690 = vmax.f32 %v1255, %v1594
  %v1691 = vmax.f32 %v1256, %v1597
  %v1692 = vmax.f32 %v1257, %v1599
  %v1693 = vmax.f32 %v1258, %v1602
  %v1694 = vmax.f32 %v1259, %v1604
  %v1695 = vmax.f32 %v1260, %v1607
  %v1696 = vmax.f32 %v1261, %v1609
  %v1697 = vmax.f32 %v1262, %v1612
  %v1698 = vmax.f32 %v1263, %v1614
  %v1699 = vmax.f32 %v1264, %v1617
  %v1700 = vmax.f32 %v1265, %v1619
  %v1701 = vmax.f32 %v1266, %v1622
  %v1702 = vmax.f32 %v1267, %v1624
  %v1703 = vmax.f32 %v1268, %v1627
  %v1704 = vmax.f32 %v1269, %v1629
  %v1705 = vmax.f32 %v1270, %v1632
  %v1706 = vmax.f32 %v1271, %v1634
  %v1707 = vmax.f32 %v1272, %v1637
  %v1708 = vmax.f32 %v1273, %v1639
  %v1709 = vmax.f32 %v1274, %v1642
  %v1710 = vmax.f32 %v1275, %v1644
  %v1711 = vmax.f32 %v1276, %v1647
  %v1712 = vmax.f32 %v1277, %v1649
  %v1713 = vmax.f32 %v1278, %v1652
  %v1714 = vmax.f32 %v1279, %v1654
  %v1715 = vmax.f32 %v1280, %v1657
  %v1716 = vmax.f32 %v1281, %v1659
  %v1717 = vmax.f32 %v1282, %v1662
  %v1718 = vmax.f32 %v1283, %v1664
  %v1719 = vmax.f32 %v1284, %v1667
  %v1720 = vmax.f32 %v1285, %v1669
  %v1721 = vld [vmem:[%s2] sm:$0x1]
  %v1723 = vperm.slane %v1721, 0
  %v1725 = vadd.f32 %v1671, %v1723
  %v1726 = vadd.f32 %v1672, %v1723
  %v1727 = vadd.f32 %v1673, %v1723
  %v1728 = vadd.f32 %v1674, %v1723
  %v1729 = vadd.f32 %v1675, %v1723
  %v1730 = vadd.f32 %v1676, %v1723
  %v1731 = vadd.f32 %v1677, %v1723
  %v1732 = vadd.f32 %v1678, %v1723
  %v1733 = vadd.f32 %v1679, %v1723
  %v1734 = vadd.f32 %v1680, %v1723
  %v1735 = vadd.f32 %v1681, %v1723
  %v1736 = vadd.f32 %v1682, %v1723
  %v1737 = vadd.f32 %v1683, %v1723
  %v1738 = vadd.f32 %v1684, %v1723
  %v1739 = vadd.f32 %v1685, %v1723
  %v1740 = vadd.f32 %v1686, %v1723
  %v1741 = vadd.f32 %v1687, %v1723
  %v1742 = vadd.f32 %v1688, %v1723
  %v1743 = vadd.f32 %v1689, %v1723
  %v1744 = vadd.f32 %v1690, %v1723
  %v1745 = vadd.f32 %v1691, %v1723
  %v1746 = vadd.f32 %v1692, %v1723
  %v1747 = vadd.f32 %v1693, %v1723
  %v1748 = vadd.f32 %v1694, %v1723
  %v1749 = vadd.f32 %v1695, %v1723
  %v1750 = vadd.f32 %v1696, %v1723
  %v1751 = vadd.f32 %v1697, %v1723
  %v1752 = vadd.f32 %v1698, %v1723
  %v1753 = vadd.f32 %v1699, %v1723
  %v1754 = vadd.f32 %v1700, %v1723
  %v1755 = vadd.f32 %v1701, %v1723
  %v1756 = vadd.f32 %v1702, %v1723
  %v1757 = vadd.f32 %v1703, %v1723
  %v1758 = vadd.f32 %v1704, %v1723
  %v1759 = vadd.f32 %v1705, %v1723
  %v1760 = vadd.f32 %v1706, %v1723
  %v1761 = vadd.f32 %v1707, %v1723
  %v1762 = vadd.f32 %v1708, %v1723
  %v1763 = vadd.f32 %v1709, %v1723
  %v1764 = vadd.f32 %v1710, %v1723
  %v1765 = vadd.f32 %v1711, %v1723
  %v1766 = vadd.f32 %v1712, %v1723
  %v1767 = vadd.f32 %v1713, %v1723
  %v1768 = vadd.f32 %v1714, %v1723
  %v1769 = vadd.f32 %v1715, %v1723
  %v1770 = vadd.f32 %v1716, %v1723
  %v1771 = vadd.f32 %v1717, %v1723
  %v1772 = vadd.f32 %v1718, %v1723
  %v1773 = vadd.f32 %v1719, %v1723
  %v1774 = vadd.f32 %v1720, %v1723
  %v1775 = vmax.f32 %v1725, 0.0
  %v1776 = vmax.f32 %v1726, 0.0
  %v1777 = vmax.f32 %v1727, 0.0
  %v1778 = vmax.f32 %v1728, 0.0
  %v1779 = vmax.f32 %v1729, 0.0
  %v1780 = vmax.f32 %v1730, 0.0
  %v1781 = vmax.f32 %v1731, 0.0
  %v1782 = vmax.f32 %v1732, 0.0
  %v1783 = vmax.f32 %v1733, 0.0
  %v1784 = vmax.f32 %v1734, 0.0
  %v1785 = vmax.f32 %v1735, 0.0
  %v1786 = vmax.f32 %v1736, 0.0
  %v1787 = vmax.f32 %v1737, 0.0
  %v1788 = vmax.f32 %v1738, 0.0
  %v1789 = vmax.f32 %v1739, 0.0
  %v1790 = vmax.f32 %v1740, 0.0
  %v1791 = vmax.f32 %v1741, 0.0
  %v1792 = vmax.f32 %v1742, 0.0
  %v1793 = vmax.f32 %v1743, 0.0
  %v1794 = vmax.f32 %v1744, 0.0
  %v1795 = vmax.f32 %v1745, 0.0
  %v1796 = vmax.f32 %v1746, 0.0
  %v1797 = vmax.f32 %v1747, 0.0
  %v1798 = vmax.f32 %v1748, 0.0
  %v1799 = vmax.f32 %v1749, 0.0
  %v1800 = vmax.f32 %v1750, 0.0
  %v1801 = vmax.f32 %v1751, 0.0
  %v1802 = vmax.f32 %v1752, 0.0
  %v1803 = vmax.f32 %v1753, 0.0
  %v1804 = vmax.f32 %v1754, 0.0
  %v1805 = vmax.f32 %v1755, 0.0
  %v1806 = vmax.f32 %v1756, 0.0
  %v1807 = vmax.f32 %v1757, 0.0
  %v1808 = vmax.f32 %v1758, 0.0
  %v1809 = vmax.f32 %v1759, 0.0
  %v1810 = vmax.f32 %v1760, 0.0
  %v1811 = vmax.f32 %v1761, 0.0
  %v1812 = vmax.f32 %v1762, 0.0
  %v1813 = vmax.f32 %v1763, 0.0
  %v1814 = vmax.f32 %v1764, 0.0
  %v1815 = vmax.f32 %v1765, 0.0
  %v1816 = vmax.f32 %v1766, 0.0
  %v1817 = vmax.f32 %v1767, 0.0
  %v1818 = vmax.f32 %v1768, 0.0
  %v1819 = vmax.f32 %v1769, 0.0
  %v1820 = vmax.f32 %v1770, 0.0
  %v1821 = vmax.f32 %v1771, 0.0
  %v1822 = vmax.f32 %v1772, 0.0
  %v1823 = vmax.f32 %v1773, 0.0
  %v1824 = vmax.f32 %v1774, 0.0
  %v1825 = vpack.c.bf16 %v1775, %v1775
  %v1826 = vpack.c.bf16 %v1776, %v1776
  %v1827 = vpack.c.bf16 %v1777, %v1777
  %v1828 = vpack.c.bf16 %v1778, %v1778
  %v1829 = vpack.c.bf16 %v1779, %v1779
  %v1830 = vpack.c.bf16 %v1780, %v1780
  %v1831 = vpack.c.bf16 %v1781, %v1781
  %v1832 = vpack.c.bf16 %v1782, %v1782
  %v1833 = vpack.c.bf16 %v1783, %v1783
  %v1834 = vpack.c.bf16 %v1784, %v1784
  %v1835 = vpack.c.bf16 %v1785, %v1785
  %v1836 = vpack.c.bf16 %v1786, %v1786
  %v1837 = vpack.c.bf16 %v1787, %v1787
  %v1838 = vpack.c.bf16 %v1788, %v1788
  %v1839 = vpack.c.bf16 %v1789, %v1789
  %v1840 = vpack.c.bf16 %v1790, %v1790
  %v1841 = vpack.c.bf16 %v1791, %v1791
  %v1842 = vpack.c.bf16 %v1792, %v1792
  %v1843 = vpack.c.bf16 %v1793, %v1793
  %v1844 = vpack.c.bf16 %v1794, %v1794
  %v1845 = vpack.c.bf16 %v1795, %v1795
  %v1846 = vpack.c.bf16 %v1796, %v1796
  %v1847 = vpack.c.bf16 %v1797, %v1797
  %v1848 = vpack.c.bf16 %v1798, %v1798
  %v1849 = vpack.c.bf16 %v1799, %v1799
  %v1850 = vpack.c.bf16 %v1800, %v1800
  %v1851 = vpack.c.bf16 %v1801, %v1801
  %v1852 = vpack.c.bf16 %v1802, %v1802
  %v1853 = vpack.c.bf16 %v1803, %v1803
  %v1854 = vpack.c.bf16 %v1804, %v1804
  %v1855 = vpack.c.bf16 %v1805, %v1805
  %v1856 = vpack.c.bf16 %v1806, %v1806
  %v1857 = vpack.c.bf16 %v1807, %v1807
  %v1858 = vpack.c.bf16 %v1808, %v1808
  %v1859 = vpack.c.bf16 %v1809, %v1809
  %v1860 = vpack.c.bf16 %v1810, %v1810
  %v1861 = vpack.c.bf16 %v1811, %v1811
  %v1862 = vpack.c.bf16 %v1812, %v1812
  %v1863 = vpack.c.bf16 %v1813, %v1813
  %v1864 = vpack.c.bf16 %v1814, %v1814
  %v1865 = vpack.c.bf16 %v1815, %v1815
  %v1866 = vpack.c.bf16 %v1816, %v1816
  %v1867 = vpack.c.bf16 %v1817, %v1817
  %v1868 = vpack.c.bf16 %v1818, %v1818
  %v1869 = vpack.c.bf16 %v1819, %v1819
  %v1870 = vpack.c.bf16 %v1820, %v1820
  %v1871 = vpack.c.bf16 %v1821, %v1821
  %v1872 = vpack.c.bf16 %v1822, %v1822
  %v1873 = vpack.c.bf16 %v1823, %v1823
  %v1874 = vpack.c.bf16 %v1824, %v1824
  %1875 = vst [vmem:[%s3] sm:$0xf] %v1825
  %1876 = vst [vmem:[%s3 + $0x4] sm:$0xf] %v1826
  %1877 = vst [vmem:[%s3 + $0x8] sm:$0xf] %v1827
  %1878 = vst [vmem:[%s3 + $0xc] sm:$0xf] %v1828
  %1879 = vst [vmem:[%s3 + $0x10] sm:$0xf] %v1829
  %1880 = vst [vmem:[%s3 + $0x14] sm:$0xf] %v1830
  %1881 = vst [vmem:[%s3 + $0x18] sm:$0xf] %v1831
  %1882 = vst [vmem:[%s3 + $0x1c] sm:$0xf] %v1832
  %1883 = vst [vmem:[%s3 + $0x20] sm:$0xf] %v1833
  %1884 = vst [vmem:[%s3 + $0x24] sm:$0xf] %v1834
  %1885 = vst [vmem:[%s3 + $0x28] sm:$0xf] %v1835
  %1886 = vst [vmem:[%s3 + $0x2c] sm:$0xf] %v1836
  %1887 = vst [vmem:[%s3 + $0x30] sm:$0xf] %v1837
  %1888 = vst [vmem:[%s3 + $0x34] sm:$0xf] %v1838
  %1889 = vst [vmem:[%s3 + $0x38] sm:$0xf] %v1839
  %1890 = vst [vmem:[%s3 + $0x3c] sm:$0xf] %v1840
  %1891 = vst [vmem:[%s3 + $0x40] sm:$0xf] %v1841
  %1892 = vst [vmem:[%s3 + $0x44] sm:$0xf] %v1842
  %1893 = vst [vmem:[%s3 + $0x48] sm:$0xf] %v1843
  %1894 = vst [vmem:[%s3 + $0x4c] sm:$0xf] %v1844
  %1895 = vst [vmem:[%s3 + $0x50] sm:$0xf] %v1845
  %1896 = vst [vmem:[%s3 + $0x54] sm:$0xf] %v1846
  %1897 = vst [vmem:[%s3 + $0x58] sm:$0xf] %v1847
  %1898 = vst [vmem:[%s3 + $0x5c] sm:$0xf] %v1848
  %1899 = vst [vmem:[%s3 + $0x60] sm:$0xf] %v1849
  %1900 = vst [vmem:[%s3 + $0x64] sm:$0xf] %v1850
  %1901 = vst [vmem:[%s3 + $0x68] sm:$0xf] %v1851
  %1902 = vst [vmem:[%s3 + $0x6c] sm:$0xf] %v1852
  %1903 = vst [vmem:[%s3 + $0x70] sm:$0xf] %v1853
  %1904 = vst [vmem:[%s3 + $0x74] sm:$0xf] %v1854
  %1905 = vst [vmem:[%s3 + $0x78] sm:$0xf] %v1855
  %1906 = vst [vmem:[%s3 + $0x7c] sm:$0xf] %v1856
  %1907 = vst [vmem:[%s3 + $0x80] sm:$0xf] %v1857
  %1908 = vst [vmem:[%s3 + $0x84] sm:$0xf] %v1858
  %1909 = vst [vmem:[%s3 + $0x88] sm:$0xf] %v1859
  %1910 = vst [vmem:[%s3 + $0x8c] sm:$0xf] %v1860
  %1911 = vst [vmem:[%s3 + $0x90] sm:$0xf] %v1861
  %1912 = vst [vmem:[%s3 + $0x94] sm:$0xf] %v1862
  %1913 = vst [vmem:[%s3 + $0x98] sm:$0xf] %v1863
  %1914 = vst [vmem:[%s3 + $0x9c] sm:$0xf] %v1864
  %1915 = vst [vmem:[%s3 + $0xa0] sm:$0xf] %v1865
  %1916 = vst [vmem:[%s3 + $0xa4] sm:$0xf] %v1866
  %1917 = vst [vmem:[%s3 + $0xa8] sm:$0xf] %v1867
  %1918 = vst [vmem:[%s3 + $0xac] sm:$0xf] %v1868
  %1919 = vst [vmem:[%s3 + $0xb0] sm:$0xf] %v1869
  %1920 = vst [vmem:[%s3 + $0xb4] sm:$0xf] %v1870
  %1921 = vst [vmem:[%s3 + $0xb8] sm:$0xf] %v1871
  %1922 = vst [vmem:[%s3 + $0xbc] sm:$0xf] %v1872
  %1923 = vst [vmem:[%s3 + $0xc0] sm:$0xf] %v1873
  %1924 = vst [vmem:[%s3 + $0xc4] sm:$0xf] %v1874
  // Predicated region
  $region14: #{cnn_forward.3} parent=0 // pred_check
    _
  $region15: #{cnn_forward.3} parent=0 // pred_check_branch
    %1926 = sbr.rel (0) target = $region17
  $region16: #{cnn_forward.3} parent=0 // pred_region
    _
  $region17: #{cnn_forward.3} parent=0 // pred_fallthru
    _
  // Predicated region
  $region18: #{cnn_forward.3} parent=0 // pred_check
    _
  $region19: #{cnn_forward.3} parent=0 // pred_check_branch
    %1928 = sbr.rel (0) target = $region21
  $region20: #{cnn_forward.3} parent=0 // pred_region
    _
  $region21: #{cnn_forward.3} parent=0 // pred_fallthru
    _

// kernel: cnn_forward.4
$region0: #{cnn_forward.4}
  #allocation0 [shape = 'u32[]', space=smem, size = 0x4, offset = 0x4, fixed_abs, tag = 'smem constant byte address 0x4 - core index']
  #allocation1 [shape = 'u32[72,128]{1,0:T(1,128)}', space=vmem, size = 0x9000, scoped, tag = 'internal scratch']
  %s0 = inlined_call_operand.vmem [shape: bf16[4,112,160], index: 0, kind: input, shape index: {}]
  %s1 = inlined_call_operand.vmem [shape: bf16[160,128], index: 1, kind: input, shape index: {}]
  %s2 = inlined_call_operand.vmem [shape: f32[1,128], index: 2, kind: input, shape index: {}]
  %s3 = inlined_call_operand.vmem [shape: bf16[112,128], index: 3, kind: output, shape index: {}]
  %s4 = sld [smem:[#allocation0]]
  $region22: #{cnn_forward.4} parent=0
    _
  %s6 = ssub.s32 1, %s4
  %s7 = scalar_select 0, %s6, %s4
  // Predicated region
  $region2: #{cnn_forward.4} parent=0 // pred_check
    _
  $region3: #{cnn_forward.4} parent=0 // pred_check_branch
    %9 = sbr.rel (0) target = $region5
  $region4: #{cnn_forward.4} parent=0 // pred_region
    _
  $region5: #{cnn_forward.4} parent=0 // pred_fallthru
    _
  // Predicated region
  $region6: #{cnn_forward.4} parent=0 // pred_check
    _
  $region7: #{cnn_forward.4} parent=0 // pred_check_branch
    %11 = sbr.rel (0) target = $region9
  $region8: #{cnn_forward.4} parent=0 // pred_region
    _
  $region9: #{cnn_forward.4} parent=0 // pred_fallthru
    _
  // Predicated region
  $region10: #{cnn_forward.4} parent=0 // pred_check
    _
  $region11: #{cnn_forward.4} parent=0 // pred_check_branch
    %13 = sbr.rel (0) target = $region13
  $region12: #{cnn_forward.4} parent=0 // pred_region
    _
  $region13: #{cnn_forward.4} parent=0 // pred_fallthru
    _
  %v15 = vld [vmem:[%s1] sm:$0xf]
  %v16 = vld [vmem:[%s1 + $0x4] sm:$0xf]
  %v17 = vld [vmem:[%s1 + $0x8] sm:$0xf]
  %v18 = vld [vmem:[%s1 + $0xc] sm:$0xf]
  %v19 = vld [vmem:[%s1 + $0x10] sm:$0xf]
  %v20 = vld [vmem:[%s1 + $0x14] sm:$0xf]
  %v21 = vld [vmem:[%s1 + $0x18] sm:$0xf]
  %v22 = vld [vmem:[%s1 + $0x1c] sm:$0xf]
  %v23 = vld [vmem:[%s1 + $0x20] sm:$0xf]
  %v24 = vld [vmem:[%s1 + $0x24] sm:$0xf]
  %v25 = vld [vmem:[%s1 + $0x28] sm:$0xf]
  %v26 = vld [vmem:[%s1 + $0x2c] sm:$0xf]
  %v27 = vld [vmem:[%s1 + $0x30] sm:$0xf]
  %v28 = vld [vmem:[%s1 + $0x34] sm:$0xf]
  %v29 = vld [vmem:[%s1 + $0x38] sm:$0xf]
  %v30 = vld [vmem:[%s1 + $0x3c] sm:$0xf]
  %v31 = vld [vmem:[%s1 + $0x40] sm:$0xf]
  %v32 = vld [vmem:[%s1 + $0x44] sm:$0xf]
  %v33 = vld [vmem:[%s1 + $0x48] sm:$0xf]
  %v34 = vld [vmem:[%s1 + $0x4c] sm:$0xf]
  %v35 = vld [vmem:[%s0] sm:$0xff]
  %v36 = vld [vmem:[%s0 + $0x8] sm:$0xff]
  %v37 = vld [vmem:[%s0 + $0x10] sm:$0xff]
  %v38 = vld [vmem:[%s0 + $0x18] sm:$0xff]
  %v39 = vld [vmem:[%s0 + $0x20] sm:$0xff]
  %v40 = vld [vmem:[%s0 + $0x28] sm:$0xff]
  %v41 = vld [vmem:[%s0 + $0x30] sm:$0xff]
  %v42 = vld [vmem:[%s0 + $0x38] sm:$0xff]
  %v43 = vld [vmem:[%s0 + $0x40] sm:$0xff]
  %v44 = vld [vmem:[%s0 + $0x48] sm:$0xff]
  %v45 = vld [vmem:[%s0 + $0x50] sm:$0xff]
  %v46 = vld [vmem:[%s0 + $0x58] sm:$0xff]
  %v47 = vld [vmem:[%s0 + $0x60] sm:$0xff]
  %v48 = vld [vmem:[%s0 + $0x68] sm:$0xff]
  %v63 = vunpack.c.l.b16 %v35
  %v64 = vunpack.c.h.b16 %v35
  %v65 = vunpack.c.l.b16 %v36
  %v66 = vunpack.c.h.b16 %v36
  %v67 = vunpack.c.l.b16 %v37
  %v68 = vunpack.c.h.b16 %v37
  %v69 = vunpack.c.l.b16 %v38
  %v70 = vunpack.c.h.b16 %v38
  %v71 = vunpack.c.l.b16 %v39
  %v72 = vunpack.c.h.b16 %v39
  %v73 = vunpack.c.l.b16 %v40
  %v74 = vunpack.c.h.b16 %v40
  %v75 = vunpack.c.l.b16 %v41
  %v76 = vunpack.c.h.b16 %v41
  %v77 = vunpack.c.l.b16 %v42
  %v78 = vunpack.c.h.b16 %v42
  %v79 = vunpack.c.l.b16 %v43
  %v80 = vunpack.c.h.b16 %v43
  %v81 = vunpack.c.l.b16 %v44
  %v82 = vunpack.c.h.b16 %v44
  %v83 = vunpack.c.l.b16 %v45
  %v84 = vunpack.c.h.b16 %v45
  %v85 = vunpack.c.l.b16 %v46
  %v86 = vunpack.c.h.b16 %v46
  %v87 = vunpack.c.l.b16 %v47
  %v88 = vunpack.c.h.b16 %v47
  %v89 = vunpack.c.l.b16 %v48
  %v90 = vunpack.c.h.b16 %v48
  %v91 = vpack.c.b16 %v65, %v63
  %v92 = vpack.c.b16 %v66, %v64
  %v93 = vpack.c.b16 %v69, %v67
  %v94 = vpack.c.b16 %v70, %v68
  %v95 = vpack.c.b16 %v73, %v71
  %v96 = vpack.c.b16 %v74, %v72
  %v97 = vpack.c.b16 %v77, %v75
  %v98 = vpack.c.b16 %v78, %v76
  %v99 = vpack.c.b16 %v81, %v79
  %v100 = vpack.c.b16 %v82, %v80
  %v101 = vpack.c.b16 %v85, %v83
  %v102 = vpack.c.b16 %v86, %v84
  %v103 = vpack.c.b16 %v89, %v87
  %v104 = vpack.c.b16 %v90, %v88
  %v132 = vunpack.c.l.b16 %v15
  %v133 = vunpack.c.l.b16 %v16
  %v134 = vunpack.c.l.b16 %v17
  %v135 = vunpack.c.l.b16 %v18
  %v136 = vunpack.c.l.b16 %v19
  %v137 = vunpack.c.l.b16 %v20
  %v138 = vunpack.c.l.b16 %v21
  %v139 = vunpack.c.l.b16 %v22
  %v140 = vunpack.c.l.b16 %v23
  %v141 = vunpack.c.l.b16 %v24
  %v142 = vunpack.c.l.b16 %v25
  %v143 = vunpack.c.l.b16 %v26
  %v144 = vunpack.c.l.b16 %v27
  %v145 = vunpack.c.l.b16 %v28
  %v146 = vunpack.c.l.b16 %v29
  %v147 = vunpack.c.l.b16 %v30
  %v148 = vunpack.c.l.b16 %v31
  %v149 = vunpack.c.l.b16 %v32
  %v150 = vunpack.c.l.b16 %v33
  %v151 = vunpack.c.l.b16 %v34
  %v152 = vpack.c.b16 %v133, %v132
  %v153 = vpack.c.b16 %v135, %v134
  %v154 = vpack.c.b16 %v137, %v136
  %v155 = vpack.c.b16 %v139, %v138
  %v156 = vpack.c.b16 %v141, %v140
  %v157 = vpack.c.b16 %v143, %v142
  %v158 = vpack.c.b16 %v145, %v144
  %v159 = vpack.c.b16 %v147, %v146
  %v160 = vpack.c.b16 %v149, %v148
  %v161 = vpack.c.b16 %v151, %v150
  %vm172 = vcmask 261120
  %v174 = vsel %vm172, %v92, 0
  %v177 = vsel %vm172, %v94, 0
  %v180 = vsel %vm172, %v96, 0
  %v183 = vsel %vm172, %v98, 0
  %v186 = vsel %vm172, %v100, 0
  %v189 = vsel %vm172, %v102, 0
  %v192 = vsel %vm172, %v104, 0
  %194 = vmatpush.bf16.msra.mxu0 %v159
  %195 = vmatpush.bf16.msra.mxu0 %v158
  %196 = vmatpush.bf16.msra.mxu0 %v157
  %197 = vmatpush.bf16.msra.mxu0 %v156
  %198 = vmatpush.bf16.msra.mxu0 %v155
  %199 = vmatpush.bf16.msra.mxu0 %v154
  %200 = vmatpush.bf16.msra.mxu0 %v153
  %201 = vmatpush.bf16.msra.mxu0 %v152
  %202 = vmatmul.bf16.gmra.mxu0 %v91
  %v203 = vpop.f32.mrf.mxu0
  %v204 = vadd.f32 0.0, %v203
  %v205 = vpop.f32.mrf.mxu0
  %v206 = vadd.f32 0.0, %v205
  %207 = vmatmul.bf16.gmra.mxu0 %v93
  %v208 = vpop.f32.mrf.mxu0
  %v209 = vadd.f32 0.0, %v208
  %v210 = vpop.f32.mrf.mxu0
  %v211 = vadd.f32 0.0, %v210
  %212 = vmatmul.bf16.gmra.mxu0 %v95
  %v213 = vpop.f32.mrf.mxu0
  %v214 = vadd.f32 0.0, %v213
  %v215 = vpop.f32.mrf.mxu0
  %v216 = vadd.f32 0.0, %v215
  %217 = vmatmul.bf16.gmra.mxu0 %v97
  %v218 = vpop.f32.mrf.mxu0
  %v219 = vadd.f32 0.0, %v218
  %v220 = vpop.f32.mrf.mxu0
  %v221 = vadd.f32 0.0, %v220
  %222 = vmatmul.bf16.gmra.mxu0 %v99
  %v223 = vpop.f32.mrf.mxu0
  %v224 = vadd.f32 0.0, %v223
  %v225 = vpop.f32.mrf.mxu0
  %v226 = vadd.f32 0.0, %v225
  %227 = vmatmul.bf16.gmra.mxu0 %v101
  %v228 = vpop.f32.mrf.mxu0
  %v229 = vadd.f32 0.0, %v228
  %v230 = vpop.f32.mrf.mxu0
  %v231 = vadd.f32 0.0, %v230
  %232 = vmatmul.bf16.gmra.mxu0 %v103
  %v233 = vpop.f32.mrf.mxu0
  %v234 = vadd.f32 0.0, %v233
  %v235 = vpop.f32.mrf.mxu0
  %v236 = vadd.f32 0.0, %v235
  %237 = vdwg.mxu0
  %238 = vmatpush.bf16.msra.mxu0 0
  %239 = vmatpush.bf16.msra.mxu0 0
  %240 = vmatpush.bf16.msra.mxu0 0
  %241 = vmatpush.bf16.msra.mxu0 0
  %242 = vmatpush.bf16.msra.mxu0 0
  %243 = vmatpush.bf16.msra.mxu0 0
  %244 = vmatpush.bf16.msra.mxu0 %v161
  %245 = vmatpush.bf16.msra.mxu0 %v160
  %246 = vmatmul.bf16.gmra.mxu0 %v174
  %v247 = vpop.f32.mrf.mxu0
  %v248 = vadd.f32 %v204, %v247
  %v249 = vpop.f32.mrf.mxu0
  %v250 = vadd.f32 %v206, %v249
  %251 = vmatmul.bf16.gmra.mxu0 %v177
  %v252 = vpop.f32.mrf.mxu0
  %v253 = vadd.f32 %v209, %v252
  %v254 = vpop.f32.mrf.mxu0
  %v255 = vadd.f32 %v211, %v254
  %256 = vmatmul.bf16.gmra.mxu0 %v180
  %v257 = vpop.f32.mrf.mxu0
  %v258 = vadd.f32 %v214, %v257
  %v259 = vpop.f32.mrf.mxu0
  %v260 = vadd.f32 %v216, %v259
  %261 = vmatmul.bf16.gmra.mxu0 %v183
  %v262 = vpop.f32.mrf.mxu0
  %v263 = vadd.f32 %v219, %v262
  %v264 = vpop.f32.mrf.mxu0
  %v265 = vadd.f32 %v221, %v264
  %266 = vmatmul.bf16.gmra.mxu0 %v186
  %v267 = vpop.f32.mrf.mxu0
  %v268 = vadd.f32 %v224, %v267
  %v269 = vpop.f32.mrf.mxu0
  %v270 = vadd.f32 %v226, %v269
  %271 = vmatmul.bf16.gmra.mxu0 %v189
  %v272 = vpop.f32.mrf.mxu0
  %v273 = vadd.f32 %v229, %v272
  %v274 = vpop.f32.mrf.mxu0
  %v275 = vadd.f32 %v231, %v274
  %276 = vmatmul.bf16.gmra.mxu0 %v192
  %v277 = vpop.f32.mrf.mxu0
  %v278 = vadd.f32 %v234, %v277
  %v279 = vpop.f32.mrf.mxu0
  %v280 = vadd.f32 %v236, %v279
  %281 = vdwg.mxu0
  %s282 = scalar_lea.vmem %s0, 112
  %v283 = vld [vmem:[%s282] sm:$0xff]
  %v284 = vld [vmem:[%s282 + $0x8] sm:$0xff]
  %v285 = vld [vmem:[%s282 + $0x10] sm:$0xff]
  %v286 = vld [vmem:[%s282 + $0x18] sm:$0xff]
  %v287 = vld [vmem:[%s282 + $0x20] sm:$0xff]
  %v288 = vld [vmem:[%s282 + $0x28] sm:$0xff]
  %v289 = vld [vmem:[%s282 + $0x30] sm:$0xff]
  %v290 = vld [vmem:[%s282 + $0x38] sm:$0xff]
  %v291 = vld [vmem:[%s282 + $0x40] sm:$0xff]
  %v292 = vld [vmem:[%s282 + $0x48] sm:$0xff]
  %v293 = vld [vmem:[%s282 + $0x50] sm:$0xff]
  %v294 = vld [vmem:[%s282 + $0x58] sm:$0xff]
  %v295 = vld [vmem:[%s282 + $0x60] sm:$0xff]
  %v296 = vld [vmem:[%s282 + $0x68] sm:$0xff]
  %v311 = vunpack.c.l.b16 %v283
  %v312 = vunpack.c.h.b16 %v283
  %v313 = vunpack.c.l.b16 %v284
  %v314 = vunpack.c.h.b16 %v284
  %v315 = vunpack.c.l.b16 %v285
  %v316 = vunpack.c.h.b16 %v285
  %v317 = vunpack.c.l.b16 %v286
  %v318 = vunpack.c.h.b16 %v286
  %v319 = vunpack.c.l.b16 %v287
  %v320 = vunpack.c.h.b16 %v287
  %v321 = vunpack.c.l.b16 %v288
  %v322 = vunpack.c.h.b16 %v288
  %v323 = vunpack.c.l.b16 %v289
  %v324 = vunpack.c.h.b16 %v289
  %v325 = vunpack.c.l.b16 %v290
  %v326 = vunpack.c.h.b16 %v290
  %v327 = vunpack.c.l.b16 %v291
  %v328 = vunpack.c.h.b16 %v291
  %v329 = vunpack.c.l.b16 %v292
  %v330 = vunpack.c.h.b16 %v292
  %v331 = vunpack.c.l.b16 %v293
  %v332 = vunpack.c.h.b16 %v293
  %v333 = vunpack.c.l.b16 %v294
  %v334 = vunpack.c.h.b16 %v294
  %v335 = vunpack.c.l.b16 %v295
  %v336 = vunpack.c.h.b16 %v295
  %v337 = vunpack.c.l.b16 %v296
  %v338 = vunpack.c.h.b16 %v296
  %v339 = vpack.c.b16 %v313, %v311
  %v340 = vpack.c.b16 %v314, %v312
  %v341 = vpack.c.b16 %v317, %v315
  %v342 = vpack.c.b16 %v318, %v316
  %v343 = vpack.c.b16 %v321, %v319
  %v344 = vpack.c.b16 %v322, %v320
  %v345 = vpack.c.b16 %v325, %v323
  %v346 = vpack.c.b16 %v326, %v324
  %v347 = vpack.c.b16 %v329, %v327
  %v348 = vpack.c.b16 %v330, %v328
  %v349 = vpack.c.b16 %v333, %v331
  %v350 = vpack.c.b16 %v334, %v332
  %v351 = vpack.c.b16 %v337, %v335
  %v352 = vpack.c.b16 %v338, %v336
  %v361 = vsel %vm172, %v340, 0
  %v364 = vsel %vm172, %v342, 0
  %v367 = vsel %vm172, %v344, 0
  %v370 = vsel %vm172, %v346, 0
  %v373 = vsel %vm172, %v348, 0
  %v376 = vsel %vm172, %v350, 0
  %v379 = vsel %vm172, %v352, 0
  %381 = vmatpush.bf16.msra.mxu0 %v159
  %382 = vmatpush.bf16.msra.mxu0 %v158
  %383 = vmatpush.bf16.msra.mxu0 %v157
  %384 = vmatpush.bf16.msra.mxu0 %v156
  %385 = vmatpush.bf16.msra.mxu0 %v155
  %386 = vmatpush.bf16.msra.mxu0 %v154
  %387 = vmatpush.bf16.msra.mxu0 %v153
  %388 = vmatpush.bf16.msra.mxu0 %v152
  %389 = vmatmul.bf16.gmra.mxu0 %v339
  %v390 = vpop.f32.mrf.mxu0
  %v391 = vadd.f32 0.0, %v390
  %v392 = vpop.f32.mrf.mxu0
  %v393 = vadd.f32 0.0, %v392
  %394 = vmatmul.bf16.gmra.mxu0 %v341
  %v395 = vpop.f32.mrf.mxu0
  %v396 = vadd.f32 0.0, %v395
  %v397 = vpop.f32.mrf.mxu0
  %v398 = vadd.f32 0.0, %v397
  %399 = vmatmul.bf16.gmra.mxu0 %v343
  %v400 = vpop.f32.mrf.mxu0
  %v401 = vadd.f32 0.0, %v400
  %v402 = vpop.f32.mrf.mxu0
  %v403 = vadd.f32 0.0, %v402
  %404 = vmatmul.bf16.gmra.mxu0 %v345
  %v405 = vpop.f32.mrf.mxu0
  %v406 = vadd.f32 0.0, %v405
  %v407 = vpop.f32.mrf.mxu0
  %v408 = vadd.f32 0.0, %v407
  %409 = vmatmul.bf16.gmra.mxu0 %v347
  %v410 = vpop.f32.mrf.mxu0
  %v411 = vadd.f32 0.0, %v410
  %v412 = vpop.f32.mrf.mxu0
  %v413 = vadd.f32 0.0, %v412
  %414 = vmatmul.bf16.gmra.mxu0 %v349
  %v415 = vpop.f32.mrf.mxu0
  %v416 = vadd.f32 0.0, %v415
  %v417 = vpop.f32.mrf.mxu0
  %v418 = vadd.f32 0.0, %v417
  %419 = vmatmul.bf16.gmra.mxu0 %v351
  %v420 = vpop.f32.mrf.mxu0
  %v421 = vadd.f32 0.0, %v420
  %v422 = vpop.f32.mrf.mxu0
  %v423 = vadd.f32 0.0, %v422
  %424 = vdwg.mxu0
  %425 = vmatpush.bf16.msra.mxu0 0
  %426 = vmatpush.bf16.msra.mxu0 0
  %427 = vmatpush.bf16.msra.mxu0 0
  %428 = vmatpush.bf16.msra.mxu0 0
  %429 = vmatpush.bf16.msra.mxu0 0
  %430 = vmatpush.bf16.msra.mxu0 0
  %431 = vmatpush.bf16.msra.mxu0 %v161
  %432 = vmatpush.bf16.msra.mxu0 %v160
  %433 = vmatmul.bf16.gmra.mxu0 %v361
  %v434 = vpop.f32.mrf.mxu0
  %v435 = vadd.f32 %v391, %v434
  %v436 = vpop.f32.mrf.mxu0
  %v437 = vadd.f32 %v393, %v436
  %438 = vmatmul.bf16.gmra.mxu0 %v364
  %v439 = vpop.f32.mrf.mxu0
  %v440 = vadd.f32 %v396, %v439
  %v441 = vpop.f32.mrf.mxu0
  %v442 = vadd.f32 %v398, %v441
  %443 = vmatmul.bf16.gmra.mxu0 %v367
  %v444 = vpop.f32.mrf.mxu0
  %v445 = vadd.f32 %v401, %v444
  %v446 = vpop.f32.mrf.mxu0
  %v447 = vadd.f32 %v403, %v446
  %448 = vmatmul.bf16.gmra.mxu0 %v370
  %v449 = vpop.f32.mrf.mxu0
  %v450 = vadd.f32 %v406, %v449
  %v451 = vpop.f32.mrf.mxu0
  %v452 = vadd.f32 %v408, %v451
  %453 = vmatmul.bf16.gmra.mxu0 %v373
  %v454 = vpop.f32.mrf.mxu0
  %v455 = vadd.f32 %v411, %v454
  %v456 = vpop.f32.mrf.mxu0
  %v457 = vadd.f32 %v413, %v456
  %458 = vmatmul.bf16.gmra.mxu0 %v376
  %v459 = vpop.f32.mrf.mxu0
  %v460 = vadd.f32 %v416, %v459
  %v461 = vpop.f32.mrf.mxu0
  %v462 = vadd.f32 %v418, %v461
  %463 = vmatmul.bf16.gmra.mxu0 %v379
  %v464 = vpop.f32.mrf.mxu0
  %v465 = vadd.f32 %v421, %v464
  %v466 = vpop.f32.mrf.mxu0
  %v467 = vadd.f32 %v423, %v466
  %468 = vdwg.mxu0
  %v469 = vmax.f32 %v248, %v435
  %v470 = vmax.f32 %v250, %v437
  %v471 = vmax.f32 %v253, %v440
  %v472 = vmax.f32 %v255, %v442
  %v473 = vmax.f32 %v258, %v445
  %v474 = vmax.f32 %v260, %v447
  %v475 = vmax.f32 %v263, %v450
  %v476 = vmax.f32 %v265, %v452
  %v477 = vmax.f32 %v268, %v455
  %v478 = vmax.f32 %v270, %v457
  %v479 = vmax.f32 %v273, %v460
  %v480 = vmax.f32 %v275, %v462
  %v481 = vmax.f32 %v278, %v465
  %v482 = vmax.f32 %v280, %v467
  %s483 = scalar_lea.vmem %s0, 224
  %v484 = vld [vmem:[%s483] sm:$0xff]
  %v485 = vld [vmem:[%s483 + $0x8] sm:$0xff]
  %v486 = vld [vmem:[%s483 + $0x10] sm:$0xff]
  %v487 = vld [vmem:[%s483 + $0x18] sm:$0xff]
  %v488 = vld [vmem:[%s483 + $0x20] sm:$0xff]
  %v489 = vld [vmem:[%s483 + $0x28] sm:$0xff]
  %v490 = vld [vmem:[%s483 + $0x30] sm:$0xff]
  %v491 = vld [vmem:[%s483 + $0x38] sm:$0xff]
  %v492 = vld [vmem:[%s483 + $0x40] sm:$0xff]
  %v493 = vld [vmem:[%s483 + $0x48] sm:$0xff]
  %v494 = vld [vmem:[%s483 + $0x50] sm:$0xff]
  %v495 = vld [vmem:[%s483 + $0x58] sm:$0xff]
  %v496 = vld [vmem:[%s483 + $0x60] sm:$0xff]
  %v497 = vld [vmem:[%s483 + $0x68] sm:$0xff]
  %v512 = vunpack.c.l.b16 %v484
  %v513 = vunpack.c.h.b16 %v484
  %v514 = vunpack.c.l.b16 %v485
  %v515 = vunpack.c.h.b16 %v485
  %v516 = vunpack.c.l.b16 %v486
  %v517 = vunpack.c.h.b16 %v486
  %v518 = vunpack.c.l.b16 %v487
  %v519 = vunpack.c.h.b16 %v487
  %v520 = vunpack.c.l.b16 %v488
  %v521 = vunpack.c.h.b16 %v488
  %v522 = vunpack.c.l.b16 %v489
  %v523 = vunpack.c.h.b16 %v489
  %v524 = vunpack.c.l.b16 %v490
  %v525 = vunpack.c.h.b16 %v490
  %v526 = vunpack.c.l.b16 %v491
  %v527 = vunpack.c.h.b16 %v491
  %v528 = vunpack.c.l.b16 %v492
  %v529 = vunpack.c.h.b16 %v492
  %v530 = vunpack.c.l.b16 %v493
  %v531 = vunpack.c.h.b16 %v493
  %v532 = vunpack.c.l.b16 %v494
  %v533 = vunpack.c.h.b16 %v494
  %v534 = vunpack.c.l.b16 %v495
  %v535 = vunpack.c.h.b16 %v495
  %v536 = vunpack.c.l.b16 %v496
  %v537 = vunpack.c.h.b16 %v496
  %v538 = vunpack.c.l.b16 %v497
  %v539 = vunpack.c.h.b16 %v497
  %v540 = vpack.c.b16 %v514, %v512
  %v541 = vpack.c.b16 %v515, %v513
  %v542 = vpack.c.b16 %v518, %v516
  %v543 = vpack.c.b16 %v519, %v517
  %v544 = vpack.c.b16 %v522, %v520
  %v545 = vpack.c.b16 %v523, %v521
  %v546 = vpack.c.b16 %v526, %v524
  %v547 = vpack.c.b16 %v527, %v525
  %v548 = vpack.c.b16 %v530, %v528
  %v549 = vpack.c.b16 %v531, %v529
  %v550 = vpack.c.b16 %v534, %v532
  %v551 = vpack.c.b16 %v535, %v533
  %v552 = vpack.c.b16 %v538, %v536
  %v553 = vpack.c.b16 %v539, %v537
  %v562 = vsel %vm172, %v541, 0
  %v565 = vsel %vm172, %v543, 0
  %v568 = vsel %vm172, %v545, 0
  %v571 = vsel %vm172, %v547, 0
  %v574 = vsel %vm172, %v549, 0
  %v577 = vsel %vm172, %v551, 0
  %v580 = vsel %vm172, %v553, 0
  %582 = vmatpush.bf16.msra.mxu0 %v159
  %583 = vmatpush.bf16.msra.mxu0 %v158
  %584 = vmatpush.bf16.msra.mxu0 %v157
  %585 = vmatpush.bf16.msra.mxu0 %v156
  %586 = vmatpush.bf16.msra.mxu0 %v155
  %587 = vmatpush.bf16.msra.mxu0 %v154
  %588 = vmatpush.bf16.msra.mxu0 %v153
  %589 = vmatpush.bf16.msra.mxu0 %v152
  %590 = vmatmul.bf16.gmra.mxu0 %v540
  %v591 = vpop.f32.mrf.mxu0
  %v592 = vadd.f32 0.0, %v591
  %v593 = vpop.f32.mrf.mxu0
  %v594 = vadd.f32 0.0, %v593
  %595 = vmatmul.bf16.gmra.mxu0 %v542
  %v596 = vpop.f32.mrf.mxu0
  %v597 = vadd.f32 0.0, %v596
  %v598 = vpop.f32.mrf.mxu0
  %v599 = vadd.f32 0.0, %v598
  %600 = vmatmul.bf16.gmra.mxu0 %v544
  %v601 = vpop.f32.mrf.mxu0
  %v602 = vadd.f32 0.0, %v601
  %v603 = vpop.f32.mrf.mxu0
  %v604 = vadd.f32 0.0, %v603
  %605 = vmatmul.bf16.gmra.mxu0 %v546
  %v606 = vpop.f32.mrf.mxu0
  %v607 = vadd.f32 0.0, %v606
  %v608 = vpop.f32.mrf.mxu0
  %v609 = vadd.f32 0.0, %v608
  %610 = vmatmul.bf16.gmra.mxu0 %v548
  %v611 = vpop.f32.mrf.mxu0
  %v612 = vadd.f32 0.0, %v611
  %v613 = vpop.f32.mrf.mxu0
  %v614 = vadd.f32 0.0, %v613
  %615 = vmatmul.bf16.gmra.mxu0 %v550
  %v616 = vpop.f32.mrf.mxu0
  %v617 = vadd.f32 0.0, %v616
  %v618 = vpop.f32.mrf.mxu0
  %v619 = vadd.f32 0.0, %v618
  %620 = vmatmul.bf16.gmra.mxu0 %v552
  %v621 = vpop.f32.mrf.mxu0
  %v622 = vadd.f32 0.0, %v621
  %v623 = vpop.f32.mrf.mxu0
  %v624 = vadd.f32 0.0, %v623
  %625 = vdwg.mxu0
  %626 = vmatpush.bf16.msra.mxu0 0
  %627 = vmatpush.bf16.msra.mxu0 0
  %628 = vmatpush.bf16.msra.mxu0 0
  %629 = vmatpush.bf16.msra.mxu0 0
  %630 = vmatpush.bf16.msra.mxu0 0
  %631 = vmatpush.bf16.msra.mxu0 0
  %632 = vmatpush.bf16.msra.mxu0 %v161
  %633 = vmatpush.bf16.msra.mxu0 %v160
  %634 = vmatmul.bf16.gmra.mxu0 %v562
  %v635 = vpop.f32.mrf.mxu0
  %v636 = vadd.f32 %v592, %v635
  %v637 = vpop.f32.mrf.mxu0
  %v638 = vadd.f32 %v594, %v637
  %639 = vmatmul.bf16.gmra.mxu0 %v565
  %v640 = vpop.f32.mrf.mxu0
  %v641 = vadd.f32 %v597, %v640
  %v642 = vpop.f32.mrf.mxu0
  %v643 = vadd.f32 %v599, %v642
  %644 = vmatmul.bf16.gmra.mxu0 %v568
  %v645 = vpop.f32.mrf.mxu0
  %v646 = vadd.f32 %v602, %v645
  %v647 = vpop.f32.mrf.mxu0
  %v648 = vadd.f32 %v604, %v647
  %649 = vmatmul.bf16.gmra.mxu0 %v571
  %v650 = vpop.f32.mrf.mxu0
  %v651 = vadd.f32 %v607, %v650
  %v652 = vpop.f32.mrf.mxu0
  %v653 = vadd.f32 %v609, %v652
  %654 = vmatmul.bf16.gmra.mxu0 %v574
  %v655 = vpop.f32.mrf.mxu0
  %v656 = vadd.f32 %v612, %v655
  %v657 = vpop.f32.mrf.mxu0
  %v658 = vadd.f32 %v614, %v657
  %659 = vmatmul.bf16.gmra.mxu0 %v577
  %v660 = vpop.f32.mrf.mxu0
  %v661 = vadd.f32 %v617, %v660
  %v662 = vpop.f32.mrf.mxu0
  %v663 = vadd.f32 %v619, %v662
  %664 = vmatmul.bf16.gmra.mxu0 %v580
  %v665 = vpop.f32.mrf.mxu0
  %v666 = vadd.f32 %v622, %v665
  %v667 = vpop.f32.mrf.mxu0
  %v668 = vadd.f32 %v624, %v667
  %669 = vdwg.mxu0
  %v670 = vmax.f32 %v469, %v636
  %v671 = vmax.f32 %v470, %v638
  %v672 = vmax.f32 %v471, %v641
  %v673 = vmax.f32 %v472, %v643
  %v674 = vmax.f32 %v473, %v646
  %v675 = vmax.f32 %v474, %v648
  %v676 = vmax.f32 %v475, %v651
  %v677 = vmax.f32 %v476, %v653
  %v678 = vmax.f32 %v477, %v656
  %v679 = vmax.f32 %v478, %v658
  %v680 = vmax.f32 %v479, %v661
  %v681 = vmax.f32 %v480, %v663
  %v682 = vmax.f32 %v481, %v666
  %v683 = vmax.f32 %v482, %v668
  %s684 = scalar_lea.vmem %s0, 336
  %v685 = vld [vmem:[%s684] sm:$0xff]
  %v686 = vld [vmem:[%s684 + $0x8] sm:$0xff]
  %v687 = vld [vmem:[%s684 + $0x10] sm:$0xff]
  %v688 = vld [vmem:[%s684 + $0x18] sm:$0xff]
  %v689 = vld [vmem:[%s684 + $0x20] sm:$0xff]
  %v690 = vld [vmem:[%s684 + $0x28] sm:$0xff]
  %v691 = vld [vmem:[%s684 + $0x30] sm:$0xff]
  %v692 = vld [vmem:[%s684 + $0x38] sm:$0xff]
  %v693 = vld [vmem:[%s684 + $0x40] sm:$0xff]
  %v694 = vld [vmem:[%s684 + $0x48] sm:$0xff]
  %v695 = vld [vmem:[%s684 + $0x50] sm:$0xff]
  %v696 = vld [vmem:[%s684 + $0x58] sm:$0xff]
  %v697 = vld [vmem:[%s684 + $0x60] sm:$0xff]
  %v698 = vld [vmem:[%s684 + $0x68] sm:$0xff]
  %v713 = vunpack.c.l.b16 %v685
  %v714 = vunpack.c.h.b16 %v685
  %v715 = vunpack.c.l.b16 %v686
  %v716 = vunpack.c.h.b16 %v686
  %v717 = vunpack.c.l.b16 %v687
  %v718 = vunpack.c.h.b16 %v687
  %v719 = vunpack.c.l.b16 %v688
  %v720 = vunpack.c.h.b16 %v688
  %v721 = vunpack.c.l.b16 %v689
  %v722 = vunpack.c.h.b16 %v689
  %v723 = vunpack.c.l.b16 %v690
  %v724 = vunpack.c.h.b16 %v690
  %v725 = vunpack.c.l.b16 %v691
  %v726 = vunpack.c.h.b16 %v691
  %v727 = vunpack.c.l.b16 %v692
  %v728 = vunpack.c.h.b16 %v692
  %v729 = vunpack.c.l.b16 %v693
  %v730 = vunpack.c.h.b16 %v693
  %v731 = vunpack.c.l.b16 %v694
  %v732 = vunpack.c.h.b16 %v694
  %v733 = vunpack.c.l.b16 %v695
  %v734 = vunpack.c.h.b16 %v695
  %v735 = vunpack.c.l.b16 %v696
  %v736 = vunpack.c.h.b16 %v696
  %v737 = vunpack.c.l.b16 %v697
  %v738 = vunpack.c.h.b16 %v697
  %v739 = vunpack.c.l.b16 %v698
  %v740 = vunpack.c.h.b16 %v698
  %v741 = vpack.c.b16 %v715, %v713
  %v742 = vpack.c.b16 %v716, %v714
  %v743 = vpack.c.b16 %v719, %v717
  %v744 = vpack.c.b16 %v720, %v718
  %v745 = vpack.c.b16 %v723, %v721
  %v746 = vpack.c.b16 %v724, %v722
  %v747 = vpack.c.b16 %v727, %v725
  %v748 = vpack.c.b16 %v728, %v726
  %v749 = vpack.c.b16 %v731, %v729
  %v750 = vpack.c.b16 %v732, %v730
  %v751 = vpack.c.b16 %v735, %v733
  %v752 = vpack.c.b16 %v736, %v734
  %v753 = vpack.c.b16 %v739, %v737
  %v754 = vpack.c.b16 %v740, %v738
  %v763 = vsel %vm172, %v742, 0
  %v766 = vsel %vm172, %v744, 0
  %v769 = vsel %vm172, %v746, 0
  %v772 = vsel %vm172, %v748, 0
  %v775 = vsel %vm172, %v750, 0
  %v778 = vsel %vm172, %v752, 0
  %v781 = vsel %vm172, %v754, 0
  %783 = vmatpush.bf16.msra.mxu0 %v159
  %784 = vmatpush.bf16.msra.mxu0 %v158
  %785 = vmatpush.bf16.msra.mxu0 %v157
  %786 = vmatpush.bf16.msra.mxu0 %v156
  %787 = vmatpush.bf16.msra.mxu0 %v155
  %788 = vmatpush.bf16.msra.mxu0 %v154
  %789 = vmatpush.bf16.msra.mxu0 %v153
  %790 = vmatpush.bf16.msra.mxu0 %v152
  %791 = vmatmul.bf16.gmra.mxu0 %v741
  %v792 = vpop.f32.mrf.mxu0
  %v793 = vadd.f32 0.0, %v792
  %v794 = vpop.f32.mrf.mxu0
  %v795 = vadd.f32 0.0, %v794
  %796 = vmatmul.bf16.gmra.mxu0 %v743
  %v797 = vpop.f32.mrf.mxu0
  %v798 = vadd.f32 0.0, %v797
  %v799 = vpop.f32.mrf.mxu0
  %v800 = vadd.f32 0.0, %v799
  %801 = vmatmul.bf16.gmra.mxu0 %v745
  %v802 = vpop.f32.mrf.mxu0
  %v803 = vadd.f32 0.0, %v802
  %v804 = vpop.f32.mrf.mxu0
  %v805 = vadd.f32 0.0, %v804
  %806 = vmatmul.bf16.gmra.mxu0 %v747
  %v807 = vpop.f32.mrf.mxu0
  %v808 = vadd.f32 0.0, %v807
  %v809 = vpop.f32.mrf.mxu0
  %v810 = vadd.f32 0.0, %v809
  %811 = vmatmul.bf16.gmra.mxu0 %v749
  %v812 = vpop.f32.mrf.mxu0
  %v813 = vadd.f32 0.0, %v812
  %v814 = vpop.f32.mrf.mxu0
  %v815 = vadd.f32 0.0, %v814
  %816 = vmatmul.bf16.gmra.mxu0 %v751
  %v817 = vpop.f32.mrf.mxu0
  %v818 = vadd.f32 0.0, %v817
  %v819 = vpop.f32.mrf.mxu0
  %v820 = vadd.f32 0.0, %v819
  %821 = vmatmul.bf16.gmra.mxu0 %v753
  %v822 = vpop.f32.mrf.mxu0
  %v823 = vadd.f32 0.0, %v822
  %v824 = vpop.f32.mrf.mxu0
  %v825 = vadd.f32 0.0, %v824
  %826 = vdwg.mxu0
  %827 = vmatpush.bf16.msra.mxu0 0
  %828 = vmatpush.bf16.msra.mxu0 0
  %829 = vmatpush.bf16.msra.mxu0 0
  %830 = vmatpush.bf16.msra.mxu0 0
  %831 = vmatpush.bf16.msra.mxu0 0
  %832 = vmatpush.bf16.msra.mxu0 0
  %833 = vmatpush.bf16.msra.mxu0 %v161
  %834 = vmatpush.bf16.msra.mxu0 %v160
  %835 = vmatmul.bf16.gmra.mxu0 %v763
  %v836 = vpop.f32.mrf.mxu0
  %v837 = vadd.f32 %v793, %v836
  %v838 = vpop.f32.mrf.mxu0
  %v839 = vadd.f32 %v795, %v838
  %840 = vmatmul.bf16.gmra.mxu0 %v766
  %v841 = vpop.f32.mrf.mxu0
  %v842 = vadd.f32 %v798, %v841
  %v843 = vpop.f32.mrf.mxu0
  %v844 = vadd.f32 %v800, %v843
  %845 = vmatmul.bf16.gmra.mxu0 %v769
  %v846 = vpop.f32.mrf.mxu0
  %v847 = vadd.f32 %v803, %v846
  %v848 = vpop.f32.mrf.mxu0
  %v849 = vadd.f32 %v805, %v848
  %850 = vmatmul.bf16.gmra.mxu0 %v772
  %v851 = vpop.f32.mrf.mxu0
  %v852 = vadd.f32 %v808, %v851
  %v853 = vpop.f32.mrf.mxu0
  %v854 = vadd.f32 %v810, %v853
  %855 = vmatmul.bf16.gmra.mxu0 %v775
  %v856 = vpop.f32.mrf.mxu0
  %v857 = vadd.f32 %v813, %v856
  %v858 = vpop.f32.mrf.mxu0
  %v859 = vadd.f32 %v815, %v858
  %860 = vmatmul.bf16.gmra.mxu0 %v778
  %v861 = vpop.f32.mrf.mxu0
  %v862 = vadd.f32 %v818, %v861
  %v863 = vpop.f32.mrf.mxu0
  %v864 = vadd.f32 %v820, %v863
  %865 = vmatmul.bf16.gmra.mxu0 %v781
  %v866 = vpop.f32.mrf.mxu0
  %v867 = vadd.f32 %v823, %v866
  %v868 = vpop.f32.mrf.mxu0
  %v869 = vadd.f32 %v825, %v868
  %870 = vdwg.mxu0
  %v871 = vmax.f32 %v670, %v837
  %v872 = vmax.f32 %v671, %v839
  %v873 = vmax.f32 %v672, %v842
  %v874 = vmax.f32 %v673, %v844
  %v875 = vmax.f32 %v674, %v847
  %v876 = vmax.f32 %v675, %v849
  %v877 = vmax.f32 %v676, %v852
  %v878 = vmax.f32 %v677, %v854
  %v879 = vmax.f32 %v678, %v857
  %v880 = vmax.f32 %v679, %v859
  %v881 = vmax.f32 %v680, %v862
  %v882 = vmax.f32 %v681, %v864
  %v883 = vmax.f32 %v682, %v867
  %v884 = vmax.f32 %v683, %v869
  %v885 = vld [vmem:[%s2] sm:$0x1]
  %v887 = vperm.slane %v885, 0
  %v889 = vadd.f32 %v871, %v887
  %v890 = vadd.f32 %v872, %v887
  %v891 = vadd.f32 %v873, %v887
  %v892 = vadd.f32 %v874, %v887
  %v893 = vadd.f32 %v875, %v887
  %v894 = vadd.f32 %v876, %v887
  %v895 = vadd.f32 %v877, %v887
  %v896 = vadd.f32 %v878, %v887
  %v897 = vadd.f32 %v879, %v887
  %v898 = vadd.f32 %v880, %v887
  %v899 = vadd.f32 %v881, %v887
  %v900 = vadd.f32 %v882, %v887
  %v901 = vadd.f32 %v883, %v887
  %v902 = vadd.f32 %v884, %v887
  %v903 = vmax.f32 %v889, 0.0
  %v904 = vmax.f32 %v890, 0.0
  %v905 = vmax.f32 %v891, 0.0
  %v906 = vmax.f32 %v892, 0.0
  %v907 = vmax.f32 %v893, 0.0
  %v908 = vmax.f32 %v894, 0.0
  %v909 = vmax.f32 %v895, 0.0
  %v910 = vmax.f32 %v896, 0.0
  %v911 = vmax.f32 %v897, 0.0
  %v912 = vmax.f32 %v898, 0.0
  %v913 = vmax.f32 %v899, 0.0
  %v914 = vmax.f32 %v900, 0.0
  %v915 = vmax.f32 %v901, 0.0
  %v916 = vmax.f32 %v902, 0.0
  %v917 = vpack.c.bf16 %v903, %v903
  %v918 = vpack.c.bf16 %v904, %v904
  %v919 = vpack.c.bf16 %v905, %v905
  %v920 = vpack.c.bf16 %v906, %v906
  %v921 = vpack.c.bf16 %v907, %v907
  %v922 = vpack.c.bf16 %v908, %v908
  %v923 = vpack.c.bf16 %v909, %v909
  %v924 = vpack.c.bf16 %v910, %v910
  %v925 = vpack.c.bf16 %v911, %v911
  %v926 = vpack.c.bf16 %v912, %v912
  %v927 = vpack.c.bf16 %v913, %v913
  %v928 = vpack.c.bf16 %v914, %v914
  %v929 = vpack.c.bf16 %v915, %v915
  %v930 = vpack.c.bf16 %v916, %v916
  %931 = vst [vmem:[%s3] sm:$0xf] %v917
  %932 = vst [vmem:[%s3 + $0x4] sm:$0xf] %v918
  %933 = vst [vmem:[%s3 + $0x8] sm:$0xf] %v919
  %934 = vst [vmem:[%s3 + $0xc] sm:$0xf] %v920
  %935 = vst [vmem:[%s3 + $0x10] sm:$0xf] %v921
  %936 = vst [vmem:[%s3 + $0x14] sm:$0xf] %v922
  %937 = vst [vmem:[%s3 + $0x18] sm:$0xf] %v923
  %938 = vst [vmem:[%s3 + $0x1c] sm:$0xf] %v924
  %939 = vst [vmem:[%s3 + $0x20] sm:$0xf] %v925
  %940 = vst [vmem:[%s3 + $0x24] sm:$0xf] %v926
  %941 = vst [vmem:[%s3 + $0x28] sm:$0xf] %v927
  %942 = vst [vmem:[%s3 + $0x2c] sm:$0xf] %v928
  %943 = vst [vmem:[%s3 + $0x30] sm:$0xf] %v929
  %944 = vst [vmem:[%s3 + $0x34] sm:$0xf] %v930
  // Predicated region
  $region14: #{cnn_forward.4} parent=0 // pred_check
    _
  $region15: #{cnn_forward.4} parent=0 // pred_check_branch
    %946 = sbr.rel (0) target = $region17
  $region16: #{cnn_forward.4} parent=0 // pred_region
    _
  $region17: #{cnn_forward.4} parent=0 // pred_fallthru
    _
  // Predicated region
  $region18: #{cnn_forward.4} parent=0 // pred_check
    _
  $region19: #{cnn_forward.4} parent=0 // pred_check_branch
    %948 = sbr.rel (0) target = $region21
  $region20: #{cnn_forward.4} parent=0 // pred_region
    _
  $region21: #{cnn_forward.4} parent=0 // pred_fallthru
    _

// kernel: cnn_forward.5
$region0: #{cnn_forward.5}
  #allocation0 [shape = 'u32[]', space=smem, size = 0x4, offset = 0x4, fixed_abs, tag = 'smem constant byte address 0x4 - core index']
  #allocation1 [shape = 'u32[72,128]{1,0:T(1,128)}', space=vmem, size = 0x9000, scoped, tag = 'internal scratch']
  %s0 = inlined_call_operand.vmem [shape: bf16[49,8,400], index: 0, kind: input, shape index: {}]
  %s1 = inlined_call_operand.vmem [shape: bf16[400,128], index: 1, kind: input, shape index: {}]
  %s2 = inlined_call_operand.vmem [shape: f32[1,128], index: 2, kind: input, shape index: {}]
  %s3 = inlined_call_operand.vmem [shape: bf16[49,128,128], index: 3, kind: input, shape index: {}]
  %s4 = inlined_call_operand.vmem [shape: f32[1,128], index: 4, kind: input, shape index: {}]
  %s5 = inlined_call_operand.vmem [shape: f32[8,128], index: 5, kind: output, shape index: {}]
  %s6 = sld [smem:[#allocation0]]
  $region30: #{cnn_forward.5} parent=0
    _
  %s8 = ssub.s32 1, %s6
  %s9 = scalar_select 0, %s8, %s6
  // Predicated region
  $region2: #{cnn_forward.5} parent=0 // pred_check
    _
  $region3: #{cnn_forward.5} parent=0 // pred_check_branch
    %11 = sbr.rel (0) target = $region5
  $region4: #{cnn_forward.5} parent=0 // pred_region
    _
  $region5: #{cnn_forward.5} parent=0 // pred_fallthru
    _
  // Predicated region
  $region6: #{cnn_forward.5} parent=0 // pred_check
    _
  $region7: #{cnn_forward.5} parent=0 // pred_check_branch
    %13 = sbr.rel (0) target = $region9
  $region8: #{cnn_forward.5} parent=0 // pred_region
    _
  $region9: #{cnn_forward.5} parent=0 // pred_fallthru
    _
  // Predicated region
  $region10: #{cnn_forward.5} parent=0 // pred_check
    _
  $region11: #{cnn_forward.5} parent=0 // pred_check_branch
    %15 = sbr.rel (0) target = $region13
  $region12: #{cnn_forward.5} parent=0 // pred_region
    _
  $region13: #{cnn_forward.5} parent=0 // pred_fallthru
    _
  // Predicated region
  $region14: #{cnn_forward.5} parent=0 // pred_check
    _
  $region15: #{cnn_forward.5} parent=0 // pred_check_branch
    %17 = sbr.rel (0) target = $region17
  $region16: #{cnn_forward.5} parent=0 // pred_region
    _
  $region17: #{cnn_forward.5} parent=0 // pred_fallthru
    _
  // Predicated region
  $region18: #{cnn_forward.5} parent=0 // pred_check
    _
  $region19: #{cnn_forward.5} parent=0 // pred_check_branch
    %19 = sbr.rel (0) target = $region21
  $region20: #{cnn_forward.5} parent=0 // pred_region
    _
  $region21: #{cnn_forward.5} parent=0 // pred_fallthru
    _
  %v21 = vld [vmem:[%s1] sm:$0xf]
  %v22 = vld [vmem:[%s1 + $0x4] sm:$0xf]
  %v23 = vld [vmem:[%s1 + $0x8] sm:$0xf]
  %v24 = vld [vmem:[%s1 + $0xc] sm:$0xf]
  %v25 = vld [vmem:[%s1 + $0x10] sm:$0xf]
  %v26 = vld [vmem:[%s1 + $0x14] sm:$0xf]
  %v27 = vld [vmem:[%s1 + $0x18] sm:$0xf]
  %v28 = vld [vmem:[%s1 + $0x1c] sm:$0xf]
  %v29 = vld [vmem:[%s1 + $0x20] sm:$0xf]
  %v30 = vld [vmem:[%s1 + $0x24] sm:$0xf]
  %v31 = vld [vmem:[%s1 + $0x28] sm:$0xf]
  %v32 = vld [vmem:[%s1 + $0x2c] sm:$0xf]
  %v33 = vld [vmem:[%s1 + $0x30] sm:$0xf]
  %v34 = vld [vmem:[%s1 + $0x34] sm:$0xf]
  %v35 = vld [vmem:[%s1 + $0x38] sm:$0xf]
  %v36 = vld [vmem:[%s1 + $0x3c] sm:$0xf]
  %v37 = vld [vmem:[%s1 + $0x40] sm:$0xf]
  %v38 = vld [vmem:[%s1 + $0x44] sm:$0xf]
  %v39 = vld [vmem:[%s1 + $0x48] sm:$0xf]
  %v40 = vld [vmem:[%s1 + $0x4c] sm:$0xf]
  %v41 = vld [vmem:[%s1 + $0x50] sm:$0xf]
  %v42 = vld [vmem:[%s1 + $0x54] sm:$0xf]
  %v43 = vld [vmem:[%s1 + $0x58] sm:$0xf]
  %v44 = vld [vmem:[%s1 + $0x5c] sm:$0xf]
  %v45 = vld [vmem:[%s1 + $0x60] sm:$0xf]
  %v46 = vld [vmem:[%s1 + $0x64] sm:$0xf]
  %v47 = vld [vmem:[%s1 + $0x68] sm:$0xf]
  %v48 = vld [vmem:[%s1 + $0x6c] sm:$0xf]
  %v49 = vld [vmem:[%s1 + $0x70] sm:$0xf]
  %v50 = vld [vmem:[%s1 + $0x74] sm:$0xf]
  %v51 = vld [vmem:[%s1 + $0x78] sm:$0xf]
  %v52 = vld [vmem:[%s1 + $0x7c] sm:$0xf]
  %v53 = vld [vmem:[%s1 + $0x80] sm:$0xf]
  %v54 = vld [vmem:[%s1 + $0x84] sm:$0xf]
  %v55 = vld [vmem:[%s1 + $0x88] sm:$0xf]
  %v56 = vld [vmem:[%s1 + $0x8c] sm:$0xf]
  %v57 = vld [vmem:[%s1 + $0x90] sm:$0xf]
  %v58 = vld [vmem:[%s1 + $0x94] sm:$0xf]
  %v59 = vld [vmem:[%s1 + $0x98] sm:$0xf]
  %v60 = vld [vmem:[%s1 + $0x9c] sm:$0xf]
  %v61 = vld [vmem:[%s1 + $0xa0] sm:$0xf]
  %v62 = vld [vmem:[%s1 + $0xa4] sm:$0xf]
  %v63 = vld [vmem:[%s1 + $0xa8] sm:$0xf]
  %v64 = vld [vmem:[%s1 + $0xac] sm:$0xf]
  %v65 = vld [vmem:[%s1 + $0xb0] sm:$0xf]
  %v66 = vld [vmem:[%s1 + $0xb4] sm:$0xf]
  %v67 = vld [vmem:[%s1 + $0xb8] sm:$0xf]
  %v68 = vld [vmem:[%s1 + $0xbc] sm:$0xf]
  %v69 = vld [vmem:[%s1 + $0xc0] sm:$0xf]
  %v70 = vld [vmem:[%s1 + $0xc4] sm:$0xf]
  %v71 = vld [vmem:[%s2] sm:$0x1]
  %v72 = vld [vmem:[%s4] sm:$0x1]
  %v74 = vperm.slane %v72, 0
  %v76 = vadd.f32 %v74, 0.0
  %v77 = vld [vmem:[%s0] sm:$0xff]
  %v78 = vld [vmem:[%s0 + $0x8] sm:$0xff]
  %v80 = vperm.slane %v71, 0
  %v84 = vunpack.c.l.b16 %v77
  %v85 = vunpack.c.h.b16 %v77
  %v86 = vunpack.c.l.b16 %v78
  %v87 = vunpack.c.h.b16 %v78
  %v88 = vpack.c.b16 %v84, %v84
  %v89 = vpack.c.b16 %v85, %v85
  %v90 = vpack.c.b16 %v86, %v86
  %v91 = vpack.c.b16 %v87, %v87
  %v145 = vunpack.c.l.b16 %v21
  %v146 = vunpack.c.l.b16 %v22
  %v147 = vunpack.c.l.b16 %v23
  %v148 = vunpack.c.l.b16 %v24
  %v149 = vunpack.c.l.b16 %v25
  %v150 = vunpack.c.l.b16 %v26
  %v151 = vunpack.c.l.b16 %v27
  %v152 = vunpack.c.l.b16 %v28
  %v153 = vunpack.c.l.b16 %v29
  %v154 = vunpack.c.l.b16 %v30
  %v155 = vunpack.c.l.b16 %v31
  %v156 = vunpack.c.l.b16 %v32
  %v157 = vunpack.c.l.b16 %v33
  %v158 = vunpack.c.l.b16 %v34
  %v159 = vunpack.c.l.b16 %v35
  %v160 = vunpack.c.l.b16 %v36
  %v161 = vunpack.c.l.b16 %v37
  %v162 = vunpack.c.l.b16 %v38
  %v163 = vunpack.c.l.b16 %v39
  %v164 = vunpack.c.l.b16 %v40
  %v165 = vunpack.c.l.b16 %v41
  %v166 = vunpack.c.l.b16 %v42
  %v167 = vunpack.c.l.b16 %v43
  %v168 = vunpack.c.l.b16 %v44
  %v169 = vunpack.c.l.b16 %v45
  %v170 = vunpack.c.l.b16 %v46
  %v171 = vunpack.c.l.b16 %v47
  %v172 = vunpack.c.l.b16 %v48
  %v173 = vunpack.c.l.b16 %v49
  %v174 = vunpack.c.l.b16 %v50
  %v175 = vunpack.c.l.b16 %v51
  %v176 = vunpack.c.l.b16 %v52
  %v177 = vunpack.c.l.b16 %v53
  %v178 = vunpack.c.l.b16 %v54
  %v179 = vunpack.c.l.b16 %v55
  %v180 = vunpack.c.l.b16 %v56
  %v181 = vunpack.c.l.b16 %v57
  %v182 = vunpack.c.l.b16 %v58
  %v183 = vunpack.c.l.b16 %v59
  %v184 = vunpack.c.l.b16 %v60
  %v185 = vunpack.c.l.b16 %v61
  %v186 = vunpack.c.l.b16 %v62
  %v187 = vunpack.c.l.b16 %v63
  %v188 = vunpack.c.l.b16 %v64
  %v189 = vunpack.c.l.b16 %v65
  %v190 = vunpack.c.l.b16 %v66
  %v191 = vunpack.c.l.b16 %v67
  %v192 = vunpack.c.l.b16 %v68
  %v193 = vunpack.c.l.b16 %v69
  %v194 = vunpack.c.l.b16 %v70
  %v195 = vpack.c.b16 %v146, %v145
  %v196 = vpack.c.b16 %v148, %v147
  %v197 = vpack.c.b16 %v150, %v149
  %v198 = vpack.c.b16 %v152, %v151
  %v199 = vpack.c.b16 %v154, %v153
  %v200 = vpack.c.b16 %v156, %v155
  %v201 = vpack.c.b16 %v158, %v157
  %v202 = vpack.c.b16 %v160, %v159
  %v203 = vpack.c.b16 %v162, %v161
  %v204 = vpack.c.b16 %v164, %v163
  %v205 = vpack.c.b16 %v166, %v165
  %v206 = vpack.c.b16 %v168, %v167
  %v207 = vpack.c.b16 %v170, %v169
  %v208 = vpack.c.b16 %v172, %v171
  %v209 = vpack.c.b16 %v174, %v173
  %v210 = vpack.c.b16 %v176, %v175
  %v211 = vpack.c.b16 %v178, %v177
  %v212 = vpack.c.b16 %v180, %v179
  %v213 = vpack.c.b16 %v182, %v181
  %v214 = vpack.c.b16 %v184, %v183
  %v215 = vpack.c.b16 %v186, %v185
  %v216 = vpack.c.b16 %v188, %v187
  %v217 = vpack.c.b16 %v190, %v189
  %v218 = vpack.c.b16 %v192, %v191
  %v219 = vpack.c.b16 %v194, %v193
  %vm245 = vcmask 130048
  %v247 = vsel %vm245, %v91, 0
  %249 = vmatpush.bf16.msra.mxu0 %v202
  %250 = vmatpush.bf16.msra.mxu0 %v201
  %251 = vmatpush.bf16.msra.mxu0 %v200
  %252 = vmatpush.bf16.msra.mxu0 %v199
  %253 = vmatpush.bf16.msra.mxu0 %v198
  %254 = vmatpush.bf16.msra.mxu0 %v197
  %255 = vmatpush.bf16.msra.mxu0 %v196
  %256 = vmatpush.bf16.msra.mxu0 %v195
  %257 = vmatmul.bf16.gmra.mxu0 %v88
  %v258 = vpop.f32.mrf.mxu0
  %v259 = vadd.f32 %v80, %v258
  %v260 = vpop.f32.mrf.mxu0
  %261 = vdwg.mxu0
  %262 = vmatpush.bf16.msra.mxu0 %v210
  %263 = vmatpush.bf16.msra.mxu0 %v209
  %264 = vmatpush.bf16.msra.mxu0 %v208
  %265 = vmatpush.bf16.msra.mxu0 %v207
  %266 = vmatpush.bf16.msra.mxu0 %v206
  %267 = vmatpush.bf16.msra.mxu0 %v205
  %268 = vmatpush.bf16.msra.mxu0 %v204
  %269 = vmatpush.bf16.msra.mxu0 %v203
  %270 = vmatmul.bf16.gmra.mxu0 %v89
  %v271 = vpop.f32.mrf.mxu0
  %v272 = vadd.f32 %v259, %v271
  %v273 = vpop.f32.mrf.mxu0
  %274 = vdwg.mxu0
  %275 = vmatpush.bf16.msra.mxu0 %v218
  %276 = vmatpush.bf16.msra.mxu0 %v217
  %277 = vmatpush.bf16.msra.mxu0 %v216
  %278 = vmatpush.bf16.msra.mxu0 %v215
  %279 = vmatpush.bf16.msra.mxu0 %v214
  %280 = vmatpush.bf16.msra.mxu0 %v213
  %281 = vmatpush.bf16.msra.mxu0 %v212
  %282 = vmatpush.bf16.msra.mxu0 %v211
  %283 = vmatmul.bf16.gmra.mxu0 %v90
  %v284 = vpop.f32.mrf.mxu0
  %v285 = vadd.f32 %v272, %v284
  %v286 = vpop.f32.mrf.mxu0
  %287 = vdwg.mxu0
  %288 = vmatpush.bf16.msra.mxu0 0
  %289 = vmatpush.bf16.msra.mxu0 0
  %290 = vmatpush.bf16.msra.mxu0 0
  %291 = vmatpush.bf16.msra.mxu0 0
  %292 = vmatpush.bf16.msra.mxu0 0
  %293 = vmatpush.bf16.msra.mxu0 0
  %294 = vmatpush.bf16.msra.mxu0 0
  %295 = vmatpush.bf16.msra.mxu0 %v219
  %296 = vmatmul.bf16.gmra.mxu0 %v247
  %v297 = vpop.f32.mrf.mxu0
  %v298 = vadd.f32 %v285, %v297
  %v299 = vpop.f32.mrf.mxu0
  %300 = vdwg.mxu0
  %v301 = vmax.f32 %v298, 0.0
  %v302 = vpack.c.bf16 %v301, %v301
  %v303 = vld [vmem:[%s3] sm:$0xf]
  %v304 = vld [vmem:[%s3 + $0x4] sm:$0xf]
  %v305 = vld [vmem:[%s3 + $0x8] sm:$0xf]
  %v306 = vld [vmem:[%s3 + $0xc] sm:$0xf]
  %v307 = vld [vmem:[%s3 + $0x10] sm:$0xf]
  %v308 = vld [vmem:[%s3 + $0x14] sm:$0xf]
  %v309 = vld [vmem:[%s3 + $0x18] sm:$0xf]
  %v310 = vld [vmem:[%s3 + $0x1c] sm:$0xf]
  %v311 = vld [vmem:[%s3 + $0x20] sm:$0xf]
  %v312 = vld [vmem:[%s3 + $0x24] sm:$0xf]
  %v313 = vld [vmem:[%s3 + $0x28] sm:$0xf]
  %v314 = vld [vmem:[%s3 + $0x2c] sm:$0xf]
  %v315 = vld [vmem:[%s3 + $0x30] sm:$0xf]
  %v316 = vld [vmem:[%s3 + $0x34] sm:$0xf]
  %v317 = vld [vmem:[%s3 + $0x38] sm:$0xf]
  %v318 = vld [vmem:[%s3 + $0x3c] sm:$0xf]
  %v335 = vunpack.c.l.b16 %v303
  %v336 = vunpack.c.l.b16 %v304
  %v337 = vunpack.c.l.b16 %v305
  %v338 = vunpack.c.l.b16 %v306
  %v339 = vunpack.c.l.b16 %v307
  %v340 = vunpack.c.l.b16 %v308
  %v341 = vunpack.c.l.b16 %v309
  %v342 = vunpack.c.l.b16 %v310
  %v343 = vunpack.c.l.b16 %v311
  %v344 = vunpack.c.l.b16 %v312
  %v345 = vunpack.c.l.b16 %v313
  %v346 = vunpack.c.l.b16 %v314
  %v347 = vunpack.c.l.b16 %v315
  %v348 = vunpack.c.l.b16 %v316
  %v349 = vunpack.c.l.b16 %v317
  %v350 = vunpack.c.l.b16 %v318
  %v351 = vpack.c.b16 %v336, %v335
  %v352 = vpack.c.b16 %v338, %v337
  %v353 = vpack.c.b16 %v340, %v339
  %v354 = vpack.c.b16 %v342, %v341
  %v355 = vpack.c.b16 %v344, %v343
  %v356 = vpack.c.b16 %v346, %v345
  %v357 = vpack.c.b16 %v348, %v347
  %v358 = vpack.c.b16 %v350, %v349
  %367 = vmatpush.bf16.msra.mxu0 %v358
  %368 = vmatpush.bf16.msra.mxu0 %v357
  %369 = vmatpush.bf16.msra.mxu0 %v356
  %370 = vmatpush.bf16.msra.mxu0 %v355
  %371 = vmatpush.bf16.msra.mxu0 %v354
  %372 = vmatpush.bf16.msra.mxu0 %v353
  %373 = vmatpush.bf16.msra.mxu0 %v352
  %374 = vmatpush.bf16.msra.mxu0 %v351
  %375 = vmatmul.bf16.gmra.mxu0 %v302
  %v376 = vpop.f32.mrf.mxu0
  %v377 = vadd.f32 0.0, %v376
  %v378 = vpop.f32.mrf.mxu0
  %379 = vdwg.mxu0
  %v380 = vadd.f32 %v76, %v377
  %s381 = scalar_lea.vmem %s0, 16
  %v382 = vld [vmem:[%s381] sm:$0xff]
  %v383 = vld [vmem:[%s381 + $0x8] sm:$0xff]
  %v386 = vunpack.c.l.b16 %v382
  %v387 = vunpack.c.h.b16 %v382
  %v388 = vunpack.c.l.b16 %v383
  %v389 = vunpack.c.h.b16 %v383
  %v390 = vpack.c.b16 %v386, %v386
  %v391 = vpack.c.b16 %v387, %v387
  %v392 = vpack.c.b16 %v388, %v388
  %v393 = vpack.c.b16 %v389, %v389
  %v398 = vsel %vm245, %v393, 0
  %400 = vmatpush.bf16.msra.mxu0 %v202
  %401 = vmatpush.bf16.msra.mxu0 %v201
  %402 = vmatpush.bf16.msra.mxu0 %v200
  %403 = vmatpush.bf16.msra.mxu0 %v199
  %404 = vmatpush.bf16.msra.mxu0 %v198
  %405 = vmatpush.bf16.msra.mxu0 %v197
  %406 = vmatpush.bf16.msra.mxu0 %v196
  %407 = vmatpush.bf16.msra.mxu0 %v195
  %408 = vmatmul.bf16.gmra.mxu0 %v390
  %v409 = vpop.f32.mrf.mxu0
  %v410 = vadd.f32 %v80, %v409
  %v411 = vpop.f32.mrf.mxu0
  %412 = vdwg.mxu0
  %413 = vmatpush.bf16.msra.mxu0 %v210
  %414 = vmatpush.bf16.msra.mxu0 %v209
  %415 = vmatpush.bf16.msra.mxu0 %v208
  %416 = vmatpush.bf16.msra.mxu0 %v207
  %417 = vmatpush.bf16.msra.mxu0 %v206
  %418 = vmatpush.bf16.msra.mxu0 %v205
  %419 = vmatpush.bf16.msra.mxu0 %v204
  %420 = vmatpush.bf16.msra.mxu0 %v203
  %421 = vmatmul.bf16.gmra.mxu0 %v391
  %v422 = vpop.f32.mrf.mxu0
  %v423 = vadd.f32 %v410, %v422
  %v424 = vpop.f32.mrf.mxu0
  %425 = vdwg.mxu0
  %426 = vmatpush.bf16.msra.mxu0 %v218
  %427 = vmatpush.bf16.msra.mxu0 %v217
  %428 = vmatpush.bf16.msra.mxu0 %v216
  %429 = vmatpush.bf16.msra.mxu0 %v215
  %430 = vmatpush.bf16.msra.mxu0 %v214
  %431 = vmatpush.bf16.msra.mxu0 %v213
  %432 = vmatpush.bf16.msra.mxu0 %v212
  %433 = vmatpush.bf16.msra.mxu0 %v211
  %434 = vmatmul.bf16.gmra.mxu0 %v392
  %v435 = vpop.f32.mrf.mxu0
  %v436 = vadd.f32 %v423, %v435
  %v437 = vpop.f32.mrf.mxu0
  %438 = vdwg.mxu0
  %439 = vmatpush.bf16.msra.mxu0 0
  %440 = vmatpush.bf16.msra.mxu0 0
  %441 = vmatpush.bf16.msra.mxu0 0
  %442 = vmatpush.bf16.msra.mxu0 0
  %443 = vmatpush.bf16.msra.mxu0 0
  %444 = vmatpush.bf16.msra.mxu0 0
  %445 = vmatpush.bf16.msra.mxu0 0
  %446 = vmatpush.bf16.msra.mxu0 %v219
  %447 = vmatmul.bf16.gmra.mxu0 %v398
  %v448 = vpop.f32.mrf.mxu0
  %v449 = vadd.f32 %v436, %v448
  %v450 = vpop.f32.mrf.mxu0
  %451 = vdwg.mxu0
  %v452 = vmax.f32 %v449, 0.0
  %v453 = vpack.c.bf16 %v452, %v452
  %s454 = scalar_lea.vmem %s3, 64
  %v455 = vld [vmem:[%s454] sm:$0xf]
  %v456 = vld [vmem:[%s454 + $0x4] sm:$0xf]
  %v457 = vld [vmem:[%s454 + $0x8] sm:$0xf]
  %v458 = vld [vmem:[%s454 + $0xc] sm:$0xf]
  %v459 = vld [vmem:[%s454 + $0x10] sm:$0xf]
  %v460 = vld [vmem:[%s454 + $0x14] sm:$0xf]
  %v461 = vld [vmem:[%s454 + $0x18] sm:$0xf]
  %v462 = vld [vmem:[%s454 + $0x1c] sm:$0xf]
  %v463 = vld [vmem:[%s454 + $0x20] sm:$0xf]
  %v464 = vld [vmem:[%s454 + $0x24] sm:$0xf]
  %v465 = vld [vmem:[%s454 + $0x28] sm:$0xf]
  %v466 = vld [vmem:[%s454 + $0x2c] sm:$0xf]
  %v467 = vld [vmem:[%s454 + $0x30] sm:$0xf]
  %v468 = vld [vmem:[%s454 + $0x34] sm:$0xf]
  %v469 = vld [vmem:[%s454 + $0x38] sm:$0xf]
  %v470 = vld [vmem:[%s454 + $0x3c] sm:$0xf]
  %v487 = vunpack.c.l.b16 %v455
  %v488 = vunpack.c.l.b16 %v456
  %v489 = vunpack.c.l.b16 %v457
  %v490 = vunpack.c.l.b16 %v458
  %v491 = vunpack.c.l.b16 %v459
  %v492 = vunpack.c.l.b16 %v460
  %v493 = vunpack.c.l.b16 %v461
  %v494 = vunpack.c.l.b16 %v462
  %v495 = vunpack.c.l.b16 %v463
  %v496 = vunpack.c.l.b16 %v464
  %v497 = vunpack.c.l.b16 %v465
  %v498 = vunpack.c.l.b16 %v466
  %v499 = vunpack.c.l.b16 %v467
  %v500 = vunpack.c.l.b16 %v468
  %v501 = vunpack.c.l.b16 %v469
  %v502 = vunpack.c.l.b16 %v470
  %v503 = vpack.c.b16 %v488, %v487
  %v504 = vpack.c.b16 %v490, %v489
  %v505 = vpack.c.b16 %v492, %v491
  %v506 = vpack.c.b16 %v494, %v493
  %v507 = vpack.c.b16 %v496, %v495
  %v508 = vpack.c.b16 %v498, %v497
  %v509 = vpack.c.b16 %v500, %v499
  %v510 = vpack.c.b16 %v502, %v501
  %519 = vmatpush.bf16.msra.mxu0 %v510
  %520 = vmatpush.bf16.msra.mxu0 %v509
  %521 = vmatpush.bf16.msra.mxu0 %v508
  %522 = vmatpush.bf16.msra.mxu0 %v507
  %523 = vmatpush.bf16.msra.mxu0 %v506
  %524 = vmatpush.bf16.msra.mxu0 %v505
  %525 = vmatpush.bf16.msra.mxu0 %v504
  %526 = vmatpush.bf16.msra.mxu0 %v503
  %527 = vmatmul.bf16.gmra.mxu0 %v453
  %v528 = vpop.f32.mrf.mxu0
  %v529 = vadd.f32 0.0, %v528
  %v530 = vpop.f32.mrf.mxu0
  %531 = vdwg.mxu0
  %v532 = vadd.f32 %v380, %v529
  %s533 = scalar_lea.vmem %s0, 32
  %v534 = vld [vmem:[%s533] sm:$0xff]
  %v535 = vld [vmem:[%s533 + $0x8] sm:$0xff]
  %v538 = vunpack.c.l.b16 %v534
  %v539 = vunpack.c.h.b16 %v534
  %v540 = vunpack.c.l.b16 %v535
  %v541 = vunpack.c.h.b16 %v535
  %v542 = vpack.c.b16 %v538, %v538
  %v543 = vpack.c.b16 %v539, %v539
  %v544 = vpack.c.b16 %v540, %v540
  %v545 = vpack.c.b16 %v541, %v541
  %v550 = vsel %vm245, %v545, 0
  %552 = vmatpush.bf16.msra.mxu0 %v202
  %553 = vmatpush.bf16.msra.mxu0 %v201
  %554 = vmatpush.bf16.msra.mxu0 %v200
  %555 = vmatpush.bf16.msra.mxu0 %v199
  %556 = vmatpush.bf16.msra.mxu0 %v198
  %557 = vmatpush.bf16.msra.mxu0 %v197
  %558 = vmatpush.bf16.msra.mxu0 %v196
  %559 = vmatpush.bf16.msra.mxu0 %v195
  %560 = vmatmul.bf16.gmra.mxu0 %v542
  %v561 = vpop.f32.mrf.mxu0
  %v562 = vadd.f32 %v80, %v561
  %v563 = vpop.f32.mrf.mxu0
  %564 = vdwg.mxu0
  %565 = vmatpush.bf16.msra.mxu0 %v210
  %566 = vmatpush.bf16.msra.mxu0 %v209
  %567 = vmatpush.bf16.msra.mxu0 %v208
  %568 = vmatpush.bf16.msra.mxu0 %v207
  %569 = vmatpush.bf16.msra.mxu0 %v206
  %570 = vmatpush.bf16.msra.mxu0 %v205
  %571 = vmatpush.bf16.msra.mxu0 %v204
  %572 = vmatpush.bf16.msra.mxu0 %v203
  %573 = vmatmul.bf16.gmra.mxu0 %v543
  %v574 = vpop.f32.mrf.mxu0
  %v575 = vadd.f32 %v562, %v574
  %v576 = vpop.f32.mrf.mxu0
  %577 = vdwg.mxu0
  %578 = vmatpush.bf16.msra.mxu0 %v218
  %579 = vmatpush.bf16.msra.mxu0 %v217
  %580 = vmatpush.bf16.msra.mxu0 %v216
  %581 = vmatpush.bf16.msra.mxu0 %v215
  %582 = vmatpush.bf16.msra.mxu0 %v214
  %583 = vmatpush.bf16.msra.mxu0 %v213
  %584 = vmatpush.bf16.msra.mxu0 %v212
  %585 = vmatpush.bf16.msra.mxu0 %v211
  %586 = vmatmul.bf16.gmra.mxu0 %v544
  %v587 = vpop.f32.mrf.mxu0
  %v588 = vadd.f32 %v575, %v587
  %v589 = vpop.f32.mrf.mxu0
  %590 = vdwg.mxu0
  %591 = vmatpush.bf16.msra.mxu0 0
  %592 = vmatpush.bf16.msra.mxu0 0
  %593 = vmatpush.bf16.msra.mxu0 0
  %594 = vmatpush.bf16.msra.mxu0 0
  %595 = vmatpush.bf16.msra.mxu0 0
  %596 = vmatpush.bf16.msra.mxu0 0
  %597 = vmatpush.bf16.msra.mxu0 0
  %598 = vmatpush.bf16.msra.mxu0 %v219
  %599 = vmatmul.bf16.gmra.mxu0 %v550
  %v600 = vpop.f32.mrf.mxu0
  %v601 = vadd.f32 %v588, %v600
  %v602 = vpop.f32.mrf.mxu0
  %603 = vdwg.mxu0
  %v604 = vmax.f32 %v601, 0.0
  %v605 = vpack.c.bf16 %v604, %v604
  %s606 = scalar_lea.vmem %s3, 128
  %v607 = vld [vmem:[%s606] sm:$0xf]
  %v608 = vld [vmem:[%s606 + $0x4] sm:$0xf]
  %v609 = vld [vmem:[%s606 + $0x8] sm:$0xf]
  %v610 = vld [vmem:[%s606 + $0xc] sm:$0xf]
  %v611 = vld [vmem:[%s606 + $0x10] sm:$0xf]
  %v612 = vld [vmem:[%s606 + $0x14] sm:$0xf]
  %v613 = vld [vmem:[%s606 + $0x18] sm:$0xf]
  %v614 = vld [vmem:[%s606 + $0x1c] sm:$0xf]
  %v615 = vld [vmem:[%s606 + $0x20] sm:$0xf]
  %v616 = vld [vmem:[%s606 + $0x24] sm:$0xf]
  %v617 = vld [vmem:[%s606 + $0x28] sm:$0xf]
  %v618 = vld [vmem:[%s606 + $0x2c] sm:$0xf]
  %v619 = vld [vmem:[%s606 + $0x30] sm:$0xf]
  %v620 = vld [vmem:[%s606 + $0x34] sm:$0xf]
  %v621 = vld [vmem:[%s606 + $0x38] sm:$0xf]
  %v622 = vld [vmem:[%s606 + $0x3c] sm:$0xf]
  %v639 = vunpack.c.l.b16 %v607
  %v640 = vunpack.c.l.b16 %v608
  %v641 = vunpack.c.l.b16 %v609
  %v642 = vunpack.c.l.b16 %v610
  %v643 = vunpack.c.l.b16 %v611
  %v644 = vunpack.c.l.b16 %v612
  %v645 = vunpack.c.l.b16 %v613
  %v646 = vunpack.c.l.b16 %v614
  %v647 = vunpack.c.l.b16 %v615
  %v648 = vunpack.c.l.b16 %v616
  %v649 = vunpack.c.l.b16 %v617
  %v650 = vunpack.c.l.b16 %v618
  %v651 = vunpack.c.l.b16 %v619
  %v652 = vunpack.c.l.b16 %v620
  %v653 = vunpack.c.l.b16 %v621
  %v654 = vunpack.c.l.b16 %v622
  %v655 = vpack.c.b16 %v640, %v639
  %v656 = vpack.c.b16 %v642, %v641
  %v657 = vpack.c.b16 %v644, %v643
  %v658 = vpack.c.b16 %v646, %v645
  %v659 = vpack.c.b16 %v648, %v647
  %v660 = vpack.c.b16 %v650, %v649
  %v661 = vpack.c.b16 %v652, %v651
  %v662 = vpack.c.b16 %v654, %v653
  %671 = vmatpush.bf16.msra.mxu0 %v662
  %672 = vmatpush.bf16.msra.mxu0 %v661
  %673 = vmatpush.bf16.msra.mxu0 %v660
  %674 = vmatpush.bf16.msra.mxu0 %v659
  %675 = vmatpush.bf16.msra.mxu0 %v658
  %676 = vmatpush.bf16.msra.mxu0 %v657
  %677 = vmatpush.bf16.msra.mxu0 %v656
  %678 = vmatpush.bf16.msra.mxu0 %v655
  %679 = vmatmul.bf16.gmra.mxu0 %v605
  %v680 = vpop.f32.mrf.mxu0
  %v681 = vadd.f32 0.0, %v680
  %v682 = vpop.f32.mrf.mxu0
  %683 = vdwg.mxu0
  %v684 = vadd.f32 %v532, %v681
  %s685 = scalar_lea.vmem %s0, 48
  %v686 = vld [vmem:[%s685] sm:$0xff]
  %v687 = vld [vmem:[%s685 + $0x8] sm:$0xff]
  %v690 = vunpack.c.l.b16 %v686
  %v691 = vunpack.c.h.b16 %v686
  %v692 = vunpack.c.l.b16 %v687
  %v693 = vunpack.c.h.b16 %v687
  %v694 = vpack.c.b16 %v690, %v690
  %v695 = vpack.c.b16 %v691, %v691
  %v696 = vpack.c.b16 %v692, %v692
  %v697 = vpack.c.b16 %v693, %v693
  %v702 = vsel %vm245, %v697, 0
  %704 = vmatpush.bf16.msra.mxu0 %v202
  %705 = vmatpush.bf16.msra.mxu0 %v201
  %706 = vmatpush.bf16.msra.mxu0 %v200
  %707 = vmatpush.bf16.msra.mxu0 %v199
  %708 = vmatpush.bf16.msra.mxu0 %v198
  %709 = vmatpush.bf16.msra.mxu0 %v197
  %710 = vmatpush.bf16.msra.mxu0 %v196
  %711 = vmatpush.bf16.msra.mxu0 %v195
  %712 = vmatmul.bf16.gmra.mxu0 %v694
  %v713 = vpop.f32.mrf.mxu0
  %v714 = vadd.f32 %v80, %v713
  %v715 = vpop.f32.mrf.mxu0
  %716 = vdwg.mxu0
  %717 = vmatpush.bf16.msra.mxu0 %v210
  %718 = vmatpush.bf16.msra.mxu0 %v209
  %719 = vmatpush.bf16.msra.mxu0 %v208
  %720 = vmatpush.bf16.msra.mxu0 %v207
  %721 = vmatpush.bf16.msra.mxu0 %v206
  %722 = vmatpush.bf16.msra.mxu0 %v205
  %723 = vmatpush.bf16.msra.mxu0 %v204
  %724 = vmatpush.bf16.msra.mxu0 %v203
  %725 = vmatmul.bf16.gmra.mxu0 %v695
  %v726 = vpop.f32.mrf.mxu0
  %v727 = vadd.f32 %v714, %v726
  %v728 = vpop.f32.mrf.mxu0
  %729 = vdwg.mxu0
  %730 = vmatpush.bf16.msra.mxu0 %v218
  %731 = vmatpush.bf16.msra.mxu0 %v217
  %732 = vmatpush.bf16.msra.mxu0 %v216
  %733 = vmatpush.bf16.msra.mxu0 %v215
  %734 = vmatpush.bf16.msra.mxu0 %v214
  %735 = vmatpush.bf16.msra.mxu0 %v213
  %736 = vmatpush.bf16.msra.mxu0 %v212
  %737 = vmatpush.bf16.msra.mxu0 %v211
  %738 = vmatmul.bf16.gmra.mxu0 %v696
  %v739 = vpop.f32.mrf.mxu0
  %v740 = vadd.f32 %v727, %v739
  %v741 = vpop.f32.mrf.mxu0
  %742 = vdwg.mxu0
  %743 = vmatpush.bf16.msra.mxu0 0
  %744 = vmatpush.bf16.msra.mxu0 0
  %745 = vmatpush.bf16.msra.mxu0 0
  %746 = vmatpush.bf16.msra.mxu0 0
  %747 = vmatpush.bf16.msra.mxu0 0
  %748 = vmatpush.bf16.msra.mxu0 0
  %749 = vmatpush.bf16.msra.mxu0 0
  %750 = vmatpush.bf16.msra.mxu0 %v219
  %751 = vmatmul.bf16.gmra.mxu0 %v702
  %v752 = vpop.f32.mrf.mxu0
  %v753 = vadd.f32 %v740, %v752
  %v754 = vpop.f32.mrf.mxu0
  %755 = vdwg.mxu0
  %v756 = vmax.f32 %v753, 0.0
  %v757 = vpack.c.bf16 %v756, %v756
  %s758 = scalar_lea.vmem %s3, 192
  %v759 = vld [vmem:[%s758] sm:$0xf]
  %v760 = vld [vmem:[%s758 + $0x4] sm:$0xf]
  %v761 = vld [vmem:[%s758 + $0x8] sm:$0xf]
  %v762 = vld [vmem:[%s758 + $0xc] sm:$0xf]
  %v763 = vld [vmem:[%s758 + $0x10] sm:$0xf]
  %v764 = vld [vmem:[%s758 + $0x14] sm:$0xf]
  %v765 = vld [vmem:[%s758 + $0x18] sm:$0xf]
  %v766 = vld [vmem:[%s758 + $0x1c] sm:$0xf]
  %v767 = vld [vmem:[%s758 + $0x20] sm:$0xf]
  %v768 = vld [vmem:[%s758 + $0x24] sm:$0xf]
  %v769 = vld [vmem:[%s758 + $0x28] sm:$0xf]
  %v770 = vld [vmem:[%s758 + $0x2c] sm:$0xf]
  %v771 = vld [vmem:[%s758 + $0x30] sm:$0xf]
  %v772 = vld [vmem:[%s758 + $0x34] sm:$0xf]
  %v773 = vld [vmem:[%s758 + $0x38] sm:$0xf]
  %v774 = vld [vmem:[%s758 + $0x3c] sm:$0xf]
  %v791 = vunpack.c.l.b16 %v759
  %v792 = vunpack.c.l.b16 %v760
  %v793 = vunpack.c.l.b16 %v761
  %v794 = vunpack.c.l.b16 %v762
  %v795 = vunpack.c.l.b16 %v763
  %v796 = vunpack.c.l.b16 %v764
  %v797 = vunpack.c.l.b16 %v765
  %v798 = vunpack.c.l.b16 %v766
  %v799 = vunpack.c.l.b16 %v767
  %v800 = vunpack.c.l.b16 %v768
  %v801 = vunpack.c.l.b16 %v769
  %v802 = vunpack.c.l.b16 %v770
  %v803 = vunpack.c.l.b16 %v771
  %v804 = vunpack.c.l.b16 %v772
  %v805 = vunpack.c.l.b16 %v773
  %v806 = vunpack.c.l.b16 %v774
  %v807 = vpack.c.b16 %v792, %v791
  %v808 = vpack.c.b16 %v794, %v793
  %v809 = vpack.c.b16 %v796, %v795
  %v810 = vpack.c.b16 %v798, %v797
  %v811 = vpack.c.b16 %v800, %v799
  %v812 = vpack.c.b16 %v802, %v801
  %v813 = vpack.c.b16 %v804, %v803
  %v814 = vpack.c.b16 %v806, %v805
  %823 = vmatpush.bf16.msra.mxu0 %v814
  %824 = vmatpush.bf16.msra.mxu0 %v813
  %825 = vmatpush.bf16.msra.mxu0 %v812
  %826 = vmatpush.bf16.msra.mxu0 %v811
  %827 = vmatpush.bf16.msra.mxu0 %v810
  %828 = vmatpush.bf16.msra.mxu0 %v809
  %829 = vmatpush.bf16.msra.mxu0 %v808
  %830 = vmatpush.bf16.msra.mxu0 %v807
  %831 = vmatmul.bf16.gmra.mxu0 %v757
  %v832 = vpop.f32.mrf.mxu0
  %v833 = vadd.f32 0.0, %v832
  %v834 = vpop.f32.mrf.mxu0
  %835 = vdwg.mxu0
  %v836 = vadd.f32 %v684, %v833
  %s837 = scalar_lea.vmem %s0, 64
  %v838 = vld [vmem:[%s837] sm:$0xff]
  %v839 = vld [vmem:[%s837 + $0x8] sm:$0xff]
  %v842 = vunpack.c.l.b16 %v838
  %v843 = vunpack.c.h.b16 %v838
  %v844 = vunpack.c.l.b16 %v839
  %v845 = vunpack.c.h.b16 %v839
  %v846 = vpack.c.b16 %v842, %v842
  %v847 = vpack.c.b16 %v843, %v843
  %v848 = vpack.c.b16 %v844, %v844
  %v849 = vpack.c.b16 %v845, %v845
  %v854 = vsel %vm245, %v849, 0
  %856 = vmatpush.bf16.msra.mxu0 %v202
  %857 = vmatpush.bf16.msra.mxu0 %v201
  %858 = vmatpush.bf16.msra.mxu0 %v200
  %859 = vmatpush.bf16.msra.mxu0 %v199
  %860 = vmatpush.bf16.msra.mxu0 %v198
  %861 = vmatpush.bf16.msra.mxu0 %v197
  %862 = vmatpush.bf16.msra.mxu0 %v196
  %863 = vmatpush.bf16.msra.mxu0 %v195
  %864 = vmatmul.bf16.gmra.mxu0 %v846
  %v865 = vpop.f32.mrf.mxu0
  %v866 = vadd.f32 %v80, %v865
  %v867 = vpop.f32.mrf.mxu0
  %868 = vdwg.mxu0
  %869 = vmatpush.bf16.msra.mxu0 %v210
  %870 = vmatpush.bf16.msra.mxu0 %v209
  %871 = vmatpush.bf16.msra.mxu0 %v208
  %872 = vmatpush.bf16.msra.mxu0 %v207
  %873 = vmatpush.bf16.msra.mxu0 %v206
  %874 = vmatpush.bf16.msra.mxu0 %v205
  %875 = vmatpush.bf16.msra.mxu0 %v204
  %876 = vmatpush.bf16.msra.mxu0 %v203
  %877 = vmatmul.bf16.gmra.mxu0 %v847
  %v878 = vpop.f32.mrf.mxu0
  %v879 = vadd.f32 %v866, %v878
  %v880 = vpop.f32.mrf.mxu0
  %881 = vdwg.mxu0
  %882 = vmatpush.bf16.msra.mxu0 %v218
  %883 = vmatpush.bf16.msra.mxu0 %v217
  %884 = vmatpush.bf16.msra.mxu0 %v216
  %885 = vmatpush.bf16.msra.mxu0 %v215
  %886 = vmatpush.bf16.msra.mxu0 %v214
  %887 = vmatpush.bf16.msra.mxu0 %v213
  %888 = vmatpush.bf16.msra.mxu0 %v212
  %889 = vmatpush.bf16.msra.mxu0 %v211
  %890 = vmatmul.bf16.gmra.mxu0 %v848
  %v891 = vpop.f32.mrf.mxu0
  %v892 = vadd.f32 %v879, %v891
  %v893 = vpop.f32.mrf.mxu0
  %894 = vdwg.mxu0
  %895 = vmatpush.bf16.msra.mxu0 0
  %896 = vmatpush.bf16.msra.mxu0 0
  %897 = vmatpush.bf16.msra.mxu0 0
  %898 = vmatpush.bf16.msra.mxu0 0
  %899 = vmatpush.bf16.msra.mxu0 0
  %900 = vmatpush.bf16.msra.mxu0 0
  %901 = vmatpush.bf16.msra.mxu0 0
  %902 = vmatpush.bf16.msra.mxu0 %v219
  %903 = vmatmul.bf16.gmra.mxu0 %v854
  %v904 = vpop.f32.mrf.mxu0
  %v905 = vadd.f32 %v892, %v904
  %v906 = vpop.f32.mrf.mxu0
  %907 = vdwg.mxu0
  %v908 = vmax.f32 %v905, 0.0
  %v909 = vpack.c.bf16 %v908, %v908
  %s910 = scalar_lea.vmem %s3, 256
  %v911 = vld [vmem:[%s910] sm:$0xf]
  %v912 = vld [vmem:[%s910 + $0x4] sm:$0xf]
  %v913 = vld [vmem:[%s910 + $0x8] sm:$0xf]
  %v914 = vld [vmem:[%s910 + $0xc] sm:$0xf]
  %v915 = vld [vmem:[%s910 + $0x10] sm:$0xf]
  %v916 = vld [vmem:[%s910 + $0x14] sm:$0xf]
  %v917 = vld [vmem:[%s910 + $0x18] sm:$0xf]
  %v918 = vld [vmem:[%s910 + $0x1c] sm:$0xf]
  %v919 = vld [vmem:[%s910 + $0x20] sm:$0xf]
  %v920 = vld [vmem:[%s910 + $0x24] sm:$0xf]
  %v921 = vld [vmem:[%s910 + $0x28] sm:$0xf]
  %v922 = vld [vmem:[%s910 + $0x2c] sm:$0xf]
  %v923 = vld [vmem:[%s910 + $0x30] sm:$0xf]
  %v924 = vld [vmem:[%s910 + $0x34] sm:$0xf]
  %v925 = vld [vmem:[%s910 + $0x38] sm:$0xf]
  %v926 = vld [vmem:[%s910 + $0x3c] sm:$0xf]
  %v943 = vunpack.c.l.b16 %v911
  %v944 = vunpack.c.l.b16 %v912
  %v945 = vunpack.c.l.b16 %v913
  %v946 = vunpack.c.l.b16 %v914
  %v947 = vunpack.c.l.b16 %v915
  %v948 = vunpack.c.l.b16 %v916
  %v949 = vunpack.c.l.b16 %v917
  %v950 = vunpack.c.l.b16 %v918
  %v951 = vunpack.c.l.b16 %v919
  %v952 = vunpack.c.l.b16 %v920
  %v953 = vunpack.c.l.b16 %v921
  %v954 = vunpack.c.l.b16 %v922
  %v955 = vunpack.c.l.b16 %v923
  %v956 = vunpack.c.l.b16 %v924
  %v957 = vunpack.c.l.b16 %v925
  %v958 = vunpack.c.l.b16 %v926
  %v959 = vpack.c.b16 %v944, %v943
  %v960 = vpack.c.b16 %v946, %v945
  %v961 = vpack.c.b16 %v948, %v947
  %v962 = vpack.c.b16 %v950, %v949
  %v963 = vpack.c.b16 %v952, %v951
  %v964 = vpack.c.b16 %v954, %v953
  %v965 = vpack.c.b16 %v956, %v955
  %v966 = vpack.c.b16 %v958, %v957
  %975 = vmatpush.bf16.msra.mxu0 %v966
  %976 = vmatpush.bf16.msra.mxu0 %v965
  %977 = vmatpush.bf16.msra.mxu0 %v964
  %978 = vmatpush.bf16.msra.mxu0 %v963
  %979 = vmatpush.bf16.msra.mxu0 %v962
  %980 = vmatpush.bf16.msra.mxu0 %v961
  %981 = vmatpush.bf16.msra.mxu0 %v960
  %982 = vmatpush.bf16.msra.mxu0 %v959
  %983 = vmatmul.bf16.gmra.mxu0 %v909
  %v984 = vpop.f32.mrf.mxu0
  %v985 = vadd.f32 0.0, %v984
  %v986 = vpop.f32.mrf.mxu0
  %987 = vdwg.mxu0
  %v988 = vadd.f32 %v836, %v985
  %s989 = scalar_lea.vmem %s0, 80
  %v990 = vld [vmem:[%s989] sm:$0xff]
  %v991 = vld [vmem:[%s989 + $0x8] sm:$0xff]
  %v994 = vunpack.c.l.b16 %v990
  %v995 = vunpack.c.h.b16 %v990
  %v996 = vunpack.c.l.b16 %v991
  %v997 = vunpack.c.h.b16 %v991
  %v998 = vpack.c.b16 %v994, %v994
  %v999 = vpack.c.b16 %v995, %v995
  %v1000 = vpack.c.b16 %v996, %v996
  %v1001 = vpack.c.b16 %v997, %v997
  %v1006 = vsel %vm245, %v1001, 0
  %1008 = vmatpush.bf16.msra.mxu0 %v202
  %1009 = vmatpush.bf16.msra.mxu0 %v201
  %1010 = vmatpush.bf16.msra.mxu0 %v200
  %1011 = vmatpush.bf16.msra.mxu0 %v199
  %1012 = vmatpush.bf16.msra.mxu0 %v198
  %1013 = vmatpush.bf16.msra.mxu0 %v197
  %1014 = vmatpush.bf16.msra.mxu0 %v196
  %1015 = vmatpush.bf16.msra.mxu0 %v195
  %1016 = vmatmul.bf16.gmra.mxu0 %v998
  %v1017 = vpop.f32.mrf.mxu0
  %v1018 = vadd.f32 %v80, %v1017
  %v1019 = vpop.f32.mrf.mxu0
  %1020 = vdwg.mxu0
  %1021 = vmatpush.bf16.msra.mxu0 %v210
  %1022 = vmatpush.bf16.msra.mxu0 %v209
  %1023 = vmatpush.bf16.msra.mxu0 %v208
  %1024 = vmatpush.bf16.msra.mxu0 %v207
  %1025 = vmatpush.bf16.msra.mxu0 %v206
  %1026 = vmatpush.bf16.msra.mxu0 %v205
  %1027 = vmatpush.bf16.msra.mxu0 %v204
  %1028 = vmatpush.bf16.msra.mxu0 %v203
  %1029 = vmatmul.bf16.gmra.mxu0 %v999
  %v1030 = vpop.f32.mrf.mxu0
  %v1031 = vadd.f32 %v1018, %v1030
  %v1032 = vpop.f32.mrf.mxu0
  %1033 = vdwg.mxu0
  %1034 = vmatpush.bf16.msra.mxu0 %v218
  %1035 = vmatpush.bf16.msra.mxu0 %v217
  %1036 = vmatpush.bf16.msra.mxu0 %v216
  %1037 = vmatpush.bf16.msra.mxu0 %v215
  %1038 = vmatpush.bf16.msra.mxu0 %v214
  %1039 = vmatpush.bf16.msra.mxu0 %v213
  %1040 = vmatpush.bf16.msra.mxu0 %v212
  %1041 = vmatpush.bf16.msra.mxu0 %v211
  %1042 = vmatmul.bf16.gmra.mxu0 %v1000
  %v1043 = vpop.f32.mrf.mxu0
  %v1044 = vadd.f32 %v1031, %v1043
  %v1045 = vpop.f32.mrf.mxu0
  %1046 = vdwg.mxu0
  %1047 = vmatpush.bf16.msra.mxu0 0
  %1048 = vmatpush.bf16.msra.mxu0 0
  %1049 = vmatpush.bf16.msra.mxu0 0
  %1050 = vmatpush.bf16.msra.mxu0 0
  %1051 = vmatpush.bf16.msra.mxu0 0
  %1052 = vmatpush.bf16.msra.mxu0 0
  %1053 = vmatpush.bf16.msra.mxu0 0
  %1054 = vmatpush.bf16.msra.mxu0 %v219
  %1055 = vmatmul.bf16.gmra.mxu0 %v1006
  %v1056 = vpop.f32.mrf.mxu0
  %v1057 = vadd.f32 %v1044, %v1056
  %v1058 = vpop.f32.mrf.mxu0
  %1059 = vdwg.mxu0
  %v1060 = vmax.f32 %v1057, 0.0
  %v1061 = vpack.c.bf16 %v1060, %v1060
  %s1062 = scalar_lea.vmem %s3, 320
  %v1063 = vld [vmem:[%s1062] sm:$0xf]
  %v1064 = vld [vmem:[%s1062 + $0x4] sm:$0xf]
  %v1065 = vld [vmem:[%s1062 + $0x8] sm:$0xf]
  %v1066 = vld [vmem:[%s1062 + $0xc] sm:$0xf]
  %v1067 = vld [vmem:[%s1062 + $0x10] sm:$0xf]
  %v1068 = vld [vmem:[%s1062 + $0x14] sm:$0xf]
  %v1069 = vld [vmem:[%s1062 + $0x18] sm:$0xf]
  %v1070 = vld [vmem:[%s1062 + $0x1c] sm:$0xf]
  %v1071 = vld [vmem:[%s1062 + $0x20] sm:$0xf]
  %v1072 = vld [vmem:[%s1062 + $0x24] sm:$0xf]
  %v1073 = vld [vmem:[%s1062 + $0x28] sm:$0xf]
  %v1074 = vld [vmem:[%s1062 + $0x2c] sm:$0xf]
  %v1075 = vld [vmem:[%s1062 + $0x30] sm:$0xf]
  %v1076 = vld [vmem:[%s1062 + $0x34] sm:$0xf]
  %v1077 = vld [vmem:[%s1062 + $0x38] sm:$0xf]
  %v1078 = vld [vmem:[%s1062 + $0x3c] sm:$0xf]
  %v1095 = vunpack.c.l.b16 %v1063
  %v1096 = vunpack.c.l.b16 %v1064
  %v1097 = vunpack.c.l.b16 %v1065
  %v1098 = vunpack.c.l.b16 %v1066
  %v1099 = vunpack.c.l.b16 %v1067
  %v1100 = vunpack.c.l.b16 %v1068
  %v1101 = vunpack.c.l.b16 %v1069
  %v1102 = vunpack.c.l.b16 %v1070
  %v1103 = vunpack.c.l.b16 %v1071
  %v1104 = vunpack.c.l.b16 %v1072
  %v1105 = vunpack.c.l.b16 %v1073
  %v1106 = vunpack.c.l.b16 %v1074
  %v1107 = vunpack.c.l.b16 %v1075
  %v1108 = vunpack.c.l.b16 %v1076
  %v1109 = vunpack.c.l.b16 %v1077
  %v1110 = vunpack.c.l.b16 %v1078
  %v1111 = vpack.c.b16 %v1096, %v1095
  %v1112 = vpack.c.b16 %v1098, %v1097
  %v1113 = vpack.c.b16 %v1100, %v1099
  %v1114 = vpack.c.b16 %v1102, %v1101
  %v1115 = vpack.c.b16 %v1104, %v1103
  %v1116 = vpack.c.b16 %v1106, %v1105
  %v1117 = vpack.c.b16 %v1108, %v1107
  %v1118 = vpack.c.b16 %v1110, %v1109
  %1127 = vmatpush.bf16.msra.mxu0 %v1118
  %1128 = vmatpush.bf16.msra.mxu0 %v1117
  %1129 = vmatpush.bf16.msra.mxu0 %v1116
  %1130 = vmatpush.bf16.msra.mxu0 %v1115
  %1131 = vmatpush.bf16.msra.mxu0 %v1114
  %1132 = vmatpush.bf16.msra.mxu0 %v1113
  %1133 = vmatpush.bf16.msra.mxu0 %v1112
  %1134 = vmatpush.bf16.msra.mxu0 %v1111
  %1135 = vmatmul.bf16.gmra.mxu0 %v1061
  %v1136 = vpop.f32.mrf.mxu0
  %v1137 = vadd.f32 0.0, %v1136
  %v1138 = vpop.f32.mrf.mxu0
  %1139 = vdwg.mxu0
  %v1140 = vadd.f32 %v988, %v1137
  %s1141 = scalar_lea.vmem %s0, 96
  %v1142 = vld [vmem:[%s1141] sm:$0xff]
  %v1143 = vld [vmem:[%s1141 + $0x8] sm:$0xff]
  %v1146 = vunpack.c.l.b16 %v1142
  %v1147 = vunpack.c.h.b16 %v1142
  %v1148 = vunpack.c.l.b16 %v1143
  %v1149 = vunpack.c.h.b16 %v1143
  %v1150 = vpack.c.b16 %v1146, %v1146
  %v1151 = vpack.c.b16 %v1147, %v1147
  %v1152 = vpack.c.b16 %v1148, %v1148
  %v1153 = vpack.c.b16 %v1149, %v1149
  %v1158 = vsel %vm245, %v1153, 0
  %1160 = vmatpush.bf16.msra.mxu0 %v202
  %1161 = vmatpush.bf16.msra.mxu0 %v201
  %1162 = vmatpush.bf16.msra.mxu0 %v200
  %1163 = vmatpush.bf16.msra.mxu0 %v199
  %1164 = vmatpush.bf16.msra.mxu0 %v198
  %1165 = vmatpush.bf16.msra.mxu0 %v197
  %1166 = vmatpush.bf16.msra.mxu0 %v196
  %1167 = vmatpush.bf16.msra.mxu0 %v195
  %1168 = vmatmul.bf16.gmra.mxu0 %v1150
  %v1169 = vpop.f32.mrf.mxu0
  %v1170 = vadd.f32 %v80, %v1169
  %v1171 = vpop.f32.mrf.mxu0
  %1172 = vdwg.mxu0
  %1173 = vmatpush.bf16.msra.mxu0 %v210
  %1174 = vmatpush.bf16.msra.mxu0 %v209
  %1175 = vmatpush.bf16.msra.mxu0 %v208
  %1176 = vmatpush.bf16.msra.mxu0 %v207
  %1177 = vmatpush.bf16.msra.mxu0 %v206
  %1178 = vmatpush.bf16.msra.mxu0 %v205
  %1179 = vmatpush.bf16.msra.mxu0 %v204
  %1180 = vmatpush.bf16.msra.mxu0 %v203
  %1181 = vmatmul.bf16.gmra.mxu0 %v1151
  %v1182 = vpop.f32.mrf.mxu0
  %v1183 = vadd.f32 %v1170, %v1182
  %v1184 = vpop.f32.mrf.mxu0
  %1185 = vdwg.mxu0
  %1186 = vmatpush.bf16.msra.mxu0 %v218
  %1187 = vmatpush.bf16.msra.mxu0 %v217
  %1188 = vmatpush.bf16.msra.mxu0 %v216
  %1189 = vmatpush.bf16.msra.mxu0 %v215
  %1190 = vmatpush.bf16.msra.mxu0 %v214
  %1191 = vmatpush.bf16.msra.mxu0 %v213
  %1192 = vmatpush.bf16.msra.mxu0 %v212
  %1193 = vmatpush.bf16.msra.mxu0 %v211
  %1194 = vmatmul.bf16.gmra.mxu0 %v1152
  %v1195 = vpop.f32.mrf.mxu0
  %v1196 = vadd.f32 %v1183, %v1195
  %v1197 = vpop.f32.mrf.mxu0
  %1198 = vdwg.mxu0
  %1199 = vmatpush.bf16.msra.mxu0 0
  %1200 = vmatpush.bf16.msra.mxu0 0
  %1201 = vmatpush.bf16.msra.mxu0 0
  %1202 = vmatpush.bf16.msra.mxu0 0
  %1203 = vmatpush.bf16.msra.mxu0 0
  %1204 = vmatpush.bf16.msra.mxu0 0
  %1205 = vmatpush.bf16.msra.mxu0 0
  %1206 = vmatpush.bf16.msra.mxu0 %v219
  %1207 = vmatmul.bf16.gmra.mxu0 %v1158
  %v1208 = vpop.f32.mrf.mxu0
  %v1209 = vadd.f32 %v1196, %v1208
  %v1210 = vpop.f32.mrf.mxu0
  %1211 = vdwg.mxu0
  %v1212 = vmax.f32 %v1209, 0.0
  %v1213 = vpack.c.bf16 %v1212, %v1212
  %s1214 = scalar_lea.vmem %s3, 384
  %v1215 = vld [vmem:[%s1214] sm:$0xf]
  %v1216 = vld [vmem:[%s1214 + $0x4] sm:$0xf]
  %v1217 = vld [vmem:[%s1214 + $0x8] sm:$0xf]
  %v1218 = vld [vmem:[%s1214 + $0xc] sm:$0xf]
  %v1219 = vld [vmem:[%s1214 + $0x10] sm:$0xf]
  %v1220 = vld [vmem:[%s1214 + $0x14] sm:$0xf]
  %v1221 = vld [vmem:[%s1214 + $0x18] sm:$0xf]
  %v1222 = vld [vmem:[%s1214 + $0x1c] sm:$0xf]
  %v1223 = vld [vmem:[%s1214 + $0x20] sm:$0xf]
  %v1224 = vld [vmem:[%s1214 + $0x24] sm:$0xf]
  %v1225 = vld [vmem:[%s1214 + $0x28] sm:$0xf]
  %v1226 = vld [vmem:[%s1214 + $0x2c] sm:$0xf]
  %v1227 = vld [vmem:[%s1214 + $0x30] sm:$0xf]
  %v1228 = vld [vmem:[%s1214 + $0x34] sm:$0xf]
  %v1229 = vld [vmem:[%s1214 + $0x38] sm:$0xf]
  %v1230 = vld [vmem:[%s1214 + $0x3c] sm:$0xf]
  %v1247 = vunpack.c.l.b16 %v1215
  %v1248 = vunpack.c.l.b16 %v1216
  %v1249 = vunpack.c.l.b16 %v1217
  %v1250 = vunpack.c.l.b16 %v1218
  %v1251 = vunpack.c.l.b16 %v1219
  %v1252 = vunpack.c.l.b16 %v1220
  %v1253 = vunpack.c.l.b16 %v1221
  %v1254 = vunpack.c.l.b16 %v1222
  %v1255 = vunpack.c.l.b16 %v1223
  %v1256 = vunpack.c.l.b16 %v1224
  %v1257 = vunpack.c.l.b16 %v1225
  %v1258 = vunpack.c.l.b16 %v1226
  %v1259 = vunpack.c.l.b16 %v1227
  %v1260 = vunpack.c.l.b16 %v1228
  %v1261 = vunpack.c.l.b16 %v1229
  %v1262 = vunpack.c.l.b16 %v1230
  %v1263 = vpack.c.b16 %v1248, %v1247
  %v1264 = vpack.c.b16 %v1250, %v1249
  %v1265 = vpack.c.b16 %v1252, %v1251
  %v1266 = vpack.c.b16 %v1254, %v1253
  %v1267 = vpack.c.b16 %v1256, %v1255
  %v1268 = vpack.c.b16 %v1258, %v1257
  %v1269 = vpack.c.b16 %v1260, %v1259
  %v1270 = vpack.c.b16 %v1262, %v1261
  %1279 = vmatpush.bf16.msra.mxu0 %v1270
  %1280 = vmatpush.bf16.msra.mxu0 %v1269
  %1281 = vmatpush.bf16.msra.mxu0 %v1268
  %1282 = vmatpush.bf16.msra.mxu0 %v1267
  %1283 = vmatpush.bf16.msra.mxu0 %v1266
  %1284 = vmatpush.bf16.msra.mxu0 %v1265
  %1285 = vmatpush.bf16.msra.mxu0 %v1264
  %1286 = vmatpush.bf16.msra.mxu0 %v1263
  %1287 = vmatmul.bf16.gmra.mxu0 %v1213
  %v1288 = vpop.f32.mrf.mxu0
  %v1289 = vadd.f32 0.0, %v1288
  %v1290 = vpop.f32.mrf.mxu0
  %1291 = vdwg.mxu0
  %v1292 = vadd.f32 %v1140, %v1289
  %s1293 = scalar_lea.vmem %s0, 112
  %v1294 = vld [vmem:[%s1293] sm:$0xff]
  %v1295 = vld [vmem:[%s1293 + $0x8] sm:$0xff]
  %v1298 = vunpack.c.l.b16 %v1294
  %v1299 = vunpack.c.h.b16 %v1294
  %v1300 = vunpack.c.l.b16 %v1295
  %v1301 = vunpack.c.h.b16 %v1295
  %v1302 = vpack.c.b16 %v1298, %v1298
  %v1303 = vpack.c.b16 %v1299, %v1299
  %v1304 = vpack.c.b16 %v1300, %v1300
  %v1305 = vpack.c.b16 %v1301, %v1301
  %v1310 = vsel %vm245, %v1305, 0
  %1312 = vmatpush.bf16.msra.mxu0 %v202
  %1313 = vmatpush.bf16.msra.mxu0 %v201
  %1314 = vmatpush.bf16.msra.mxu0 %v200
  %1315 = vmatpush.bf16.msra.mxu0 %v199
  %1316 = vmatpush.bf16.msra.mxu0 %v198
  %1317 = vmatpush.bf16.msra.mxu0 %v197
  %1318 = vmatpush.bf16.msra.mxu0 %v196
  %1319 = vmatpush.bf16.msra.mxu0 %v195
  %1320 = vmatmul.bf16.gmra.mxu0 %v1302
  %v1321 = vpop.f32.mrf.mxu0
  %v1322 = vadd.f32 %v80, %v1321
  %v1323 = vpop.f32.mrf.mxu0
  %1324 = vdwg.mxu0
  %1325 = vmatpush.bf16.msra.mxu0 %v210
  %1326 = vmatpush.bf16.msra.mxu0 %v209
  %1327 = vmatpush.bf16.msra.mxu0 %v208
  %1328 = vmatpush.bf16.msra.mxu0 %v207
  %1329 = vmatpush.bf16.msra.mxu0 %v206
  %1330 = vmatpush.bf16.msra.mxu0 %v205
  %1331 = vmatpush.bf16.msra.mxu0 %v204
  %1332 = vmatpush.bf16.msra.mxu0 %v203
  %1333 = vmatmul.bf16.gmra.mxu0 %v1303
  %v1334 = vpop.f32.mrf.mxu0
  %v1335 = vadd.f32 %v1322, %v1334
  %v1336 = vpop.f32.mrf.mxu0
  %1337 = vdwg.mxu0
  %1338 = vmatpush.bf16.msra.mxu0 %v218
  %1339 = vmatpush.bf16.msra.mxu0 %v217
  %1340 = vmatpush.bf16.msra.mxu0 %v216
  %1341 = vmatpush.bf16.msra.mxu0 %v215
  %1342 = vmatpush.bf16.msra.mxu0 %v214
  %1343 = vmatpush.bf16.msra.mxu0 %v213
  %1344 = vmatpush.bf16.msra.mxu0 %v212
  %1345 = vmatpush.bf16.msra.mxu0 %v211
  %1346 = vmatmul.bf16.gmra.mxu0 %v1304
  %v1347 = vpop.f32.mrf.mxu0
  %v1348 = vadd.f32 %v1335, %v1347
  %v1349 = vpop.f32.mrf.mxu0
  %1350 = vdwg.mxu0
  %1351 = vmatpush.bf16.msra.mxu0 0
  %1352 = vmatpush.bf16.msra.mxu0 0
  %1353 = vmatpush.bf16.msra.mxu0 0
  %1354 = vmatpush.bf16.msra.mxu0 0
  %1355 = vmatpush.bf16.msra.mxu0 0
  %1356 = vmatpush.bf16.msra.mxu0 0
  %1357 = vmatpush.bf16.msra.mxu0 0
  %1358 = vmatpush.bf16.msra.mxu0 %v219
  %1359 = vmatmul.bf16.gmra.mxu0 %v1310
  %v1360 = vpop.f32.mrf.mxu0
  %v1361 = vadd.f32 %v1348, %v1360
  %v1362 = vpop.f32.mrf.mxu0
  %1363 = vdwg.mxu0
  %v1364 = vmax.f32 %v1361, 0.0
  %v1365 = vpack.c.bf16 %v1364, %v1364
  %s1366 = scalar_lea.vmem %s3, 448
  %v1367 = vld [vmem:[%s1366] sm:$0xf]
  %v1368 = vld [vmem:[%s1366 + $0x4] sm:$0xf]
  %v1369 = vld [vmem:[%s1366 + $0x8] sm:$0xf]
  %v1370 = vld [vmem:[%s1366 + $0xc] sm:$0xf]
  %v1371 = vld [vmem:[%s1366 + $0x10] sm:$0xf]
  %v1372 = vld [vmem:[%s1366 + $0x14] sm:$0xf]
  %v1373 = vld [vmem:[%s1366 + $0x18] sm:$0xf]
  %v1374 = vld [vmem:[%s1366 + $0x1c] sm:$0xf]
  %v1375 = vld [vmem:[%s1366 + $0x20] sm:$0xf]
  %v1376 = vld [vmem:[%s1366 + $0x24] sm:$0xf]
  %v1377 = vld [vmem:[%s1366 + $0x28] sm:$0xf]
  %v1378 = vld [vmem:[%s1366 + $0x2c] sm:$0xf]
  %v1379 = vld [vmem:[%s1366 + $0x30] sm:$0xf]
  %v1380 = vld [vmem:[%s1366 + $0x34] sm:$0xf]
  %v1381 = vld [vmem:[%s1366 + $0x38] sm:$0xf]
  %v1382 = vld [vmem:[%s1366 + $0x3c] sm:$0xf]
  %v1399 = vunpack.c.l.b16 %v1367
  %v1400 = vunpack.c.l.b16 %v1368
  %v1401 = vunpack.c.l.b16 %v1369
  %v1402 = vunpack.c.l.b16 %v1370
  %v1403 = vunpack.c.l.b16 %v1371
  %v1404 = vunpack.c.l.b16 %v1372
  %v1405 = vunpack.c.l.b16 %v1373
  %v1406 = vunpack.c.l.b16 %v1374
  %v1407 = vunpack.c.l.b16 %v1375
  %v1408 = vunpack.c.l.b16 %v1376
  %v1409 = vunpack.c.l.b16 %v1377
  %v1410 = vunpack.c.l.b16 %v1378
  %v1411 = vunpack.c.l.b16 %v1379
  %v1412 = vunpack.c.l.b16 %v1380
  %v1413 = vunpack.c.l.b16 %v1381
  %v1414 = vunpack.c.l.b16 %v1382
  %v1415 = vpack.c.b16 %v1400, %v1399
  %v1416 = vpack.c.b16 %v1402, %v1401
  %v1417 = vpack.c.b16 %v1404, %v1403
  %v1418 = vpack.c.b16 %v1406, %v1405
  %v1419 = vpack.c.b16 %v1408, %v1407
  %v1420 = vpack.c.b16 %v1410, %v1409
  %v1421 = vpack.c.b16 %v1412, %v1411
  %v1422 = vpack.c.b16 %v1414, %v1413
  %1431 = vmatpush.bf16.msra.mxu0 %v1422
  %1432 = vmatpush.bf16.msra.mxu0 %v1421
  %1433 = vmatpush.bf16.msra.mxu0 %v1420
  %1434 = vmatpush.bf16.msra.mxu0 %v1419
  %1435 = vmatpush.bf16.msra.mxu0 %v1418
  %1436 = vmatpush.bf16.msra.mxu0 %v1417
  %1437 = vmatpush.bf16.msra.mxu0 %v1416
  %1438 = vmatpush.bf16.msra.mxu0 %v1415
  %1439 = vmatmul.bf16.gmra.mxu0 %v1365
  %v1440 = vpop.f32.mrf.mxu0
  %v1441 = vadd.f32 0.0, %v1440
  %v1442 = vpop.f32.mrf.mxu0
  %1443 = vdwg.mxu0
  %v1444 = vadd.f32 %v1292, %v1441
  %s1445 = scalar_lea.vmem %s0, 128
  %v1446 = vld [vmem:[%s1445] sm:$0xff]
  %v1447 = vld [vmem:[%s1445 + $0x8] sm:$0xff]
  %v1450 = vunpack.c.l.b16 %v1446
  %v1451 = vunpack.c.h.b16 %v1446
  %v1452 = vunpack.c.l.b16 %v1447
  %v1453 = vunpack.c.h.b16 %v1447
  %v1454 = vpack.c.b16 %v1450, %v1450
  %v1455 = vpack.c.b16 %v1451, %v1451
  %v1456 = vpack.c.b16 %v1452, %v1452
  %v1457 = vpack.c.b16 %v1453, %v1453
  %v1462 = vsel %vm245, %v1457, 0
  %1464 = vmatpush.bf16.msra.mxu0 %v202
  %1465 = vmatpush.bf16.msra.mxu0 %v201
  %1466 = vmatpush.bf16.msra.mxu0 %v200
  %1467 = vmatpush.bf16.msra.mxu0 %v199
  %1468 = vmatpush.bf16.msra.mxu0 %v198
  %1469 = vmatpush.bf16.msra.mxu0 %v197
  %1470 = vmatpush.bf16.msra.mxu0 %v196
  %1471 = vmatpush.bf16.msra.mxu0 %v195
  %1472 = vmatmul.bf16.gmra.mxu0 %v1454
  %v1473 = vpop.f32.mrf.mxu0
  %v1474 = vadd.f32 %v80, %v1473
  %v1475 = vpop.f32.mrf.mxu0
  %1476 = vdwg.mxu0
  %1477 = vmatpush.bf16.msra.mxu0 %v210
  %1478 = vmatpush.bf16.msra.mxu0 %v209
  %1479 = vmatpush.bf16.msra.mxu0 %v208
  %1480 = vmatpush.bf16.msra.mxu0 %v207
  %1481 = vmatpush.bf16.msra.mxu0 %v206
  %1482 = vmatpush.bf16.msra.mxu0 %v205
  %1483 = vmatpush.bf16.msra.mxu0 %v204
  %1484 = vmatpush.bf16.msra.mxu0 %v203
  %1485 = vmatmul.bf16.gmra.mxu0 %v1455
  %v1486 = vpop.f32.mrf.mxu0
  %v1487 = vadd.f32 %v1474, %v1486
  %v1488 = vpop.f32.mrf.mxu0
  %1489 = vdwg.mxu0
  %1490 = vmatpush.bf16.msra.mxu0 %v218
  %1491 = vmatpush.bf16.msra.mxu0 %v217
  %1492 = vmatpush.bf16.msra.mxu0 %v216
  %1493 = vmatpush.bf16.msra.mxu0 %v215
  %1494 = vmatpush.bf16.msra.mxu0 %v214
  %1495 = vmatpush.bf16.msra.mxu0 %v213
  %1496 = vmatpush.bf16.msra.mxu0 %v212
  %1497 = vmatpush.bf16.msra.mxu0 %v211
  %1498 = vmatmul.bf16.gmra.mxu0 %v1456
  %v1499 = vpop.f32.mrf.mxu0
  %v1500 = vadd.f32 %v1487, %v1499
  %v1501 = vpop.f32.mrf.mxu0
  %1502 = vdwg.mxu0
  %1503 = vmatpush.bf16.msra.mxu0 0
  %1504 = vmatpush.bf16.msra.mxu0 0
  %1505 = vmatpush.bf16.msra.mxu0 0
  %1506 = vmatpush.bf16.msra.mxu0 0
  %1507 = vmatpush.bf16.msra.mxu0 0
  %1508 = vmatpush.bf16.msra.mxu0 0
  %1509 = vmatpush.bf16.msra.mxu0 0
  %1510 = vmatpush.bf16.msra.mxu0 %v219
  %1511 = vmatmul.bf16.gmra.mxu0 %v1462
  %v1512 = vpop.f32.mrf.mxu0
  %v1513 = vadd.f32 %v1500, %v1512
  %v1514 = vpop.f32.mrf.mxu0
  %1515 = vdwg.mxu0
  %v1516 = vmax.f32 %v1513, 0.0
  %v1517 = vpack.c.bf16 %v1516, %v1516
  %s1518 = scalar_lea.vmem %s3, 512
  %v1519 = vld [vmem:[%s1518] sm:$0xf]
  %v1520 = vld [vmem:[%s1518 + $0x4] sm:$0xf]
  %v1521 = vld [vmem:[%s1518 + $0x8] sm:$0xf]
  %v1522 = vld [vmem:[%s1518 + $0xc] sm:$0xf]
  %v1523 = vld [vmem:[%s1518 + $0x10] sm:$0xf]
  %v1524 = vld [vmem:[%s1518 + $0x14] sm:$0xf]
  %v1525 = vld [vmem:[%s1518 + $0x18] sm:$0xf]
  %v1526 = vld [vmem:[%s1518 + $0x1c] sm:$0xf]
  %v1527 = vld [vmem:[%s1518 + $0x20] sm:$0xf]
  %v1528 = vld [vmem:[%s1518 + $0x24] sm:$0xf]
  %v1529 = vld [vmem:[%s1518 + $0x28] sm:$0xf]
  %v1530 = vld [vmem:[%s1518 + $0x2c] sm:$0xf]
  %v1531 = vld [vmem:[%s1518 + $0x30] sm:$0xf]
  %v1532 = vld [vmem:[%s1518 + $0x34] sm:$0xf]
  %v1533 = vld [vmem:[%s1518 + $0x38] sm:$0xf]
  %v1534 = vld [vmem:[%s1518 + $0x3c] sm:$0xf]
  %v1551 = vunpack.c.l.b16 %v1519
  %v1552 = vunpack.c.l.b16 %v1520
  %v1553 = vunpack.c.l.b16 %v1521
  %v1554 = vunpack.c.l.b16 %v1522
  %v1555 = vunpack.c.l.b16 %v1523
  %v1556 = vunpack.c.l.b16 %v1524
  %v1557 = vunpack.c.l.b16 %v1525
  %v1558 = vunpack.c.l.b16 %v1526
  %v1559 = vunpack.c.l.b16 %v1527
  %v1560 = vunpack.c.l.b16 %v1528
  %v1561 = vunpack.c.l.b16 %v1529
  %v1562 = vunpack.c.l.b16 %v1530
  %v1563 = vunpack.c.l.b16 %v1531
  %v1564 = vunpack.c.l.b16 %v1532
  %v1565 = vunpack.c.l.b16 %v1533
  %v1566 = vunpack.c.l.b16 %v1534
  %v1567 = vpack.c.b16 %v1552, %v1551
  %v1568 = vpack.c.b16 %v1554, %v1553
  %v1569 = vpack.c.b16 %v1556, %v1555
  %v1570 = vpack.c.b16 %v1558, %v1557
  %v1571 = vpack.c.b16 %v1560, %v1559
  %v1572 = vpack.c.b16 %v1562, %v1561
  %v1573 = vpack.c.b16 %v1564, %v1563
  %v1574 = vpack.c.b16 %v1566, %v1565
  %1583 = vmatpush.bf16.msra.mxu0 %v1574
  %1584 = vmatpush.bf16.msra.mxu0 %v1573
  %1585 = vmatpush.bf16.msra.mxu0 %v1572
  %1586 = vmatpush.bf16.msra.mxu0 %v1571
  %1587 = vmatpush.bf16.msra.mxu0 %v1570
  %1588 = vmatpush.bf16.msra.mxu0 %v1569
  %1589 = vmatpush.bf16.msra.mxu0 %v1568
  %1590 = vmatpush.bf16.msra.mxu0 %v1567
  %1591 = vmatmul.bf16.gmra.mxu0 %v1517
  %v1592 = vpop.f32.mrf.mxu0
  %v1593 = vadd.f32 0.0, %v1592
  %v1594 = vpop.f32.mrf.mxu0
  %1595 = vdwg.mxu0
  %v1596 = vadd.f32 %v1444, %v1593
  %s1597 = scalar_lea.vmem %s0, 144
  %v1598 = vld [vmem:[%s1597] sm:$0xff]
  %v1599 = vld [vmem:[%s1597 + $0x8] sm:$0xff]
  %v1602 = vunpack.c.l.b16 %v1598
  %v1603 = vunpack.c.h.b16 %v1598
  %v1604 = vunpack.c.l.b16 %v1599
  %v1605 = vunpack.c.h.b16 %v1599
  %v1606 = vpack.c.b16 %v1602, %v1602
  %v1607 = vpack.c.b16 %v1603, %v1603
  %v1608 = vpack.c.b16 %v1604, %v1604
  %v1609 = vpack.c.b16 %v1605, %v1605
  %v1614 = vsel %vm245, %v1609, 0
  %1616 = vmatpush.bf16.msra.mxu0 %v202
  %1617 = vmatpush.bf16.msra.mxu0 %v201
  %1618 = vmatpush.bf16.msra.mxu0 %v200
  %1619 = vmatpush.bf16.msra.mxu0 %v199
  %1620 = vmatpush.bf16.msra.mxu0 %v198
  %1621 = vmatpush.bf16.msra.mxu0 %v197
  %1622 = vmatpush.bf16.msra.mxu0 %v196
  %1623 = vmatpush.bf16.msra.mxu0 %v195
  %1624 = vmatmul.bf16.gmra.mxu0 %v1606
  %v1625 = vpop.f32.mrf.mxu0
  %v1626 = vadd.f32 %v80, %v1625
  %v1627 = vpop.f32.mrf.mxu0
  %1628 = vdwg.mxu0
  %1629 = vmatpush.bf16.msra.mxu0 %v210
  %1630 = vmatpush.bf16.msra.mxu0 %v209
  %1631 = vmatpush.bf16.msra.mxu0 %v208
  %1632 = vmatpush.bf16.msra.mxu0 %v207
  %1633 = vmatpush.bf16.msra.mxu0 %v206
  %1634 = vmatpush.bf16.msra.mxu0 %v205
  %1635 = vmatpush.bf16.msra.mxu0 %v204
  %1636 = vmatpush.bf16.msra.mxu0 %v203
  %1637 = vmatmul.bf16.gmra.mxu0 %v1607
  %v1638 = vpop.f32.mrf.mxu0
  %v1639 = vadd.f32 %v1626, %v1638
  %v1640 = vpop.f32.mrf.mxu0
  %1641 = vdwg.mxu0
  %1642 = vmatpush.bf16.msra.mxu0 %v218
  %1643 = vmatpush.bf16.msra.mxu0 %v217
  %1644 = vmatpush.bf16.msra.mxu0 %v216
  %1645 = vmatpush.bf16.msra.mxu0 %v215
  %1646 = vmatpush.bf16.msra.mxu0 %v214
  %1647 = vmatpush.bf16.msra.mxu0 %v213
  %1648 = vmatpush.bf16.msra.mxu0 %v212
  %1649 = vmatpush.bf16.msra.mxu0 %v211
  %1650 = vmatmul.bf16.gmra.mxu0 %v1608
  %v1651 = vpop.f32.mrf.mxu0
  %v1652 = vadd.f32 %v1639, %v1651
  %v1653 = vpop.f32.mrf.mxu0
  %1654 = vdwg.mxu0
  %1655 = vmatpush.bf16.msra.mxu0 0
  %1656 = vmatpush.bf16.msra.mxu0 0
  %1657 = vmatpush.bf16.msra.mxu0 0
  %1658 = vmatpush.bf16.msra.mxu0 0
  %1659 = vmatpush.bf16.msra.mxu0 0
  %1660 = vmatpush.bf16.msra.mxu0 0
  %1661 = vmatpush.bf16.msra.mxu0 0
  %1662 = vmatpush.bf16.msra.mxu0 %v219
  %1663 = vmatmul.bf16.gmra.mxu0 %v1614
  %v1664 = vpop.f32.mrf.mxu0
  %v1665 = vadd.f32 %v1652, %v1664
  %v1666 = vpop.f32.mrf.mxu0
  %1667 = vdwg.mxu0
  %v1668 = vmax.f32 %v1665, 0.0
  %v1669 = vpack.c.bf16 %v1668, %v1668
  %s1670 = scalar_lea.vmem %s3, 576
  %v1671 = vld [vmem:[%s1670] sm:$0xf]
  %v1672 = vld [vmem:[%s1670 + $0x4] sm:$0xf]
  %v1673 = vld [vmem:[%s1670 + $0x8] sm:$0xf]
  %v1674 = vld [vmem:[%s1670 + $0xc] sm:$0xf]
  %v1675 = vld [vmem:[%s1670 + $0x10] sm:$0xf]
  %v1676 = vld [vmem:[%s1670 + $0x14] sm:$0xf]
  %v1677 = vld [vmem:[%s1670 + $0x18] sm:$0xf]
  %v1678 = vld [vmem:[%s1670 + $0x1c] sm:$0xf]
  %v1679 = vld [vmem:[%s1670 + $0x20] sm:$0xf]
  %v1680 = vld [vmem:[%s1670 + $0x24] sm:$0xf]
  %v1681 = vld [vmem:[%s1670 + $0x28] sm:$0xf]
  %v1682 = vld [vmem:[%s1670 + $0x2c] sm:$0xf]
  %v1683 = vld [vmem:[%s1670 + $0x30] sm:$0xf]
  %v1684 = vld [vmem:[%s1670 + $0x34] sm:$0xf]
  %v1685 = vld [vmem:[%s1670 + $0x38] sm:$0xf]
  %v1686 = vld [vmem:[%s1670 + $0x3c] sm:$0xf]
  %v1703 = vunpack.c.l.b16 %v1671
  %v1704 = vunpack.c.l.b16 %v1672
  %v1705 = vunpack.c.l.b16 %v1673
  %v1706 = vunpack.c.l.b16 %v1674
  %v1707 = vunpack.c.l.b16 %v1675
  %v1708 = vunpack.c.l.b16 %v1676
  %v1709 = vunpack.c.l.b16 %v1677
  %v1710 = vunpack.c.l.b16 %v1678
  %v1711 = vunpack.c.l.b16 %v1679
  %v1712 = vunpack.c.l.b16 %v1680
  %v1713 = vunpack.c.l.b16 %v1681
  %v1714 = vunpack.c.l.b16 %v1682
  %v1715 = vunpack.c.l.b16 %v1683
  %v1716 = vunpack.c.l.b16 %v1684
  %v1717 = vunpack.c.l.b16 %v1685
  %v1718 = vunpack.c.l.b16 %v1686
  %v1719 = vpack.c.b16 %v1704, %v1703
  %v1720 = vpack.c.b16 %v1706, %v1705
  %v1721 = vpack.c.b16 %v1708, %v1707
  %v1722 = vpack.c.b16 %v1710, %v1709
  %v1723 = vpack.c.b16 %v1712, %v1711
  %v1724 = vpack.c.b16 %v1714, %v1713
  %v1725 = vpack.c.b16 %v1716, %v1715
  %v1726 = vpack.c.b16 %v1718, %v1717
  %1735 = vmatpush.bf16.msra.mxu0 %v1726
  %1736 = vmatpush.bf16.msra.mxu0 %v1725
  %1737 = vmatpush.bf16.msra.mxu0 %v1724
  %1738 = vmatpush.bf16.msra.mxu0 %v1723
  %1739 = vmatpush.bf16.msra.mxu0 %v1722
  %1740 = vmatpush.bf16.msra.mxu0 %v1721
  %1741 = vmatpush.bf16.msra.mxu0 %v1720
  %1742 = vmatpush.bf16.msra.mxu0 %v1719
  %1743 = vmatmul.bf16.gmra.mxu0 %v1669
  %v1744 = vpop.f32.mrf.mxu0
  %v1745 = vadd.f32 0.0, %v1744
  %v1746 = vpop.f32.mrf.mxu0
  %1747 = vdwg.mxu0
  %v1748 = vadd.f32 %v1596, %v1745
  %s1749 = scalar_lea.vmem %s0, 160
  %v1750 = vld [vmem:[%s1749] sm:$0xff]
  %v1751 = vld [vmem:[%s1749 + $0x8] sm:$0xff]
  %v1754 = vunpack.c.l.b16 %v1750
  %v1755 = vunpack.c.h.b16 %v1750
  %v1756 = vunpack.c.l.b16 %v1751
  %v1757 = vunpack.c.h.b16 %v1751
  %v1758 = vpack.c.b16 %v1754, %v1754
  %v1759 = vpack.c.b16 %v1755, %v1755
  %v1760 = vpack.c.b16 %v1756, %v1756
  %v1761 = vpack.c.b16 %v1757, %v1757
  %v1766 = vsel %vm245, %v1761, 0
  %1768 = vmatpush.bf16.msra.mxu0 %v202
  %1769 = vmatpush.bf16.msra.mxu0 %v201
  %1770 = vmatpush.bf16.msra.mxu0 %v200
  %1771 = vmatpush.bf16.msra.mxu0 %v199
  %1772 = vmatpush.bf16.msra.mxu0 %v198
  %1773 = vmatpush.bf16.msra.mxu0 %v197
  %1774 = vmatpush.bf16.msra.mxu0 %v196
  %1775 = vmatpush.bf16.msra.mxu0 %v195
  %1776 = vmatmul.bf16.gmra.mxu0 %v1758
  %v1777 = vpop.f32.mrf.mxu0
  %v1778 = vadd.f32 %v80, %v1777
  %v1779 = vpop.f32.mrf.mxu0
  %1780 = vdwg.mxu0
  %1781 = vmatpush.bf16.msra.mxu0 %v210
  %1782 = vmatpush.bf16.msra.mxu0 %v209
  %1783 = vmatpush.bf16.msra.mxu0 %v208
  %1784 = vmatpush.bf16.msra.mxu0 %v207
  %1785 = vmatpush.bf16.msra.mxu0 %v206
  %1786 = vmatpush.bf16.msra.mxu0 %v205
  %1787 = vmatpush.bf16.msra.mxu0 %v204
  %1788 = vmatpush.bf16.msra.mxu0 %v203
  %1789 = vmatmul.bf16.gmra.mxu0 %v1759
  %v1790 = vpop.f32.mrf.mxu0
  %v1791 = vadd.f32 %v1778, %v1790
  %v1792 = vpop.f32.mrf.mxu0
  %1793 = vdwg.mxu0
  %1794 = vmatpush.bf16.msra.mxu0 %v218
  %1795 = vmatpush.bf16.msra.mxu0 %v217
  %1796 = vmatpush.bf16.msra.mxu0 %v216
  %1797 = vmatpush.bf16.msra.mxu0 %v215
  %1798 = vmatpush.bf16.msra.mxu0 %v214
  %1799 = vmatpush.bf16.msra.mxu0 %v213
  %1800 = vmatpush.bf16.msra.mxu0 %v212
  %1801 = vmatpush.bf16.msra.mxu0 %v211
  %1802 = vmatmul.bf16.gmra.mxu0 %v1760
  %v1803 = vpop.f32.mrf.mxu0
  %v1804 = vadd.f32 %v1791, %v1803
  %v1805 = vpop.f32.mrf.mxu0
  %1806 = vdwg.mxu0
  %1807 = vmatpush.bf16.msra.mxu0 0
  %1808 = vmatpush.bf16.msra.mxu0 0
  %1809 = vmatpush.bf16.msra.mxu0 0
  %1810 = vmatpush.bf16.msra.mxu0 0
  %1811 = vmatpush.bf16.msra.mxu0 0
  %1812 = vmatpush.bf16.msra.mxu0 0
  %1813 = vmatpush.bf16.msra.mxu0 0
  %1814 = vmatpush.bf16.msra.mxu0 %v219
  %1815 = vmatmul.bf16.gmra.mxu0 %v1766
  %v1816 = vpop.f32.mrf.mxu0
  %v1817 = vadd.f32 %v1804, %v1816
  %v1818 = vpop.f32.mrf.mxu0
  %1819 = vdwg.mxu0
  %v1820 = vmax.f32 %v1817, 0.0
  %v1821 = vpack.c.bf16 %v1820, %v1820
  %s1822 = scalar_lea.vmem %s3, 640
  %v1823 = vld [vmem:[%s1822] sm:$0xf]
  %v1824 = vld [vmem:[%s1822 + $0x4] sm:$0xf]
  %v1825 = vld [vmem:[%s1822 + $0x8] sm:$0xf]
  %v1826 = vld [vmem:[%s1822 + $0xc] sm:$0xf]
  %v1827 = vld [vmem:[%s1822 + $0x10] sm:$0xf]
  %v1828 = vld [vmem:[%s1822 + $0x14] sm:$0xf]
  %v1829 = vld [vmem:[%s1822 + $0x18] sm:$0xf]
  %v1830 = vld [vmem:[%s1822 + $0x1c] sm:$0xf]
  %v1831 = vld [vmem:[%s1822 + $0x20] sm:$0xf]
  %v1832 = vld [vmem:[%s1822 + $0x24] sm:$0xf]
  %v1833 = vld [vmem:[%s1822 + $0x28] sm:$0xf]
  %v1834 = vld [vmem:[%s1822 + $0x2c] sm:$0xf]
  %v1835 = vld [vmem:[%s1822 + $0x30] sm:$0xf]
  %v1836 = vld [vmem:[%s1822 + $0x34] sm:$0xf]
  %v1837 = vld [vmem:[%s1822 + $0x38] sm:$0xf]
  %v1838 = vld [vmem:[%s1822 + $0x3c] sm:$0xf]
  %v1855 = vunpack.c.l.b16 %v1823
  %v1856 = vunpack.c.l.b16 %v1824
  %v1857 = vunpack.c.l.b16 %v1825
  %v1858 = vunpack.c.l.b16 %v1826
  %v1859 = vunpack.c.l.b16 %v1827
  %v1860 = vunpack.c.l.b16 %v1828
  %v1861 = vunpack.c.l.b16 %v1829
  %v1862 = vunpack.c.l.b16 %v1830
  %v1863 = vunpack.c.l.b16 %v1831
  %v1864 = vunpack.c.l.b16 %v1832
  %v1865 = vunpack.c.l.b16 %v1833
  %v1866 = vunpack.c.l.b16 %v1834
  %v1867 = vunpack.c.l.b16 %v1835
  %v1868 = vunpack.c.l.b16 %v1836
  %v1869 = vunpack.c.l.b16 %v1837
  %v1870 = vunpack.c.l.b16 %v1838
  %v1871 = vpack.c.b16 %v1856, %v1855
  %v1872 = vpack.c.b16 %v1858, %v1857
  %v1873 = vpack.c.b16 %v1860, %v1859
  %v1874 = vpack.c.b16 %v1862, %v1861
  %v1875 = vpack.c.b16 %v1864, %v1863
  %v1876 = vpack.c.b16 %v1866, %v1865
  %v1877 = vpack.c.b16 %v1868, %v1867
  %v1878 = vpack.c.b16 %v1870, %v1869
  %1887 = vmatpush.bf16.msra.mxu0 %v1878
  %1888 = vmatpush.bf16.msra.mxu0 %v1877
  %1889 = vmatpush.bf16.msra.mxu0 %v1876
  %1890 = vmatpush.bf16.msra.mxu0 %v1875
  %1891 = vmatpush.bf16.msra.mxu0 %v1874
  %1892 = vmatpush.bf16.msra.mxu0 %v1873
  %1893 = vmatpush.bf16.msra.mxu0 %v1872
  %1894 = vmatpush.bf16.msra.mxu0 %v1871
  %1895 = vmatmul.bf16.gmra.mxu0 %v1821
  %v1896 = vpop.f32.mrf.mxu0
  %v1897 = vadd.f32 0.0, %v1896
  %v1898 = vpop.f32.mrf.mxu0
  %1899 = vdwg.mxu0
  %v1900 = vadd.f32 %v1748, %v1897
  %s1901 = scalar_lea.vmem %s0, 176
  %v1902 = vld [vmem:[%s1901] sm:$0xff]
  %v1903 = vld [vmem:[%s1901 + $0x8] sm:$0xff]
  %v1906 = vunpack.c.l.b16 %v1902
  %v1907 = vunpack.c.h.b16 %v1902
  %v1908 = vunpack.c.l.b16 %v1903
  %v1909 = vunpack.c.h.b16 %v1903
  %v1910 = vpack.c.b16 %v1906, %v1906
  %v1911 = vpack.c.b16 %v1907, %v1907
  %v1912 = vpack.c.b16 %v1908, %v1908
  %v1913 = vpack.c.b16 %v1909, %v1909
  %v1918 = vsel %vm245, %v1913, 0
  %1920 = vmatpush.bf16.msra.mxu0 %v202
  %1921 = vmatpush.bf16.msra.mxu0 %v201
  %1922 = vmatpush.bf16.msra.mxu0 %v200
  %1923 = vmatpush.bf16.msra.mxu0 %v199
  %1924 = vmatpush.bf16.msra.mxu0 %v198
  %1925 = vmatpush.bf16.msra.mxu0 %v197
  %1926 = vmatpush.bf16.msra.mxu0 %v196
  %1927 = vmatpush.bf16.msra.mxu0 %v195
  %1928 = vmatmul.bf16.gmra.mxu0 %v1910
  %v1929 = vpop.f32.mrf.mxu0
  %v1930 = vadd.f32 %v80, %v1929
  %v1931 = vpop.f32.mrf.mxu0
  %1932 = vdwg.mxu0
  %1933 = vmatpush.bf16.msra.mxu0 %v210
  %1934 = vmatpush.bf16.msra.mxu0 %v209
  %1935 = vmatpush.bf16.msra.mxu0 %v208
  %1936 = vmatpush.bf16.msra.mxu0 %v207
  %1937 = vmatpush.bf16.msra.mxu0 %v206
  %1938 = vmatpush.bf16.msra.mxu0 %v205
  %1939 = vmatpush.bf16.msra.mxu0 %v204
  %1940 = vmatpush.bf16.msra.mxu0 %v203
  %1941 = vmatmul.bf16.gmra.mxu0 %v1911
  %v1942 = vpop.f32.mrf.mxu0
  %v1943 = vadd.f32 %v1930, %v1942
  %v1944 = vpop.f32.mrf.mxu0
  %1945 = vdwg.mxu0
  %1946 = vmatpush.bf16.msra.mxu0 %v218
  %1947 = vmatpush.bf16.msra.mxu0 %v217
  %1948 = vmatpush.bf16.msra.mxu0 %v216
  %1949 = vmatpush.bf16.msra.mxu0 %v215
  %1950 = vmatpush.bf16.msra.mxu0 %v214
  %1951 = vmatpush.bf16.msra.mxu0 %v213
  %1952 = vmatpush.bf16.msra.mxu0 %v212
  %1953 = vmatpush.bf16.msra.mxu0 %v211
  %1954 = vmatmul.bf16.gmra.mxu0 %v1912
  %v1955 = vpop.f32.mrf.mxu0
  %v1956 = vadd.f32 %v1943, %v1955
  %v1957 = vpop.f32.mrf.mxu0
  %1958 = vdwg.mxu0
  %1959 = vmatpush.bf16.msra.mxu0 0
  %1960 = vmatpush.bf16.msra.mxu0 0
  %1961 = vmatpush.bf16.msra.mxu0 0
  %1962 = vmatpush.bf16.msra.mxu0 0
  %1963 = vmatpush.bf16.msra.mxu0 0
  %1964 = vmatpush.bf16.msra.mxu0 0
  %1965 = vmatpush.bf16.msra.mxu0 0
  %1966 = vmatpush.bf16.msra.mxu0 %v219
  %1967 = vmatmul.bf16.gmra.mxu0 %v1918
  %v1968 = vpop.f32.mrf.mxu0
  %v1969 = vadd.f32 %v1956, %v1968
  %v1970 = vpop.f32.mrf.mxu0
  %1971 = vdwg.mxu0
  %v1972 = vmax.f32 %v1969, 0.0
  %v1973 = vpack.c.bf16 %v1972, %v1972
  %s1974 = scalar_lea.vmem %s3, 704
  %v1975 = vld [vmem:[%s1974] sm:$0xf]
  %v1976 = vld [vmem:[%s1974 + $0x4] sm:$0xf]
  %v1977 = vld [vmem:[%s1974 + $0x8] sm:$0xf]
  %v1978 = vld [vmem:[%s1974 + $0xc] sm:$0xf]
  %v1979 = vld [vmem:[%s1974 + $0x10] sm:$0xf]
  %v1980 = vld [vmem:[%s1974 + $0x14] sm:$0xf]
  %v1981 = vld [vmem:[%s1974 + $0x18] sm:$0xf]
  %v1982 = vld [vmem:[%s1974 + $0x1c] sm:$0xf]
  %v1983 = vld [vmem:[%s1974 + $0x20] sm:$0xf]
  %v1984 = vld [vmem:[%s1974 + $0x24] sm:$0xf]
  %v1985 = vld [vmem:[%s1974 + $0x28] sm:$0xf]
  %v1986 = vld [vmem:[%s1974 + $0x2c] sm:$0xf]
  %v1987 = vld [vmem:[%s1974 + $0x30] sm:$0xf]
  %v1988 = vld [vmem:[%s1974 + $0x34] sm:$0xf]
  %v1989 = vld [vmem:[%s1974 + $0x38] sm:$0xf]
  %v1990 = vld [vmem:[%s1974 + $0x3c] sm:$0xf]
  %v2007 = vunpack.c.l.b16 %v1975
  %v2008 = vunpack.c.l.b16 %v1976
  %v2009 = vunpack.c.l.b16 %v1977
  %v2010 = vunpack.c.l.b16 %v1978
  %v2011 = vunpack.c.l.b16 %v1979
  %v2012 = vunpack.c.l.b16 %v1980
  %v2013 = vunpack.c.l.b16 %v1981
  %v2014 = vunpack.c.l.b16 %v1982
  %v2015 = vunpack.c.l.b16 %v1983
  %v2016 = vunpack.c.l.b16 %v1984
  %v2017 = vunpack.c.l.b16 %v1985
  %v2018 = vunpack.c.l.b16 %v1986
  %v2019 = vunpack.c.l.b16 %v1987
  %v2020 = vunpack.c.l.b16 %v1988
  %v2021 = vunpack.c.l.b16 %v1989
  %v2022 = vunpack.c.l.b16 %v1990
  %v2023 = vpack.c.b16 %v2008, %v2007
  %v2024 = vpack.c.b16 %v2010, %v2009
  %v2025 = vpack.c.b16 %v2012, %v2011
  %v2026 = vpack.c.b16 %v2014, %v2013
  %v2027 = vpack.c.b16 %v2016, %v2015
  %v2028 = vpack.c.b16 %v2018, %v2017
  %v2029 = vpack.c.b16 %v2020, %v2019
  %v2030 = vpack.c.b16 %v2022, %v2021
  %2039 = vmatpush.bf16.msra.mxu0 %v2030
  %2040 = vmatpush.bf16.msra.mxu0 %v2029
  %2041 = vmatpush.bf16.msra.mxu0 %v2028
  %2042 = vmatpush.bf16.msra.mxu0 %v2027
  %2043 = vmatpush.bf16.msra.mxu0 %v2026
  %2044 = vmatpush.bf16.msra.mxu0 %v2025
  %2045 = vmatpush.bf16.msra.mxu0 %v2024
  %2046 = vmatpush.bf16.msra.mxu0 %v2023
  %2047 = vmatmul.bf16.gmra.mxu0 %v1973
  %v2048 = vpop.f32.mrf.mxu0
  %v2049 = vadd.f32 0.0, %v2048
  %v2050 = vpop.f32.mrf.mxu0
  %2051 = vdwg.mxu0
  %v2052 = vadd.f32 %v1900, %v2049
  %s2053 = scalar_lea.vmem %s0, 192
  %v2054 = vld [vmem:[%s2053] sm:$0xff]
  %v2055 = vld [vmem:[%s2053 + $0x8] sm:$0xff]
  %v2058 = vunpack.c.l.b16 %v2054
  %v2059 = vunpack.c.h.b16 %v2054
  %v2060 = vunpack.c.l.b16 %v2055
  %v2061 = vunpack.c.h.b16 %v2055
  %v2062 = vpack.c.b16 %v2058, %v2058
  %v2063 = vpack.c.b16 %v2059, %v2059
  %v2064 = vpack.c.b16 %v2060, %v2060
  %v2065 = vpack.c.b16 %v2061, %v2061
  %v2070 = vsel %vm245, %v2065, 0
  %2072 = vmatpush.bf16.msra.mxu0 %v202
  %2073 = vmatpush.bf16.msra.mxu0 %v201
  %2074 = vmatpush.bf16.msra.mxu0 %v200
  %2075 = vmatpush.bf16.msra.mxu0 %v199
  %2076 = vmatpush.bf16.msra.mxu0 %v198
  %2077 = vmatpush.bf16.msra.mxu0 %v197
  %2078 = vmatpush.bf16.msra.mxu0 %v196
  %2079 = vmatpush.bf16.msra.mxu0 %v195
  %2080 = vmatmul.bf16.gmra.mxu0 %v2062
  %v2081 = vpop.f32.mrf.mxu0
  %v2082 = vadd.f32 %v80, %v2081
  %v2083 = vpop.f32.mrf.mxu0
  %2084 = vdwg.mxu0
  %2085 = vmatpush.bf16.msra.mxu0 %v210
  %2086 = vmatpush.bf16.msra.mxu0 %v209
  %2087 = vmatpush.bf16.msra.mxu0 %v208
  %2088 = vmatpush.bf16.msra.mxu0 %v207
  %2089 = vmatpush.bf16.msra.mxu0 %v206
  %2090 = vmatpush.bf16.msra.mxu0 %v205
  %2091 = vmatpush.bf16.msra.mxu0 %v204
  %2092 = vmatpush.bf16.msra.mxu0 %v203
  %2093 = vmatmul.bf16.gmra.mxu0 %v2063
  %v2094 = vpop.f32.mrf.mxu0
  %v2095 = vadd.f32 %v2082, %v2094
  %v2096 = vpop.f32.mrf.mxu0
  %2097 = vdwg.mxu0
  %2098 = vmatpush.bf16.msra.mxu0 %v218
  %2099 = vmatpush.bf16.msra.mxu0 %v217
  %2100 = vmatpush.bf16.msra.mxu0 %v216
  %2101 = vmatpush.bf16.msra.mxu0 %v215
  %2102 = vmatpush.bf16.msra.mxu0 %v214
  %2103 = vmatpush.bf16.msra.mxu0 %v213
  %2104 = vmatpush.bf16.msra.mxu0 %v212
  %2105 = vmatpush.bf16.msra.mxu0 %v211
  %2106 = vmatmul.bf16.gmra.mxu0 %v2064
  %v2107 = vpop.f32.mrf.mxu0
  %v2108 = vadd.f32 %v2095, %v2107
  %v2109 = vpop.f32.mrf.mxu0
  %2110 = vdwg.mxu0
  %2111 = vmatpush.bf16.msra.mxu0 0
  %2112 = vmatpush.bf16.msra.mxu0 0
  %2113 = vmatpush.bf16.msra.mxu0 0
  %2114 = vmatpush.bf16.msra.mxu0 0
  %2115 = vmatpush.bf16.msra.mxu0 0
  %2116 = vmatpush.bf16.msra.mxu0 0
  %2117 = vmatpush.bf16.msra.mxu0 0
  %2118 = vmatpush.bf16.msra.mxu0 %v219
  %2119 = vmatmul.bf16.gmra.mxu0 %v2070
  %v2120 = vpop.f32.mrf.mxu0
  %v2121 = vadd.f32 %v2108, %v2120
  %v2122 = vpop.f32.mrf.mxu0
  %2123 = vdwg.mxu0
  %v2124 = vmax.f32 %v2121, 0.0
  %v2125 = vpack.c.bf16 %v2124, %v2124
  %s2126 = scalar_lea.vmem %s3, 768
  %v2127 = vld [vmem:[%s2126] sm:$0xf]
  %v2128 = vld [vmem:[%s2126 + $0x4] sm:$0xf]
  %v2129 = vld [vmem:[%s2126 + $0x8] sm:$0xf]
  %v2130 = vld [vmem:[%s2126 + $0xc] sm:$0xf]
  %v2131 = vld [vmem:[%s2126 + $0x10] sm:$0xf]
  %v2132 = vld [vmem:[%s2126 + $0x14] sm:$0xf]
  %v2133 = vld [vmem:[%s2126 + $0x18] sm:$0xf]
  %v2134 = vld [vmem:[%s2126 + $0x1c] sm:$0xf]
  %v2135 = vld [vmem:[%s2126 + $0x20] sm:$0xf]
  %v2136 = vld [vmem:[%s2126 + $0x24] sm:$0xf]
  %v2137 = vld [vmem:[%s2126 + $0x28] sm:$0xf]
  %v2138 = vld [vmem:[%s2126 + $0x2c] sm:$0xf]
  %v2139 = vld [vmem:[%s2126 + $0x30] sm:$0xf]
  %v2140 = vld [vmem:[%s2126 + $0x34] sm:$0xf]
  %v2141 = vld [vmem:[%s2126 + $0x38] sm:$0xf]
  %v2142 = vld [vmem:[%s2126 + $0x3c] sm:$0xf]
  %v2159 = vunpack.c.l.b16 %v2127
  %v2160 = vunpack.c.l.b16 %v2128
  %v2161 = vunpack.c.l.b16 %v2129
  %v2162 = vunpack.c.l.b16 %v2130
  %v2163 = vunpack.c.l.b16 %v2131
  %v2164 = vunpack.c.l.b16 %v2132
  %v2165 = vunpack.c.l.b16 %v2133
  %v2166 = vunpack.c.l.b16 %v2134
  %v2167 = vunpack.c.l.b16 %v2135
  %v2168 = vunpack.c.l.b16 %v2136
  %v2169 = vunpack.c.l.b16 %v2137
  %v2170 = vunpack.c.l.b16 %v2138
  %v2171 = vunpack.c.l.b16 %v2139
  %v2172 = vunpack.c.l.b16 %v2140
  %v2173 = vunpack.c.l.b16 %v2141
  %v2174 = vunpack.c.l.b16 %v2142
  %v2175 = vpack.c.b16 %v2160, %v2159
  %v2176 = vpack.c.b16 %v2162, %v2161
  %v2177 = vpack.c.b16 %v2164, %v2163
  %v2178 = vpack.c.b16 %v2166, %v2165
  %v2179 = vpack.c.b16 %v2168, %v2167
  %v2180 = vpack.c.b16 %v2170, %v2169
  %v2181 = vpack.c.b16 %v2172, %v2171
  %v2182 = vpack.c.b16 %v2174, %v2173
  %2191 = vmatpush.bf16.msra.mxu0 %v2182
  %2192 = vmatpush.bf16.msra.mxu0 %v2181
  %2193 = vmatpush.bf16.msra.mxu0 %v2180
  %2194 = vmatpush.bf16.msra.mxu0 %v2179
  %2195 = vmatpush.bf16.msra.mxu0 %v2178
  %2196 = vmatpush.bf16.msra.mxu0 %v2177
  %2197 = vmatpush.bf16.msra.mxu0 %v2176
  %2198 = vmatpush.bf16.msra.mxu0 %v2175
  %2199 = vmatmul.bf16.gmra.mxu0 %v2125
  %v2200 = vpop.f32.mrf.mxu0
  %v2201 = vadd.f32 0.0, %v2200
  %v2202 = vpop.f32.mrf.mxu0
  %2203 = vdwg.mxu0
  %v2204 = vadd.f32 %v2052, %v2201
  %s2205 = scalar_lea.vmem %s0, 208
  %v2206 = vld [vmem:[%s2205] sm:$0xff]
  %v2207 = vld [vmem:[%s2205 + $0x8] sm:$0xff]
  %v2210 = vunpack.c.l.b16 %v2206
  %v2211 = vunpack.c.h.b16 %v2206
  %v2212 = vunpack.c.l.b16 %v2207
  %v2213 = vunpack.c.h.b16 %v2207
  %v2214 = vpack.c.b16 %v2210, %v2210
  %v2215 = vpack.c.b16 %v2211, %v2211
  %v2216 = vpack.c.b16 %v2212, %v2212
  %v2217 = vpack.c.b16 %v2213, %v2213
  %v2222 = vsel %vm245, %v2217, 0
  %2224 = vmatpush.bf16.msra.mxu0 %v202
  %2225 = vmatpush.bf16.msra.mxu0 %v201
  %2226 = vmatpush.bf16.msra.mxu0 %v200
  %2227 = vmatpush.bf16.msra.mxu0 %v199
  %2228 = vmatpush.bf16.msra.mxu0 %v198
  %2229 = vmatpush.bf16.msra.mxu0 %v197
  %2230 = vmatpush.bf16.msra.mxu0 %v196
  %2231 = vmatpush.bf16.msra.mxu0 %v195
  %2232 = vmatmul.bf16.gmra.mxu0 %v2214
  %v2233 = vpop.f32.mrf.mxu0
  %v2234 = vadd.f32 %v80, %v2233
  %v2235 = vpop.f32.mrf.mxu0
  %2236 = vdwg.mxu0
  %2237 = vmatpush.bf16.msra.mxu0 %v210
  %2238 = vmatpush.bf16.msra.mxu0 %v209
  %2239 = vmatpush.bf16.msra.mxu0 %v208
  %2240 = vmatpush.bf16.msra.mxu0 %v207
  %2241 = vmatpush.bf16.msra.mxu0 %v206
  %2242 = vmatpush.bf16.msra.mxu0 %v205
  %2243 = vmatpush.bf16.msra.mxu0 %v204
  %2244 = vmatpush.bf16.msra.mxu0 %v203
  %2245 = vmatmul.bf16.gmra.mxu0 %v2215
  %v2246 = vpop.f32.mrf.mxu0
  %v2247 = vadd.f32 %v2234, %v2246
  %v2248 = vpop.f32.mrf.mxu0
  %2249 = vdwg.mxu0
  %2250 = vmatpush.bf16.msra.mxu0 %v218
  %2251 = vmatpush.bf16.msra.mxu0 %v217
  %2252 = vmatpush.bf16.msra.mxu0 %v216
  %2253 = vmatpush.bf16.msra.mxu0 %v215
  %2254 = vmatpush.bf16.msra.mxu0 %v214
  %2255 = vmatpush.bf16.msra.mxu0 %v213
  %2256 = vmatpush.bf16.msra.mxu0 %v212
  %2257 = vmatpush.bf16.msra.mxu0 %v211
  %2258 = vmatmul.bf16.gmra.mxu0 %v2216
  %v2259 = vpop.f32.mrf.mxu0
  %v2260 = vadd.f32 %v2247, %v2259
  %v2261 = vpop.f32.mrf.mxu0
  %2262 = vdwg.mxu0
  %2263 = vmatpush.bf16.msra.mxu0 0
  %2264 = vmatpush.bf16.msra.mxu0 0
  %2265 = vmatpush.bf16.msra.mxu0 0
  %2266 = vmatpush.bf16.msra.mxu0 0
  %2267 = vmatpush.bf16.msra.mxu0 0
  %2268 = vmatpush.bf16.msra.mxu0 0
  %2269 = vmatpush.bf16.msra.mxu0 0
  %2270 = vmatpush.bf16.msra.mxu0 %v219
  %2271 = vmatmul.bf16.gmra.mxu0 %v2222
  %v2272 = vpop.f32.mrf.mxu0
  %v2273 = vadd.f32 %v2260, %v2272
  %v2274 = vpop.f32.mrf.mxu0
  %2275 = vdwg.mxu0
  %v2276 = vmax.f32 %v2273, 0.0
  %v2277 = vpack.c.bf16 %v2276, %v2276
  %s2278 = scalar_lea.vmem %s3, 832
  %v2279 = vld [vmem:[%s2278] sm:$0xf]
  %v2280 = vld [vmem:[%s2278 + $0x4] sm:$0xf]
  %v2281 = vld [vmem:[%s2278 + $0x8] sm:$0xf]
  %v2282 = vld [vmem:[%s2278 + $0xc] sm:$0xf]
  %v2283 = vld [vmem:[%s2278 + $0x10] sm:$0xf]
  %v2284 = vld [vmem:[%s2278 + $0x14] sm:$0xf]
  %v2285 = vld [vmem:[%s2278 + $0x18] sm:$0xf]
  %v2286 = vld [vmem:[%s2278 + $0x1c] sm:$0xf]
  %v2287 = vld [vmem:[%s2278 + $0x20] sm:$0xf]
  %v2288 = vld [vmem:[%s2278 + $0x24] sm:$0xf]
  %v2289 = vld [vmem:[%s2278 + $0x28] sm:$0xf]
  %v2290 = vld [vmem:[%s2278 + $0x2c] sm:$0xf]
  %v2291 = vld [vmem:[%s2278 + $0x30] sm:$0xf]
  %v2292 = vld [vmem:[%s2278 + $0x34] sm:$0xf]
  %v2293 = vld [vmem:[%s2278 + $0x38] sm:$0xf]
  %v2294 = vld [vmem:[%s2278 + $0x3c] sm:$0xf]
  %v2311 = vunpack.c.l.b16 %v2279
  %v2312 = vunpack.c.l.b16 %v2280
  %v2313 = vunpack.c.l.b16 %v2281
  %v2314 = vunpack.c.l.b16 %v2282
  %v2315 = vunpack.c.l.b16 %v2283
  %v2316 = vunpack.c.l.b16 %v2284
  %v2317 = vunpack.c.l.b16 %v2285
  %v2318 = vunpack.c.l.b16 %v2286
  %v2319 = vunpack.c.l.b16 %v2287
  %v2320 = vunpack.c.l.b16 %v2288
  %v2321 = vunpack.c.l.b16 %v2289
  %v2322 = vunpack.c.l.b16 %v2290
  %v2323 = vunpack.c.l.b16 %v2291
  %v2324 = vunpack.c.l.b16 %v2292
  %v2325 = vunpack.c.l.b16 %v2293
  %v2326 = vunpack.c.l.b16 %v2294
  %v2327 = vpack.c.b16 %v2312, %v2311
  %v2328 = vpack.c.b16 %v2314, %v2313
  %v2329 = vpack.c.b16 %v2316, %v2315
  %v2330 = vpack.c.b16 %v2318, %v2317
  %v2331 = vpack.c.b16 %v2320, %v2319
  %v2332 = vpack.c.b16 %v2322, %v2321
  %v2333 = vpack.c.b16 %v2324, %v2323
  %v2334 = vpack.c.b16 %v2326, %v2325
  %2343 = vmatpush.bf16.msra.mxu0 %v2334
  %2344 = vmatpush.bf16.msra.mxu0 %v2333
  %2345 = vmatpush.bf16.msra.mxu0 %v2332
  %2346 = vmatpush.bf16.msra.mxu0 %v2331
  %2347 = vmatpush.bf16.msra.mxu0 %v2330
  %2348 = vmatpush.bf16.msra.mxu0 %v2329
  %2349 = vmatpush.bf16.msra.mxu0 %v2328
  %2350 = vmatpush.bf16.msra.mxu0 %v2327
  %2351 = vmatmul.bf16.gmra.mxu0 %v2277
  %v2352 = vpop.f32.mrf.mxu0
  %v2353 = vadd.f32 0.0, %v2352
  %v2354 = vpop.f32.mrf.mxu0
  %2355 = vdwg.mxu0
  %v2356 = vadd.f32 %v2204, %v2353
  %s2357 = scalar_lea.vmem %s0, 224
  %v2358 = vld [vmem:[%s2357] sm:$0xff]
  %v2359 = vld [vmem:[%s2357 + $0x8] sm:$0xff]
  %v2362 = vunpack.c.l.b16 %v2358
  %v2363 = vunpack.c.h.b16 %v2358
  %v2364 = vunpack.c.l.b16 %v2359
  %v2365 = vunpack.c.h.b16 %v2359
  %v2366 = vpack.c.b16 %v2362, %v2362
  %v2367 = vpack.c.b16 %v2363, %v2363
  %v2368 = vpack.c.b16 %v2364, %v2364
  %v2369 = vpack.c.b16 %v2365, %v2365
  %v2374 = vsel %vm245, %v2369, 0
  %2376 = vmatpush.bf16.msra.mxu0 %v202
  %2377 = vmatpush.bf16.msra.mxu0 %v201
  %2378 = vmatpush.bf16.msra.mxu0 %v200
  %2379 = vmatpush.bf16.msra.mxu0 %v199
  %2380 = vmatpush.bf16.msra.mxu0 %v198
  %2381 = vmatpush.bf16.msra.mxu0 %v197
  %2382 = vmatpush.bf16.msra.mxu0 %v196
  %2383 = vmatpush.bf16.msra.mxu0 %v195
  %2384 = vmatmul.bf16.gmra.mxu0 %v2366
  %v2385 = vpop.f32.mrf.mxu0
  %v2386 = vadd.f32 %v80, %v2385
  %v2387 = vpop.f32.mrf.mxu0
  %2388 = vdwg.mxu0
  %2389 = vmatpush.bf16.msra.mxu0 %v210
  %2390 = vmatpush.bf16.msra.mxu0 %v209
  %2391 = vmatpush.bf16.msra.mxu0 %v208
  %2392 = vmatpush.bf16.msra.mxu0 %v207
  %2393 = vmatpush.bf16.msra.mxu0 %v206
  %2394 = vmatpush.bf16.msra.mxu0 %v205
  %2395 = vmatpush.bf16.msra.mxu0 %v204
  %2396 = vmatpush.bf16.msra.mxu0 %v203
  %2397 = vmatmul.bf16.gmra.mxu0 %v2367
  %v2398 = vpop.f32.mrf.mxu0
  %v2399 = vadd.f32 %v2386, %v2398
  %v2400 = vpop.f32.mrf.mxu0
  %2401 = vdwg.mxu0
  %2402 = vmatpush.bf16.msra.mxu0 %v218
  %2403 = vmatpush.bf16.msra.mxu0 %v217
  %2404 = vmatpush.bf16.msra.mxu0 %v216
  %2405 = vmatpush.bf16.msra.mxu0 %v215
  %2406 = vmatpush.bf16.msra.mxu0 %v214
  %2407 = vmatpush.bf16.msra.mxu0 %v213
  %2408 = vmatpush.bf16.msra.mxu0 %v212
  %2409 = vmatpush.bf16.msra.mxu0 %v211
  %2410 = vmatmul.bf16.gmra.mxu0 %v2368
  %v2411 = vpop.f32.mrf.mxu0
  %v2412 = vadd.f32 %v2399, %v2411
  %v2413 = vpop.f32.mrf.mxu0
  %2414 = vdwg.mxu0
  %2415 = vmatpush.bf16.msra.mxu0 0
  %2416 = vmatpush.bf16.msra.mxu0 0
  %2417 = vmatpush.bf16.msra.mxu0 0
  %2418 = vmatpush.bf16.msra.mxu0 0
  %2419 = vmatpush.bf16.msra.mxu0 0
  %2420 = vmatpush.bf16.msra.mxu0 0
  %2421 = vmatpush.bf16.msra.mxu0 0
  %2422 = vmatpush.bf16.msra.mxu0 %v219
  %2423 = vmatmul.bf16.gmra.mxu0 %v2374
  %v2424 = vpop.f32.mrf.mxu0
  %v2425 = vadd.f32 %v2412, %v2424
  %v2426 = vpop.f32.mrf.mxu0
  %2427 = vdwg.mxu0
  %v2428 = vmax.f32 %v2425, 0.0
  %v2429 = vpack.c.bf16 %v2428, %v2428
  %s2430 = scalar_lea.vmem %s3, 896
  %v2431 = vld [vmem:[%s2430] sm:$0xf]
  %v2432 = vld [vmem:[%s2430 + $0x4] sm:$0xf]
  %v2433 = vld [vmem:[%s2430 + $0x8] sm:$0xf]
  %v2434 = vld [vmem:[%s2430 + $0xc] sm:$0xf]
  %v2435 = vld [vmem:[%s2430 + $0x10] sm:$0xf]
  %v2436 = vld [vmem:[%s2430 + $0x14] sm:$0xf]
  %v2437 = vld [vmem:[%s2430 + $0x18] sm:$0xf]
  %v2438 = vld [vmem:[%s2430 + $0x1c] sm:$0xf]
  %v2439 = vld [vmem:[%s2430 + $0x20] sm:$0xf]
  %v2440 = vld [vmem:[%s2430 + $0x24] sm:$0xf]
  %v2441 = vld [vmem:[%s2430 + $0x28] sm:$0xf]
  %v2442 = vld [vmem:[%s2430 + $0x2c] sm:$0xf]
  %v2443 = vld [vmem:[%s2430 + $0x30] sm:$0xf]
  %v2444 = vld [vmem:[%s2430 + $0x34] sm:$0xf]
  %v2445 = vld [vmem:[%s2430 + $0x38] sm:$0xf]
  %v2446 = vld [vmem:[%s2430 + $0x3c] sm:$0xf]
  %v2463 = vunpack.c.l.b16 %v2431
  %v2464 = vunpack.c.l.b16 %v2432
  %v2465 = vunpack.c.l.b16 %v2433
  %v2466 = vunpack.c.l.b16 %v2434
  %v2467 = vunpack.c.l.b16 %v2435
  %v2468 = vunpack.c.l.b16 %v2436
  %v2469 = vunpack.c.l.b16 %v2437
  %v2470 = vunpack.c.l.b16 %v2438
  %v2471 = vunpack.c.l.b16 %v2439
  %v2472 = vunpack.c.l.b16 %v2440
  %v2473 = vunpack.c.l.b16 %v2441
  %v2474 = vunpack.c.l.b16 %v2442
  %v2475 = vunpack.c.l.b16 %v2443
  %v2476 = vunpack.c.l.b16 %v2444
  %v2477 = vunpack.c.l.b16 %v2445
  %v2478 = vunpack.c.l.b16 %v2446
  %v2479 = vpack.c.b16 %v2464, %v2463
  %v2480 = vpack.c.b16 %v2466, %v2465
  %v2481 = vpack.c.b16 %v2468, %v2467
  %v2482 = vpack.c.b16 %v2470, %v2469
  %v2483 = vpack.c.b16 %v2472, %v2471
  %v2484 = vpack.c.b16 %v2474, %v2473
  %v2485 = vpack.c.b16 %v2476, %v2475
  %v2486 = vpack.c.b16 %v2478, %v2477
  %2495 = vmatpush.bf16.msra.mxu0 %v2486
  %2496 = vmatpush.bf16.msra.mxu0 %v2485
  %2497 = vmatpush.bf16.msra.mxu0 %v2484
  %2498 = vmatpush.bf16.msra.mxu0 %v2483
  %2499 = vmatpush.bf16.msra.mxu0 %v2482
  %2500 = vmatpush.bf16.msra.mxu0 %v2481
  %2501 = vmatpush.bf16.msra.mxu0 %v2480
  %2502 = vmatpush.bf16.msra.mxu0 %v2479
  %2503 = vmatmul.bf16.gmra.mxu0 %v2429
  %v2504 = vpop.f32.mrf.mxu0
  %v2505 = vadd.f32 0.0, %v2504
  %v2506 = vpop.f32.mrf.mxu0
  %2507 = vdwg.mxu0
  %v2508 = vadd.f32 %v2356, %v2505
  %s2509 = scalar_lea.vmem %s0, 240
  %v2510 = vld [vmem:[%s2509] sm:$0xff]
  %v2511 = vld [vmem:[%s2509 + $0x8] sm:$0xff]
  %v2514 = vunpack.c.l.b16 %v2510
  %v2515 = vunpack.c.h.b16 %v2510
  %v2516 = vunpack.c.l.b16 %v2511
  %v2517 = vunpack.c.h.b16 %v2511
  %v2518 = vpack.c.b16 %v2514, %v2514
  %v2519 = vpack.c.b16 %v2515, %v2515
  %v2520 = vpack.c.b16 %v2516, %v2516
  %v2521 = vpack.c.b16 %v2517, %v2517
  %v2526 = vsel %vm245, %v2521, 0
  %2528 = vmatpush.bf16.msra.mxu0 %v202
  %2529 = vmatpush.bf16.msra.mxu0 %v201
  %2530 = vmatpush.bf16.msra.mxu0 %v200
  %2531 = vmatpush.bf16.msra.mxu0 %v199
  %2532 = vmatpush.bf16.msra.mxu0 %v198
  %2533 = vmatpush.bf16.msra.mxu0 %v197
  %2534 = vmatpush.bf16.msra.mxu0 %v196
  %2535 = vmatpush.bf16.msra.mxu0 %v195
  %2536 = vmatmul.bf16.gmra.mxu0 %v2518
  %v2537 = vpop.f32.mrf.mxu0
  %v2538 = vadd.f32 %v80, %v2537
  %v2539 = vpop.f32.mrf.mxu0
  %2540 = vdwg.mxu0
  %2541 = vmatpush.bf16.msra.mxu0 %v210
  %2542 = vmatpush.bf16.msra.mxu0 %v209
  %2543 = vmatpush.bf16.msra.mxu0 %v208
  %2544 = vmatpush.bf16.msra.mxu0 %v207
  %2545 = vmatpush.bf16.msra.mxu0 %v206
  %2546 = vmatpush.bf16.msra.mxu0 %v205
  %2547 = vmatpush.bf16.msra.mxu0 %v204
  %2548 = vmatpush.bf16.msra.mxu0 %v203
  %2549 = vmatmul.bf16.gmra.mxu0 %v2519
  %v2550 = vpop.f32.mrf.mxu0
  %v2551 = vadd.f32 %v2538, %v2550
  %v2552 = vpop.f32.mrf.mxu0
  %2553 = vdwg.mxu0
  %2554 = vmatpush.bf16.msra.mxu0 %v218
  %2555 = vmatpush.bf16.msra.mxu0 %v217
  %2556 = vmatpush.bf16.msra.mxu0 %v216
  %2557 = vmatpush.bf16.msra.mxu0 %v215
  %2558 = vmatpush.bf16.msra.mxu0 %v214
  %2559 = vmatpush.bf16.msra.mxu0 %v213
  %2560 = vmatpush.bf16.msra.mxu0 %v212
  %2561 = vmatpush.bf16.msra.mxu0 %v211
  %2562 = vmatmul.bf16.gmra.mxu0 %v2520
  %v2563 = vpop.f32.mrf.mxu0
  %v2564 = vadd.f32 %v2551, %v2563
  %v2565 = vpop.f32.mrf.mxu0
  %2566 = vdwg.mxu0
  %2567 = vmatpush.bf16.msra.mxu0 0
  %2568 = vmatpush.bf16.msra.mxu0 0
  %2569 = vmatpush.bf16.msra.mxu0 0
  %2570 = vmatpush.bf16.msra.mxu0 0
  %2571 = vmatpush.bf16.msra.mxu0 0
  %2572 = vmatpush.bf16.msra.mxu0 0
  %2573 = vmatpush.bf16.msra.mxu0 0
  %2574 = vmatpush.bf16.msra.mxu0 %v219
  %2575 = vmatmul.bf16.gmra.mxu0 %v2526
  %v2576 = vpop.f32.mrf.mxu0
  %v2577 = vadd.f32 %v2564, %v2576
  %v2578 = vpop.f32.mrf.mxu0
  %2579 = vdwg.mxu0
  %v2580 = vmax.f32 %v2577, 0.0
  %v2581 = vpack.c.bf16 %v2580, %v2580
  %s2582 = scalar_lea.vmem %s3, 960
  %v2583 = vld [vmem:[%s2582] sm:$0xf]
  %v2584 = vld [vmem:[%s2582 + $0x4] sm:$0xf]
  %v2585 = vld [vmem:[%s2582 + $0x8] sm:$0xf]
  %v2586 = vld [vmem:[%s2582 + $0xc] sm:$0xf]
  %v2587 = vld [vmem:[%s2582 + $0x10] sm:$0xf]
  %v2588 = vld [vmem:[%s2582 + $0x14] sm:$0xf]
  %v2589 = vld [vmem:[%s2582 + $0x18] sm:$0xf]
  %v2590 = vld [vmem:[%s2582 + $0x1c] sm:$0xf]
  %v2591 = vld [vmem:[%s2582 + $0x20] sm:$0xf]
  %v2592 = vld [vmem:[%s2582 + $0x24] sm:$0xf]
  %v2593 = vld [vmem:[%s2582 + $0x28] sm:$0xf]
  %v2594 = vld [vmem:[%s2582 + $0x2c] sm:$0xf]
  %v2595 = vld [vmem:[%s2582 + $0x30] sm:$0xf]
  %v2596 = vld [vmem:[%s2582 + $0x34] sm:$0xf]
  %v2597 = vld [vmem:[%s2582 + $0x38] sm:$0xf]
  %v2598 = vld [vmem:[%s2582 + $0x3c] sm:$0xf]
  %v2615 = vunpack.c.l.b16 %v2583
  %v2616 = vunpack.c.l.b16 %v2584
  %v2617 = vunpack.c.l.b16 %v2585
  %v2618 = vunpack.c.l.b16 %v2586
  %v2619 = vunpack.c.l.b16 %v2587
  %v2620 = vunpack.c.l.b16 %v2588
  %v2621 = vunpack.c.l.b16 %v2589
  %v2622 = vunpack.c.l.b16 %v2590
  %v2623 = vunpack.c.l.b16 %v2591
  %v2624 = vunpack.c.l.b16 %v2592
  %v2625 = vunpack.c.l.b16 %v2593
  %v2626 = vunpack.c.l.b16 %v2594
  %v2627 = vunpack.c.l.b16 %v2595
  %v2628 = vunpack.c.l.b16 %v2596
  %v2629 = vunpack.c.l.b16 %v2597
  %v2630 = vunpack.c.l.b16 %v2598
  %v2631 = vpack.c.b16 %v2616, %v2615
  %v2632 = vpack.c.b16 %v2618, %v2617
  %v2633 = vpack.c.b16 %v2620, %v2619
  %v2634 = vpack.c.b16 %v2622, %v2621
  %v2635 = vpack.c.b16 %v2624, %v2623
  %v2636 = vpack.c.b16 %v2626, %v2625
  %v2637 = vpack.c.b16 %v2628, %v2627
  %v2638 = vpack.c.b16 %v2630, %v2629
  %2647 = vmatpush.bf16.msra.mxu0 %v2638
  %2648 = vmatpush.bf16.msra.mxu0 %v2637
  %2649 = vmatpush.bf16.msra.mxu0 %v2636
  %2650 = vmatpush.bf16.msra.mxu0 %v2635
  %2651 = vmatpush.bf16.msra.mxu0 %v2634
  %2652 = vmatpush.bf16.msra.mxu0 %v2633
  %2653 = vmatpush.bf16.msra.mxu0 %v2632
  %2654 = vmatpush.bf16.msra.mxu0 %v2631
  %2655 = vmatmul.bf16.gmra.mxu0 %v2581
  %v2656 = vpop.f32.mrf.mxu0
  %v2657 = vadd.f32 0.0, %v2656
  %v2658 = vpop.f32.mrf.mxu0
  %2659 = vdwg.mxu0
  %v2660 = vadd.f32 %v2508, %v2657
  %s2661 = scalar_lea.vmem %s0, 256
  %v2662 = vld [vmem:[%s2661] sm:$0xff]
  %v2663 = vld [vmem:[%s2661 + $0x8] sm:$0xff]
  %v2666 = vunpack.c.l.b16 %v2662
  %v2667 = vunpack.c.h.b16 %v2662
  %v2668 = vunpack.c.l.b16 %v2663
  %v2669 = vunpack.c.h.b16 %v2663
  %v2670 = vpack.c.b16 %v2666, %v2666
  %v2671 = vpack.c.b16 %v2667, %v2667
  %v2672 = vpack.c.b16 %v2668, %v2668
  %v2673 = vpack.c.b16 %v2669, %v2669
  %v2678 = vsel %vm245, %v2673, 0
  %2680 = vmatpush.bf16.msra.mxu0 %v202
  %2681 = vmatpush.bf16.msra.mxu0 %v201
  %2682 = vmatpush.bf16.msra.mxu0 %v200
  %2683 = vmatpush.bf16.msra.mxu0 %v199
  %2684 = vmatpush.bf16.msra.mxu0 %v198
  %2685 = vmatpush.bf16.msra.mxu0 %v197
  %2686 = vmatpush.bf16.msra.mxu0 %v196
  %2687 = vmatpush.bf16.msra.mxu0 %v195
  %2688 = vmatmul.bf16.gmra.mxu0 %v2670
  %v2689 = vpop.f32.mrf.mxu0
  %v2690 = vadd.f32 %v80, %v2689
  %v2691 = vpop.f32.mrf.mxu0
  %2692 = vdwg.mxu0
  %2693 = vmatpush.bf16.msra.mxu0 %v210
  %2694 = vmatpush.bf16.msra.mxu0 %v209
  %2695 = vmatpush.bf16.msra.mxu0 %v208
  %2696 = vmatpush.bf16.msra.mxu0 %v207
  %2697 = vmatpush.bf16.msra.mxu0 %v206
  %2698 = vmatpush.bf16.msra.mxu0 %v205
  %2699 = vmatpush.bf16.msra.mxu0 %v204
  %2700 = vmatpush.bf16.msra.mxu0 %v203
  %2701 = vmatmul.bf16.gmra.mxu0 %v2671
  %v2702 = vpop.f32.mrf.mxu0
  %v2703 = vadd.f32 %v2690, %v2702
  %v2704 = vpop.f32.mrf.mxu0
  %2705 = vdwg.mxu0
  %2706 = vmatpush.bf16.msra.mxu0 %v218
  %2707 = vmatpush.bf16.msra.mxu0 %v217
  %2708 = vmatpush.bf16.msra.mxu0 %v216
  %2709 = vmatpush.bf16.msra.mxu0 %v215
  %2710 = vmatpush.bf16.msra.mxu0 %v214
  %2711 = vmatpush.bf16.msra.mxu0 %v213
  %2712 = vmatpush.bf16.msra.mxu0 %v212
  %2713 = vmatpush.bf16.msra.mxu0 %v211
  %2714 = vmatmul.bf16.gmra.mxu0 %v2672
  %v2715 = vpop.f32.mrf.mxu0
  %v2716 = vadd.f32 %v2703, %v2715
  %v2717 = vpop.f32.mrf.mxu0
  %2718 = vdwg.mxu0
  %2719 = vmatpush.bf16.msra.mxu0 0
  %2720 = vmatpush.bf16.msra.mxu0 0
  %2721 = vmatpush.bf16.msra.mxu0 0
  %2722 = vmatpush.bf16.msra.mxu0 0
  %2723 = vmatpush.bf16.msra.mxu0 0
  %2724 = vmatpush.bf16.msra.mxu0 0
  %2725 = vmatpush.bf16.msra.mxu0 0
  %2726 = vmatpush.bf16.msra.mxu0 %v219
  %2727 = vmatmul.bf16.gmra.mxu0 %v2678
  %v2728 = vpop.f32.mrf.mxu0
  %v2729 = vadd.f32 %v2716, %v2728
  %v2730 = vpop.f32.mrf.mxu0
  %2731 = vdwg.mxu0
  %v2732 = vmax.f32 %v2729, 0.0
  %v2733 = vpack.c.bf16 %v2732, %v2732
  %s2734 = scalar_lea.vmem %s3, 1024
  %v2735 = vld [vmem:[%s2734] sm:$0xf]
  %v2736 = vld [vmem:[%s2734 + $0x4] sm:$0xf]
  %v2737 = vld [vmem:[%s2734 + $0x8] sm:$0xf]
  %v2738 = vld [vmem:[%s2734 + $0xc] sm:$0xf]
  %v2739 = vld [vmem:[%s2734 + $0x10] sm:$0xf]
  %v2740 = vld [vmem:[%s2734 + $0x14] sm:$0xf]
  %v2741 = vld [vmem:[%s2734 + $0x18] sm:$0xf]
  %v2742 = vld [vmem:[%s2734 + $0x1c] sm:$0xf]
  %v2743 = vld [vmem:[%s2734 + $0x20] sm:$0xf]
  %v2744 = vld [vmem:[%s2734 + $0x24] sm:$0xf]
  %v2745 = vld [vmem:[%s2734 + $0x28] sm:$0xf]
  %v2746 = vld [vmem:[%s2734 + $0x2c] sm:$0xf]
  %v2747 = vld [vmem:[%s2734 + $0x30] sm:$0xf]
  %v2748 = vld [vmem:[%s2734 + $0x34] sm:$0xf]
  %v2749 = vld [vmem:[%s2734 + $0x38] sm:$0xf]
  %v2750 = vld [vmem:[%s2734 + $0x3c] sm:$0xf]
  %v2767 = vunpack.c.l.b16 %v2735
  %v2768 = vunpack.c.l.b16 %v2736
  %v2769 = vunpack.c.l.b16 %v2737
  %v2770 = vunpack.c.l.b16 %v2738
  %v2771 = vunpack.c.l.b16 %v2739
  %v2772 = vunpack.c.l.b16 %v2740
  %v2773 = vunpack.c.l.b16 %v2741
  %v2774 = vunpack.c.l.b16 %v2742
  %v2775 = vunpack.c.l.b16 %v2743
  %v2776 = vunpack.c.l.b16 %v2744
  %v2777 = vunpack.c.l.b16 %v2745
  %v2778 = vunpack.c.l.b16 %v2746
  %v2779 = vunpack.c.l.b16 %v2747
  %v2780 = vunpack.c.l.b16 %v2748
  %v2781 = vunpack.c.l.b16 %v2749
  %v2782 = vunpack.c.l.b16 %v2750
  %v2783 = vpack.c.b16 %v2768, %v2767
  %v2784 = vpack.c.b16 %v2770, %v2769
  %v2785 = vpack.c.b16 %v2772, %v2771
  %v2786 = vpack.c.b16 %v2774, %v2773
  %v2787 = vpack.c.b16 %v2776, %v2775
  %v2788 = vpack.c.b16 %v2778, %v2777
  %v2789 = vpack.c.b16 %v2780, %v2779
  %v2790 = vpack.c.b16 %v2782, %v2781
  %2799 = vmatpush.bf16.msra.mxu0 %v2790
  %2800 = vmatpush.bf16.msra.mxu0 %v2789
  %2801 = vmatpush.bf16.msra.mxu0 %v2788
  %2802 = vmatpush.bf16.msra.mxu0 %v2787
  %2803 = vmatpush.bf16.msra.mxu0 %v2786
  %2804 = vmatpush.bf16.msra.mxu0 %v2785
  %2805 = vmatpush.bf16.msra.mxu0 %v2784
  %2806 = vmatpush.bf16.msra.mxu0 %v2783
  %2807 = vmatmul.bf16.gmra.mxu0 %v2733
  %v2808 = vpop.f32.mrf.mxu0
  %v2809 = vadd.f32 0.0, %v2808
  %v2810 = vpop.f32.mrf.mxu0
  %2811 = vdwg.mxu0
  %v2812 = vadd.f32 %v2660, %v2809
  %s2813 = scalar_lea.vmem %s0, 272
  %v2814 = vld [vmem:[%s2813] sm:$0xff]
  %v2815 = vld [vmem:[%s2813 + $0x8] sm:$0xff]
  %v2818 = vunpack.c.l.b16 %v2814
  %v2819 = vunpack.c.h.b16 %v2814
  %v2820 = vunpack.c.l.b16 %v2815
  %v2821 = vunpack.c.h.b16 %v2815
  %v2822 = vpack.c.b16 %v2818, %v2818
  %v2823 = vpack.c.b16 %v2819, %v2819
  %v2824 = vpack.c.b16 %v2820, %v2820
  %v2825 = vpack.c.b16 %v2821, %v2821
  %v2830 = vsel %vm245, %v2825, 0
  %2832 = vmatpush.bf16.msra.mxu0 %v202
  %2833 = vmatpush.bf16.msra.mxu0 %v201
  %2834 = vmatpush.bf16.msra.mxu0 %v200
  %2835 = vmatpush.bf16.msra.mxu0 %v199
  %2836 = vmatpush.bf16.msra.mxu0 %v198
  %2837 = vmatpush.bf16.msra.mxu0 %v197
  %2838 = vmatpush.bf16.msra.mxu0 %v196
  %2839 = vmatpush.bf16.msra.mxu0 %v195
  %2840 = vmatmul.bf16.gmra.mxu0 %v2822
  %v2841 = vpop.f32.mrf.mxu0
  %v2842 = vadd.f32 %v80, %v2841
  %v2843 = vpop.f32.mrf.mxu0
  %2844 = vdwg.mxu0
  %2845 = vmatpush.bf16.msra.mxu0 %v210
  %2846 = vmatpush.bf16.msra.mxu0 %v209
  %2847 = vmatpush.bf16.msra.mxu0 %v208
  %2848 = vmatpush.bf16.msra.mxu0 %v207
  %2849 = vmatpush.bf16.msra.mxu0 %v206
  %2850 = vmatpush.bf16.msra.mxu0 %v205
  %2851 = vmatpush.bf16.msra.mxu0 %v204
  %2852 = vmatpush.bf16.msra.mxu0 %v203
  %2853 = vmatmul.bf16.gmra.mxu0 %v2823
  %v2854 = vpop.f32.mrf.mxu0
  %v2855 = vadd.f32 %v2842, %v2854
  %v2856 = vpop.f32.mrf.mxu0
  %2857 = vdwg.mxu0
  %2858 = vmatpush.bf16.msra.mxu0 %v218
  %2859 = vmatpush.bf16.msra.mxu0 %v217
  %2860 = vmatpush.bf16.msra.mxu0 %v216
  %2861 = vmatpush.bf16.msra.mxu0 %v215
  %2862 = vmatpush.bf16.msra.mxu0 %v214
  %2863 = vmatpush.bf16.msra.mxu0 %v213
  %2864 = vmatpush.bf16.msra.mxu0 %v212
  %2865 = vmatpush.bf16.msra.mxu0 %v211
  %2866 = vmatmul.bf16.gmra.mxu0 %v2824
  %v2867 = vpop.f32.mrf.mxu0
  %v2868 = vadd.f32 %v2855, %v2867
  %v2869 = vpop.f32.mrf.mxu0
  %2870 = vdwg.mxu0
  %2871 = vmatpush.bf16.msra.mxu0 0
  %2872 = vmatpush.bf16.msra.mxu0 0
  %2873 = vmatpush.bf16.msra.mxu0 0
  %2874 = vmatpush.bf16.msra.mxu0 0
  %2875 = vmatpush.bf16.msra.mxu0 0
  %2876 = vmatpush.bf16.msra.mxu0 0
  %2877 = vmatpush.bf16.msra.mxu0 0
  %2878 = vmatpush.bf16.msra.mxu0 %v219
  %2879 = vmatmul.bf16.gmra.mxu0 %v2830
  %v2880 = vpop.f32.mrf.mxu0
  %v2881 = vadd.f32 %v2868, %v2880
  %v2882 = vpop.f32.mrf.mxu0
  %2883 = vdwg.mxu0
  %v2884 = vmax.f32 %v2881, 0.0
  %v2885 = vpack.c.bf16 %v2884, %v2884
  %s2886 = scalar_lea.vmem %s3, 1088
  %v2887 = vld [vmem:[%s2886] sm:$0xf]
  %v2888 = vld [vmem:[%s2886 + $0x4] sm:$0xf]
  %v2889 = vld [vmem:[%s2886 + $0x8] sm:$0xf]
  %v2890 = vld [vmem:[%s2886 + $0xc] sm:$0xf]
  %v2891 = vld [vmem:[%s2886 + $0x10] sm:$0xf]
  %v2892 = vld [vmem:[%s2886 + $0x14] sm:$0xf]
  %v2893 = vld [vmem:[%s2886 + $0x18] sm:$0xf]
  %v2894 = vld [vmem:[%s2886 + $0x1c] sm:$0xf]
  %v2895 = vld [vmem:[%s2886 + $0x20] sm:$0xf]
  %v2896 = vld [vmem:[%s2886 + $0x24] sm:$0xf]
  %v2897 = vld [vmem:[%s2886 + $0x28] sm:$0xf]
  %v2898 = vld [vmem:[%s2886 + $0x2c] sm:$0xf]
  %v2899 = vld [vmem:[%s2886 + $0x30] sm:$0xf]
  %v2900 = vld [vmem:[%s2886 + $0x34] sm:$0xf]
  %v2901 = vld [vmem:[%s2886 + $0x38] sm:$0xf]
  %v2902 = vld [vmem:[%s2886 + $0x3c] sm:$0xf]
  %v2919 = vunpack.c.l.b16 %v2887
  %v2920 = vunpack.c.l.b16 %v2888
  %v2921 = vunpack.c.l.b16 %v2889
  %v2922 = vunpack.c.l.b16 %v2890
  %v2923 = vunpack.c.l.b16 %v2891
  %v2924 = vunpack.c.l.b16 %v2892
  %v2925 = vunpack.c.l.b16 %v2893
  %v2926 = vunpack.c.l.b16 %v2894
  %v2927 = vunpack.c.l.b16 %v2895
  %v2928 = vunpack.c.l.b16 %v2896
  %v2929 = vunpack.c.l.b16 %v2897
  %v2930 = vunpack.c.l.b16 %v2898
  %v2931 = vunpack.c.l.b16 %v2899
  %v2932 = vunpack.c.l.b16 %v2900
  %v2933 = vunpack.c.l.b16 %v2901
  %v2934 = vunpack.c.l.b16 %v2902
  %v2935 = vpack.c.b16 %v2920, %v2919
  %v2936 = vpack.c.b16 %v2922, %v2921
  %v2937 = vpack.c.b16 %v2924, %v2923
  %v2938 = vpack.c.b16 %v2926, %v2925
  %v2939 = vpack.c.b16 %v2928, %v2927
  %v2940 = vpack.c.b16 %v2930, %v2929
  %v2941 = vpack.c.b16 %v2932, %v2931
  %v2942 = vpack.c.b16 %v2934, %v2933
  %2951 = vmatpush.bf16.msra.mxu0 %v2942
  %2952 = vmatpush.bf16.msra.mxu0 %v2941
  %2953 = vmatpush.bf16.msra.mxu0 %v2940
  %2954 = vmatpush.bf16.msra.mxu0 %v2939
  %2955 = vmatpush.bf16.msra.mxu0 %v2938
  %2956 = vmatpush.bf16.msra.mxu0 %v2937
  %2957 = vmatpush.bf16.msra.mxu0 %v2936
  %2958 = vmatpush.bf16.msra.mxu0 %v2935
  %2959 = vmatmul.bf16.gmra.mxu0 %v2885
  %v2960 = vpop.f32.mrf.mxu0
  %v2961 = vadd.f32 0.0, %v2960
  %v2962 = vpop.f32.mrf.mxu0
  %2963 = vdwg.mxu0
  %v2964 = vadd.f32 %v2812, %v2961
  %s2965 = scalar_lea.vmem %s0, 288
  %v2966 = vld [vmem:[%s2965] sm:$0xff]
  %v2967 = vld [vmem:[%s2965 + $0x8] sm:$0xff]
  %v2970 = vunpack.c.l.b16 %v2966
  %v2971 = vunpack.c.h.b16 %v2966
  %v2972 = vunpack.c.l.b16 %v2967
  %v2973 = vunpack.c.h.b16 %v2967
  %v2974 = vpack.c.b16 %v2970, %v2970
  %v2975 = vpack.c.b16 %v2971, %v2971
  %v2976 = vpack.c.b16 %v2972, %v2972
  %v2977 = vpack.c.b16 %v2973, %v2973
  %v2982 = vsel %vm245, %v2977, 0
  %2984 = vmatpush.bf16.msra.mxu0 %v202
  %2985 = vmatpush.bf16.msra.mxu0 %v201
  %2986 = vmatpush.bf16.msra.mxu0 %v200
  %2987 = vmatpush.bf16.msra.mxu0 %v199
  %2988 = vmatpush.bf16.msra.mxu0 %v198
  %2989 = vmatpush.bf16.msra.mxu0 %v197
  %2990 = vmatpush.bf16.msra.mxu0 %v196
  %2991 = vmatpush.bf16.msra.mxu0 %v195
  %2992 = vmatmul.bf16.gmra.mxu0 %v2974
  %v2993 = vpop.f32.mrf.mxu0
  %v2994 = vadd.f32 %v80, %v2993
  %v2995 = vpop.f32.mrf.mxu0
  %2996 = vdwg.mxu0
  %2997 = vmatpush.bf16.msra.mxu0 %v210
  %2998 = vmatpush.bf16.msra.mxu0 %v209
  %2999 = vmatpush.bf16.msra.mxu0 %v208
  %3000 = vmatpush.bf16.msra.mxu0 %v207
  %3001 = vmatpush.bf16.msra.mxu0 %v206
  %3002 = vmatpush.bf16.msra.mxu0 %v205
  %3003 = vmatpush.bf16.msra.mxu0 %v204
  %3004 = vmatpush.bf16.msra.mxu0 %v203
  %3005 = vmatmul.bf16.gmra.mxu0 %v2975
  %v3006 = vpop.f32.mrf.mxu0
  %v3007 = vadd.f32 %v2994, %v3006
  %v3008 = vpop.f32.mrf.mxu0
  %3009 = vdwg.mxu0
  %3010 = vmatpush.bf16.msra.mxu0 %v218
  %3011 = vmatpush.bf16.msra.mxu0 %v217
  %3012 = vmatpush.bf16.msra.mxu0 %v216
  %3013 = vmatpush.bf16.msra.mxu0 %v215
  %3014 = vmatpush.bf16.msra.mxu0 %v214
  %3015 = vmatpush.bf16.msra.mxu0 %v213
  %3016 = vmatpush.bf16.msra.mxu0 %v212
  %3017 = vmatpush.bf16.msra.mxu0 %v211
  %3018 = vmatmul.bf16.gmra.mxu0 %v2976
  %v3019 = vpop.f32.mrf.mxu0
  %v3020 = vadd.f32 %v3007, %v3019
  %v3021 = vpop.f32.mrf.mxu0
  %3022 = vdwg.mxu0
  %3023 = vmatpush.bf16.msra.mxu0 0
  %3024 = vmatpush.bf16.msra.mxu0 0
  %3025 = vmatpush.bf16.msra.mxu0 0
  %3026 = vmatpush.bf16.msra.mxu0 0
  %3027 = vmatpush.bf16.msra.mxu0 0
  %3028 = vmatpush.bf16.msra.mxu0 0
  %3029 = vmatpush.bf16.msra.mxu0 0
  %3030 = vmatpush.bf16.msra.mxu0 %v219
  %3031 = vmatmul.bf16.gmra.mxu0 %v2982
  %v3032 = vpop.f32.mrf.mxu0
  %v3033 = vadd.f32 %v3020, %v3032
  %v3034 = vpop.f32.mrf.mxu0
  %3035 = vdwg.mxu0
  %v3036 = vmax.f32 %v3033, 0.0
  %v3037 = vpack.c.bf16 %v3036, %v3036
  %s3038 = scalar_lea.vmem %s3, 1152
  %v3039 = vld [vmem:[%s3038] sm:$0xf]
  %v3040 = vld [vmem:[%s3038 + $0x4] sm:$0xf]
  %v3041 = vld [vmem:[%s3038 + $0x8] sm:$0xf]
  %v3042 = vld [vmem:[%s3038 + $0xc] sm:$0xf]
  %v3043 = vld [vmem:[%s3038 + $0x10] sm:$0xf]
  %v3044 = vld [vmem:[%s3038 + $0x14] sm:$0xf]
  %v3045 = vld [vmem:[%s3038 + $0x18] sm:$0xf]
  %v3046 = vld [vmem:[%s3038 + $0x1c] sm:$0xf]
  %v3047 = vld [vmem:[%s3038 + $0x20] sm:$0xf]
  %v3048 = vld [vmem:[%s3038 + $0x24] sm:$0xf]
  %v3049 = vld [vmem:[%s3038 + $0x28] sm:$0xf]
  %v3050 = vld [vmem:[%s3038 + $0x2c] sm:$0xf]
  %v3051 = vld [vmem:[%s3038 + $0x30] sm:$0xf]
  %v3052 = vld [vmem:[%s3038 + $0x34] sm:$0xf]
  %v3053 = vld [vmem:[%s3038 + $0x38] sm:$0xf]
  %v3054 = vld [vmem:[%s3038 + $0x3c] sm:$0xf]
  %v3071 = vunpack.c.l.b16 %v3039
  %v3072 = vunpack.c.l.b16 %v3040
  %v3073 = vunpack.c.l.b16 %v3041
  %v3074 = vunpack.c.l.b16 %v3042
  %v3075 = vunpack.c.l.b16 %v3043
  %v3076 = vunpack.c.l.b16 %v3044
  %v3077 = vunpack.c.l.b16 %v3045
  %v3078 = vunpack.c.l.b16 %v3046
  %v3079 = vunpack.c.l.b16 %v3047
  %v3080 = vunpack.c.l.b16 %v3048
  %v3081 = vunpack.c.l.b16 %v3049
  %v3082 = vunpack.c.l.b16 %v3050
  %v3083 = vunpack.c.l.b16 %v3051
  %v3084 = vunpack.c.l.b16 %v3052
  %v3085 = vunpack.c.l.b16 %v3053
  %v3086 = vunpack.c.l.b16 %v3054
  %v3087 = vpack.c.b16 %v3072, %v3071
  %v3088 = vpack.c.b16 %v3074, %v3073
  %v3089 = vpack.c.b16 %v3076, %v3075
  %v3090 = vpack.c.b16 %v3078, %v3077
  %v3091 = vpack.c.b16 %v3080, %v3079
  %v3092 = vpack.c.b16 %v3082, %v3081
  %v3093 = vpack.c.b16 %v3084, %v3083
  %v3094 = vpack.c.b16 %v3086, %v3085
  %3103 = vmatpush.bf16.msra.mxu0 %v3094
  %3104 = vmatpush.bf16.msra.mxu0 %v3093
  %3105 = vmatpush.bf16.msra.mxu0 %v3092
  %3106 = vmatpush.bf16.msra.mxu0 %v3091
  %3107 = vmatpush.bf16.msra.mxu0 %v3090
  %3108 = vmatpush.bf16.msra.mxu0 %v3089
  %3109 = vmatpush.bf16.msra.mxu0 %v3088
  %3110 = vmatpush.bf16.msra.mxu0 %v3087
  %3111 = vmatmul.bf16.gmra.mxu0 %v3037
  %v3112 = vpop.f32.mrf.mxu0
  %v3113 = vadd.f32 0.0, %v3112
  %v3114 = vpop.f32.mrf.mxu0
  %3115 = vdwg.mxu0
  %v3116 = vadd.f32 %v2964, %v3113
  %s3117 = scalar_lea.vmem %s0, 304
  %v3118 = vld [vmem:[%s3117] sm:$0xff]
  %v3119 = vld [vmem:[%s3117 + $0x8] sm:$0xff]
  %v3122 = vunpack.c.l.b16 %v3118
  %v3123 = vunpack.c.h.b16 %v3118
  %v3124 = vunpack.c.l.b16 %v3119
  %v3125 = vunpack.c.h.b16 %v3119
  %v3126 = vpack.c.b16 %v3122, %v3122
  %v3127 = vpack.c.b16 %v3123, %v3123
  %v3128 = vpack.c.b16 %v3124, %v3124
  %v3129 = vpack.c.b16 %v3125, %v3125
  %v3134 = vsel %vm245, %v3129, 0
  %3136 = vmatpush.bf16.msra.mxu0 %v202
  %3137 = vmatpush.bf16.msra.mxu0 %v201
  %3138 = vmatpush.bf16.msra.mxu0 %v200
  %3139 = vmatpush.bf16.msra.mxu0 %v199
  %3140 = vmatpush.bf16.msra.mxu0 %v198
  %3141 = vmatpush.bf16.msra.mxu0 %v197
  %3142 = vmatpush.bf16.msra.mxu0 %v196
  %3143 = vmatpush.bf16.msra.mxu0 %v195
  %3144 = vmatmul.bf16.gmra.mxu0 %v3126
  %v3145 = vpop.f32.mrf.mxu0
  %v3146 = vadd.f32 %v80, %v3145
  %v3147 = vpop.f32.mrf.mxu0
  %3148 = vdwg.mxu0
  %3149 = vmatpush.bf16.msra.mxu0 %v210
  %3150 = vmatpush.bf16.msra.mxu0 %v209
  %3151 = vmatpush.bf16.msra.mxu0 %v208
  %3152 = vmatpush.bf16.msra.mxu0 %v207
  %3153 = vmatpush.bf16.msra.mxu0 %v206
  %3154 = vmatpush.bf16.msra.mxu0 %v205
  %3155 = vmatpush.bf16.msra.mxu0 %v204
  %3156 = vmatpush.bf16.msra.mxu0 %v203
  %3157 = vmatmul.bf16.gmra.mxu0 %v3127
  %v3158 = vpop.f32.mrf.mxu0
  %v3159 = vadd.f32 %v3146, %v3158
  %v3160 = vpop.f32.mrf.mxu0
  %3161 = vdwg.mxu0
  %3162 = vmatpush.bf16.msra.mxu0 %v218
  %3163 = vmatpush.bf16.msra.mxu0 %v217
  %3164 = vmatpush.bf16.msra.mxu0 %v216
  %3165 = vmatpush.bf16.msra.mxu0 %v215
  %3166 = vmatpush.bf16.msra.mxu0 %v214
  %3167 = vmatpush.bf16.msra.mxu0 %v213
  %3168 = vmatpush.bf16.msra.mxu0 %v212
  %3169 = vmatpush.bf16.msra.mxu0 %v211
  %3170 = vmatmul.bf16.gmra.mxu0 %v3128
  %v3171 = vpop.f32.mrf.mxu0
  %v3172 = vadd.f32 %v3159, %v3171
  %v3173 = vpop.f32.mrf.mxu0
  %3174 = vdwg.mxu0
  %3175 = vmatpush.bf16.msra.mxu0 0
  %3176 = vmatpush.bf16.msra.mxu0 0
  %3177 = vmatpush.bf16.msra.mxu0 0
  %3178 = vmatpush.bf16.msra.mxu0 0
  %3179 = vmatpush.bf16.msra.mxu0 0
  %3180 = vmatpush.bf16.msra.mxu0 0
  %3181 = vmatpush.bf16.msra.mxu0 0
  %3182 = vmatpush.bf16.msra.mxu0 %v219
  %3183 = vmatmul.bf16.gmra.mxu0 %v3134
  %v3184 = vpop.f32.mrf.mxu0
  %v3185 = vadd.f32 %v3172, %v3184
  %v3186 = vpop.f32.mrf.mxu0
  %3187 = vdwg.mxu0
  %v3188 = vmax.f32 %v3185, 0.0
  %v3189 = vpack.c.bf16 %v3188, %v3188
  %s3190 = scalar_lea.vmem %s3, 1216
  %v3191 = vld [vmem:[%s3190] sm:$0xf]
  %v3192 = vld [vmem:[%s3190 + $0x4] sm:$0xf]
  %v3193 = vld [vmem:[%s3190 + $0x8] sm:$0xf]
  %v3194 = vld [vmem:[%s3190 + $0xc] sm:$0xf]
  %v3195 = vld [vmem:[%s3190 + $0x10] sm:$0xf]
  %v3196 = vld [vmem:[%s3190 + $0x14] sm:$0xf]
  %v3197 = vld [vmem:[%s3190 + $0x18] sm:$0xf]
  %v3198 = vld [vmem:[%s3190 + $0x1c] sm:$0xf]
  %v3199 = vld [vmem:[%s3190 + $0x20] sm:$0xf]
  %v3200 = vld [vmem:[%s3190 + $0x24] sm:$0xf]
  %v3201 = vld [vmem:[%s3190 + $0x28] sm:$0xf]
  %v3202 = vld [vmem:[%s3190 + $0x2c] sm:$0xf]
  %v3203 = vld [vmem:[%s3190 + $0x30] sm:$0xf]
  %v3204 = vld [vmem:[%s3190 + $0x34] sm:$0xf]
  %v3205 = vld [vmem:[%s3190 + $0x38] sm:$0xf]
  %v3206 = vld [vmem:[%s3190 + $0x3c] sm:$0xf]
  %v3223 = vunpack.c.l.b16 %v3191
  %v3224 = vunpack.c.l.b16 %v3192
  %v3225 = vunpack.c.l.b16 %v3193
  %v3226 = vunpack.c.l.b16 %v3194
  %v3227 = vunpack.c.l.b16 %v3195
  %v3228 = vunpack.c.l.b16 %v3196
  %v3229 = vunpack.c.l.b16 %v3197
  %v3230 = vunpack.c.l.b16 %v3198
  %v3231 = vunpack.c.l.b16 %v3199
  %v3232 = vunpack.c.l.b16 %v3200
  %v3233 = vunpack.c.l.b16 %v3201
  %v3234 = vunpack.c.l.b16 %v3202
  %v3235 = vunpack.c.l.b16 %v3203
  %v3236 = vunpack.c.l.b16 %v3204
  %v3237 = vunpack.c.l.b16 %v3205
  %v3238 = vunpack.c.l.b16 %v3206
  %v3239 = vpack.c.b16 %v3224, %v3223
  %v3240 = vpack.c.b16 %v3226, %v3225
  %v3241 = vpack.c.b16 %v3228, %v3227
  %v3242 = vpack.c.b16 %v3230, %v3229
  %v3243 = vpack.c.b16 %v3232, %v3231
  %v3244 = vpack.c.b16 %v3234, %v3233
  %v3245 = vpack.c.b16 %v3236, %v3235
  %v3246 = vpack.c.b16 %v3238, %v3237
  %3255 = vmatpush.bf16.msra.mxu0 %v3246
  %3256 = vmatpush.bf16.msra.mxu0 %v3245
  %3257 = vmatpush.bf16.msra.mxu0 %v3244
  %3258 = vmatpush.bf16.msra.mxu0 %v3243
  %3259 = vmatpush.bf16.msra.mxu0 %v3242
  %3260 = vmatpush.bf16.msra.mxu0 %v3241
  %3261 = vmatpush.bf16.msra.mxu0 %v3240
  %3262 = vmatpush.bf16.msra.mxu0 %v3239
  %3263 = vmatmul.bf16.gmra.mxu0 %v3189
  %v3264 = vpop.f32.mrf.mxu0
  %v3265 = vadd.f32 0.0, %v3264
  %v3266 = vpop.f32.mrf.mxu0
  %3267 = vdwg.mxu0
  %v3268 = vadd.f32 %v3116, %v3265
  %s3269 = scalar_lea.vmem %s0, 320
  %v3270 = vld [vmem:[%s3269] sm:$0xff]
  %v3271 = vld [vmem:[%s3269 + $0x8] sm:$0xff]
  %v3274 = vunpack.c.l.b16 %v3270
  %v3275 = vunpack.c.h.b16 %v3270
  %v3276 = vunpack.c.l.b16 %v3271
  %v3277 = vunpack.c.h.b16 %v3271
  %v3278 = vpack.c.b16 %v3274, %v3274
  %v3279 = vpack.c.b16 %v3275, %v3275
  %v3280 = vpack.c.b16 %v3276, %v3276
  %v3281 = vpack.c.b16 %v3277, %v3277
  %v3286 = vsel %vm245, %v3281, 0
  %3288 = vmatpush.bf16.msra.mxu0 %v202
  %3289 = vmatpush.bf16.msra.mxu0 %v201
  %3290 = vmatpush.bf16.msra.mxu0 %v200
  %3291 = vmatpush.bf16.msra.mxu0 %v199
  %3292 = vmatpush.bf16.msra.mxu0 %v198
  %3293 = vmatpush.bf16.msra.mxu0 %v197
  %3294 = vmatpush.bf16.msra.mxu0 %v196
  %3295 = vmatpush.bf16.msra.mxu0 %v195
  %3296 = vmatmul.bf16.gmra.mxu0 %v3278
  %v3297 = vpop.f32.mrf.mxu0
  %v3298 = vadd.f32 %v80, %v3297
  %v3299 = vpop.f32.mrf.mxu0
  %3300 = vdwg.mxu0
  %3301 = vmatpush.bf16.msra.mxu0 %v210
  %3302 = vmatpush.bf16.msra.mxu0 %v209
  %3303 = vmatpush.bf16.msra.mxu0 %v208
  %3304 = vmatpush.bf16.msra.mxu0 %v207
  %3305 = vmatpush.bf16.msra.mxu0 %v206
  %3306 = vmatpush.bf16.msra.mxu0 %v205
  %3307 = vmatpush.bf16.msra.mxu0 %v204
  %3308 = vmatpush.bf16.msra.mxu0 %v203
  %3309 = vmatmul.bf16.gmra.mxu0 %v3279
  %v3310 = vpop.f32.mrf.mxu0
  %v3311 = vadd.f32 %v3298, %v3310
  %v3312 = vpop.f32.mrf.mxu0
  %3313 = vdwg.mxu0
  %3314 = vmatpush.bf16.msra.mxu0 %v218
  %3315 = vmatpush.bf16.msra.mxu0 %v217
  %3316 = vmatpush.bf16.msra.mxu0 %v216
  %3317 = vmatpush.bf16.msra.mxu0 %v215
  %3318 = vmatpush.bf16.msra.mxu0 %v214
  %3319 = vmatpush.bf16.msra.mxu0 %v213
  %3320 = vmatpush.bf16.msra.mxu0 %v212
  %3321 = vmatpush.bf16.msra.mxu0 %v211
  %3322 = vmatmul.bf16.gmra.mxu0 %v3280
  %v3323 = vpop.f32.mrf.mxu0
  %v3324 = vadd.f32 %v3311, %v3323
  %v3325 = vpop.f32.mrf.mxu0
  %3326 = vdwg.mxu0
  %3327 = vmatpush.bf16.msra.mxu0 0
  %3328 = vmatpush.bf16.msra.mxu0 0
  %3329 = vmatpush.bf16.msra.mxu0 0
  %3330 = vmatpush.bf16.msra.mxu0 0
  %3331 = vmatpush.bf16.msra.mxu0 0
  %3332 = vmatpush.bf16.msra.mxu0 0
  %3333 = vmatpush.bf16.msra.mxu0 0
  %3334 = vmatpush.bf16.msra.mxu0 %v219
  %3335 = vmatmul.bf16.gmra.mxu0 %v3286
  %v3336 = vpop.f32.mrf.mxu0
  %v3337 = vadd.f32 %v3324, %v3336
  %v3338 = vpop.f32.mrf.mxu0
  %3339 = vdwg.mxu0
  %v3340 = vmax.f32 %v3337, 0.0
  %v3341 = vpack.c.bf16 %v3340, %v3340
  %s3342 = scalar_lea.vmem %s3, 1280
  %v3343 = vld [vmem:[%s3342] sm:$0xf]
  %v3344 = vld [vmem:[%s3342 + $0x4] sm:$0xf]
  %v3345 = vld [vmem:[%s3342 + $0x8] sm:$0xf]
  %v3346 = vld [vmem:[%s3342 + $0xc] sm:$0xf]
  %v3347 = vld [vmem:[%s3342 + $0x10] sm:$0xf]
  %v3348 = vld [vmem:[%s3342 + $0x14] sm:$0xf]
  %v3349 = vld [vmem:[%s3342 + $0x18] sm:$0xf]
  %v3350 = vld [vmem:[%s3342 + $0x1c] sm:$0xf]
  %v3351 = vld [vmem:[%s3342 + $0x20] sm:$0xf]
  %v3352 = vld [vmem:[%s3342 + $0x24] sm:$0xf]
  %v3353 = vld [vmem:[%s3342 + $0x28] sm:$0xf]
  %v3354 = vld [vmem:[%s3342 + $0x2c] sm:$0xf]
  %v3355 = vld [vmem:[%s3342 + $0x30] sm:$0xf]
  %v3356 = vld [vmem:[%s3342 + $0x34] sm:$0xf]
  %v3357 = vld [vmem:[%s3342 + $0x38] sm:$0xf]
  %v3358 = vld [vmem:[%s3342 + $0x3c] sm:$0xf]
  %v3375 = vunpack.c.l.b16 %v3343
  %v3376 = vunpack.c.l.b16 %v3344
  %v3377 = vunpack.c.l.b16 %v3345
  %v3378 = vunpack.c.l.b16 %v3346
  %v3379 = vunpack.c.l.b16 %v3347
  %v3380 = vunpack.c.l.b16 %v3348
  %v3381 = vunpack.c.l.b16 %v3349
  %v3382 = vunpack.c.l.b16 %v3350
  %v3383 = vunpack.c.l.b16 %v3351
  %v3384 = vunpack.c.l.b16 %v3352
  %v3385 = vunpack.c.l.b16 %v3353
  %v3386 = vunpack.c.l.b16 %v3354
  %v3387 = vunpack.c.l.b16 %v3355
  %v3388 = vunpack.c.l.b16 %v3356
  %v3389 = vunpack.c.l.b16 %v3357
  %v3390 = vunpack.c.l.b16 %v3358
  %v3391 = vpack.c.b16 %v3376, %v3375
  %v3392 = vpack.c.b16 %v3378, %v3377
  %v3393 = vpack.c.b16 %v3380, %v3379
  %v3394 = vpack.c.b16 %v3382, %v3381
  %v3395 = vpack.c.b16 %v3384, %v3383
  %v3396 = vpack.c.b16 %v3386, %v3385
  %v3397 = vpack.c.b16 %v3388, %v3387
  %v3398 = vpack.c.b16 %v3390, %v3389
  %3407 = vmatpush.bf16.msra.mxu0 %v3398
  %3408 = vmatpush.bf16.msra.mxu0 %v3397
  %3409 = vmatpush.bf16.msra.mxu0 %v3396
  %3410 = vmatpush.bf16.msra.mxu0 %v3395
  %3411 = vmatpush.bf16.msra.mxu0 %v3394
  %3412 = vmatpush.bf16.msra.mxu0 %v3393
  %3413 = vmatpush.bf16.msra.mxu0 %v3392
  %3414 = vmatpush.bf16.msra.mxu0 %v3391
  %3415 = vmatmul.bf16.gmra.mxu0 %v3341
  %v3416 = vpop.f32.mrf.mxu0
  %v3417 = vadd.f32 0.0, %v3416
  %v3418 = vpop.f32.mrf.mxu0
  %3419 = vdwg.mxu0
  %v3420 = vadd.f32 %v3268, %v3417
  %s3421 = scalar_lea.vmem %s0, 336
  %v3422 = vld [vmem:[%s3421] sm:$0xff]
  %v3423 = vld [vmem:[%s3421 + $0x8] sm:$0xff]
  %v3426 = vunpack.c.l.b16 %v3422
  %v3427 = vunpack.c.h.b16 %v3422
  %v3428 = vunpack.c.l.b16 %v3423
  %v3429 = vunpack.c.h.b16 %v3423
  %v3430 = vpack.c.b16 %v3426, %v3426
  %v3431 = vpack.c.b16 %v3427, %v3427
  %v3432 = vpack.c.b16 %v3428, %v3428
  %v3433 = vpack.c.b16 %v3429, %v3429
  %v3438 = vsel %vm245, %v3433, 0
  %3440 = vmatpush.bf16.msra.mxu0 %v202
  %3441 = vmatpush.bf16.msra.mxu0 %v201
  %3442 = vmatpush.bf16.msra.mxu0 %v200
  %3443 = vmatpush.bf16.msra.mxu0 %v199
  %3444 = vmatpush.bf16.msra.mxu0 %v198
  %3445 = vmatpush.bf16.msra.mxu0 %v197
  %3446 = vmatpush.bf16.msra.mxu0 %v196
  %3447 = vmatpush.bf16.msra.mxu0 %v195
  %3448 = vmatmul.bf16.gmra.mxu0 %v3430
  %v3449 = vpop.f32.mrf.mxu0
  %v3450 = vadd.f32 %v80, %v3449
  %v3451 = vpop.f32.mrf.mxu0
  %3452 = vdwg.mxu0
  %3453 = vmatpush.bf16.msra.mxu0 %v210
  %3454 = vmatpush.bf16.msra.mxu0 %v209
  %3455 = vmatpush.bf16.msra.mxu0 %v208
  %3456 = vmatpush.bf16.msra.mxu0 %v207
  %3457 = vmatpush.bf16.msra.mxu0 %v206
  %3458 = vmatpush.bf16.msra.mxu0 %v205
  %3459 = vmatpush.bf16.msra.mxu0 %v204
  %3460 = vmatpush.bf16.msra.mxu0 %v203
  %3461 = vmatmul.bf16.gmra.mxu0 %v3431
  %v3462 = vpop.f32.mrf.mxu0
  %v3463 = vadd.f32 %v3450, %v3462
  %v3464 = vpop.f32.mrf.mxu0
  %3465 = vdwg.mxu0
  %3466 = vmatpush.bf16.msra.mxu0 %v218
  %3467 = vmatpush.bf16.msra.mxu0 %v217
  %3468 = vmatpush.bf16.msra.mxu0 %v216
  %3469 = vmatpush.bf16.msra.mxu0 %v215
  %3470 = vmatpush.bf16.msra.mxu0 %v214
  %3471 = vmatpush.bf16.msra.mxu0 %v213
  %3472 = vmatpush.bf16.msra.mxu0 %v212
  %3473 = vmatpush.bf16.msra.mxu0 %v211
  %3474 = vmatmul.bf16.gmra.mxu0 %v3432
  %v3475 = vpop.f32.mrf.mxu0
  %v3476 = vadd.f32 %v3463, %v3475
  %v3477 = vpop.f32.mrf.mxu0
  %3478 = vdwg.mxu0
  %3479 = vmatpush.bf16.msra.mxu0 0
  %3480 = vmatpush.bf16.msra.mxu0 0
  %3481 = vmatpush.bf16.msra.mxu0 0
  %3482 = vmatpush.bf16.msra.mxu0 0
  %3483 = vmatpush.bf16.msra.mxu0 0
  %3484 = vmatpush.bf16.msra.mxu0 0
  %3485 = vmatpush.bf16.msra.mxu0 0
  %3486 = vmatpush.bf16.msra.mxu0 %v219
  %3487 = vmatmul.bf16.gmra.mxu0 %v3438
  %v3488 = vpop.f32.mrf.mxu0
  %v3489 = vadd.f32 %v3476, %v3488
  %v3490 = vpop.f32.mrf.mxu0
  %3491 = vdwg.mxu0
  %v3492 = vmax.f32 %v3489, 0.0
  %v3493 = vpack.c.bf16 %v3492, %v3492
  %s3494 = scalar_lea.vmem %s3, 1344
  %v3495 = vld [vmem:[%s3494] sm:$0xf]
  %v3496 = vld [vmem:[%s3494 + $0x4] sm:$0xf]
  %v3497 = vld [vmem:[%s3494 + $0x8] sm:$0xf]
  %v3498 = vld [vmem:[%s3494 + $0xc] sm:$0xf]
  %v3499 = vld [vmem:[%s3494 + $0x10] sm:$0xf]
  %v3500 = vld [vmem:[%s3494 + $0x14] sm:$0xf]
  %v3501 = vld [vmem:[%s3494 + $0x18] sm:$0xf]
  %v3502 = vld [vmem:[%s3494 + $0x1c] sm:$0xf]
  %v3503 = vld [vmem:[%s3494 + $0x20] sm:$0xf]
  %v3504 = vld [vmem:[%s3494 + $0x24] sm:$0xf]
  %v3505 = vld [vmem:[%s3494 + $0x28] sm:$0xf]
  %v3506 = vld [vmem:[%s3494 + $0x2c] sm:$0xf]
  %v3507 = vld [vmem:[%s3494 + $0x30] sm:$0xf]
  %v3508 = vld [vmem:[%s3494 + $0x34] sm:$0xf]
  %v3509 = vld [vmem:[%s3494 + $0x38] sm:$0xf]
  %v3510 = vld [vmem:[%s3494 + $0x3c] sm:$0xf]
  %v3527 = vunpack.c.l.b16 %v3495
  %v3528 = vunpack.c.l.b16 %v3496
  %v3529 = vunpack.c.l.b16 %v3497
  %v3530 = vunpack.c.l.b16 %v3498
  %v3531 = vunpack.c.l.b16 %v3499
  %v3532 = vunpack.c.l.b16 %v3500
  %v3533 = vunpack.c.l.b16 %v3501
  %v3534 = vunpack.c.l.b16 %v3502
  %v3535 = vunpack.c.l.b16 %v3503
  %v3536 = vunpack.c.l.b16 %v3504
  %v3537 = vunpack.c.l.b16 %v3505
  %v3538 = vunpack.c.l.b16 %v3506
  %v3539 = vunpack.c.l.b16 %v3507
  %v3540 = vunpack.c.l.b16 %v3508
  %v3541 = vunpack.c.l.b16 %v3509
  %v3542 = vunpack.c.l.b16 %v3510
  %v3543 = vpack.c.b16 %v3528, %v3527
  %v3544 = vpack.c.b16 %v3530, %v3529
  %v3545 = vpack.c.b16 %v3532, %v3531
  %v3546 = vpack.c.b16 %v3534, %v3533
  %v3547 = vpack.c.b16 %v3536, %v3535
  %v3548 = vpack.c.b16 %v3538, %v3537
  %v3549 = vpack.c.b16 %v3540, %v3539
  %v3550 = vpack.c.b16 %v3542, %v3541
  %3559 = vmatpush.bf16.msra.mxu0 %v3550
  %3560 = vmatpush.bf16.msra.mxu0 %v3549
  %3561 = vmatpush.bf16.msra.mxu0 %v3548
  %3562 = vmatpush.bf16.msra.mxu0 %v3547
  %3563 = vmatpush.bf16.msra.mxu0 %v3546
  %3564 = vmatpush.bf16.msra.mxu0 %v3545
  %3565 = vmatpush.bf16.msra.mxu0 %v3544
  %3566 = vmatpush.bf16.msra.mxu0 %v3543
  %3567 = vmatmul.bf16.gmra.mxu0 %v3493
  %v3568 = vpop.f32.mrf.mxu0
  %v3569 = vadd.f32 0.0, %v3568
  %v3570 = vpop.f32.mrf.mxu0
  %3571 = vdwg.mxu0
  %v3572 = vadd.f32 %v3420, %v3569
  %s3573 = scalar_lea.vmem %s0, 352
  %v3574 = vld [vmem:[%s3573] sm:$0xff]
  %v3575 = vld [vmem:[%s3573 + $0x8] sm:$0xff]
  %v3578 = vunpack.c.l.b16 %v3574
  %v3579 = vunpack.c.h.b16 %v3574
  %v3580 = vunpack.c.l.b16 %v3575
  %v3581 = vunpack.c.h.b16 %v3575
  %v3582 = vpack.c.b16 %v3578, %v3578
  %v3583 = vpack.c.b16 %v3579, %v3579
  %v3584 = vpack.c.b16 %v3580, %v3580
  %v3585 = vpack.c.b16 %v3581, %v3581
  %v3590 = vsel %vm245, %v3585, 0
  %3592 = vmatpush.bf16.msra.mxu0 %v202
  %3593 = vmatpush.bf16.msra.mxu0 %v201
  %3594 = vmatpush.bf16.msra.mxu0 %v200
  %3595 = vmatpush.bf16.msra.mxu0 %v199
  %3596 = vmatpush.bf16.msra.mxu0 %v198
  %3597 = vmatpush.bf16.msra.mxu0 %v197
  %3598 = vmatpush.bf16.msra.mxu0 %v196
  %3599 = vmatpush.bf16.msra.mxu0 %v195
  %3600 = vmatmul.bf16.gmra.mxu0 %v3582
  %v3601 = vpop.f32.mrf.mxu0
  %v3602 = vadd.f32 %v80, %v3601
  %v3603 = vpop.f32.mrf.mxu0
  %3604 = vdwg.mxu0
  %3605 = vmatpush.bf16.msra.mxu0 %v210
  %3606 = vmatpush.bf16.msra.mxu0 %v209
  %3607 = vmatpush.bf16.msra.mxu0 %v208
  %3608 = vmatpush.bf16.msra.mxu0 %v207
  %3609 = vmatpush.bf16.msra.mxu0 %v206
  %3610 = vmatpush.bf16.msra.mxu0 %v205
  %3611 = vmatpush.bf16.msra.mxu0 %v204
  %3612 = vmatpush.bf16.msra.mxu0 %v203
  %3613 = vmatmul.bf16.gmra.mxu0 %v3583
  %v3614 = vpop.f32.mrf.mxu0
  %v3615 = vadd.f32 %v3602, %v3614
  %v3616 = vpop.f32.mrf.mxu0
  %3617 = vdwg.mxu0
  %3618 = vmatpush.bf16.msra.mxu0 %v218
  %3619 = vmatpush.bf16.msra.mxu0 %v217
  %3620 = vmatpush.bf16.msra.mxu0 %v216
  %3621 = vmatpush.bf16.msra.mxu0 %v215
  %3622 = vmatpush.bf16.msra.mxu0 %v214
  %3623 = vmatpush.bf16.msra.mxu0 %v213
  %3624 = vmatpush.bf16.msra.mxu0 %v212
  %3625 = vmatpush.bf16.msra.mxu0 %v211
  %3626 = vmatmul.bf16.gmra.mxu0 %v3584
  %v3627 = vpop.f32.mrf.mxu0
  %v3628 = vadd.f32 %v3615, %v3627
  %v3629 = vpop.f32.mrf.mxu0
  %3630 = vdwg.mxu0
  %3631 = vmatpush.bf16.msra.mxu0 0
  %3632 = vmatpush.bf16.msra.mxu0 0
  %3633 = vmatpush.bf16.msra.mxu0 0
  %3634 = vmatpush.bf16.msra.mxu0 0
  %3635 = vmatpush.bf16.msra.mxu0 0
  %3636 = vmatpush.bf16.msra.mxu0 0
  %3637 = vmatpush.bf16.msra.mxu0 0
  %3638 = vmatpush.bf16.msra.mxu0 %v219
  %3639 = vmatmul.bf16.gmra.mxu0 %v3590
  %v3640 = vpop.f32.mrf.mxu0
  %v3641 = vadd.f32 %v3628, %v3640
  %v3642 = vpop.f32.mrf.mxu0
  %3643 = vdwg.mxu0
  %v3644 = vmax.f32 %v3641, 0.0
  %v3645 = vpack.c.bf16 %v3644, %v3644
  %s3646 = scalar_lea.vmem %s3, 1408
  %v3647 = vld [vmem:[%s3646] sm:$0xf]
  %v3648 = vld [vmem:[%s3646 + $0x4] sm:$0xf]
  %v3649 = vld [vmem:[%s3646 + $0x8] sm:$0xf]
  %v3650 = vld [vmem:[%s3646 + $0xc] sm:$0xf]
  %v3651 = vld [vmem:[%s3646 + $0x10] sm:$0xf]
  %v3652 = vld [vmem:[%s3646 + $0x14] sm:$0xf]
  %v3653 = vld [vmem:[%s3646 + $0x18] sm:$0xf]
  %v3654 = vld [vmem:[%s3646 + $0x1c] sm:$0xf]
  %v3655 = vld [vmem:[%s3646 + $0x20] sm:$0xf]
  %v3656 = vld [vmem:[%s3646 + $0x24] sm:$0xf]
  %v3657 = vld [vmem:[%s3646 + $0x28] sm:$0xf]
  %v3658 = vld [vmem:[%s3646 + $0x2c] sm:$0xf]
  %v3659 = vld [vmem:[%s3646 + $0x30] sm:$0xf]
  %v3660 = vld [vmem:[%s3646 + $0x34] sm:$0xf]
  %v3661 = vld [vmem:[%s3646 + $0x38] sm:$0xf]
  %v3662 = vld [vmem:[%s3646 + $0x3c] sm:$0xf]
  %v3679 = vunpack.c.l.b16 %v3647
  %v3680 = vunpack.c.l.b16 %v3648
  %v3681 = vunpack.c.l.b16 %v3649
  %v3682 = vunpack.c.l.b16 %v3650
  %v3683 = vunpack.c.l.b16 %v3651
  %v3684 = vunpack.c.l.b16 %v3652
  %v3685 = vunpack.c.l.b16 %v3653
  %v3686 = vunpack.c.l.b16 %v3654
  %v3687 = vunpack.c.l.b16 %v3655
  %v3688 = vunpack.c.l.b16 %v3656
  %v3689 = vunpack.c.l.b16 %v3657
  %v3690 = vunpack.c.l.b16 %v3658
  %v3691 = vunpack.c.l.b16 %v3659
  %v3692 = vunpack.c.l.b16 %v3660
  %v3693 = vunpack.c.l.b16 %v3661
  %v3694 = vunpack.c.l.b16 %v3662
  %v3695 = vpack.c.b16 %v3680, %v3679
  %v3696 = vpack.c.b16 %v3682, %v3681
  %v3697 = vpack.c.b16 %v3684, %v3683
  %v3698 = vpack.c.b16 %v3686, %v3685
  %v3699 = vpack.c.b16 %v3688, %v3687
  %v3700 = vpack.c.b16 %v3690, %v3689
  %v3701 = vpack.c.b16 %v3692, %v3691
  %v3702 = vpack.c.b16 %v3694, %v3693
  %3711 = vmatpush.bf16.msra.mxu0 %v3702
  %3712 = vmatpush.bf16.msra.mxu0 %v3701
  %3713 = vmatpush.bf16.msra.mxu0 %v3700
  %3714 = vmatpush.bf16.msra.mxu0 %v3699
  %3715 = vmatpush.bf16.msra.mxu0 %v3698
  %3716 = vmatpush.bf16.msra.mxu0 %v3697
  %3717 = vmatpush.bf16.msra.mxu0 %v3696
  %3718 = vmatpush.bf16.msra.mxu0 %v3695
  %3719 = vmatmul.bf16.gmra.mxu0 %v3645
  %v3720 = vpop.f32.mrf.mxu0
  %v3721 = vadd.f32 0.0, %v3720
  %v3722 = vpop.f32.mrf.mxu0
  %3723 = vdwg.mxu0
  %v3724 = vadd.f32 %v3572, %v3721
  %s3725 = scalar_lea.vmem %s0, 368
  %v3726 = vld [vmem:[%s3725] sm:$0xff]
  %v3727 = vld [vmem:[%s3725 + $0x8] sm:$0xff]
  %v3730 = vunpack.c.l.b16 %v3726
  %v3731 = vunpack.c.h.b16 %v3726
  %v3732 = vunpack.c.l.b16 %v3727
  %v3733 = vunpack.c.h.b16 %v3727
  %v3734 = vpack.c.b16 %v3730, %v3730
  %v3735 = vpack.c.b16 %v3731, %v3731
  %v3736 = vpack.c.b16 %v3732, %v3732
  %v3737 = vpack.c.b16 %v3733, %v3733
  %v3742 = vsel %vm245, %v3737, 0
  %3744 = vmatpush.bf16.msra.mxu0 %v202
  %3745 = vmatpush.bf16.msra.mxu0 %v201
  %3746 = vmatpush.bf16.msra.mxu0 %v200
  %3747 = vmatpush.bf16.msra.mxu0 %v199
  %3748 = vmatpush.bf16.msra.mxu0 %v198
  %3749 = vmatpush.bf16.msra.mxu0 %v197
  %3750 = vmatpush.bf16.msra.mxu0 %v196
  %3751 = vmatpush.bf16.msra.mxu0 %v195
  %3752 = vmatmul.bf16.gmra.mxu0 %v3734
  %v3753 = vpop.f32.mrf.mxu0
  %v3754 = vadd.f32 %v80, %v3753
  %v3755 = vpop.f32.mrf.mxu0
  %3756 = vdwg.mxu0
  %3757 = vmatpush.bf16.msra.mxu0 %v210
  %3758 = vmatpush.bf16.msra.mxu0 %v209
  %3759 = vmatpush.bf16.msra.mxu0 %v208
  %3760 = vmatpush.bf16.msra.mxu0 %v207
  %3761 = vmatpush.bf16.msra.mxu0 %v206
  %3762 = vmatpush.bf16.msra.mxu0 %v205
  %3763 = vmatpush.bf16.msra.mxu0 %v204
  %3764 = vmatpush.bf16.msra.mxu0 %v203
  %3765 = vmatmul.bf16.gmra.mxu0 %v3735
  %v3766 = vpop.f32.mrf.mxu0
  %v3767 = vadd.f32 %v3754, %v3766
  %v3768 = vpop.f32.mrf.mxu0
  %3769 = vdwg.mxu0
  %3770 = vmatpush.bf16.msra.mxu0 %v218
  %3771 = vmatpush.bf16.msra.mxu0 %v217
  %3772 = vmatpush.bf16.msra.mxu0 %v216
  %3773 = vmatpush.bf16.msra.mxu0 %v215
  %3774 = vmatpush.bf16.msra.mxu0 %v214
  %3775 = vmatpush.bf16.msra.mxu0 %v213
  %3776 = vmatpush.bf16.msra.mxu0 %v212
  %3777 = vmatpush.bf16.msra.mxu0 %v211
  %3778 = vmatmul.bf16.gmra.mxu0 %v3736
  %v3779 = vpop.f32.mrf.mxu0
  %v3780 = vadd.f32 %v3767, %v3779
  %v3781 = vpop.f32.mrf.mxu0
  %3782 = vdwg.mxu0
  %3783 = vmatpush.bf16.msra.mxu0 0
  %3784 = vmatpush.bf16.msra.mxu0 0
  %3785 = vmatpush.bf16.msra.mxu0 0
  %3786 = vmatpush.bf16.msra.mxu0 0
  %3787 = vmatpush.bf16.msra.mxu0 0
  %3788 = vmatpush.bf16.msra.mxu0 0
  %3789 = vmatpush.bf16.msra.mxu0 0
  %3790 = vmatpush.bf16.msra.mxu0 %v219
  %3791 = vmatmul.bf16.gmra.mxu0 %v3742
  %v3792 = vpop.f32.mrf.mxu0
  %v3793 = vadd.f32 %v3780, %v3792
  %v3794 = vpop.f32.mrf.mxu0
  %3795 = vdwg.mxu0
  %v3796 = vmax.f32 %v3793, 0.0
  %v3797 = vpack.c.bf16 %v3796, %v3796
  %s3798 = scalar_lea.vmem %s3, 1472
  %v3799 = vld [vmem:[%s3798] sm:$0xf]
  %v3800 = vld [vmem:[%s3798 + $0x4] sm:$0xf]
  %v3801 = vld [vmem:[%s3798 + $0x8] sm:$0xf]
  %v3802 = vld [vmem:[%s3798 + $0xc] sm:$0xf]
  %v3803 = vld [vmem:[%s3798 + $0x10] sm:$0xf]
  %v3804 = vld [vmem:[%s3798 + $0x14] sm:$0xf]
  %v3805 = vld [vmem:[%s3798 + $0x18] sm:$0xf]
  %v3806 = vld [vmem:[%s3798 + $0x1c] sm:$0xf]
  %v3807 = vld [vmem:[%s3798 + $0x20] sm:$0xf]
  %v3808 = vld [vmem:[%s3798 + $0x24] sm:$0xf]
  %v3809 = vld [vmem:[%s3798 + $0x28] sm:$0xf]
  %v3810 = vld [vmem:[%s3798 + $0x2c] sm:$0xf]
  %v3811 = vld [vmem:[%s3798 + $0x30] sm:$0xf]
  %v3812 = vld [vmem:[%s3798 + $0x34] sm:$0xf]
  %v3813 = vld [vmem:[%s3798 + $0x38] sm:$0xf]
  %v3814 = vld [vmem:[%s3798 + $0x3c] sm:$0xf]
  %v3831 = vunpack.c.l.b16 %v3799
  %v3832 = vunpack.c.l.b16 %v3800
  %v3833 = vunpack.c.l.b16 %v3801
  %v3834 = vunpack.c.l.b16 %v3802
  %v3835 = vunpack.c.l.b16 %v3803
  %v3836 = vunpack.c.l.b16 %v3804
  %v3837 = vunpack.c.l.b16 %v3805
  %v3838 = vunpack.c.l.b16 %v3806
  %v3839 = vunpack.c.l.b16 %v3807
  %v3840 = vunpack.c.l.b16 %v3808
  %v3841 = vunpack.c.l.b16 %v3809
  %v3842 = vunpack.c.l.b16 %v3810
  %v3843 = vunpack.c.l.b16 %v3811
  %v3844 = vunpack.c.l.b16 %v3812
  %v3845 = vunpack.c.l.b16 %v3813
  %v3846 = vunpack.c.l.b16 %v3814
  %v3847 = vpack.c.b16 %v3832, %v3831
  %v3848 = vpack.c.b16 %v3834, %v3833
  %v3849 = vpack.c.b16 %v3836, %v3835
  %v3850 = vpack.c.b16 %v3838, %v3837
  %v3851 = vpack.c.b16 %v3840, %v3839
  %v3852 = vpack.c.b16 %v3842, %v3841
  %v3853 = vpack.c.b16 %v3844, %v3843
  %v3854 = vpack.c.b16 %v3846, %v3845
  %3863 = vmatpush.bf16.msra.mxu0 %v3854
  %3864 = vmatpush.bf16.msra.mxu0 %v3853
  %3865 = vmatpush.bf16.msra.mxu0 %v3852
  %3866 = vmatpush.bf16.msra.mxu0 %v3851
  %3867 = vmatpush.bf16.msra.mxu0 %v3850
  %3868 = vmatpush.bf16.msra.mxu0 %v3849
  %3869 = vmatpush.bf16.msra.mxu0 %v3848
  %3870 = vmatpush.bf16.msra.mxu0 %v3847
  %3871 = vmatmul.bf16.gmra.mxu0 %v3797
  %v3872 = vpop.f32.mrf.mxu0
  %v3873 = vadd.f32 0.0, %v3872
  %v3874 = vpop.f32.mrf.mxu0
  %3875 = vdwg.mxu0
  %v3876 = vadd.f32 %v3724, %v3873
  %s3877 = scalar_lea.vmem %s0, 384
  %v3878 = vld [vmem:[%s3877] sm:$0xff]
  %v3879 = vld [vmem:[%s3877 + $0x8] sm:$0xff]
  %v3882 = vunpack.c.l.b16 %v3878
  %v3883 = vunpack.c.h.b16 %v3878
  %v3884 = vunpack.c.l.b16 %v3879
  %v3885 = vunpack.c.h.b16 %v3879
  %v3886 = vpack.c.b16 %v3882, %v3882
  %v3887 = vpack.c.b16 %v3883, %v3883
  %v3888 = vpack.c.b16 %v3884, %v3884
  %v3889 = vpack.c.b16 %v3885, %v3885
  %v3894 = vsel %vm245, %v3889, 0
  %3896 = vmatpush.bf16.msra.mxu0 %v202
  %3897 = vmatpush.bf16.msra.mxu0 %v201
  %3898 = vmatpush.bf16.msra.mxu0 %v200
  %3899 = vmatpush.bf16.msra.mxu0 %v199
  %3900 = vmatpush.bf16.msra.mxu0 %v198
  %3901 = vmatpush.bf16.msra.mxu0 %v197
  %3902 = vmatpush.bf16.msra.mxu0 %v196
  %3903 = vmatpush.bf16.msra.mxu0 %v195
  %3904 = vmatmul.bf16.gmra.mxu0 %v3886
  %v3905 = vpop.f32.mrf.mxu0
  %v3906 = vadd.f32 %v80, %v3905
  %v3907 = vpop.f32.mrf.mxu0
  %3908 = vdwg.mxu0
  %3909 = vmatpush.bf16.msra.mxu0 %v210
  %3910 = vmatpush.bf16.msra.mxu0 %v209
  %3911 = vmatpush.bf16.msra.mxu0 %v208
  %3912 = vmatpush.bf16.msra.mxu0 %v207
  %3913 = vmatpush.bf16.msra.mxu0 %v206
  %3914 = vmatpush.bf16.msra.mxu0 %v205
  %3915 = vmatpush.bf16.msra.mxu0 %v204
  %3916 = vmatpush.bf16.msra.mxu0 %v203
  %3917 = vmatmul.bf16.gmra.mxu0 %v3887
  %v3918 = vpop.f32.mrf.mxu0
  %v3919 = vadd.f32 %v3906, %v3918
  %v3920 = vpop.f32.mrf.mxu0
  %3921 = vdwg.mxu0
  %3922 = vmatpush.bf16.msra.mxu0 %v218
  %3923 = vmatpush.bf16.msra.mxu0 %v217
  %3924 = vmatpush.bf16.msra.mxu0 %v216
  %3925 = vmatpush.bf16.msra.mxu0 %v215
  %3926 = vmatpush.bf16.msra.mxu0 %v214
  %3927 = vmatpush.bf16.msra.mxu0 %v213
  %3928 = vmatpush.bf16.msra.mxu0 %v212
  %3929 = vmatpush.bf16.msra.mxu0 %v211
  %3930 = vmatmul.bf16.gmra.mxu0 %v3888
  %v3931 = vpop.f32.mrf.mxu0
  %v3932 = vadd.f32 %v3919, %v3931
  %v3933 = vpop.f32.mrf.mxu0
  %3934 = vdwg.mxu0
  %3935 = vmatpush.bf16.msra.mxu0 0
  %3936 = vmatpush.bf16.msra.mxu0 0
  %3937 = vmatpush.bf16.msra.mxu0 0
  %3938 = vmatpush.bf16.msra.mxu0 0
  %3939 = vmatpush.bf16.msra.mxu0 0
  %3940 = vmatpush.bf16.msra.mxu0 0
  %3941 = vmatpush.bf16.msra.mxu0 0
  %3942 = vmatpush.bf16.msra.mxu0 %v219
  %3943 = vmatmul.bf16.gmra.mxu0 %v3894
  %v3944 = vpop.f32.mrf.mxu0
  %v3945 = vadd.f32 %v3932, %v3944
  %v3946 = vpop.f32.mrf.mxu0
  %3947 = vdwg.mxu0
  %v3948 = vmax.f32 %v3945, 0.0
  %v3949 = vpack.c.bf16 %v3948, %v3948
  %s3950 = scalar_lea.vmem %s3, 1536
  %v3951 = vld [vmem:[%s3950] sm:$0xf]
  %v3952 = vld [vmem:[%s3950 + $0x4] sm:$0xf]
  %v3953 = vld [vmem:[%s3950 + $0x8] sm:$0xf]
  %v3954 = vld [vmem:[%s3950 + $0xc] sm:$0xf]
  %v3955 = vld [vmem:[%s3950 + $0x10] sm:$0xf]
  %v3956 = vld [vmem:[%s3950 + $0x14] sm:$0xf]
  %v3957 = vld [vmem:[%s3950 + $0x18] sm:$0xf]
  %v3958 = vld [vmem:[%s3950 + $0x1c] sm:$0xf]
  %v3959 = vld [vmem:[%s3950 + $0x20] sm:$0xf]
  %v3960 = vld [vmem:[%s3950 + $0x24] sm:$0xf]
  %v3961 = vld [vmem:[%s3950 + $0x28] sm:$0xf]
  %v3962 = vld [vmem:[%s3950 + $0x2c] sm:$0xf]
  %v3963 = vld [vmem:[%s3950 + $0x30] sm:$0xf]
  %v3964 = vld [vmem:[%s3950 + $0x34] sm:$0xf]
  %v3965 = vld [vmem:[%s3950 + $0x38] sm:$0xf]
  %v3966 = vld [vmem:[%s3950 + $0x3c] sm:$0xf]
  %v3983 = vunpack.c.l.b16 %v3951
  %v3984 = vunpack.c.l.b16 %v3952
  %v3985 = vunpack.c.l.b16 %v3953
  %v3986 = vunpack.c.l.b16 %v3954
  %v3987 = vunpack.c.l.b16 %v3955
  %v3988 = vunpack.c.l.b16 %v3956
  %v3989 = vunpack.c.l.b16 %v3957
  %v3990 = vunpack.c.l.b16 %v3958
  %v3991 = vunpack.c.l.b16 %v3959
  %v3992 = vunpack.c.l.b16 %v3960
  %v3993 = vunpack.c.l.b16 %v3961
  %v3994 = vunpack.c.l.b16 %v3962
  %v3995 = vunpack.c.l.b16 %v3963
  %v3996 = vunpack.c.l.b16 %v3964
  %v3997 = vunpack.c.l.b16 %v3965
  %v3998 = vunpack.c.l.b16 %v3966
  %v3999 = vpack.c.b16 %v3984, %v3983
  %v4000 = vpack.c.b16 %v3986, %v3985
  %v4001 = vpack.c.b16 %v3988, %v3987
  %v4002 = vpack.c.b16 %v3990, %v3989
  %v4003 = vpack.c.b16 %v3992, %v3991
  %v4004 = vpack.c.b16 %v3994, %v3993
  %v4005 = vpack.c.b16 %v3996, %v3995
  %v4006 = vpack.c.b16 %v3998, %v3997
  %4015 = vmatpush.bf16.msra.mxu0 %v4006
  %4016 = vmatpush.bf16.msra.mxu0 %v4005
  %4017 = vmatpush.bf16.msra.mxu0 %v4004
  %4018 = vmatpush.bf16.msra.mxu0 %v4003
  %4019 = vmatpush.bf16.msra.mxu0 %v4002
  %4020 = vmatpush.bf16.msra.mxu0 %v4001
  %4021 = vmatpush.bf16.msra.mxu0 %v4000
  %4022 = vmatpush.bf16.msra.mxu0 %v3999
  %4023 = vmatmul.bf16.gmra.mxu0 %v3949
  %v4024 = vpop.f32.mrf.mxu0
  %v4025 = vadd.f32 0.0, %v4024
  %v4026 = vpop.f32.mrf.mxu0
  %4027 = vdwg.mxu0
  %v4028 = vadd.f32 %v3876, %v4025
  %s4029 = scalar_lea.vmem %s0, 400
  %v4030 = vld [vmem:[%s4029] sm:$0xff]
  %v4031 = vld [vmem:[%s4029 + $0x8] sm:$0xff]
  %v4034 = vunpack.c.l.b16 %v4030
  %v4035 = vunpack.c.h.b16 %v4030
  %v4036 = vunpack.c.l.b16 %v4031
  %v4037 = vunpack.c.h.b16 %v4031
  %v4038 = vpack.c.b16 %v4034, %v4034
  %v4039 = vpack.c.b16 %v4035, %v4035
  %v4040 = vpack.c.b16 %v4036, %v4036
  %v4041 = vpack.c.b16 %v4037, %v4037
  %v4046 = vsel %vm245, %v4041, 0
  %4048 = vmatpush.bf16.msra.mxu0 %v202
  %4049 = vmatpush.bf16.msra.mxu0 %v201
  %4050 = vmatpush.bf16.msra.mxu0 %v200
  %4051 = vmatpush.bf16.msra.mxu0 %v199
  %4052 = vmatpush.bf16.msra.mxu0 %v198
  %4053 = vmatpush.bf16.msra.mxu0 %v197
  %4054 = vmatpush.bf16.msra.mxu0 %v196
  %4055 = vmatpush.bf16.msra.mxu0 %v195
  %4056 = vmatmul.bf16.gmra.mxu0 %v4038
  %v4057 = vpop.f32.mrf.mxu0
  %v4058 = vadd.f32 %v80, %v4057
  %v4059 = vpop.f32.mrf.mxu0
  %4060 = vdwg.mxu0
  %4061 = vmatpush.bf16.msra.mxu0 %v210
  %4062 = vmatpush.bf16.msra.mxu0 %v209
  %4063 = vmatpush.bf16.msra.mxu0 %v208
  %4064 = vmatpush.bf16.msra.mxu0 %v207
  %4065 = vmatpush.bf16.msra.mxu0 %v206
  %4066 = vmatpush.bf16.msra.mxu0 %v205
  %4067 = vmatpush.bf16.msra.mxu0 %v204
  %4068 = vmatpush.bf16.msra.mxu0 %v203
  %4069 = vmatmul.bf16.gmra.mxu0 %v4039
  %v4070 = vpop.f32.mrf.mxu0
  %v4071 = vadd.f32 %v4058, %v4070
  %v4072 = vpop.f32.mrf.mxu0
  %4073 = vdwg.mxu0
  %4074 = vmatpush.bf16.msra.mxu0 %v218
  %4075 = vmatpush.bf16.msra.mxu0 %v217
  %4076 = vmatpush.bf16.msra.mxu0 %v216
  %4077 = vmatpush.bf16.msra.mxu0 %v215
  %4078 = vmatpush.bf16.msra.mxu0 %v214
  %4079 = vmatpush.bf16.msra.mxu0 %v213
  %4080 = vmatpush.bf16.msra.mxu0 %v212
  %4081 = vmatpush.bf16.msra.mxu0 %v211
  %4082 = vmatmul.bf16.gmra.mxu0 %v4040
  %v4083 = vpop.f32.mrf.mxu0
  %v4084 = vadd.f32 %v4071, %v4083
  %v4085 = vpop.f32.mrf.mxu0
  %4086 = vdwg.mxu0
  %4087 = vmatpush.bf16.msra.mxu0 0
  %4088 = vmatpush.bf16.msra.mxu0 0
  %4089 = vmatpush.bf16.msra.mxu0 0
  %4090 = vmatpush.bf16.msra.mxu0 0
  %4091 = vmatpush.bf16.msra.mxu0 0
  %4092 = vmatpush.bf16.msra.mxu0 0
  %4093 = vmatpush.bf16.msra.mxu0 0
  %4094 = vmatpush.bf16.msra.mxu0 %v219
  %4095 = vmatmul.bf16.gmra.mxu0 %v4046
  %v4096 = vpop.f32.mrf.mxu0
  %v4097 = vadd.f32 %v4084, %v4096
  %v4098 = vpop.f32.mrf.mxu0
  %4099 = vdwg.mxu0
  %v4100 = vmax.f32 %v4097, 0.0
  %v4101 = vpack.c.bf16 %v4100, %v4100
  %s4102 = scalar_lea.vmem %s3, 1600
  %v4103 = vld [vmem:[%s4102] sm:$0xf]
  %v4104 = vld [vmem:[%s4102 + $0x4] sm:$0xf]
  %v4105 = vld [vmem:[%s4102 + $0x8] sm:$0xf]
  %v4106 = vld [vmem:[%s4102 + $0xc] sm:$0xf]
  %v4107 = vld [vmem:[%s4102 + $0x10] sm:$0xf]
  %v4108 = vld [vmem:[%s4102 + $0x14] sm:$0xf]
  %v4109 = vld [vmem:[%s4102 + $0x18] sm:$0xf]
  %v4110 = vld [vmem:[%s4102 + $0x1c] sm:$0xf]
  %v4111 = vld [vmem:[%s4102 + $0x20] sm:$0xf]
  %v4112 = vld [vmem:[%s4102 + $0x24] sm:$0xf]
  %v4113 = vld [vmem:[%s4102 + $0x28] sm:$0xf]
  %v4114 = vld [vmem:[%s4102 + $0x2c] sm:$0xf]
  %v4115 = vld [vmem:[%s4102 + $0x30] sm:$0xf]
  %v4116 = vld [vmem:[%s4102 + $0x34] sm:$0xf]
  %v4117 = vld [vmem:[%s4102 + $0x38] sm:$0xf]
  %v4118 = vld [vmem:[%s4102 + $0x3c] sm:$0xf]
  %v4135 = vunpack.c.l.b16 %v4103
  %v4136 = vunpack.c.l.b16 %v4104
  %v4137 = vunpack.c.l.b16 %v4105
  %v4138 = vunpack.c.l.b16 %v4106
  %v4139 = vunpack.c.l.b16 %v4107
  %v4140 = vunpack.c.l.b16 %v4108
  %v4141 = vunpack.c.l.b16 %v4109
  %v4142 = vunpack.c.l.b16 %v4110
  %v4143 = vunpack.c.l.b16 %v4111
  %v4144 = vunpack.c.l.b16 %v4112
  %v4145 = vunpack.c.l.b16 %v4113
  %v4146 = vunpack.c.l.b16 %v4114
  %v4147 = vunpack.c.l.b16 %v4115
  %v4148 = vunpack.c.l.b16 %v4116
  %v4149 = vunpack.c.l.b16 %v4117
  %v4150 = vunpack.c.l.b16 %v4118
  %v4151 = vpack.c.b16 %v4136, %v4135
  %v4152 = vpack.c.b16 %v4138, %v4137
  %v4153 = vpack.c.b16 %v4140, %v4139
  %v4154 = vpack.c.b16 %v4142, %v4141
  %v4155 = vpack.c.b16 %v4144, %v4143
  %v4156 = vpack.c.b16 %v4146, %v4145
  %v4157 = vpack.c.b16 %v4148, %v4147
  %v4158 = vpack.c.b16 %v4150, %v4149
  %4167 = vmatpush.bf16.msra.mxu0 %v4158
  %4168 = vmatpush.bf16.msra.mxu0 %v4157
  %4169 = vmatpush.bf16.msra.mxu0 %v4156
  %4170 = vmatpush.bf16.msra.mxu0 %v4155
  %4171 = vmatpush.bf16.msra.mxu0 %v4154
  %4172 = vmatpush.bf16.msra.mxu0 %v4153
  %4173 = vmatpush.bf16.msra.mxu0 %v4152
  %4174 = vmatpush.bf16.msra.mxu0 %v4151
  %4175 = vmatmul.bf16.gmra.mxu0 %v4101
  %v4176 = vpop.f32.mrf.mxu0
  %v4177 = vadd.f32 0.0, %v4176
  %v4178 = vpop.f32.mrf.mxu0
  %4179 = vdwg.mxu0
  %v4180 = vadd.f32 %v4028, %v4177
  %s4181 = scalar_lea.vmem %s0, 416
  %v4182 = vld [vmem:[%s4181] sm:$0xff]
  %v4183 = vld [vmem:[%s4181 + $0x8] sm:$0xff]
  %v4186 = vunpack.c.l.b16 %v4182
  %v4187 = vunpack.c.h.b16 %v4182
  %v4188 = vunpack.c.l.b16 %v4183
  %v4189 = vunpack.c.h.b16 %v4183
  %v4190 = vpack.c.b16 %v4186, %v4186
  %v4191 = vpack.c.b16 %v4187, %v4187
  %v4192 = vpack.c.b16 %v4188, %v4188
  %v4193 = vpack.c.b16 %v4189, %v4189
  %v4198 = vsel %vm245, %v4193, 0
  %4200 = vmatpush.bf16.msra.mxu0 %v202
  %4201 = vmatpush.bf16.msra.mxu0 %v201
  %4202 = vmatpush.bf16.msra.mxu0 %v200
  %4203 = vmatpush.bf16.msra.mxu0 %v199
  %4204 = vmatpush.bf16.msra.mxu0 %v198
  %4205 = vmatpush.bf16.msra.mxu0 %v197
  %4206 = vmatpush.bf16.msra.mxu0 %v196
  %4207 = vmatpush.bf16.msra.mxu0 %v195
  %4208 = vmatmul.bf16.gmra.mxu0 %v4190
  %v4209 = vpop.f32.mrf.mxu0
  %v4210 = vadd.f32 %v80, %v4209
  %v4211 = vpop.f32.mrf.mxu0
  %4212 = vdwg.mxu0
  %4213 = vmatpush.bf16.msra.mxu0 %v210
  %4214 = vmatpush.bf16.msra.mxu0 %v209
  %4215 = vmatpush.bf16.msra.mxu0 %v208
  %4216 = vmatpush.bf16.msra.mxu0 %v207
  %4217 = vmatpush.bf16.msra.mxu0 %v206
  %4218 = vmatpush.bf16.msra.mxu0 %v205
  %4219 = vmatpush.bf16.msra.mxu0 %v204
  %4220 = vmatpush.bf16.msra.mxu0 %v203
  %4221 = vmatmul.bf16.gmra.mxu0 %v4191
  %v4222 = vpop.f32.mrf.mxu0
  %v4223 = vadd.f32 %v4210, %v4222
  %v4224 = vpop.f32.mrf.mxu0
  %4225 = vdwg.mxu0
  %4226 = vmatpush.bf16.msra.mxu0 %v218
  %4227 = vmatpush.bf16.msra.mxu0 %v217
  %4228 = vmatpush.bf16.msra.mxu0 %v216
  %4229 = vmatpush.bf16.msra.mxu0 %v215
  %4230 = vmatpush.bf16.msra.mxu0 %v214
  %4231 = vmatpush.bf16.msra.mxu0 %v213
  %4232 = vmatpush.bf16.msra.mxu0 %v212
  %4233 = vmatpush.bf16.msra.mxu0 %v211
  %4234 = vmatmul.bf16.gmra.mxu0 %v4192
  %v4235 = vpop.f32.mrf.mxu0
  %v4236 = vadd.f32 %v4223, %v4235
  %v4237 = vpop.f32.mrf.mxu0
  %4238 = vdwg.mxu0
  %4239 = vmatpush.bf16.msra.mxu0 0
  %4240 = vmatpush.bf16.msra.mxu0 0
  %4241 = vmatpush.bf16.msra.mxu0 0
  %4242 = vmatpush.bf16.msra.mxu0 0
  %4243 = vmatpush.bf16.msra.mxu0 0
  %4244 = vmatpush.bf16.msra.mxu0 0
  %4245 = vmatpush.bf16.msra.mxu0 0
  %4246 = vmatpush.bf16.msra.mxu0 %v219
  %4247 = vmatmul.bf16.gmra.mxu0 %v4198
  %v4248 = vpop.f32.mrf.mxu0
  %v4249 = vadd.f32 %v4236, %v4248
  %v4250 = vpop.f32.mrf.mxu0
  %4251 = vdwg.mxu0
  %v4252 = vmax.f32 %v4249, 0.0
  %v4253 = vpack.c.bf16 %v4252, %v4252
  %s4254 = scalar_lea.vmem %s3, 1664
  %v4255 = vld [vmem:[%s4254] sm:$0xf]
  %v4256 = vld [vmem:[%s4254 + $0x4] sm:$0xf]
  %v4257 = vld [vmem:[%s4254 + $0x8] sm:$0xf]
  %v4258 = vld [vmem:[%s4254 + $0xc] sm:$0xf]
  %v4259 = vld [vmem:[%s4254 + $0x10] sm:$0xf]
  %v4260 = vld [vmem:[%s4254 + $0x14] sm:$0xf]
  %v4261 = vld [vmem:[%s4254 + $0x18] sm:$0xf]
  %v4262 = vld [vmem:[%s4254 + $0x1c] sm:$0xf]
  %v4263 = vld [vmem:[%s4254 + $0x20] sm:$0xf]
  %v4264 = vld [vmem:[%s4254 + $0x24] sm:$0xf]
  %v4265 = vld [vmem:[%s4254 + $0x28] sm:$0xf]
  %v4266 = vld [vmem:[%s4254 + $0x2c] sm:$0xf]
  %v4267 = vld [vmem:[%s4254 + $0x30] sm:$0xf]
  %v4268 = vld [vmem:[%s4254 + $0x34] sm:$0xf]
  %v4269 = vld [vmem:[%s4254 + $0x38] sm:$0xf]
  %v4270 = vld [vmem:[%s4254 + $0x3c] sm:$0xf]
  %v4287 = vunpack.c.l.b16 %v4255
  %v4288 = vunpack.c.l.b16 %v4256
  %v4289 = vunpack.c.l.b16 %v4257
  %v4290 = vunpack.c.l.b16 %v4258
  %v4291 = vunpack.c.l.b16 %v4259
  %v4292 = vunpack.c.l.b16 %v4260
  %v4293 = vunpack.c.l.b16 %v4261
  %v4294 = vunpack.c.l.b16 %v4262
  %v4295 = vunpack.c.l.b16 %v4263
  %v4296 = vunpack.c.l.b16 %v4264
  %v4297 = vunpack.c.l.b16 %v4265
  %v4298 = vunpack.c.l.b16 %v4266
  %v4299 = vunpack.c.l.b16 %v4267
  %v4300 = vunpack.c.l.b16 %v4268
  %v4301 = vunpack.c.l.b16 %v4269
  %v4302 = vunpack.c.l.b16 %v4270
  %v4303 = vpack.c.b16 %v4288, %v4287
  %v4304 = vpack.c.b16 %v4290, %v4289
  %v4305 = vpack.c.b16 %v4292, %v4291
  %v4306 = vpack.c.b16 %v4294, %v4293
  %v4307 = vpack.c.b16 %v4296, %v4295
  %v4308 = vpack.c.b16 %v4298, %v4297
  %v4309 = vpack.c.b16 %v4300, %v4299
  %v4310 = vpack.c.b16 %v4302, %v4301
  %4319 = vmatpush.bf16.msra.mxu0 %v4310
  %4320 = vmatpush.bf16.msra.mxu0 %v4309
  %4321 = vmatpush.bf16.msra.mxu0 %v4308
  %4322 = vmatpush.bf16.msra.mxu0 %v4307
  %4323 = vmatpush.bf16.msra.mxu0 %v4306
  %4324 = vmatpush.bf16.msra.mxu0 %v4305
  %4325 = vmatpush.bf16.msra.mxu0 %v4304
  %4326 = vmatpush.bf16.msra.mxu0 %v4303
  %4327 = vmatmul.bf16.gmra.mxu0 %v4253
  %v4328 = vpop.f32.mrf.mxu0
  %v4329 = vadd.f32 0.0, %v4328
  %v4330 = vpop.f32.mrf.mxu0
  %4331 = vdwg.mxu0
  %v4332 = vadd.f32 %v4180, %v4329
  %s4333 = scalar_lea.vmem %s0, 432
  %v4334 = vld [vmem:[%s4333] sm:$0xff]
  %v4335 = vld [vmem:[%s4333 + $0x8] sm:$0xff]
  %v4338 = vunpack.c.l.b16 %v4334
  %v4339 = vunpack.c.h.b16 %v4334
  %v4340 = vunpack.c.l.b16 %v4335
  %v4341 = vunpack.c.h.b16 %v4335
  %v4342 = vpack.c.b16 %v4338, %v4338
  %v4343 = vpack.c.b16 %v4339, %v4339
  %v4344 = vpack.c.b16 %v4340, %v4340
  %v4345 = vpack.c.b16 %v4341, %v4341
  %v4350 = vsel %vm245, %v4345, 0
  %4352 = vmatpush.bf16.msra.mxu0 %v202
  %4353 = vmatpush.bf16.msra.mxu0 %v201
  %4354 = vmatpush.bf16.msra.mxu0 %v200
  %4355 = vmatpush.bf16.msra.mxu0 %v199
  %4356 = vmatpush.bf16.msra.mxu0 %v198
  %4357 = vmatpush.bf16.msra.mxu0 %v197
  %4358 = vmatpush.bf16.msra.mxu0 %v196
  %4359 = vmatpush.bf16.msra.mxu0 %v195
  %4360 = vmatmul.bf16.gmra.mxu0 %v4342
  %v4361 = vpop.f32.mrf.mxu0
  %v4362 = vadd.f32 %v80, %v4361
  %v4363 = vpop.f32.mrf.mxu0
  %4364 = vdwg.mxu0
  %4365 = vmatpush.bf16.msra.mxu0 %v210
  %4366 = vmatpush.bf16.msra.mxu0 %v209
  %4367 = vmatpush.bf16.msra.mxu0 %v208
  %4368 = vmatpush.bf16.msra.mxu0 %v207
  %4369 = vmatpush.bf16.msra.mxu0 %v206
  %4370 = vmatpush.bf16.msra.mxu0 %v205
  %4371 = vmatpush.bf16.msra.mxu0 %v204
  %4372 = vmatpush.bf16.msra.mxu0 %v203
  %4373 = vmatmul.bf16.gmra.mxu0 %v4343
  %v4374 = vpop.f32.mrf.mxu0
  %v4375 = vadd.f32 %v4362, %v4374
  %v4376 = vpop.f32.mrf.mxu0
  %4377 = vdwg.mxu0
  %4378 = vmatpush.bf16.msra.mxu0 %v218
  %4379 = vmatpush.bf16.msra.mxu0 %v217
  %4380 = vmatpush.bf16.msra.mxu0 %v216
  %4381 = vmatpush.bf16.msra.mxu0 %v215
  %4382 = vmatpush.bf16.msra.mxu0 %v214
  %4383 = vmatpush.bf16.msra.mxu0 %v213
  %4384 = vmatpush.bf16.msra.mxu0 %v212
  %4385 = vmatpush.bf16.msra.mxu0 %v211
  %4386 = vmatmul.bf16.gmra.mxu0 %v4344
  %v4387 = vpop.f32.mrf.mxu0
  %v4388 = vadd.f32 %v4375, %v4387
  %v4389 = vpop.f32.mrf.mxu0
  %4390 = vdwg.mxu0
  %4391 = vmatpush.bf16.msra.mxu0 0
  %4392 = vmatpush.bf16.msra.mxu0 0
  %4393 = vmatpush.bf16.msra.mxu0 0
  %4394 = vmatpush.bf16.msra.mxu0 0
  %4395 = vmatpush.bf16.msra.mxu0 0
  %4396 = vmatpush.bf16.msra.mxu0 0
  %4397 = vmatpush.bf16.msra.mxu0 0
  %4398 = vmatpush.bf16.msra.mxu0 %v219
  %4399 = vmatmul.bf16.gmra.mxu0 %v4350
  %v4400 = vpop.f32.mrf.mxu0
  %v4401 = vadd.f32 %v4388, %v4400
  %v4402 = vpop.f32.mrf.mxu0
  %4403 = vdwg.mxu0
  %v4404 = vmax.f32 %v4401, 0.0
  %v4405 = vpack.c.bf16 %v4404, %v4404
  %s4406 = scalar_lea.vmem %s3, 1728
  %v4407 = vld [vmem:[%s4406] sm:$0xf]
  %v4408 = vld [vmem:[%s4406 + $0x4] sm:$0xf]
  %v4409 = vld [vmem:[%s4406 + $0x8] sm:$0xf]
  %v4410 = vld [vmem:[%s4406 + $0xc] sm:$0xf]
  %v4411 = vld [vmem:[%s4406 + $0x10] sm:$0xf]
  %v4412 = vld [vmem:[%s4406 + $0x14] sm:$0xf]
  %v4413 = vld [vmem:[%s4406 + $0x18] sm:$0xf]
  %v4414 = vld [vmem:[%s4406 + $0x1c] sm:$0xf]
  %v4415 = vld [vmem:[%s4406 + $0x20] sm:$0xf]
  %v4416 = vld [vmem:[%s4406 + $0x24] sm:$0xf]
  %v4417 = vld [vmem:[%s4406 + $0x28] sm:$0xf]
  %v4418 = vld [vmem:[%s4406 + $0x2c] sm:$0xf]
  %v4419 = vld [vmem:[%s4406 + $0x30] sm:$0xf]
  %v4420 = vld [vmem:[%s4406 + $0x34] sm:$0xf]
  %v4421 = vld [vmem:[%s4406 + $0x38] sm:$0xf]
  %v4422 = vld [vmem:[%s4406 + $0x3c] sm:$0xf]
  %v4439 = vunpack.c.l.b16 %v4407
  %v4440 = vunpack.c.l.b16 %v4408
  %v4441 = vunpack.c.l.b16 %v4409
  %v4442 = vunpack.c.l.b16 %v4410
  %v4443 = vunpack.c.l.b16 %v4411
  %v4444 = vunpack.c.l.b16 %v4412
  %v4445 = vunpack.c.l.b16 %v4413
  %v4446 = vunpack.c.l.b16 %v4414
  %v4447 = vunpack.c.l.b16 %v4415
  %v4448 = vunpack.c.l.b16 %v4416
  %v4449 = vunpack.c.l.b16 %v4417
  %v4450 = vunpack.c.l.b16 %v4418
  %v4451 = vunpack.c.l.b16 %v4419
  %v4452 = vunpack.c.l.b16 %v4420
  %v4453 = vunpack.c.l.b16 %v4421
  %v4454 = vunpack.c.l.b16 %v4422
  %v4455 = vpack.c.b16 %v4440, %v4439
  %v4456 = vpack.c.b16 %v4442, %v4441
  %v4457 = vpack.c.b16 %v4444, %v4443
  %v4458 = vpack.c.b16 %v4446, %v4445
  %v4459 = vpack.c.b16 %v4448, %v4447
  %v4460 = vpack.c.b16 %v4450, %v4449
  %v4461 = vpack.c.b16 %v4452, %v4451
  %v4462 = vpack.c.b16 %v4454, %v4453
  %4471 = vmatpush.bf16.msra.mxu0 %v4462
  %4472 = vmatpush.bf16.msra.mxu0 %v4461
  %4473 = vmatpush.bf16.msra.mxu0 %v4460
  %4474 = vmatpush.bf16.msra.mxu0 %v4459
  %4475 = vmatpush.bf16.msra.mxu0 %v4458
  %4476 = vmatpush.bf16.msra.mxu0 %v4457
  %4477 = vmatpush.bf16.msra.mxu0 %v4456
  %4478 = vmatpush.bf16.msra.mxu0 %v4455
  %4479 = vmatmul.bf16.gmra.mxu0 %v4405
  %v4480 = vpop.f32.mrf.mxu0
  %v4481 = vadd.f32 0.0, %v4480
  %v4482 = vpop.f32.mrf.mxu0
  %4483 = vdwg.mxu0
  %v4484 = vadd.f32 %v4332, %v4481
  %s4485 = scalar_lea.vmem %s0, 448
  %v4486 = vld [vmem:[%s4485] sm:$0xff]
  %v4487 = vld [vmem:[%s4485 + $0x8] sm:$0xff]
  %v4490 = vunpack.c.l.b16 %v4486
  %v4491 = vunpack.c.h.b16 %v4486
  %v4492 = vunpack.c.l.b16 %v4487
  %v4493 = vunpack.c.h.b16 %v4487
  %v4494 = vpack.c.b16 %v4490, %v4490
  %v4495 = vpack.c.b16 %v4491, %v4491
  %v4496 = vpack.c.b16 %v4492, %v4492
  %v4497 = vpack.c.b16 %v4493, %v4493
  %v4502 = vsel %vm245, %v4497, 0
  %4504 = vmatpush.bf16.msra.mxu0 %v202
  %4505 = vmatpush.bf16.msra.mxu0 %v201
  %4506 = vmatpush.bf16.msra.mxu0 %v200
  %4507 = vmatpush.bf16.msra.mxu0 %v199
  %4508 = vmatpush.bf16.msra.mxu0 %v198
  %4509 = vmatpush.bf16.msra.mxu0 %v197
  %4510 = vmatpush.bf16.msra.mxu0 %v196
  %4511 = vmatpush.bf16.msra.mxu0 %v195
  %4512 = vmatmul.bf16.gmra.mxu0 %v4494
  %v4513 = vpop.f32.mrf.mxu0
  %v4514 = vadd.f32 %v80, %v4513
  %v4515 = vpop.f32.mrf.mxu0
  %4516 = vdwg.mxu0
  %4517 = vmatpush.bf16.msra.mxu0 %v210
  %4518 = vmatpush.bf16.msra.mxu0 %v209
  %4519 = vmatpush.bf16.msra.mxu0 %v208
  %4520 = vmatpush.bf16.msra.mxu0 %v207
  %4521 = vmatpush.bf16.msra.mxu0 %v206
  %4522 = vmatpush.bf16.msra.mxu0 %v205
  %4523 = vmatpush.bf16.msra.mxu0 %v204
  %4524 = vmatpush.bf16.msra.mxu0 %v203
  %4525 = vmatmul.bf16.gmra.mxu0 %v4495
  %v4526 = vpop.f32.mrf.mxu0
  %v4527 = vadd.f32 %v4514, %v4526
  %v4528 = vpop.f32.mrf.mxu0
  %4529 = vdwg.mxu0
  %4530 = vmatpush.bf16.msra.mxu0 %v218
  %4531 = vmatpush.bf16.msra.mxu0 %v217
  %4532 = vmatpush.bf16.msra.mxu0 %v216
  %4533 = vmatpush.bf16.msra.mxu0 %v215
  %4534 = vmatpush.bf16.msra.mxu0 %v214
  %4535 = vmatpush.bf16.msra.mxu0 %v213
  %4536 = vmatpush.bf16.msra.mxu0 %v212
  %4537 = vmatpush.bf16.msra.mxu0 %v211
  %4538 = vmatmul.bf16.gmra.mxu0 %v4496
  %v4539 = vpop.f32.mrf.mxu0
  %v4540 = vadd.f32 %v4527, %v4539
  %v4541 = vpop.f32.mrf.mxu0
  %4542 = vdwg.mxu0
  %4543 = vmatpush.bf16.msra.mxu0 0
  %4544 = vmatpush.bf16.msra.mxu0 0
  %4545 = vmatpush.bf16.msra.mxu0 0
  %4546 = vmatpush.bf16.msra.mxu0 0
  %4547 = vmatpush.bf16.msra.mxu0 0
  %4548 = vmatpush.bf16.msra.mxu0 0
  %4549 = vmatpush.bf16.msra.mxu0 0
  %4550 = vmatpush.bf16.msra.mxu0 %v219
  %4551 = vmatmul.bf16.gmra.mxu0 %v4502
  %v4552 = vpop.f32.mrf.mxu0
  %v4553 = vadd.f32 %v4540, %v4552
  %v4554 = vpop.f32.mrf.mxu0
  %4555 = vdwg.mxu0
  %v4556 = vmax.f32 %v4553, 0.0
  %v4557 = vpack.c.bf16 %v4556, %v4556
  %s4558 = scalar_lea.vmem %s3, 1792
  %v4559 = vld [vmem:[%s4558] sm:$0xf]
  %v4560 = vld [vmem:[%s4558 + $0x4] sm:$0xf]
  %v4561 = vld [vmem:[%s4558 + $0x8] sm:$0xf]
  %v4562 = vld [vmem:[%s4558 + $0xc] sm:$0xf]
  %v4563 = vld [vmem:[%s4558 + $0x10] sm:$0xf]
  %v4564 = vld [vmem:[%s4558 + $0x14] sm:$0xf]
  %v4565 = vld [vmem:[%s4558 + $0x18] sm:$0xf]
  %v4566 = vld [vmem:[%s4558 + $0x1c] sm:$0xf]
  %v4567 = vld [vmem:[%s4558 + $0x20] sm:$0xf]
  %v4568 = vld [vmem:[%s4558 + $0x24] sm:$0xf]
  %v4569 = vld [vmem:[%s4558 + $0x28] sm:$0xf]
  %v4570 = vld [vmem:[%s4558 + $0x2c] sm:$0xf]
  %v4571 = vld [vmem:[%s4558 + $0x30] sm:$0xf]
  %v4572 = vld [vmem:[%s4558 + $0x34] sm:$0xf]
  %v4573 = vld [vmem:[%s4558 + $0x38] sm:$0xf]
  %v4574 = vld [vmem:[%s4558 + $0x3c] sm:$0xf]
  %v4591 = vunpack.c.l.b16 %v4559
  %v4592 = vunpack.c.l.b16 %v4560
  %v4593 = vunpack.c.l.b16 %v4561
  %v4594 = vunpack.c.l.b16 %v4562
  %v4595 = vunpack.c.l.b16 %v4563
  %v4596 = vunpack.c.l.b16 %v4564
  %v4597 = vunpack.c.l.b16 %v4565
  %v4598 = vunpack.c.l.b16 %v4566
  %v4599 = vunpack.c.l.b16 %v4567
  %v4600 = vunpack.c.l.b16 %v4568
  %v4601 = vunpack.c.l.b16 %v4569
  %v4602 = vunpack.c.l.b16 %v4570
  %v4603 = vunpack.c.l.b16 %v4571
  %v4604 = vunpack.c.l.b16 %v4572
  %v4605 = vunpack.c.l.b16 %v4573
  %v4606 = vunpack.c.l.b16 %v4574
  %v4607 = vpack.c.b16 %v4592, %v4591
  %v4608 = vpack.c.b16 %v4594, %v4593
  %v4609 = vpack.c.b16 %v4596, %v4595
  %v4610 = vpack.c.b16 %v4598, %v4597
  %v4611 = vpack.c.b16 %v4600, %v4599
  %v4612 = vpack.c.b16 %v4602, %v4601
  %v4613 = vpack.c.b16 %v4604, %v4603
  %v4614 = vpack.c.b16 %v4606, %v4605
  %4623 = vmatpush.bf16.msra.mxu0 %v4614
  %4624 = vmatpush.bf16.msra.mxu0 %v4613
  %4625 = vmatpush.bf16.msra.mxu0 %v4612
  %4626 = vmatpush.bf16.msra.mxu0 %v4611
  %4627 = vmatpush.bf16.msra.mxu0 %v4610
  %4628 = vmatpush.bf16.msra.mxu0 %v4609
  %4629 = vmatpush.bf16.msra.mxu0 %v4608
  %4630 = vmatpush.bf16.msra.mxu0 %v4607
  %4631 = vmatmul.bf16.gmra.mxu0 %v4557
  %v4632 = vpop.f32.mrf.mxu0
  %v4633 = vadd.f32 0.0, %v4632
  %v4634 = vpop.f32.mrf.mxu0
  %4635 = vdwg.mxu0
  %v4636 = vadd.f32 %v4484, %v4633
  %s4637 = scalar_lea.vmem %s0, 464
  %v4638 = vld [vmem:[%s4637] sm:$0xff]
  %v4639 = vld [vmem:[%s4637 + $0x8] sm:$0xff]
  %v4642 = vunpack.c.l.b16 %v4638
  %v4643 = vunpack.c.h.b16 %v4638
  %v4644 = vunpack.c.l.b16 %v4639
  %v4645 = vunpack.c.h.b16 %v4639
  %v4646 = vpack.c.b16 %v4642, %v4642
  %v4647 = vpack.c.b16 %v4643, %v4643
  %v4648 = vpack.c.b16 %v4644, %v4644
  %v4649 = vpack.c.b16 %v4645, %v4645
  %v4654 = vsel %vm245, %v4649, 0
  %4656 = vmatpush.bf16.msra.mxu0 %v202
  %4657 = vmatpush.bf16.msra.mxu0 %v201
  %4658 = vmatpush.bf16.msra.mxu0 %v200
  %4659 = vmatpush.bf16.msra.mxu0 %v199
  %4660 = vmatpush.bf16.msra.mxu0 %v198
  %4661 = vmatpush.bf16.msra.mxu0 %v197
  %4662 = vmatpush.bf16.msra.mxu0 %v196
  %4663 = vmatpush.bf16.msra.mxu0 %v195
  %4664 = vmatmul.bf16.gmra.mxu0 %v4646
  %v4665 = vpop.f32.mrf.mxu0
  %v4666 = vadd.f32 %v80, %v4665
  %v4667 = vpop.f32.mrf.mxu0
  %4668 = vdwg.mxu0
  %4669 = vmatpush.bf16.msra.mxu0 %v210
  %4670 = vmatpush.bf16.msra.mxu0 %v209
  %4671 = vmatpush.bf16.msra.mxu0 %v208
  %4672 = vmatpush.bf16.msra.mxu0 %v207
  %4673 = vmatpush.bf16.msra.mxu0 %v206
  %4674 = vmatpush.bf16.msra.mxu0 %v205
  %4675 = vmatpush.bf16.msra.mxu0 %v204
  %4676 = vmatpush.bf16.msra.mxu0 %v203
  %4677 = vmatmul.bf16.gmra.mxu0 %v4647
  %v4678 = vpop.f32.mrf.mxu0
  %v4679 = vadd.f32 %v4666, %v4678
  %v4680 = vpop.f32.mrf.mxu0
  %4681 = vdwg.mxu0
  %4682 = vmatpush.bf16.msra.mxu0 %v218
  %4683 = vmatpush.bf16.msra.mxu0 %v217
  %4684 = vmatpush.bf16.msra.mxu0 %v216
  %4685 = vmatpush.bf16.msra.mxu0 %v215
  %4686 = vmatpush.bf16.msra.mxu0 %v214
  %4687 = vmatpush.bf16.msra.mxu0 %v213
  %4688 = vmatpush.bf16.msra.mxu0 %v212
  %4689 = vmatpush.bf16.msra.mxu0 %v211
  %4690 = vmatmul.bf16.gmra.mxu0 %v4648
  %v4691 = vpop.f32.mrf.mxu0
  %v4692 = vadd.f32 %v4679, %v4691
  %v4693 = vpop.f32.mrf.mxu0
  %4694 = vdwg.mxu0
  %4695 = vmatpush.bf16.msra.mxu0 0
  %4696 = vmatpush.bf16.msra.mxu0 0
  %4697 = vmatpush.bf16.msra.mxu0 0
  %4698 = vmatpush.bf16.msra.mxu0 0
  %4699 = vmatpush.bf16.msra.mxu0 0
  %4700 = vmatpush.bf16.msra.mxu0 0
  %4701 = vmatpush.bf16.msra.mxu0 0
  %4702 = vmatpush.bf16.msra.mxu0 %v219
  %4703 = vmatmul.bf16.gmra.mxu0 %v4654
  %v4704 = vpop.f32.mrf.mxu0
  %v4705 = vadd.f32 %v4692, %v4704
  %v4706 = vpop.f32.mrf.mxu0
  %4707 = vdwg.mxu0
  %v4708 = vmax.f32 %v4705, 0.0
  %v4709 = vpack.c.bf16 %v4708, %v4708
  %s4710 = scalar_lea.vmem %s3, 1856
  %v4711 = vld [vmem:[%s4710] sm:$0xf]
  %v4712 = vld [vmem:[%s4710 + $0x4] sm:$0xf]
  %v4713 = vld [vmem:[%s4710 + $0x8] sm:$0xf]
  %v4714 = vld [vmem:[%s4710 + $0xc] sm:$0xf]
  %v4715 = vld [vmem:[%s4710 + $0x10] sm:$0xf]
  %v4716 = vld [vmem:[%s4710 + $0x14] sm:$0xf]
  %v4717 = vld [vmem:[%s4710 + $0x18] sm:$0xf]
  %v4718 = vld [vmem:[%s4710 + $0x1c] sm:$0xf]
  %v4719 = vld [vmem:[%s4710 + $0x20] sm:$0xf]
  %v4720 = vld [vmem:[%s4710 + $0x24] sm:$0xf]
  %v4721 = vld [vmem:[%s4710 + $0x28] sm:$0xf]
  %v4722 = vld [vmem:[%s4710 + $0x2c] sm:$0xf]
  %v4723 = vld [vmem:[%s4710 + $0x30] sm:$0xf]
  %v4724 = vld [vmem:[%s4710 + $0x34] sm:$0xf]
  %v4725 = vld [vmem:[%s4710 + $0x38] sm:$0xf]
  %v4726 = vld [vmem:[%s4710 + $0x3c] sm:$0xf]
  %v4743 = vunpack.c.l.b16 %v4711
  %v4744 = vunpack.c.l.b16 %v4712
  %v4745 = vunpack.c.l.b16 %v4713
  %v4746 = vunpack.c.l.b16 %v4714
  %v4747 = vunpack.c.l.b16 %v4715
  %v4748 = vunpack.c.l.b16 %v4716
  %v4749 = vunpack.c.l.b16 %v4717
  %v4750 = vunpack.c.l.b16 %v4718
  %v4751 = vunpack.c.l.b16 %v4719
  %v4752 = vunpack.c.l.b16 %v4720
  %v4753 = vunpack.c.l.b16 %v4721
  %v4754 = vunpack.c.l.b16 %v4722
  %v4755 = vunpack.c.l.b16 %v4723
  %v4756 = vunpack.c.l.b16 %v4724
  %v4757 = vunpack.c.l.b16 %v4725
  %v4758 = vunpack.c.l.b16 %v4726
  %v4759 = vpack.c.b16 %v4744, %v4743
  %v4760 = vpack.c.b16 %v4746, %v4745
  %v4761 = vpack.c.b16 %v4748, %v4747
  %v4762 = vpack.c.b16 %v4750, %v4749
  %v4763 = vpack.c.b16 %v4752, %v4751
  %v4764 = vpack.c.b16 %v4754, %v4753
  %v4765 = vpack.c.b16 %v4756, %v4755
  %v4766 = vpack.c.b16 %v4758, %v4757
  %4775 = vmatpush.bf16.msra.mxu0 %v4766
  %4776 = vmatpush.bf16.msra.mxu0 %v4765
  %4777 = vmatpush.bf16.msra.mxu0 %v4764
  %4778 = vmatpush.bf16.msra.mxu0 %v4763
  %4779 = vmatpush.bf16.msra.mxu0 %v4762
  %4780 = vmatpush.bf16.msra.mxu0 %v4761
  %4781 = vmatpush.bf16.msra.mxu0 %v4760
  %4782 = vmatpush.bf16.msra.mxu0 %v4759
  %4783 = vmatmul.bf16.gmra.mxu0 %v4709
  %v4784 = vpop.f32.mrf.mxu0
  %v4785 = vadd.f32 0.0, %v4784
  %v4786 = vpop.f32.mrf.mxu0
  %4787 = vdwg.mxu0
  %v4788 = vadd.f32 %v4636, %v4785
  %s4789 = scalar_lea.vmem %s0, 480
  %v4790 = vld [vmem:[%s4789] sm:$0xff]
  %v4791 = vld [vmem:[%s4789 + $0x8] sm:$0xff]
  %v4794 = vunpack.c.l.b16 %v4790
  %v4795 = vunpack.c.h.b16 %v4790
  %v4796 = vunpack.c.l.b16 %v4791
  %v4797 = vunpack.c.h.b16 %v4791
  %v4798 = vpack.c.b16 %v4794, %v4794
  %v4799 = vpack.c.b16 %v4795, %v4795
  %v4800 = vpack.c.b16 %v4796, %v4796
  %v4801 = vpack.c.b16 %v4797, %v4797
  %v4806 = vsel %vm245, %v4801, 0
  %4808 = vmatpush.bf16.msra.mxu0 %v202
  %4809 = vmatpush.bf16.msra.mxu0 %v201
  %4810 = vmatpush.bf16.msra.mxu0 %v200
  %4811 = vmatpush.bf16.msra.mxu0 %v199
  %4812 = vmatpush.bf16.msra.mxu0 %v198
  %4813 = vmatpush.bf16.msra.mxu0 %v197
  %4814 = vmatpush.bf16.msra.mxu0 %v196
  %4815 = vmatpush.bf16.msra.mxu0 %v195
  %4816 = vmatmul.bf16.gmra.mxu0 %v4798
  %v4817 = vpop.f32.mrf.mxu0
  %v4818 = vadd.f32 %v80, %v4817
  %v4819 = vpop.f32.mrf.mxu0
  %4820 = vdwg.mxu0
  %4821 = vmatpush.bf16.msra.mxu0 %v210
  %4822 = vmatpush.bf16.msra.mxu0 %v209
  %4823 = vmatpush.bf16.msra.mxu0 %v208
  %4824 = vmatpush.bf16.msra.mxu0 %v207
  %4825 = vmatpush.bf16.msra.mxu0 %v206
  %4826 = vmatpush.bf16.msra.mxu0 %v205
  %4827 = vmatpush.bf16.msra.mxu0 %v204
  %4828 = vmatpush.bf16.msra.mxu0 %v203
  %4829 = vmatmul.bf16.gmra.mxu0 %v4799
  %v4830 = vpop.f32.mrf.mxu0
  %v4831 = vadd.f32 %v4818, %v4830
  %v4832 = vpop.f32.mrf.mxu0
  %4833 = vdwg.mxu0
  %4834 = vmatpush.bf16.msra.mxu0 %v218
  %4835 = vmatpush.bf16.msra.mxu0 %v217
  %4836 = vmatpush.bf16.msra.mxu0 %v216
  %4837 = vmatpush.bf16.msra.mxu0 %v215
  %4838 = vmatpush.bf16.msra.mxu0 %v214
  %4839 = vmatpush.bf16.msra.mxu0 %v213
  %4840 = vmatpush.bf16.msra.mxu0 %v212
  %4841 = vmatpush.bf16.msra.mxu0 %v211
  %4842 = vmatmul.bf16.gmra.mxu0 %v4800
  %v4843 = vpop.f32.mrf.mxu0
  %v4844 = vadd.f32 %v4831, %v4843
  %v4845 = vpop.f32.mrf.mxu0
  %4846 = vdwg.mxu0
  %4847 = vmatpush.bf16.msra.mxu0 0
  %4848 = vmatpush.bf16.msra.mxu0 0
  %4849 = vmatpush.bf16.msra.mxu0 0
  %4850 = vmatpush.bf16.msra.mxu0 0
  %4851 = vmatpush.bf16.msra.mxu0 0
  %4852 = vmatpush.bf16.msra.mxu0 0
  %4853 = vmatpush.bf16.msra.mxu0 0
  %4854 = vmatpush.bf16.msra.mxu0 %v219
  %4855 = vmatmul.bf16.gmra.mxu0 %v4806
  %v4856 = vpop.f32.mrf.mxu0
  %v4857 = vadd.f32 %v4844, %v4856
  %v4858 = vpop.f32.mrf.mxu0
  %4859 = vdwg.mxu0
  %v4860 = vmax.f32 %v4857, 0.0
  %v4861 = vpack.c.bf16 %v4860, %v4860
  %s4862 = scalar_lea.vmem %s3, 1920
  %v4863 = vld [vmem:[%s4862] sm:$0xf]
  %v4864 = vld [vmem:[%s4862 + $0x4] sm:$0xf]
  %v4865 = vld [vmem:[%s4862 + $0x8] sm:$0xf]
  %v4866 = vld [vmem:[%s4862 + $0xc] sm:$0xf]
  %v4867 = vld [vmem:[%s4862 + $0x10] sm:$0xf]
  %v4868 = vld [vmem:[%s4862 + $0x14] sm:$0xf]
  %v4869 = vld [vmem:[%s4862 + $0x18] sm:$0xf]
  %v4870 = vld [vmem:[%s4862 + $0x1c] sm:$0xf]
  %v4871 = vld [vmem:[%s4862 + $0x20] sm:$0xf]
  %v4872 = vld [vmem:[%s4862 + $0x24] sm:$0xf]
  %v4873 = vld [vmem:[%s4862 + $0x28] sm:$0xf]
  %v4874 = vld [vmem:[%s4862 + $0x2c] sm:$0xf]
  %v4875 = vld [vmem:[%s4862 + $0x30] sm:$0xf]
  %v4876 = vld [vmem:[%s4862 + $0x34] sm:$0xf]
  %v4877 = vld [vmem:[%s4862 + $0x38] sm:$0xf]
  %v4878 = vld [vmem:[%s4862 + $0x3c] sm:$0xf]
  %v4895 = vunpack.c.l.b16 %v4863
  %v4896 = vunpack.c.l.b16 %v4864
  %v4897 = vunpack.c.l.b16 %v4865
  %v4898 = vunpack.c.l.b16 %v4866
  %v4899 = vunpack.c.l.b16 %v4867
  %v4900 = vunpack.c.l.b16 %v4868
  %v4901 = vunpack.c.l.b16 %v4869
  %v4902 = vunpack.c.l.b16 %v4870
  %v4903 = vunpack.c.l.b16 %v4871
  %v4904 = vunpack.c.l.b16 %v4872
  %v4905 = vunpack.c.l.b16 %v4873
  %v4906 = vunpack.c.l.b16 %v4874
  %v4907 = vunpack.c.l.b16 %v4875
  %v4908 = vunpack.c.l.b16 %v4876
  %v4909 = vunpack.c.l.b16 %v4877
  %v4910 = vunpack.c.l.b16 %v4878
  %v4911 = vpack.c.b16 %v4896, %v4895
  %v4912 = vpack.c.b16 %v4898, %v4897
  %v4913 = vpack.c.b16 %v4900, %v4899
  %v4914 = vpack.c.b16 %v4902, %v4901
  %v4915 = vpack.c.b16 %v4904, %v4903
  %v4916 = vpack.c.b16 %v4906, %v4905
  %v4917 = vpack.c.b16 %v4908, %v4907
  %v4918 = vpack.c.b16 %v4910, %v4909
  %4927 = vmatpush.bf16.msra.mxu0 %v4918
  %4928 = vmatpush.bf16.msra.mxu0 %v4917
  %4929 = vmatpush.bf16.msra.mxu0 %v4916
  %4930 = vmatpush.bf16.msra.mxu0 %v4915
  %4931 = vmatpush.bf16.msra.mxu0 %v4914
  %4932 = vmatpush.bf16.msra.mxu0 %v4913
  %4933 = vmatpush.bf16.msra.mxu0 %v4912
  %4934 = vmatpush.bf16.msra.mxu0 %v4911
  %4935 = vmatmul.bf16.gmra.mxu0 %v4861
  %v4936 = vpop.f32.mrf.mxu0
  %v4937 = vadd.f32 0.0, %v4936
  %v4938 = vpop.f32.mrf.mxu0
  %4939 = vdwg.mxu0
  %v4940 = vadd.f32 %v4788, %v4937
  %s4941 = scalar_lea.vmem %s0, 496
  %v4942 = vld [vmem:[%s4941] sm:$0xff]
  %v4943 = vld [vmem:[%s4941 + $0x8] sm:$0xff]
  %v4946 = vunpack.c.l.b16 %v4942
  %v4947 = vunpack.c.h.b16 %v4942
  %v4948 = vunpack.c.l.b16 %v4943
  %v4949 = vunpack.c.h.b16 %v4943
  %v4950 = vpack.c.b16 %v4946, %v4946
  %v4951 = vpack.c.b16 %v4947, %v4947
  %v4952 = vpack.c.b16 %v4948, %v4948
  %v4953 = vpack.c.b16 %v4949, %v4949
  %v4958 = vsel %vm245, %v4953, 0
  %4960 = vmatpush.bf16.msra.mxu0 %v202
  %4961 = vmatpush.bf16.msra.mxu0 %v201
  %4962 = vmatpush.bf16.msra.mxu0 %v200
  %4963 = vmatpush.bf16.msra.mxu0 %v199
  %4964 = vmatpush.bf16.msra.mxu0 %v198
  %4965 = vmatpush.bf16.msra.mxu0 %v197
  %4966 = vmatpush.bf16.msra.mxu0 %v196
  %4967 = vmatpush.bf16.msra.mxu0 %v195
  %4968 = vmatmul.bf16.gmra.mxu0 %v4950
  %v4969 = vpop.f32.mrf.mxu0
  %v4970 = vadd.f32 %v80, %v4969
  %v4971 = vpop.f32.mrf.mxu0
  %4972 = vdwg.mxu0
  %4973 = vmatpush.bf16.msra.mxu0 %v210
  %4974 = vmatpush.bf16.msra.mxu0 %v209
  %4975 = vmatpush.bf16.msra.mxu0 %v208
  %4976 = vmatpush.bf16.msra.mxu0 %v207
  %4977 = vmatpush.bf16.msra.mxu0 %v206
  %4978 = vmatpush.bf16.msra.mxu0 %v205
  %4979 = vmatpush.bf16.msra.mxu0 %v204
  %4980 = vmatpush.bf16.msra.mxu0 %v203
  %4981 = vmatmul.bf16.gmra.mxu0 %v4951
  %v4982 = vpop.f32.mrf.mxu0
  %v4983 = vadd.f32 %v4970, %v4982
  %v4984 = vpop.f32.mrf.mxu0
  %4985 = vdwg.mxu0
  %4986 = vmatpush.bf16.msra.mxu0 %v218
  %4987 = vmatpush.bf16.msra.mxu0 %v217
  %4988 = vmatpush.bf16.msra.mxu0 %v216
  %4989 = vmatpush.bf16.msra.mxu0 %v215
  %4990 = vmatpush.bf16.msra.mxu0 %v214
  %4991 = vmatpush.bf16.msra.mxu0 %v213
  %4992 = vmatpush.bf16.msra.mxu0 %v212
  %4993 = vmatpush.bf16.msra.mxu0 %v211
  %4994 = vmatmul.bf16.gmra.mxu0 %v4952
  %v4995 = vpop.f32.mrf.mxu0
  %v4996 = vadd.f32 %v4983, %v4995
  %v4997 = vpop.f32.mrf.mxu0
  %4998 = vdwg.mxu0
  %4999 = vmatpush.bf16.msra.mxu0 0
  %5000 = vmatpush.bf16.msra.mxu0 0
  %5001 = vmatpush.bf16.msra.mxu0 0
  %5002 = vmatpush.bf16.msra.mxu0 0
  %5003 = vmatpush.bf16.msra.mxu0 0
  %5004 = vmatpush.bf16.msra.mxu0 0
  %5005 = vmatpush.bf16.msra.mxu0 0
  %5006 = vmatpush.bf16.msra.mxu0 %v219
  %5007 = vmatmul.bf16.gmra.mxu0 %v4958
  %v5008 = vpop.f32.mrf.mxu0
  %v5009 = vadd.f32 %v4996, %v5008
  %v5010 = vpop.f32.mrf.mxu0
  %5011 = vdwg.mxu0
  %v5012 = vmax.f32 %v5009, 0.0
  %v5013 = vpack.c.bf16 %v5012, %v5012
  %s5014 = scalar_lea.vmem %s3, 1984
  %v5015 = vld [vmem:[%s5014] sm:$0xf]
  %v5016 = vld [vmem:[%s5014 + $0x4] sm:$0xf]
  %v5017 = vld [vmem:[%s5014 + $0x8] sm:$0xf]
  %v5018 = vld [vmem:[%s5014 + $0xc] sm:$0xf]
  %v5019 = vld [vmem:[%s5014 + $0x10] sm:$0xf]
  %v5020 = vld [vmem:[%s5014 + $0x14] sm:$0xf]
  %v5021 = vld [vmem:[%s5014 + $0x18] sm:$0xf]
  %v5022 = vld [vmem:[%s5014 + $0x1c] sm:$0xf]
  %v5023 = vld [vmem:[%s5014 + $0x20] sm:$0xf]
  %v5024 = vld [vmem:[%s5014 + $0x24] sm:$0xf]
  %v5025 = vld [vmem:[%s5014 + $0x28] sm:$0xf]
  %v5026 = vld [vmem:[%s5014 + $0x2c] sm:$0xf]
  %v5027 = vld [vmem:[%s5014 + $0x30] sm:$0xf]
  %v5028 = vld [vmem:[%s5014 + $0x34] sm:$0xf]
  %v5029 = vld [vmem:[%s5014 + $0x38] sm:$0xf]
  %v5030 = vld [vmem:[%s5014 + $0x3c] sm:$0xf]
  %v5047 = vunpack.c.l.b16 %v5015
  %v5048 = vunpack.c.l.b16 %v5016
  %v5049 = vunpack.c.l.b16 %v5017
  %v5050 = vunpack.c.l.b16 %v5018
  %v5051 = vunpack.c.l.b16 %v5019
  %v5052 = vunpack.c.l.b16 %v5020
  %v5053 = vunpack.c.l.b16 %v5021
  %v5054 = vunpack.c.l.b16 %v5022
  %v5055 = vunpack.c.l.b16 %v5023
  %v5056 = vunpack.c.l.b16 %v5024
  %v5057 = vunpack.c.l.b16 %v5025
  %v5058 = vunpack.c.l.b16 %v5026
  %v5059 = vunpack.c.l.b16 %v5027
  %v5060 = vunpack.c.l.b16 %v5028
  %v5061 = vunpack.c.l.b16 %v5029
  %v5062 = vunpack.c.l.b16 %v5030
  %v5063 = vpack.c.b16 %v5048, %v5047
  %v5064 = vpack.c.b16 %v5050, %v5049
  %v5065 = vpack.c.b16 %v5052, %v5051
  %v5066 = vpack.c.b16 %v5054, %v5053
  %v5067 = vpack.c.b16 %v5056, %v5055
  %v5068 = vpack.c.b16 %v5058, %v5057
  %v5069 = vpack.c.b16 %v5060, %v5059
  %v5070 = vpack.c.b16 %v5062, %v5061
  %5079 = vmatpush.bf16.msra.mxu0 %v5070
  %5080 = vmatpush.bf16.msra.mxu0 %v5069
  %5081 = vmatpush.bf16.msra.mxu0 %v5068
  %5082 = vmatpush.bf16.msra.mxu0 %v5067
  %5083 = vmatpush.bf16.msra.mxu0 %v5066
  %5084 = vmatpush.bf16.msra.mxu0 %v5065
  %5085 = vmatpush.bf16.msra.mxu0 %v5064
  %5086 = vmatpush.bf16.msra.mxu0 %v5063
  %5087 = vmatmul.bf16.gmra.mxu0 %v5013
  %v5088 = vpop.f32.mrf.mxu0
  %v5089 = vadd.f32 0.0, %v5088
  %v5090 = vpop.f32.mrf.mxu0
  %5091 = vdwg.mxu0
  %v5092 = vadd.f32 %v4940, %v5089
  %s5093 = scalar_lea.vmem %s0, 512
  %v5094 = vld [vmem:[%s5093] sm:$0xff]
  %v5095 = vld [vmem:[%s5093 + $0x8] sm:$0xff]
  %v5098 = vunpack.c.l.b16 %v5094
  %v5099 = vunpack.c.h.b16 %v5094
  %v5100 = vunpack.c.l.b16 %v5095
  %v5101 = vunpack.c.h.b16 %v5095
  %v5102 = vpack.c.b16 %v5098, %v5098
  %v5103 = vpack.c.b16 %v5099, %v5099
  %v5104 = vpack.c.b16 %v5100, %v5100
  %v5105 = vpack.c.b16 %v5101, %v5101
  %v5110 = vsel %vm245, %v5105, 0
  %5112 = vmatpush.bf16.msra.mxu0 %v202
  %5113 = vmatpush.bf16.msra.mxu0 %v201
  %5114 = vmatpush.bf16.msra.mxu0 %v200
  %5115 = vmatpush.bf16.msra.mxu0 %v199
  %5116 = vmatpush.bf16.msra.mxu0 %v198
  %5117 = vmatpush.bf16.msra.mxu0 %v197
  %5118 = vmatpush.bf16.msra.mxu0 %v196
  %5119 = vmatpush.bf16.msra.mxu0 %v195
  %5120 = vmatmul.bf16.gmra.mxu0 %v5102
  %v5121 = vpop.f32.mrf.mxu0
  %v5122 = vadd.f32 %v80, %v5121
  %v5123 = vpop.f32.mrf.mxu0
  %5124 = vdwg.mxu0
  %5125 = vmatpush.bf16.msra.mxu0 %v210
  %5126 = vmatpush.bf16.msra.mxu0 %v209
  %5127 = vmatpush.bf16.msra.mxu0 %v208
  %5128 = vmatpush.bf16.msra.mxu0 %v207
  %5129 = vmatpush.bf16.msra.mxu0 %v206
  %5130 = vmatpush.bf16.msra.mxu0 %v205
  %5131 = vmatpush.bf16.msra.mxu0 %v204
  %5132 = vmatpush.bf16.msra.mxu0 %v203
  %5133 = vmatmul.bf16.gmra.mxu0 %v5103
  %v5134 = vpop.f32.mrf.mxu0
  %v5135 = vadd.f32 %v5122, %v5134
  %v5136 = vpop.f32.mrf.mxu0
  %5137 = vdwg.mxu0
  %5138 = vmatpush.bf16.msra.mxu0 %v218
  %5139 = vmatpush.bf16.msra.mxu0 %v217
  %5140 = vmatpush.bf16.msra.mxu0 %v216
  %5141 = vmatpush.bf16.msra.mxu0 %v215
  %5142 = vmatpush.bf16.msra.mxu0 %v214
  %5143 = vmatpush.bf16.msra.mxu0 %v213
  %5144 = vmatpush.bf16.msra.mxu0 %v212
  %5145 = vmatpush.bf16.msra.mxu0 %v211
  %5146 = vmatmul.bf16.gmra.mxu0 %v5104
  %v5147 = vpop.f32.mrf.mxu0
  %v5148 = vadd.f32 %v5135, %v5147
  %v5149 = vpop.f32.mrf.mxu0
  %5150 = vdwg.mxu0
  %5151 = vmatpush.bf16.msra.mxu0 0
  %5152 = vmatpush.bf16.msra.mxu0 0
  %5153 = vmatpush.bf16.msra.mxu0 0
  %5154 = vmatpush.bf16.msra.mxu0 0
  %5155 = vmatpush.bf16.msra.mxu0 0
  %5156 = vmatpush.bf16.msra.mxu0 0
  %5157 = vmatpush.bf16.msra.mxu0 0
  %5158 = vmatpush.bf16.msra.mxu0 %v219
  %5159 = vmatmul.bf16.gmra.mxu0 %v5110
  %v5160 = vpop.f32.mrf.mxu0
  %v5161 = vadd.f32 %v5148, %v5160
  %v5162 = vpop.f32.mrf.mxu0
  %5163 = vdwg.mxu0
  %v5164 = vmax.f32 %v5161, 0.0
  %v5165 = vpack.c.bf16 %v5164, %v5164
  %s5166 = scalar_lea.vmem %s3, 2048
  %v5167 = vld [vmem:[%s5166] sm:$0xf]
  %v5168 = vld [vmem:[%s5166 + $0x4] sm:$0xf]
  %v5169 = vld [vmem:[%s5166 + $0x8] sm:$0xf]
  %v5170 = vld [vmem:[%s5166 + $0xc] sm:$0xf]
  %v5171 = vld [vmem:[%s5166 + $0x10] sm:$0xf]
  %v5172 = vld [vmem:[%s5166 + $0x14] sm:$0xf]
  %v5173 = vld [vmem:[%s5166 + $0x18] sm:$0xf]
  %v5174 = vld [vmem:[%s5166 + $0x1c] sm:$0xf]
  %v5175 = vld [vmem:[%s5166 + $0x20] sm:$0xf]
  %v5176 = vld [vmem:[%s5166 + $0x24] sm:$0xf]
  %v5177 = vld [vmem:[%s5166 + $0x28] sm:$0xf]
  %v5178 = vld [vmem:[%s5166 + $0x2c] sm:$0xf]
  %v5179 = vld [vmem:[%s5166 + $0x30] sm:$0xf]
  %v5180 = vld [vmem:[%s5166 + $0x34] sm:$0xf]
  %v5181 = vld [vmem:[%s5166 + $0x38] sm:$0xf]
  %v5182 = vld [vmem:[%s5166 + $0x3c] sm:$0xf]
  %v5199 = vunpack.c.l.b16 %v5167
  %v5200 = vunpack.c.l.b16 %v5168
  %v5201 = vunpack.c.l.b16 %v5169
  %v5202 = vunpack.c.l.b16 %v5170
  %v5203 = vunpack.c.l.b16 %v5171
  %v5204 = vunpack.c.l.b16 %v5172
  %v5205 = vunpack.c.l.b16 %v5173
  %v5206 = vunpack.c.l.b16 %v5174
  %v5207 = vunpack.c.l.b16 %v5175
  %v5208 = vunpack.c.l.b16 %v5176
  %v5209 = vunpack.c.l.b16 %v5177
  %v5210 = vunpack.c.l.b16 %v5178
  %v5211 = vunpack.c.l.b16 %v5179
  %v5212 = vunpack.c.l.b16 %v5180
  %v5213 = vunpack.c.l.b16 %v5181
  %v5214 = vunpack.c.l.b16 %v5182
  %v5215 = vpack.c.b16 %v5200, %v5199
  %v5216 = vpack.c.b16 %v5202, %v5201
  %v5217 = vpack.c.b16 %v5204, %v5203
  %v5218 = vpack.c.b16 %v5206, %v5205
  %v5219 = vpack.c.b16 %v5208, %v5207
  %v5220 = vpack.c.b16 %v5210, %v5209
  %v5221 = vpack.c.b16 %v5212, %v5211
  %v5222 = vpack.c.b16 %v5214, %v5213
  %5231 = vmatpush.bf16.msra.mxu0 %v5222
  %5232 = vmatpush.bf16.msra.mxu0 %v5221
  %5233 = vmatpush.bf16.msra.mxu0 %v5220
  %5234 = vmatpush.bf16.msra.mxu0 %v5219
  %5235 = vmatpush.bf16.msra.mxu0 %v5218
  %5236 = vmatpush.bf16.msra.mxu0 %v5217
  %5237 = vmatpush.bf16.msra.mxu0 %v5216
  %5238 = vmatpush.bf16.msra.mxu0 %v5215
  %5239 = vmatmul.bf16.gmra.mxu0 %v5165
  %v5240 = vpop.f32.mrf.mxu0
  %v5241 = vadd.f32 0.0, %v5240
  %v5242 = vpop.f32.mrf.mxu0
  %5243 = vdwg.mxu0
  %v5244 = vadd.f32 %v5092, %v5241
  %s5245 = scalar_lea.vmem %s0, 528
  %v5246 = vld [vmem:[%s5245] sm:$0xff]
  %v5247 = vld [vmem:[%s5245 + $0x8] sm:$0xff]
  %v5250 = vunpack.c.l.b16 %v5246
  %v5251 = vunpack.c.h.b16 %v5246
  %v5252 = vunpack.c.l.b16 %v5247
  %v5253 = vunpack.c.h.b16 %v5247
  %v5254 = vpack.c.b16 %v5250, %v5250
  %v5255 = vpack.c.b16 %v5251, %v5251
  %v5256 = vpack.c.b16 %v5252, %v5252
  %v5257 = vpack.c.b16 %v5253, %v5253
  %v5262 = vsel %vm245, %v5257, 0
  %5264 = vmatpush.bf16.msra.mxu0 %v202
  %5265 = vmatpush.bf16.msra.mxu0 %v201
  %5266 = vmatpush.bf16.msra.mxu0 %v200
  %5267 = vmatpush.bf16.msra.mxu0 %v199
  %5268 = vmatpush.bf16.msra.mxu0 %v198
  %5269 = vmatpush.bf16.msra.mxu0 %v197
  %5270 = vmatpush.bf16.msra.mxu0 %v196
  %5271 = vmatpush.bf16.msra.mxu0 %v195
  %5272 = vmatmul.bf16.gmra.mxu0 %v5254
  %v5273 = vpop.f32.mrf.mxu0
  %v5274 = vadd.f32 %v80, %v5273
  %v5275 = vpop.f32.mrf.mxu0
  %5276 = vdwg.mxu0
  %5277 = vmatpush.bf16.msra.mxu0 %v210
  %5278 = vmatpush.bf16.msra.mxu0 %v209
  %5279 = vmatpush.bf16.msra.mxu0 %v208
  %5280 = vmatpush.bf16.msra.mxu0 %v207
  %5281 = vmatpush.bf16.msra.mxu0 %v206
  %5282 = vmatpush.bf16.msra.mxu0 %v205
  %5283 = vmatpush.bf16.msra.mxu0 %v204
  %5284 = vmatpush.bf16.msra.mxu0 %v203
  %5285 = vmatmul.bf16.gmra.mxu0 %v5255
  %v5286 = vpop.f32.mrf.mxu0
  %v5287 = vadd.f32 %v5274, %v5286
  %v5288 = vpop.f32.mrf.mxu0
  %5289 = vdwg.mxu0
  %5290 = vmatpush.bf16.msra.mxu0 %v218
  %5291 = vmatpush.bf16.msra.mxu0 %v217
  %5292 = vmatpush.bf16.msra.mxu0 %v216
  %5293 = vmatpush.bf16.msra.mxu0 %v215
  %5294 = vmatpush.bf16.msra.mxu0 %v214
  %5295 = vmatpush.bf16.msra.mxu0 %v213
  %5296 = vmatpush.bf16.msra.mxu0 %v212
  %5297 = vmatpush.bf16.msra.mxu0 %v211
  %5298 = vmatmul.bf16.gmra.mxu0 %v5256
  %v5299 = vpop.f32.mrf.mxu0
  %v5300 = vadd.f32 %v5287, %v5299
  %v5301 = vpop.f32.mrf.mxu0
  %5302 = vdwg.mxu0
  %5303 = vmatpush.bf16.msra.mxu0 0
  %5304 = vmatpush.bf16.msra.mxu0 0
  %5305 = vmatpush.bf16.msra.mxu0 0
  %5306 = vmatpush.bf16.msra.mxu0 0
  %5307 = vmatpush.bf16.msra.mxu0 0
  %5308 = vmatpush.bf16.msra.mxu0 0
  %5309 = vmatpush.bf16.msra.mxu0 0
  %5310 = vmatpush.bf16.msra.mxu0 %v219
  %5311 = vmatmul.bf16.gmra.mxu0 %v5262
  %v5312 = vpop.f32.mrf.mxu0
  %v5313 = vadd.f32 %v5300, %v5312
  %v5314 = vpop.f32.mrf.mxu0
  %5315 = vdwg.mxu0
  %v5316 = vmax.f32 %v5313, 0.0
  %v5317 = vpack.c.bf16 %v5316, %v5316
  %s5318 = scalar_lea.vmem %s3, 2112
  %v5319 = vld [vmem:[%s5318] sm:$0xf]
  %v5320 = vld [vmem:[%s5318 + $0x4] sm:$0xf]
  %v5321 = vld [vmem:[%s5318 + $0x8] sm:$0xf]
  %v5322 = vld [vmem:[%s5318 + $0xc] sm:$0xf]
  %v5323 = vld [vmem:[%s5318 + $0x10] sm:$0xf]
  %v5324 = vld [vmem:[%s5318 + $0x14] sm:$0xf]
  %v5325 = vld [vmem:[%s5318 + $0x18] sm:$0xf]
  %v5326 = vld [vmem:[%s5318 + $0x1c] sm:$0xf]
  %v5327 = vld [vmem:[%s5318 + $0x20] sm:$0xf]
  %v5328 = vld [vmem:[%s5318 + $0x24] sm:$0xf]
  %v5329 = vld [vmem:[%s5318 + $0x28] sm:$0xf]
  %v5330 = vld [vmem:[%s5318 + $0x2c] sm:$0xf]
  %v5331 = vld [vmem:[%s5318 + $0x30] sm:$0xf]
  %v5332 = vld [vmem:[%s5318 + $0x34] sm:$0xf]
  %v5333 = vld [vmem:[%s5318 + $0x38] sm:$0xf]
  %v5334 = vld [vmem:[%s5318 + $0x3c] sm:$0xf]
  %v5351 = vunpack.c.l.b16 %v5319
  %v5352 = vunpack.c.l.b16 %v5320
  %v5353 = vunpack.c.l.b16 %v5321
  %v5354 = vunpack.c.l.b16 %v5322
  %v5355 = vunpack.c.l.b16 %v5323
  %v5356 = vunpack.c.l.b16 %v5324
  %v5357 = vunpack.c.l.b16 %v5325
  %v5358 = vunpack.c.l.b16 %v5326
  %v5359 = vunpack.c.l.b16 %v5327
  %v5360 = vunpack.c.l.b16 %v5328
  %v5361 = vunpack.c.l.b16 %v5329
  %v5362 = vunpack.c.l.b16 %v5330
  %v5363 = vunpack.c.l.b16 %v5331
  %v5364 = vunpack.c.l.b16 %v5332
  %v5365 = vunpack.c.l.b16 %v5333
  %v5366 = vunpack.c.l.b16 %v5334
  %v5367 = vpack.c.b16 %v5352, %v5351
  %v5368 = vpack.c.b16 %v5354, %v5353
  %v5369 = vpack.c.b16 %v5356, %v5355
  %v5370 = vpack.c.b16 %v5358, %v5357
  %v5371 = vpack.c.b16 %v5360, %v5359
  %v5372 = vpack.c.b16 %v5362, %v5361
  %v5373 = vpack.c.b16 %v5364, %v5363
  %v5374 = vpack.c.b16 %v5366, %v5365
  %5383 = vmatpush.bf16.msra.mxu0 %v5374
  %5384 = vmatpush.bf16.msra.mxu0 %v5373
  %5385 = vmatpush.bf16.msra.mxu0 %v5372
  %5386 = vmatpush.bf16.msra.mxu0 %v5371
  %5387 = vmatpush.bf16.msra.mxu0 %v5370
  %5388 = vmatpush.bf16.msra.mxu0 %v5369
  %5389 = vmatpush.bf16.msra.mxu0 %v5368
  %5390 = vmatpush.bf16.msra.mxu0 %v5367
  %5391 = vmatmul.bf16.gmra.mxu0 %v5317
  %v5392 = vpop.f32.mrf.mxu0
  %v5393 = vadd.f32 0.0, %v5392
  %v5394 = vpop.f32.mrf.mxu0
  %5395 = vdwg.mxu0
  %v5396 = vadd.f32 %v5244, %v5393
  %s5397 = scalar_lea.vmem %s0, 544
  %v5398 = vld [vmem:[%s5397] sm:$0xff]
  %v5399 = vld [vmem:[%s5397 + $0x8] sm:$0xff]
  %v5402 = vunpack.c.l.b16 %v5398
  %v5403 = vunpack.c.h.b16 %v5398
  %v5404 = vunpack.c.l.b16 %v5399
  %v5405 = vunpack.c.h.b16 %v5399
  %v5406 = vpack.c.b16 %v5402, %v5402
  %v5407 = vpack.c.b16 %v5403, %v5403
  %v5408 = vpack.c.b16 %v5404, %v5404
  %v5409 = vpack.c.b16 %v5405, %v5405
  %v5414 = vsel %vm245, %v5409, 0
  %5416 = vmatpush.bf16.msra.mxu0 %v202
  %5417 = vmatpush.bf16.msra.mxu0 %v201
  %5418 = vmatpush.bf16.msra.mxu0 %v200
  %5419 = vmatpush.bf16.msra.mxu0 %v199
  %5420 = vmatpush.bf16.msra.mxu0 %v198
  %5421 = vmatpush.bf16.msra.mxu0 %v197
  %5422 = vmatpush.bf16.msra.mxu0 %v196
  %5423 = vmatpush.bf16.msra.mxu0 %v195
  %5424 = vmatmul.bf16.gmra.mxu0 %v5406
  %v5425 = vpop.f32.mrf.mxu0
  %v5426 = vadd.f32 %v80, %v5425
  %v5427 = vpop.f32.mrf.mxu0
  %5428 = vdwg.mxu0
  %5429 = vmatpush.bf16.msra.mxu0 %v210
  %5430 = vmatpush.bf16.msra.mxu0 %v209
  %5431 = vmatpush.bf16.msra.mxu0 %v208
  %5432 = vmatpush.bf16.msra.mxu0 %v207
  %5433 = vmatpush.bf16.msra.mxu0 %v206
  %5434 = vmatpush.bf16.msra.mxu0 %v205
  %5435 = vmatpush.bf16.msra.mxu0 %v204
  %5436 = vmatpush.bf16.msra.mxu0 %v203
  %5437 = vmatmul.bf16.gmra.mxu0 %v5407
  %v5438 = vpop.f32.mrf.mxu0
  %v5439 = vadd.f32 %v5426, %v5438
  %v5440 = vpop.f32.mrf.mxu0
  %5441 = vdwg.mxu0
  %5442 = vmatpush.bf16.msra.mxu0 %v218
  %5443 = vmatpush.bf16.msra.mxu0 %v217
  %5444 = vmatpush.bf16.msra.mxu0 %v216
  %5445 = vmatpush.bf16.msra.mxu0 %v215
  %5446 = vmatpush.bf16.msra.mxu0 %v214
  %5447 = vmatpush.bf16.msra.mxu0 %v213
  %5448 = vmatpush.bf16.msra.mxu0 %v212
  %5449 = vmatpush.bf16.msra.mxu0 %v211
  %5450 = vmatmul.bf16.gmra.mxu0 %v5408
  %v5451 = vpop.f32.mrf.mxu0
  %v5452 = vadd.f32 %v5439, %v5451
  %v5453 = vpop.f32.mrf.mxu0
  %5454 = vdwg.mxu0
  %5455 = vmatpush.bf16.msra.mxu0 0
  %5456 = vmatpush.bf16.msra.mxu0 0
  %5457 = vmatpush.bf16.msra.mxu0 0
  %5458 = vmatpush.bf16.msra.mxu0 0
  %5459 = vmatpush.bf16.msra.mxu0 0
  %5460 = vmatpush.bf16.msra.mxu0 0
  %5461 = vmatpush.bf16.msra.mxu0 0
  %5462 = vmatpush.bf16.msra.mxu0 %v219
  %5463 = vmatmul.bf16.gmra.mxu0 %v5414
  %v5464 = vpop.f32.mrf.mxu0
  %v5465 = vadd.f32 %v5452, %v5464
  %v5466 = vpop.f32.mrf.mxu0
  %5467 = vdwg.mxu0
  %v5468 = vmax.f32 %v5465, 0.0
  %v5469 = vpack.c.bf16 %v5468, %v5468
  %s5470 = scalar_lea.vmem %s3, 2176
  %v5471 = vld [vmem:[%s5470] sm:$0xf]
  %v5472 = vld [vmem:[%s5470 + $0x4] sm:$0xf]
  %v5473 = vld [vmem:[%s5470 + $0x8] sm:$0xf]
  %v5474 = vld [vmem:[%s5470 + $0xc] sm:$0xf]
  %v5475 = vld [vmem:[%s5470 + $0x10] sm:$0xf]
  %v5476 = vld [vmem:[%s5470 + $0x14] sm:$0xf]
  %v5477 = vld [vmem:[%s5470 + $0x18] sm:$0xf]
  %v5478 = vld [vmem:[%s5470 + $0x1c] sm:$0xf]
  %v5479 = vld [vmem:[%s5470 + $0x20] sm:$0xf]
  %v5480 = vld [vmem:[%s5470 + $0x24] sm:$0xf]
  %v5481 = vld [vmem:[%s5470 + $0x28] sm:$0xf]
  %v5482 = vld [vmem:[%s5470 + $0x2c] sm:$0xf]
  %v5483 = vld [vmem:[%s5470 + $0x30] sm:$0xf]
  %v5484 = vld [vmem:[%s5470 + $0x34] sm:$0xf]
  %v5485 = vld [vmem:[%s5470 + $0x38] sm:$0xf]
  %v5486 = vld [vmem:[%s5470 + $0x3c] sm:$0xf]
  %v5503 = vunpack.c.l.b16 %v5471
  %v5504 = vunpack.c.l.b16 %v5472
  %v5505 = vunpack.c.l.b16 %v5473
  %v5506 = vunpack.c.l.b16 %v5474
  %v5507 = vunpack.c.l.b16 %v5475
  %v5508 = vunpack.c.l.b16 %v5476
  %v5509 = vunpack.c.l.b16 %v5477
  %v5510 = vunpack.c.l.b16 %v5478
  %v5511 = vunpack.c.l.b16 %v5479
  %v5512 = vunpack.c.l.b16 %v5480
  %v5513 = vunpack.c.l.b16 %v5481
  %v5514 = vunpack.c.l.b16 %v5482
  %v5515 = vunpack.c.l.b16 %v5483
  %v5516 = vunpack.c.l.b16 %v5484
  %v5517 = vunpack.c.l.b16 %v5485
  %v5518 = vunpack.c.l.b16 %v5486
  %v5519 = vpack.c.b16 %v5504, %v5503
  %v5520 = vpack.c.b16 %v5506, %v5505
  %v5521 = vpack.c.b16 %v5508, %v5507
  %v5522 = vpack.c.b16 %v5510, %v5509
  %v5523 = vpack.c.b16 %v5512, %v5511
  %v5524 = vpack.c.b16 %v5514, %v5513
  %v5525 = vpack.c.b16 %v5516, %v5515
  %v5526 = vpack.c.b16 %v5518, %v5517
  %5535 = vmatpush.bf16.msra.mxu0 %v5526
  %5536 = vmatpush.bf16.msra.mxu0 %v5525
  %5537 = vmatpush.bf16.msra.mxu0 %v5524
  %5538 = vmatpush.bf16.msra.mxu0 %v5523
  %5539 = vmatpush.bf16.msra.mxu0 %v5522
  %5540 = vmatpush.bf16.msra.mxu0 %v5521
  %5541 = vmatpush.bf16.msra.mxu0 %v5520
  %5542 = vmatpush.bf16.msra.mxu0 %v5519
  %5543 = vmatmul.bf16.gmra.mxu0 %v5469
  %v5544 = vpop.f32.mrf.mxu0
  %v5545 = vadd.f32 0.0, %v5544
  %v5546 = vpop.f32.mrf.mxu0
  %5547 = vdwg.mxu0
  %v5548 = vadd.f32 %v5396, %v5545
  %s5549 = scalar_lea.vmem %s0, 560
  %v5550 = vld [vmem:[%s5549] sm:$0xff]
  %v5551 = vld [vmem:[%s5549 + $0x8] sm:$0xff]
  %v5554 = vunpack.c.l.b16 %v5550
  %v5555 = vunpack.c.h.b16 %v5550
  %v5556 = vunpack.c.l.b16 %v5551
  %v5557 = vunpack.c.h.b16 %v5551
  %v5558 = vpack.c.b16 %v5554, %v5554
  %v5559 = vpack.c.b16 %v5555, %v5555
  %v5560 = vpack.c.b16 %v5556, %v5556
  %v5561 = vpack.c.b16 %v5557, %v5557
  %v5566 = vsel %vm245, %v5561, 0
  %5568 = vmatpush.bf16.msra.mxu0 %v202
  %5569 = vmatpush.bf16.msra.mxu0 %v201
  %5570 = vmatpush.bf16.msra.mxu0 %v200
  %5571 = vmatpush.bf16.msra.mxu0 %v199
  %5572 = vmatpush.bf16.msra.mxu0 %v198
  %5573 = vmatpush.bf16.msra.mxu0 %v197
  %5574 = vmatpush.bf16.msra.mxu0 %v196
  %5575 = vmatpush.bf16.msra.mxu0 %v195
  %5576 = vmatmul.bf16.gmra.mxu0 %v5558
  %v5577 = vpop.f32.mrf.mxu0
  %v5578 = vadd.f32 %v80, %v5577
  %v5579 = vpop.f32.mrf.mxu0
  %5580 = vdwg.mxu0
  %5581 = vmatpush.bf16.msra.mxu0 %v210
  %5582 = vmatpush.bf16.msra.mxu0 %v209
  %5583 = vmatpush.bf16.msra.mxu0 %v208
  %5584 = vmatpush.bf16.msra.mxu0 %v207
  %5585 = vmatpush.bf16.msra.mxu0 %v206
  %5586 = vmatpush.bf16.msra.mxu0 %v205
  %5587 = vmatpush.bf16.msra.mxu0 %v204
  %5588 = vmatpush.bf16.msra.mxu0 %v203
  %5589 = vmatmul.bf16.gmra.mxu0 %v5559
  %v5590 = vpop.f32.mrf.mxu0
  %v5591 = vadd.f32 %v5578, %v5590
  %v5592 = vpop.f32.mrf.mxu0
  %5593 = vdwg.mxu0
  %5594 = vmatpush.bf16.msra.mxu0 %v218
  %5595 = vmatpush.bf16.msra.mxu0 %v217
  %5596 = vmatpush.bf16.msra.mxu0 %v216
  %5597 = vmatpush.bf16.msra.mxu0 %v215
  %5598 = vmatpush.bf16.msra.mxu0 %v214
  %5599 = vmatpush.bf16.msra.mxu0 %v213
  %5600 = vmatpush.bf16.msra.mxu0 %v212
  %5601 = vmatpush.bf16.msra.mxu0 %v211
  %5602 = vmatmul.bf16.gmra.mxu0 %v5560
  %v5603 = vpop.f32.mrf.mxu0
  %v5604 = vadd.f32 %v5591, %v5603
  %v5605 = vpop.f32.mrf.mxu0
  %5606 = vdwg.mxu0
  %5607 = vmatpush.bf16.msra.mxu0 0
  %5608 = vmatpush.bf16.msra.mxu0 0
  %5609 = vmatpush.bf16.msra.mxu0 0
  %5610 = vmatpush.bf16.msra.mxu0 0
  %5611 = vmatpush.bf16.msra.mxu0 0
  %5612 = vmatpush.bf16.msra.mxu0 0
  %5613 = vmatpush.bf16.msra.mxu0 0
  %5614 = vmatpush.bf16.msra.mxu0 %v219
  %5615 = vmatmul.bf16.gmra.mxu0 %v5566
  %v5616 = vpop.f32.mrf.mxu0
  %v5617 = vadd.f32 %v5604, %v5616
  %v5618 = vpop.f32.mrf.mxu0
  %5619 = vdwg.mxu0
  %v5620 = vmax.f32 %v5617, 0.0
  %v5621 = vpack.c.bf16 %v5620, %v5620
  %s5622 = scalar_lea.vmem %s3, 2240
  %v5623 = vld [vmem:[%s5622] sm:$0xf]
  %v5624 = vld [vmem:[%s5622 + $0x4] sm:$0xf]
  %v5625 = vld [vmem:[%s5622 + $0x8] sm:$0xf]
  %v5626 = vld [vmem:[%s5622 + $0xc] sm:$0xf]
  %v5627 = vld [vmem:[%s5622 + $0x10] sm:$0xf]
  %v5628 = vld [vmem:[%s5622 + $0x14] sm:$0xf]
  %v5629 = vld [vmem:[%s5622 + $0x18] sm:$0xf]
  %v5630 = vld [vmem:[%s5622 + $0x1c] sm:$0xf]
  %v5631 = vld [vmem:[%s5622 + $0x20] sm:$0xf]
  %v5632 = vld [vmem:[%s5622 + $0x24] sm:$0xf]
  %v5633 = vld [vmem:[%s5622 + $0x28] sm:$0xf]
  %v5634 = vld [vmem:[%s5622 + $0x2c] sm:$0xf]
  %v5635 = vld [vmem:[%s5622 + $0x30] sm:$0xf]
  %v5636 = vld [vmem:[%s5622 + $0x34] sm:$0xf]
  %v5637 = vld [vmem:[%s5622 + $0x38] sm:$0xf]
  %v5638 = vld [vmem:[%s5622 + $0x3c] sm:$0xf]
  %v5655 = vunpack.c.l.b16 %v5623
  %v5656 = vunpack.c.l.b16 %v5624
  %v5657 = vunpack.c.l.b16 %v5625
  %v5658 = vunpack.c.l.b16 %v5626
  %v5659 = vunpack.c.l.b16 %v5627
  %v5660 = vunpack.c.l.b16 %v5628
  %v5661 = vunpack.c.l.b16 %v5629
  %v5662 = vunpack.c.l.b16 %v5630
  %v5663 = vunpack.c.l.b16 %v5631
  %v5664 = vunpack.c.l.b16 %v5632
  %v5665 = vunpack.c.l.b16 %v5633
  %v5666 = vunpack.c.l.b16 %v5634
  %v5667 = vunpack.c.l.b16 %v5635
  %v5668 = vunpack.c.l.b16 %v5636
  %v5669 = vunpack.c.l.b16 %v5637
  %v5670 = vunpack.c.l.b16 %v5638
  %v5671 = vpack.c.b16 %v5656, %v5655
  %v5672 = vpack.c.b16 %v5658, %v5657
  %v5673 = vpack.c.b16 %v5660, %v5659
  %v5674 = vpack.c.b16 %v5662, %v5661
  %v5675 = vpack.c.b16 %v5664, %v5663
  %v5676 = vpack.c.b16 %v5666, %v5665
  %v5677 = vpack.c.b16 %v5668, %v5667
  %v5678 = vpack.c.b16 %v5670, %v5669
  %5687 = vmatpush.bf16.msra.mxu0 %v5678
  %5688 = vmatpush.bf16.msra.mxu0 %v5677
  %5689 = vmatpush.bf16.msra.mxu0 %v5676
  %5690 = vmatpush.bf16.msra.mxu0 %v5675
  %5691 = vmatpush.bf16.msra.mxu0 %v5674
  %5692 = vmatpush.bf16.msra.mxu0 %v5673
  %5693 = vmatpush.bf16.msra.mxu0 %v5672
  %5694 = vmatpush.bf16.msra.mxu0 %v5671
  %5695 = vmatmul.bf16.gmra.mxu0 %v5621
  %v5696 = vpop.f32.mrf.mxu0
  %v5697 = vadd.f32 0.0, %v5696
  %v5698 = vpop.f32.mrf.mxu0
  %5699 = vdwg.mxu0
  %v5700 = vadd.f32 %v5548, %v5697
  %s5701 = scalar_lea.vmem %s0, 576
  %v5702 = vld [vmem:[%s5701] sm:$0xff]
  %v5703 = vld [vmem:[%s5701 + $0x8] sm:$0xff]
  %v5706 = vunpack.c.l.b16 %v5702
  %v5707 = vunpack.c.h.b16 %v5702
  %v5708 = vunpack.c.l.b16 %v5703
  %v5709 = vunpack.c.h.b16 %v5703
  %v5710 = vpack.c.b16 %v5706, %v5706
  %v5711 = vpack.c.b16 %v5707, %v5707
  %v5712 = vpack.c.b16 %v5708, %v5708
  %v5713 = vpack.c.b16 %v5709, %v5709
  %v5718 = vsel %vm245, %v5713, 0
  %5720 = vmatpush.bf16.msra.mxu0 %v202
  %5721 = vmatpush.bf16.msra.mxu0 %v201
  %5722 = vmatpush.bf16.msra.mxu0 %v200
  %5723 = vmatpush.bf16.msra.mxu0 %v199
  %5724 = vmatpush.bf16.msra.mxu0 %v198
  %5725 = vmatpush.bf16.msra.mxu0 %v197
  %5726 = vmatpush.bf16.msra.mxu0 %v196
  %5727 = vmatpush.bf16.msra.mxu0 %v195
  %5728 = vmatmul.bf16.gmra.mxu0 %v5710
  %v5729 = vpop.f32.mrf.mxu0
  %v5730 = vadd.f32 %v80, %v5729
  %v5731 = vpop.f32.mrf.mxu0
  %5732 = vdwg.mxu0
  %5733 = vmatpush.bf16.msra.mxu0 %v210
  %5734 = vmatpush.bf16.msra.mxu0 %v209
  %5735 = vmatpush.bf16.msra.mxu0 %v208
  %5736 = vmatpush.bf16.msra.mxu0 %v207
  %5737 = vmatpush.bf16.msra.mxu0 %v206
  %5738 = vmatpush.bf16.msra.mxu0 %v205
  %5739 = vmatpush.bf16.msra.mxu0 %v204
  %5740 = vmatpush.bf16.msra.mxu0 %v203
  %5741 = vmatmul.bf16.gmra.mxu0 %v5711
  %v5742 = vpop.f32.mrf.mxu0
  %v5743 = vadd.f32 %v5730, %v5742
  %v5744 = vpop.f32.mrf.mxu0
  %5745 = vdwg.mxu0
  %5746 = vmatpush.bf16.msra.mxu0 %v218
  %5747 = vmatpush.bf16.msra.mxu0 %v217
  %5748 = vmatpush.bf16.msra.mxu0 %v216
  %5749 = vmatpush.bf16.msra.mxu0 %v215
  %5750 = vmatpush.bf16.msra.mxu0 %v214
  %5751 = vmatpush.bf16.msra.mxu0 %v213
  %5752 = vmatpush.bf16.msra.mxu0 %v212
  %5753 = vmatpush.bf16.msra.mxu0 %v211
  %5754 = vmatmul.bf16.gmra.mxu0 %v5712
  %v5755 = vpop.f32.mrf.mxu0
  %v5756 = vadd.f32 %v5743, %v5755
  %v5757 = vpop.f32.mrf.mxu0
  %5758 = vdwg.mxu0
  %5759 = vmatpush.bf16.msra.mxu0 0
  %5760 = vmatpush.bf16.msra.mxu0 0
  %5761 = vmatpush.bf16.msra.mxu0 0
  %5762 = vmatpush.bf16.msra.mxu0 0
  %5763 = vmatpush.bf16.msra.mxu0 0
  %5764 = vmatpush.bf16.msra.mxu0 0
  %5765 = vmatpush.bf16.msra.mxu0 0
  %5766 = vmatpush.bf16.msra.mxu0 %v219
  %5767 = vmatmul.bf16.gmra.mxu0 %v5718
  %v5768 = vpop.f32.mrf.mxu0
  %v5769 = vadd.f32 %v5756, %v5768
  %v5770 = vpop.f32.mrf.mxu0
  %5771 = vdwg.mxu0
  %v5772 = vmax.f32 %v5769, 0.0
  %v5773 = vpack.c.bf16 %v5772, %v5772
  %s5774 = scalar_lea.vmem %s3, 2304
  %v5775 = vld [vmem:[%s5774] sm:$0xf]
  %v5776 = vld [vmem:[%s5774 + $0x4] sm:$0xf]
  %v5777 = vld [vmem:[%s5774 + $0x8] sm:$0xf]
  %v5778 = vld [vmem:[%s5774 + $0xc] sm:$0xf]
  %v5779 = vld [vmem:[%s5774 + $0x10] sm:$0xf]
  %v5780 = vld [vmem:[%s5774 + $0x14] sm:$0xf]
  %v5781 = vld [vmem:[%s5774 + $0x18] sm:$0xf]
  %v5782 = vld [vmem:[%s5774 + $0x1c] sm:$0xf]
  %v5783 = vld [vmem:[%s5774 + $0x20] sm:$0xf]
  %v5784 = vld [vmem:[%s5774 + $0x24] sm:$0xf]
  %v5785 = vld [vmem:[%s5774 + $0x28] sm:$0xf]
  %v5786 = vld [vmem:[%s5774 + $0x2c] sm:$0xf]
  %v5787 = vld [vmem:[%s5774 + $0x30] sm:$0xf]
  %v5788 = vld [vmem:[%s5774 + $0x34] sm:$0xf]
  %v5789 = vld [vmem:[%s5774 + $0x38] sm:$0xf]
  %v5790 = vld [vmem:[%s5774 + $0x3c] sm:$0xf]
  %v5807 = vunpack.c.l.b16 %v5775
  %v5808 = vunpack.c.l.b16 %v5776
  %v5809 = vunpack.c.l.b16 %v5777
  %v5810 = vunpack.c.l.b16 %v5778
  %v5811 = vunpack.c.l.b16 %v5779
  %v5812 = vunpack.c.l.b16 %v5780
  %v5813 = vunpack.c.l.b16 %v5781
  %v5814 = vunpack.c.l.b16 %v5782
  %v5815 = vunpack.c.l.b16 %v5783
  %v5816 = vunpack.c.l.b16 %v5784
  %v5817 = vunpack.c.l.b16 %v5785
  %v5818 = vunpack.c.l.b16 %v5786
  %v5819 = vunpack.c.l.b16 %v5787
  %v5820 = vunpack.c.l.b16 %v5788
  %v5821 = vunpack.c.l.b16 %v5789
  %v5822 = vunpack.c.l.b16 %v5790
  %v5823 = vpack.c.b16 %v5808, %v5807
  %v5824 = vpack.c.b16 %v5810, %v5809
  %v5825 = vpack.c.b16 %v5812, %v5811
  %v5826 = vpack.c.b16 %v5814, %v5813
  %v5827 = vpack.c.b16 %v5816, %v5815
  %v5828 = vpack.c.b16 %v5818, %v5817
  %v5829 = vpack.c.b16 %v5820, %v5819
  %v5830 = vpack.c.b16 %v5822, %v5821
  %5839 = vmatpush.bf16.msra.mxu0 %v5830
  %5840 = vmatpush.bf16.msra.mxu0 %v5829
  %5841 = vmatpush.bf16.msra.mxu0 %v5828
  %5842 = vmatpush.bf16.msra.mxu0 %v5827
  %5843 = vmatpush.bf16.msra.mxu0 %v5826
  %5844 = vmatpush.bf16.msra.mxu0 %v5825
  %5845 = vmatpush.bf16.msra.mxu0 %v5824
  %5846 = vmatpush.bf16.msra.mxu0 %v5823
  %5847 = vmatmul.bf16.gmra.mxu0 %v5773
  %v5848 = vpop.f32.mrf.mxu0
  %v5849 = vadd.f32 0.0, %v5848
  %v5850 = vpop.f32.mrf.mxu0
  %5851 = vdwg.mxu0
  %v5852 = vadd.f32 %v5700, %v5849
  %s5853 = scalar_lea.vmem %s0, 592
  %v5854 = vld [vmem:[%s5853] sm:$0xff]
  %v5855 = vld [vmem:[%s5853 + $0x8] sm:$0xff]
  %v5858 = vunpack.c.l.b16 %v5854
  %v5859 = vunpack.c.h.b16 %v5854
  %v5860 = vunpack.c.l.b16 %v5855
  %v5861 = vunpack.c.h.b16 %v5855
  %v5862 = vpack.c.b16 %v5858, %v5858
  %v5863 = vpack.c.b16 %v5859, %v5859
  %v5864 = vpack.c.b16 %v5860, %v5860
  %v5865 = vpack.c.b16 %v5861, %v5861
  %v5870 = vsel %vm245, %v5865, 0
  %5872 = vmatpush.bf16.msra.mxu0 %v202
  %5873 = vmatpush.bf16.msra.mxu0 %v201
  %5874 = vmatpush.bf16.msra.mxu0 %v200
  %5875 = vmatpush.bf16.msra.mxu0 %v199
  %5876 = vmatpush.bf16.msra.mxu0 %v198
  %5877 = vmatpush.bf16.msra.mxu0 %v197
  %5878 = vmatpush.bf16.msra.mxu0 %v196
  %5879 = vmatpush.bf16.msra.mxu0 %v195
  %5880 = vmatmul.bf16.gmra.mxu0 %v5862
  %v5881 = vpop.f32.mrf.mxu0
  %v5882 = vadd.f32 %v80, %v5881
  %v5883 = vpop.f32.mrf.mxu0
  %5884 = vdwg.mxu0
  %5885 = vmatpush.bf16.msra.mxu0 %v210
  %5886 = vmatpush.bf16.msra.mxu0 %v209
  %5887 = vmatpush.bf16.msra.mxu0 %v208
  %5888 = vmatpush.bf16.msra.mxu0 %v207
  %5889 = vmatpush.bf16.msra.mxu0 %v206
  %5890 = vmatpush.bf16.msra.mxu0 %v205
  %5891 = vmatpush.bf16.msra.mxu0 %v204
  %5892 = vmatpush.bf16.msra.mxu0 %v203
  %5893 = vmatmul.bf16.gmra.mxu0 %v5863
  %v5894 = vpop.f32.mrf.mxu0
  %v5895 = vadd.f32 %v5882, %v5894
  %v5896 = vpop.f32.mrf.mxu0
  %5897 = vdwg.mxu0
  %5898 = vmatpush.bf16.msra.mxu0 %v218
  %5899 = vmatpush.bf16.msra.mxu0 %v217
  %5900 = vmatpush.bf16.msra.mxu0 %v216
  %5901 = vmatpush.bf16.msra.mxu0 %v215
  %5902 = vmatpush.bf16.msra.mxu0 %v214
  %5903 = vmatpush.bf16.msra.mxu0 %v213
  %5904 = vmatpush.bf16.msra.mxu0 %v212
  %5905 = vmatpush.bf16.msra.mxu0 %v211
  %5906 = vmatmul.bf16.gmra.mxu0 %v5864
  %v5907 = vpop.f32.mrf.mxu0
  %v5908 = vadd.f32 %v5895, %v5907
  %v5909 = vpop.f32.mrf.mxu0
  %5910 = vdwg.mxu0
  %5911 = vmatpush.bf16.msra.mxu0 0
  %5912 = vmatpush.bf16.msra.mxu0 0
  %5913 = vmatpush.bf16.msra.mxu0 0
  %5914 = vmatpush.bf16.msra.mxu0 0
  %5915 = vmatpush.bf16.msra.mxu0 0
  %5916 = vmatpush.bf16.msra.mxu0 0
  %5917 = vmatpush.bf16.msra.mxu0 0
  %5918 = vmatpush.bf16.msra.mxu0 %v219
  %5919 = vmatmul.bf16.gmra.mxu0 %v5870
  %v5920 = vpop.f32.mrf.mxu0
  %v5921 = vadd.f32 %v5908, %v5920
  %v5922 = vpop.f32.mrf.mxu0
  %5923 = vdwg.mxu0
  %v5924 = vmax.f32 %v5921, 0.0
  %v5925 = vpack.c.bf16 %v5924, %v5924
  %s5926 = scalar_lea.vmem %s3, 2368
  %v5927 = vld [vmem:[%s5926] sm:$0xf]
  %v5928 = vld [vmem:[%s5926 + $0x4] sm:$0xf]
  %v5929 = vld [vmem:[%s5926 + $0x8] sm:$0xf]
  %v5930 = vld [vmem:[%s5926 + $0xc] sm:$0xf]
  %v5931 = vld [vmem:[%s5926 + $0x10] sm:$0xf]
  %v5932 = vld [vmem:[%s5926 + $0x14] sm:$0xf]
  %v5933 = vld [vmem:[%s5926 + $0x18] sm:$0xf]
  %v5934 = vld [vmem:[%s5926 + $0x1c] sm:$0xf]
  %v5935 = vld [vmem:[%s5926 + $0x20] sm:$0xf]
  %v5936 = vld [vmem:[%s5926 + $0x24] sm:$0xf]
  %v5937 = vld [vmem:[%s5926 + $0x28] sm:$0xf]
  %v5938 = vld [vmem:[%s5926 + $0x2c] sm:$0xf]
  %v5939 = vld [vmem:[%s5926 + $0x30] sm:$0xf]
  %v5940 = vld [vmem:[%s5926 + $0x34] sm:$0xf]
  %v5941 = vld [vmem:[%s5926 + $0x38] sm:$0xf]
  %v5942 = vld [vmem:[%s5926 + $0x3c] sm:$0xf]
  %v5959 = vunpack.c.l.b16 %v5927
  %v5960 = vunpack.c.l.b16 %v5928
  %v5961 = vunpack.c.l.b16 %v5929
  %v5962 = vunpack.c.l.b16 %v5930
  %v5963 = vunpack.c.l.b16 %v5931
  %v5964 = vunpack.c.l.b16 %v5932
  %v5965 = vunpack.c.l.b16 %v5933
  %v5966 = vunpack.c.l.b16 %v5934
  %v5967 = vunpack.c.l.b16 %v5935
  %v5968 = vunpack.c.l.b16 %v5936
  %v5969 = vunpack.c.l.b16 %v5937
  %v5970 = vunpack.c.l.b16 %v5938
  %v5971 = vunpack.c.l.b16 %v5939
  %v5972 = vunpack.c.l.b16 %v5940
  %v5973 = vunpack.c.l.b16 %v5941
  %v5974 = vunpack.c.l.b16 %v5942
  %v5975 = vpack.c.b16 %v5960, %v5959
  %v5976 = vpack.c.b16 %v5962, %v5961
  %v5977 = vpack.c.b16 %v5964, %v5963
  %v5978 = vpack.c.b16 %v5966, %v5965
  %v5979 = vpack.c.b16 %v5968, %v5967
  %v5980 = vpack.c.b16 %v5970, %v5969
  %v5981 = vpack.c.b16 %v5972, %v5971
  %v5982 = vpack.c.b16 %v5974, %v5973
  %5991 = vmatpush.bf16.msra.mxu0 %v5982
  %5992 = vmatpush.bf16.msra.mxu0 %v5981
  %5993 = vmatpush.bf16.msra.mxu0 %v5980
  %5994 = vmatpush.bf16.msra.mxu0 %v5979
  %5995 = vmatpush.bf16.msra.mxu0 %v5978
  %5996 = vmatpush.bf16.msra.mxu0 %v5977
  %5997 = vmatpush.bf16.msra.mxu0 %v5976
  %5998 = vmatpush.bf16.msra.mxu0 %v5975
  %5999 = vmatmul.bf16.gmra.mxu0 %v5925
  %v6000 = vpop.f32.mrf.mxu0
  %v6001 = vadd.f32 0.0, %v6000
  %v6002 = vpop.f32.mrf.mxu0
  %6003 = vdwg.mxu0
  %v6004 = vadd.f32 %v5852, %v6001
  %s6005 = scalar_lea.vmem %s0, 608
  %v6006 = vld [vmem:[%s6005] sm:$0xff]
  %v6007 = vld [vmem:[%s6005 + $0x8] sm:$0xff]
  %v6010 = vunpack.c.l.b16 %v6006
  %v6011 = vunpack.c.h.b16 %v6006
  %v6012 = vunpack.c.l.b16 %v6007
  %v6013 = vunpack.c.h.b16 %v6007
  %v6014 = vpack.c.b16 %v6010, %v6010
  %v6015 = vpack.c.b16 %v6011, %v6011
  %v6016 = vpack.c.b16 %v6012, %v6012
  %v6017 = vpack.c.b16 %v6013, %v6013
  %v6022 = vsel %vm245, %v6017, 0
  %6024 = vmatpush.bf16.msra.mxu0 %v202
  %6025 = vmatpush.bf16.msra.mxu0 %v201
  %6026 = vmatpush.bf16.msra.mxu0 %v200
  %6027 = vmatpush.bf16.msra.mxu0 %v199
  %6028 = vmatpush.bf16.msra.mxu0 %v198
  %6029 = vmatpush.bf16.msra.mxu0 %v197
  %6030 = vmatpush.bf16.msra.mxu0 %v196
  %6031 = vmatpush.bf16.msra.mxu0 %v195
  %6032 = vmatmul.bf16.gmra.mxu0 %v6014
  %v6033 = vpop.f32.mrf.mxu0
  %v6034 = vadd.f32 %v80, %v6033
  %v6035 = vpop.f32.mrf.mxu0
  %6036 = vdwg.mxu0
  %6037 = vmatpush.bf16.msra.mxu0 %v210
  %6038 = vmatpush.bf16.msra.mxu0 %v209
  %6039 = vmatpush.bf16.msra.mxu0 %v208
  %6040 = vmatpush.bf16.msra.mxu0 %v207
  %6041 = vmatpush.bf16.msra.mxu0 %v206
  %6042 = vmatpush.bf16.msra.mxu0 %v205
  %6043 = vmatpush.bf16.msra.mxu0 %v204
  %6044 = vmatpush.bf16.msra.mxu0 %v203
  %6045 = vmatmul.bf16.gmra.mxu0 %v6015
  %v6046 = vpop.f32.mrf.mxu0
  %v6047 = vadd.f32 %v6034, %v6046
  %v6048 = vpop.f32.mrf.mxu0
  %6049 = vdwg.mxu0
  %6050 = vmatpush.bf16.msra.mxu0 %v218
  %6051 = vmatpush.bf16.msra.mxu0 %v217
  %6052 = vmatpush.bf16.msra.mxu0 %v216
  %6053 = vmatpush.bf16.msra.mxu0 %v215
  %6054 = vmatpush.bf16.msra.mxu0 %v214
  %6055 = vmatpush.bf16.msra.mxu0 %v213
  %6056 = vmatpush.bf16.msra.mxu0 %v212
  %6057 = vmatpush.bf16.msra.mxu0 %v211
  %6058 = vmatmul.bf16.gmra.mxu0 %v6016
  %v6059 = vpop.f32.mrf.mxu0
  %v6060 = vadd.f32 %v6047, %v6059
  %v6061 = vpop.f32.mrf.mxu0
  %6062 = vdwg.mxu0
  %6063 = vmatpush.bf16.msra.mxu0 0
  %6064 = vmatpush.bf16.msra.mxu0 0
  %6065 = vmatpush.bf16.msra.mxu0 0
  %6066 = vmatpush.bf16.msra.mxu0 0
  %6067 = vmatpush.bf16.msra.mxu0 0
  %6068 = vmatpush.bf16.msra.mxu0 0
  %6069 = vmatpush.bf16.msra.mxu0 0
  %6070 = vmatpush.bf16.msra.mxu0 %v219
  %6071 = vmatmul.bf16.gmra.mxu0 %v6022
  %v6072 = vpop.f32.mrf.mxu0
  %v6073 = vadd.f32 %v6060, %v6072
  %v6074 = vpop.f32.mrf.mxu0
  %6075 = vdwg.mxu0
  %v6076 = vmax.f32 %v6073, 0.0
  %v6077 = vpack.c.bf16 %v6076, %v6076
  %s6078 = scalar_lea.vmem %s3, 2432
  %v6079 = vld [vmem:[%s6078] sm:$0xf]
  %v6080 = vld [vmem:[%s6078 + $0x4] sm:$0xf]
  %v6081 = vld [vmem:[%s6078 + $0x8] sm:$0xf]
  %v6082 = vld [vmem:[%s6078 + $0xc] sm:$0xf]
  %v6083 = vld [vmem:[%s6078 + $0x10] sm:$0xf]
  %v6084 = vld [vmem:[%s6078 + $0x14] sm:$0xf]
  %v6085 = vld [vmem:[%s6078 + $0x18] sm:$0xf]
  %v6086 = vld [vmem:[%s6078 + $0x1c] sm:$0xf]
  %v6087 = vld [vmem:[%s6078 + $0x20] sm:$0xf]
  %v6088 = vld [vmem:[%s6078 + $0x24] sm:$0xf]
  %v6089 = vld [vmem:[%s6078 + $0x28] sm:$0xf]
  %v6090 = vld [vmem:[%s6078 + $0x2c] sm:$0xf]
  %v6091 = vld [vmem:[%s6078 + $0x30] sm:$0xf]
  %v6092 = vld [vmem:[%s6078 + $0x34] sm:$0xf]
  %v6093 = vld [vmem:[%s6078 + $0x38] sm:$0xf]
  %v6094 = vld [vmem:[%s6078 + $0x3c] sm:$0xf]
  %v6111 = vunpack.c.l.b16 %v6079
  %v6112 = vunpack.c.l.b16 %v6080
  %v6113 = vunpack.c.l.b16 %v6081
  %v6114 = vunpack.c.l.b16 %v6082
  %v6115 = vunpack.c.l.b16 %v6083
  %v6116 = vunpack.c.l.b16 %v6084
  %v6117 = vunpack.c.l.b16 %v6085
  %v6118 = vunpack.c.l.b16 %v6086
  %v6119 = vunpack.c.l.b16 %v6087
  %v6120 = vunpack.c.l.b16 %v6088
  %v6121 = vunpack.c.l.b16 %v6089
  %v6122 = vunpack.c.l.b16 %v6090
  %v6123 = vunpack.c.l.b16 %v6091
  %v6124 = vunpack.c.l.b16 %v6092
  %v6125 = vunpack.c.l.b16 %v6093
  %v6126 = vunpack.c.l.b16 %v6094
  %v6127 = vpack.c.b16 %v6112, %v6111
  %v6128 = vpack.c.b16 %v6114, %v6113
  %v6129 = vpack.c.b16 %v6116, %v6115
  %v6130 = vpack.c.b16 %v6118, %v6117
  %v6131 = vpack.c.b16 %v6120, %v6119
  %v6132 = vpack.c.b16 %v6122, %v6121
  %v6133 = vpack.c.b16 %v6124, %v6123
  %v6134 = vpack.c.b16 %v6126, %v6125
  %6143 = vmatpush.bf16.msra.mxu0 %v6134
  %6144 = vmatpush.bf16.msra.mxu0 %v6133
  %6145 = vmatpush.bf16.msra.mxu0 %v6132
  %6146 = vmatpush.bf16.msra.mxu0 %v6131
  %6147 = vmatpush.bf16.msra.mxu0 %v6130
  %6148 = vmatpush.bf16.msra.mxu0 %v6129
  %6149 = vmatpush.bf16.msra.mxu0 %v6128
  %6150 = vmatpush.bf16.msra.mxu0 %v6127
  %6151 = vmatmul.bf16.gmra.mxu0 %v6077
  %v6152 = vpop.f32.mrf.mxu0
  %v6153 = vadd.f32 0.0, %v6152
  %v6154 = vpop.f32.mrf.mxu0
  %6155 = vdwg.mxu0
  %v6156 = vadd.f32 %v6004, %v6153
  %s6157 = scalar_lea.vmem %s0, 624
  %v6158 = vld [vmem:[%s6157] sm:$0xff]
  %v6159 = vld [vmem:[%s6157 + $0x8] sm:$0xff]
  %v6162 = vunpack.c.l.b16 %v6158
  %v6163 = vunpack.c.h.b16 %v6158
  %v6164 = vunpack.c.l.b16 %v6159
  %v6165 = vunpack.c.h.b16 %v6159
  %v6166 = vpack.c.b16 %v6162, %v6162
  %v6167 = vpack.c.b16 %v6163, %v6163
  %v6168 = vpack.c.b16 %v6164, %v6164
  %v6169 = vpack.c.b16 %v6165, %v6165
  %v6174 = vsel %vm245, %v6169, 0
  %6176 = vmatpush.bf16.msra.mxu0 %v202
  %6177 = vmatpush.bf16.msra.mxu0 %v201
  %6178 = vmatpush.bf16.msra.mxu0 %v200
  %6179 = vmatpush.bf16.msra.mxu0 %v199
  %6180 = vmatpush.bf16.msra.mxu0 %v198
  %6181 = vmatpush.bf16.msra.mxu0 %v197
  %6182 = vmatpush.bf16.msra.mxu0 %v196
  %6183 = vmatpush.bf16.msra.mxu0 %v195
  %6184 = vmatmul.bf16.gmra.mxu0 %v6166
  %v6185 = vpop.f32.mrf.mxu0
  %v6186 = vadd.f32 %v80, %v6185
  %v6187 = vpop.f32.mrf.mxu0
  %6188 = vdwg.mxu0
  %6189 = vmatpush.bf16.msra.mxu0 %v210
  %6190 = vmatpush.bf16.msra.mxu0 %v209
  %6191 = vmatpush.bf16.msra.mxu0 %v208
  %6192 = vmatpush.bf16.msra.mxu0 %v207
  %6193 = vmatpush.bf16.msra.mxu0 %v206
  %6194 = vmatpush.bf16.msra.mxu0 %v205
  %6195 = vmatpush.bf16.msra.mxu0 %v204
  %6196 = vmatpush.bf16.msra.mxu0 %v203
  %6197 = vmatmul.bf16.gmra.mxu0 %v6167
  %v6198 = vpop.f32.mrf.mxu0
  %v6199 = vadd.f32 %v6186, %v6198
  %v6200 = vpop.f32.mrf.mxu0
  %6201 = vdwg.mxu0
  %6202 = vmatpush.bf16.msra.mxu0 %v218
  %6203 = vmatpush.bf16.msra.mxu0 %v217
  %6204 = vmatpush.bf16.msra.mxu0 %v216
  %6205 = vmatpush.bf16.msra.mxu0 %v215
  %6206 = vmatpush.bf16.msra.mxu0 %v214
  %6207 = vmatpush.bf16.msra.mxu0 %v213
  %6208 = vmatpush.bf16.msra.mxu0 %v212
  %6209 = vmatpush.bf16.msra.mxu0 %v211
  %6210 = vmatmul.bf16.gmra.mxu0 %v6168
  %v6211 = vpop.f32.mrf.mxu0
  %v6212 = vadd.f32 %v6199, %v6211
  %v6213 = vpop.f32.mrf.mxu0
  %6214 = vdwg.mxu0
  %6215 = vmatpush.bf16.msra.mxu0 0
  %6216 = vmatpush.bf16.msra.mxu0 0
  %6217 = vmatpush.bf16.msra.mxu0 0
  %6218 = vmatpush.bf16.msra.mxu0 0
  %6219 = vmatpush.bf16.msra.mxu0 0
  %6220 = vmatpush.bf16.msra.mxu0 0
  %6221 = vmatpush.bf16.msra.mxu0 0
  %6222 = vmatpush.bf16.msra.mxu0 %v219
  %6223 = vmatmul.bf16.gmra.mxu0 %v6174
  %v6224 = vpop.f32.mrf.mxu0
  %v6225 = vadd.f32 %v6212, %v6224
  %v6226 = vpop.f32.mrf.mxu0
  %6227 = vdwg.mxu0
  %v6228 = vmax.f32 %v6225, 0.0
  %v6229 = vpack.c.bf16 %v6228, %v6228
  %s6230 = scalar_lea.vmem %s3, 2496
  %v6231 = vld [vmem:[%s6230] sm:$0xf]
  %v6232 = vld [vmem:[%s6230 + $0x4] sm:$0xf]
  %v6233 = vld [vmem:[%s6230 + $0x8] sm:$0xf]
  %v6234 = vld [vmem:[%s6230 + $0xc] sm:$0xf]
  %v6235 = vld [vmem:[%s6230 + $0x10] sm:$0xf]
  %v6236 = vld [vmem:[%s6230 + $0x14] sm:$0xf]
  %v6237 = vld [vmem:[%s6230 + $0x18] sm:$0xf]
  %v6238 = vld [vmem:[%s6230 + $0x1c] sm:$0xf]
  %v6239 = vld [vmem:[%s6230 + $0x20] sm:$0xf]
  %v6240 = vld [vmem:[%s6230 + $0x24] sm:$0xf]
  %v6241 = vld [vmem:[%s6230 + $0x28] sm:$0xf]
  %v6242 = vld [vmem:[%s6230 + $0x2c] sm:$0xf]
  %v6243 = vld [vmem:[%s6230 + $0x30] sm:$0xf]
  %v6244 = vld [vmem:[%s6230 + $0x34] sm:$0xf]
  %v6245 = vld [vmem:[%s6230 + $0x38] sm:$0xf]
  %v6246 = vld [vmem:[%s6230 + $0x3c] sm:$0xf]
  %v6263 = vunpack.c.l.b16 %v6231
  %v6264 = vunpack.c.l.b16 %v6232
  %v6265 = vunpack.c.l.b16 %v6233
  %v6266 = vunpack.c.l.b16 %v6234
  %v6267 = vunpack.c.l.b16 %v6235
  %v6268 = vunpack.c.l.b16 %v6236
  %v6269 = vunpack.c.l.b16 %v6237
  %v6270 = vunpack.c.l.b16 %v6238
  %v6271 = vunpack.c.l.b16 %v6239
  %v6272 = vunpack.c.l.b16 %v6240
  %v6273 = vunpack.c.l.b16 %v6241
  %v6274 = vunpack.c.l.b16 %v6242
  %v6275 = vunpack.c.l.b16 %v6243
  %v6276 = vunpack.c.l.b16 %v6244
  %v6277 = vunpack.c.l.b16 %v6245
  %v6278 = vunpack.c.l.b16 %v6246
  %v6279 = vpack.c.b16 %v6264, %v6263
  %v6280 = vpack.c.b16 %v6266, %v6265
  %v6281 = vpack.c.b16 %v6268, %v6267
  %v6282 = vpack.c.b16 %v6270, %v6269
  %v6283 = vpack.c.b16 %v6272, %v6271
  %v6284 = vpack.c.b16 %v6274, %v6273
  %v6285 = vpack.c.b16 %v6276, %v6275
  %v6286 = vpack.c.b16 %v6278, %v6277
  %6295 = vmatpush.bf16.msra.mxu0 %v6286
  %6296 = vmatpush.bf16.msra.mxu0 %v6285
  %6297 = vmatpush.bf16.msra.mxu0 %v6284
  %6298 = vmatpush.bf16.msra.mxu0 %v6283
  %6299 = vmatpush.bf16.msra.mxu0 %v6282
  %6300 = vmatpush.bf16.msra.mxu0 %v6281
  %6301 = vmatpush.bf16.msra.mxu0 %v6280
  %6302 = vmatpush.bf16.msra.mxu0 %v6279
  %6303 = vmatmul.bf16.gmra.mxu0 %v6229
  %v6304 = vpop.f32.mrf.mxu0
  %v6305 = vadd.f32 0.0, %v6304
  %v6306 = vpop.f32.mrf.mxu0
  %6307 = vdwg.mxu0
  %v6308 = vadd.f32 %v6156, %v6305
  %s6309 = scalar_lea.vmem %s0, 640
  %v6310 = vld [vmem:[%s6309] sm:$0xff]
  %v6311 = vld [vmem:[%s6309 + $0x8] sm:$0xff]
  %v6314 = vunpack.c.l.b16 %v6310
  %v6315 = vunpack.c.h.b16 %v6310
  %v6316 = vunpack.c.l.b16 %v6311
  %v6317 = vunpack.c.h.b16 %v6311
  %v6318 = vpack.c.b16 %v6314, %v6314
  %v6319 = vpack.c.b16 %v6315, %v6315
  %v6320 = vpack.c.b16 %v6316, %v6316
  %v6321 = vpack.c.b16 %v6317, %v6317
  %v6326 = vsel %vm245, %v6321, 0
  %6328 = vmatpush.bf16.msra.mxu0 %v202
  %6329 = vmatpush.bf16.msra.mxu0 %v201
  %6330 = vmatpush.bf16.msra.mxu0 %v200
  %6331 = vmatpush.bf16.msra.mxu0 %v199
  %6332 = vmatpush.bf16.msra.mxu0 %v198
  %6333 = vmatpush.bf16.msra.mxu0 %v197
  %6334 = vmatpush.bf16.msra.mxu0 %v196
  %6335 = vmatpush.bf16.msra.mxu0 %v195
  %6336 = vmatmul.bf16.gmra.mxu0 %v6318
  %v6337 = vpop.f32.mrf.mxu0
  %v6338 = vadd.f32 %v80, %v6337
  %v6339 = vpop.f32.mrf.mxu0
  %6340 = vdwg.mxu0
  %6341 = vmatpush.bf16.msra.mxu0 %v210
  %6342 = vmatpush.bf16.msra.mxu0 %v209
  %6343 = vmatpush.bf16.msra.mxu0 %v208
  %6344 = vmatpush.bf16.msra.mxu0 %v207
  %6345 = vmatpush.bf16.msra.mxu0 %v206
  %6346 = vmatpush.bf16.msra.mxu0 %v205
  %6347 = vmatpush.bf16.msra.mxu0 %v204
  %6348 = vmatpush.bf16.msra.mxu0 %v203
  %6349 = vmatmul.bf16.gmra.mxu0 %v6319
  %v6350 = vpop.f32.mrf.mxu0
  %v6351 = vadd.f32 %v6338, %v6350
  %v6352 = vpop.f32.mrf.mxu0
  %6353 = vdwg.mxu0
  %6354 = vmatpush.bf16.msra.mxu0 %v218
  %6355 = vmatpush.bf16.msra.mxu0 %v217
  %6356 = vmatpush.bf16.msra.mxu0 %v216
  %6357 = vmatpush.bf16.msra.mxu0 %v215
  %6358 = vmatpush.bf16.msra.mxu0 %v214
  %6359 = vmatpush.bf16.msra.mxu0 %v213
  %6360 = vmatpush.bf16.msra.mxu0 %v212
  %6361 = vmatpush.bf16.msra.mxu0 %v211
  %6362 = vmatmul.bf16.gmra.mxu0 %v6320
  %v6363 = vpop.f32.mrf.mxu0
  %v6364 = vadd.f32 %v6351, %v6363
  %v6365 = vpop.f32.mrf.mxu0
  %6366 = vdwg.mxu0
  %6367 = vmatpush.bf16.msra.mxu0 0
  %6368 = vmatpush.bf16.msra.mxu0 0
  %6369 = vmatpush.bf16.msra.mxu0 0
  %6370 = vmatpush.bf16.msra.mxu0 0
  %6371 = vmatpush.bf16.msra.mxu0 0
  %6372 = vmatpush.bf16.msra.mxu0 0
  %6373 = vmatpush.bf16.msra.mxu0 0
  %6374 = vmatpush.bf16.msra.mxu0 %v219
  %6375 = vmatmul.bf16.gmra.mxu0 %v6326
  %v6376 = vpop.f32.mrf.mxu0
  %v6377 = vadd.f32 %v6364, %v6376
  %v6378 = vpop.f32.mrf.mxu0
  %6379 = vdwg.mxu0
  %v6380 = vmax.f32 %v6377, 0.0
  %v6381 = vpack.c.bf16 %v6380, %v6380
  %s6382 = scalar_lea.vmem %s3, 2560
  %v6383 = vld [vmem:[%s6382] sm:$0xf]
  %v6384 = vld [vmem:[%s6382 + $0x4] sm:$0xf]
  %v6385 = vld [vmem:[%s6382 + $0x8] sm:$0xf]
  %v6386 = vld [vmem:[%s6382 + $0xc] sm:$0xf]
  %v6387 = vld [vmem:[%s6382 + $0x10] sm:$0xf]
  %v6388 = vld [vmem:[%s6382 + $0x14] sm:$0xf]
  %v6389 = vld [vmem:[%s6382 + $0x18] sm:$0xf]
  %v6390 = vld [vmem:[%s6382 + $0x1c] sm:$0xf]
  %v6391 = vld [vmem:[%s6382 + $0x20] sm:$0xf]
  %v6392 = vld [vmem:[%s6382 + $0x24] sm:$0xf]
  %v6393 = vld [vmem:[%s6382 + $0x28] sm:$0xf]
  %v6394 = vld [vmem:[%s6382 + $0x2c] sm:$0xf]
  %v6395 = vld [vmem:[%s6382 + $0x30] sm:$0xf]
  %v6396 = vld [vmem:[%s6382 + $0x34] sm:$0xf]
  %v6397 = vld [vmem:[%s6382 + $0x38] sm:$0xf]
  %v6398 = vld [vmem:[%s6382 + $0x3c] sm:$0xf]
  %v6415 = vunpack.c.l.b16 %v6383
  %v6416 = vunpack.c.l.b16 %v6384
  %v6417 = vunpack.c.l.b16 %v6385
  %v6418 = vunpack.c.l.b16 %v6386
  %v6419 = vunpack.c.l.b16 %v6387
  %v6420 = vunpack.c.l.b16 %v6388
  %v6421 = vunpack.c.l.b16 %v6389
  %v6422 = vunpack.c.l.b16 %v6390
  %v6423 = vunpack.c.l.b16 %v6391
  %v6424 = vunpack.c.l.b16 %v6392
  %v6425 = vunpack.c.l.b16 %v6393
  %v6426 = vunpack.c.l.b16 %v6394
  %v6427 = vunpack.c.l.b16 %v6395
  %v6428 = vunpack.c.l.b16 %v6396
  %v6429 = vunpack.c.l.b16 %v6397
  %v6430 = vunpack.c.l.b16 %v6398
  %v6431 = vpack.c.b16 %v6416, %v6415
  %v6432 = vpack.c.b16 %v6418, %v6417
  %v6433 = vpack.c.b16 %v6420, %v6419
  %v6434 = vpack.c.b16 %v6422, %v6421
  %v6435 = vpack.c.b16 %v6424, %v6423
  %v6436 = vpack.c.b16 %v6426, %v6425
  %v6437 = vpack.c.b16 %v6428, %v6427
  %v6438 = vpack.c.b16 %v6430, %v6429
  %6447 = vmatpush.bf16.msra.mxu0 %v6438
  %6448 = vmatpush.bf16.msra.mxu0 %v6437
  %6449 = vmatpush.bf16.msra.mxu0 %v6436
  %6450 = vmatpush.bf16.msra.mxu0 %v6435
  %6451 = vmatpush.bf16.msra.mxu0 %v6434
  %6452 = vmatpush.bf16.msra.mxu0 %v6433
  %6453 = vmatpush.bf16.msra.mxu0 %v6432
  %6454 = vmatpush.bf16.msra.mxu0 %v6431
  %6455 = vmatmul.bf16.gmra.mxu0 %v6381
  %v6456 = vpop.f32.mrf.mxu0
  %v6457 = vadd.f32 0.0, %v6456
  %v6458 = vpop.f32.mrf.mxu0
  %6459 = vdwg.mxu0
  %v6460 = vadd.f32 %v6308, %v6457
  %s6461 = scalar_lea.vmem %s0, 656
  %v6462 = vld [vmem:[%s6461] sm:$0xff]
  %v6463 = vld [vmem:[%s6461 + $0x8] sm:$0xff]
  %v6466 = vunpack.c.l.b16 %v6462
  %v6467 = vunpack.c.h.b16 %v6462
  %v6468 = vunpack.c.l.b16 %v6463
  %v6469 = vunpack.c.h.b16 %v6463
  %v6470 = vpack.c.b16 %v6466, %v6466
  %v6471 = vpack.c.b16 %v6467, %v6467
  %v6472 = vpack.c.b16 %v6468, %v6468
  %v6473 = vpack.c.b16 %v6469, %v6469
  %v6478 = vsel %vm245, %v6473, 0
  %6480 = vmatpush.bf16.msra.mxu0 %v202
  %6481 = vmatpush.bf16.msra.mxu0 %v201
  %6482 = vmatpush.bf16.msra.mxu0 %v200
  %6483 = vmatpush.bf16.msra.mxu0 %v199
  %6484 = vmatpush.bf16.msra.mxu0 %v198
  %6485 = vmatpush.bf16.msra.mxu0 %v197
  %6486 = vmatpush.bf16.msra.mxu0 %v196
  %6487 = vmatpush.bf16.msra.mxu0 %v195
  %6488 = vmatmul.bf16.gmra.mxu0 %v6470
  %v6489 = vpop.f32.mrf.mxu0
  %v6490 = vadd.f32 %v80, %v6489
  %v6491 = vpop.f32.mrf.mxu0
  %6492 = vdwg.mxu0
  %6493 = vmatpush.bf16.msra.mxu0 %v210
  %6494 = vmatpush.bf16.msra.mxu0 %v209
  %6495 = vmatpush.bf16.msra.mxu0 %v208
  %6496 = vmatpush.bf16.msra.mxu0 %v207
  %6497 = vmatpush.bf16.msra.mxu0 %v206
  %6498 = vmatpush.bf16.msra.mxu0 %v205
  %6499 = vmatpush.bf16.msra.mxu0 %v204
  %6500 = vmatpush.bf16.msra.mxu0 %v203
  %6501 = vmatmul.bf16.gmra.mxu0 %v6471
  %v6502 = vpop.f32.mrf.mxu0
  %v6503 = vadd.f32 %v6490, %v6502
  %v6504 = vpop.f32.mrf.mxu0
  %6505 = vdwg.mxu0
  %6506 = vmatpush.bf16.msra.mxu0 %v218
  %6507 = vmatpush.bf16.msra.mxu0 %v217
  %6508 = vmatpush.bf16.msra.mxu0 %v216
  %6509 = vmatpush.bf16.msra.mxu0 %v215
  %6510 = vmatpush.bf16.msra.mxu0 %v214
  %6511 = vmatpush.bf16.msra.mxu0 %v213
  %6512 = vmatpush.bf16.msra.mxu0 %v212
  %6513 = vmatpush.bf16.msra.mxu0 %v211
  %6514 = vmatmul.bf16.gmra.mxu0 %v6472
  %v6515 = vpop.f32.mrf.mxu0
  %v6516 = vadd.f32 %v6503, %v6515
  %v6517 = vpop.f32.mrf.mxu0
  %6518 = vdwg.mxu0
  %6519 = vmatpush.bf16.msra.mxu0 0
  %6520 = vmatpush.bf16.msra.mxu0 0
  %6521 = vmatpush.bf16.msra.mxu0 0
  %6522 = vmatpush.bf16.msra.mxu0 0
  %6523 = vmatpush.bf16.msra.mxu0 0
  %6524 = vmatpush.bf16.msra.mxu0 0
  %6525 = vmatpush.bf16.msra.mxu0 0
  %6526 = vmatpush.bf16.msra.mxu0 %v219
  %6527 = vmatmul.bf16.gmra.mxu0 %v6478
  %v6528 = vpop.f32.mrf.mxu0
  %v6529 = vadd.f32 %v6516, %v6528
  %v6530 = vpop.f32.mrf.mxu0
  %6531 = vdwg.mxu0
  %v6532 = vmax.f32 %v6529, 0.0
  %v6533 = vpack.c.bf16 %v6532, %v6532
  %s6534 = scalar_lea.vmem %s3, 2624
  %v6535 = vld [vmem:[%s6534] sm:$0xf]
  %v6536 = vld [vmem:[%s6534 + $0x4] sm:$0xf]
  %v6537 = vld [vmem:[%s6534 + $0x8] sm:$0xf]
  %v6538 = vld [vmem:[%s6534 + $0xc] sm:$0xf]
  %v6539 = vld [vmem:[%s6534 + $0x10] sm:$0xf]
  %v6540 = vld [vmem:[%s6534 + $0x14] sm:$0xf]
  %v6541 = vld [vmem:[%s6534 + $0x18] sm:$0xf]
  %v6542 = vld [vmem:[%s6534 + $0x1c] sm:$0xf]
  %v6543 = vld [vmem:[%s6534 + $0x20] sm:$0xf]
  %v6544 = vld [vmem:[%s6534 + $0x24] sm:$0xf]
  %v6545 = vld [vmem:[%s6534 + $0x28] sm:$0xf]
  %v6546 = vld [vmem:[%s6534 + $0x2c] sm:$0xf]
  %v6547 = vld [vmem:[%s6534 + $0x30] sm:$0xf]
  %v6548 = vld [vmem:[%s6534 + $0x34] sm:$0xf]
  %v6549 = vld [vmem:[%s6534 + $0x38] sm:$0xf]
  %v6550 = vld [vmem:[%s6534 + $0x3c] sm:$0xf]
  %v6567 = vunpack.c.l.b16 %v6535
  %v6568 = vunpack.c.l.b16 %v6536
  %v6569 = vunpack.c.l.b16 %v6537
  %v6570 = vunpack.c.l.b16 %v6538
  %v6571 = vunpack.c.l.b16 %v6539
  %v6572 = vunpack.c.l.b16 %v6540
  %v6573 = vunpack.c.l.b16 %v6541
  %v6574 = vunpack.c.l.b16 %v6542
  %v6575 = vunpack.c.l.b16 %v6543
  %v6576 = vunpack.c.l.b16 %v6544
  %v6577 = vunpack.c.l.b16 %v6545
  %v6578 = vunpack.c.l.b16 %v6546
  %v6579 = vunpack.c.l.b16 %v6547
  %v6580 = vunpack.c.l.b16 %v6548
  %v6581 = vunpack.c.l.b16 %v6549
  %v6582 = vunpack.c.l.b16 %v6550
  %v6583 = vpack.c.b16 %v6568, %v6567
  %v6584 = vpack.c.b16 %v6570, %v6569
  %v6585 = vpack.c.b16 %v6572, %v6571
  %v6586 = vpack.c.b16 %v6574, %v6573
  %v6587 = vpack.c.b16 %v6576, %v6575
  %v6588 = vpack.c.b16 %v6578, %v6577
  %v6589 = vpack.c.b16 %v6580, %v6579
  %v6590 = vpack.c.b16 %v6582, %v6581
  %6599 = vmatpush.bf16.msra.mxu0 %v6590
  %6600 = vmatpush.bf16.msra.mxu0 %v6589
  %6601 = vmatpush.bf16.msra.mxu0 %v6588
  %6602 = vmatpush.bf16.msra.mxu0 %v6587
  %6603 = vmatpush.bf16.msra.mxu0 %v6586
  %6604 = vmatpush.bf16.msra.mxu0 %v6585
  %6605 = vmatpush.bf16.msra.mxu0 %v6584
  %6606 = vmatpush.bf16.msra.mxu0 %v6583
  %6607 = vmatmul.bf16.gmra.mxu0 %v6533
  %v6608 = vpop.f32.mrf.mxu0
  %v6609 = vadd.f32 0.0, %v6608
  %v6610 = vpop.f32.mrf.mxu0
  %6611 = vdwg.mxu0
  %v6612 = vadd.f32 %v6460, %v6609
  %s6613 = scalar_lea.vmem %s0, 672
  %v6614 = vld [vmem:[%s6613] sm:$0xff]
  %v6615 = vld [vmem:[%s6613 + $0x8] sm:$0xff]
  %v6618 = vunpack.c.l.b16 %v6614
  %v6619 = vunpack.c.h.b16 %v6614
  %v6620 = vunpack.c.l.b16 %v6615
  %v6621 = vunpack.c.h.b16 %v6615
  %v6622 = vpack.c.b16 %v6618, %v6618
  %v6623 = vpack.c.b16 %v6619, %v6619
  %v6624 = vpack.c.b16 %v6620, %v6620
  %v6625 = vpack.c.b16 %v6621, %v6621
  %v6630 = vsel %vm245, %v6625, 0
  %6632 = vmatpush.bf16.msra.mxu0 %v202
  %6633 = vmatpush.bf16.msra.mxu0 %v201
  %6634 = vmatpush.bf16.msra.mxu0 %v200
  %6635 = vmatpush.bf16.msra.mxu0 %v199
  %6636 = vmatpush.bf16.msra.mxu0 %v198
  %6637 = vmatpush.bf16.msra.mxu0 %v197
  %6638 = vmatpush.bf16.msra.mxu0 %v196
  %6639 = vmatpush.bf16.msra.mxu0 %v195
  %6640 = vmatmul.bf16.gmra.mxu0 %v6622
  %v6641 = vpop.f32.mrf.mxu0
  %v6642 = vadd.f32 %v80, %v6641
  %v6643 = vpop.f32.mrf.mxu0
  %6644 = vdwg.mxu0
  %6645 = vmatpush.bf16.msra.mxu0 %v210
  %6646 = vmatpush.bf16.msra.mxu0 %v209
  %6647 = vmatpush.bf16.msra.mxu0 %v208
  %6648 = vmatpush.bf16.msra.mxu0 %v207
  %6649 = vmatpush.bf16.msra.mxu0 %v206
  %6650 = vmatpush.bf16.msra.mxu0 %v205
  %6651 = vmatpush.bf16.msra.mxu0 %v204
  %6652 = vmatpush.bf16.msra.mxu0 %v203
  %6653 = vmatmul.bf16.gmra.mxu0 %v6623
  %v6654 = vpop.f32.mrf.mxu0
  %v6655 = vadd.f32 %v6642, %v6654
  %v6656 = vpop.f32.mrf.mxu0
  %6657 = vdwg.mxu0
  %6658 = vmatpush.bf16.msra.mxu0 %v218
  %6659 = vmatpush.bf16.msra.mxu0 %v217
  %6660 = vmatpush.bf16.msra.mxu0 %v216
  %6661 = vmatpush.bf16.msra.mxu0 %v215
  %6662 = vmatpush.bf16.msra.mxu0 %v214
  %6663 = vmatpush.bf16.msra.mxu0 %v213
  %6664 = vmatpush.bf16.msra.mxu0 %v212
  %6665 = vmatpush.bf16.msra.mxu0 %v211
  %6666 = vmatmul.bf16.gmra.mxu0 %v6624
  %v6667 = vpop.f32.mrf.mxu0
  %v6668 = vadd.f32 %v6655, %v6667
  %v6669 = vpop.f32.mrf.mxu0
  %6670 = vdwg.mxu0
  %6671 = vmatpush.bf16.msra.mxu0 0
  %6672 = vmatpush.bf16.msra.mxu0 0
  %6673 = vmatpush.bf16.msra.mxu0 0
  %6674 = vmatpush.bf16.msra.mxu0 0
  %6675 = vmatpush.bf16.msra.mxu0 0
  %6676 = vmatpush.bf16.msra.mxu0 0
  %6677 = vmatpush.bf16.msra.mxu0 0
  %6678 = vmatpush.bf16.msra.mxu0 %v219
  %6679 = vmatmul.bf16.gmra.mxu0 %v6630
  %v6680 = vpop.f32.mrf.mxu0
  %v6681 = vadd.f32 %v6668, %v6680
  %v6682 = vpop.f32.mrf.mxu0
  %6683 = vdwg.mxu0
  %v6684 = vmax.f32 %v6681, 0.0
  %v6685 = vpack.c.bf16 %v6684, %v6684
  %s6686 = scalar_lea.vmem %s3, 2688
  %v6687 = vld [vmem:[%s6686] sm:$0xf]
  %v6688 = vld [vmem:[%s6686 + $0x4] sm:$0xf]
  %v6689 = vld [vmem:[%s6686 + $0x8] sm:$0xf]
  %v6690 = vld [vmem:[%s6686 + $0xc] sm:$0xf]
  %v6691 = vld [vmem:[%s6686 + $0x10] sm:$0xf]
  %v6692 = vld [vmem:[%s6686 + $0x14] sm:$0xf]
  %v6693 = vld [vmem:[%s6686 + $0x18] sm:$0xf]
  %v6694 = vld [vmem:[%s6686 + $0x1c] sm:$0xf]
  %v6695 = vld [vmem:[%s6686 + $0x20] sm:$0xf]
  %v6696 = vld [vmem:[%s6686 + $0x24] sm:$0xf]
  %v6697 = vld [vmem:[%s6686 + $0x28] sm:$0xf]
  %v6698 = vld [vmem:[%s6686 + $0x2c] sm:$0xf]
  %v6699 = vld [vmem:[%s6686 + $0x30] sm:$0xf]
  %v6700 = vld [vmem:[%s6686 + $0x34] sm:$0xf]
  %v6701 = vld [vmem:[%s6686 + $0x38] sm:$0xf]
  %v6702 = vld [vmem:[%s6686 + $0x3c] sm:$0xf]
  %v6719 = vunpack.c.l.b16 %v6687
  %v6720 = vunpack.c.l.b16 %v6688
  %v6721 = vunpack.c.l.b16 %v6689
  %v6722 = vunpack.c.l.b16 %v6690
  %v6723 = vunpack.c.l.b16 %v6691
  %v6724 = vunpack.c.l.b16 %v6692
  %v6725 = vunpack.c.l.b16 %v6693
  %v6726 = vunpack.c.l.b16 %v6694
  %v6727 = vunpack.c.l.b16 %v6695
  %v6728 = vunpack.c.l.b16 %v6696
  %v6729 = vunpack.c.l.b16 %v6697
  %v6730 = vunpack.c.l.b16 %v6698
  %v6731 = vunpack.c.l.b16 %v6699
  %v6732 = vunpack.c.l.b16 %v6700
  %v6733 = vunpack.c.l.b16 %v6701
  %v6734 = vunpack.c.l.b16 %v6702
  %v6735 = vpack.c.b16 %v6720, %v6719
  %v6736 = vpack.c.b16 %v6722, %v6721
  %v6737 = vpack.c.b16 %v6724, %v6723
  %v6738 = vpack.c.b16 %v6726, %v6725
  %v6739 = vpack.c.b16 %v6728, %v6727
  %v6740 = vpack.c.b16 %v6730, %v6729
  %v6741 = vpack.c.b16 %v6732, %v6731
  %v6742 = vpack.c.b16 %v6734, %v6733
  %6751 = vmatpush.bf16.msra.mxu0 %v6742
  %6752 = vmatpush.bf16.msra.mxu0 %v6741
  %6753 = vmatpush.bf16.msra.mxu0 %v6740
  %6754 = vmatpush.bf16.msra.mxu0 %v6739
  %6755 = vmatpush.bf16.msra.mxu0 %v6738
  %6756 = vmatpush.bf16.msra.mxu0 %v6737
  %6757 = vmatpush.bf16.msra.mxu0 %v6736
  %6758 = vmatpush.bf16.msra.mxu0 %v6735
  %6759 = vmatmul.bf16.gmra.mxu0 %v6685
  %v6760 = vpop.f32.mrf.mxu0
  %v6761 = vadd.f32 0.0, %v6760
  %v6762 = vpop.f32.mrf.mxu0
  %6763 = vdwg.mxu0
  %v6764 = vadd.f32 %v6612, %v6761
  %s6765 = scalar_lea.vmem %s0, 688
  %v6766 = vld [vmem:[%s6765] sm:$0xff]
  %v6767 = vld [vmem:[%s6765 + $0x8] sm:$0xff]
  %v6770 = vunpack.c.l.b16 %v6766
  %v6771 = vunpack.c.h.b16 %v6766
  %v6772 = vunpack.c.l.b16 %v6767
  %v6773 = vunpack.c.h.b16 %v6767
  %v6774 = vpack.c.b16 %v6770, %v6770
  %v6775 = vpack.c.b16 %v6771, %v6771
  %v6776 = vpack.c.b16 %v6772, %v6772
  %v6777 = vpack.c.b16 %v6773, %v6773
  %v6782 = vsel %vm245, %v6777, 0
  %6784 = vmatpush.bf16.msra.mxu0 %v202
  %6785 = vmatpush.bf16.msra.mxu0 %v201
  %6786 = vmatpush.bf16.msra.mxu0 %v200
  %6787 = vmatpush.bf16.msra.mxu0 %v199
  %6788 = vmatpush.bf16.msra.mxu0 %v198
  %6789 = vmatpush.bf16.msra.mxu0 %v197
  %6790 = vmatpush.bf16.msra.mxu0 %v196
  %6791 = vmatpush.bf16.msra.mxu0 %v195
  %6792 = vmatmul.bf16.gmra.mxu0 %v6774
  %v6793 = vpop.f32.mrf.mxu0
  %v6794 = vadd.f32 %v80, %v6793
  %v6795 = vpop.f32.mrf.mxu0
  %6796 = vdwg.mxu0
  %6797 = vmatpush.bf16.msra.mxu0 %v210
  %6798 = vmatpush.bf16.msra.mxu0 %v209
  %6799 = vmatpush.bf16.msra.mxu0 %v208
  %6800 = vmatpush.bf16.msra.mxu0 %v207
  %6801 = vmatpush.bf16.msra.mxu0 %v206
  %6802 = vmatpush.bf16.msra.mxu0 %v205
  %6803 = vmatpush.bf16.msra.mxu0 %v204
  %6804 = vmatpush.bf16.msra.mxu0 %v203
  %6805 = vmatmul.bf16.gmra.mxu0 %v6775
  %v6806 = vpop.f32.mrf.mxu0
  %v6807 = vadd.f32 %v6794, %v6806
  %v6808 = vpop.f32.mrf.mxu0
  %6809 = vdwg.mxu0
  %6810 = vmatpush.bf16.msra.mxu0 %v218
  %6811 = vmatpush.bf16.msra.mxu0 %v217
  %6812 = vmatpush.bf16.msra.mxu0 %v216
  %6813 = vmatpush.bf16.msra.mxu0 %v215
  %6814 = vmatpush.bf16.msra.mxu0 %v214
  %6815 = vmatpush.bf16.msra.mxu0 %v213
  %6816 = vmatpush.bf16.msra.mxu0 %v212
  %6817 = vmatpush.bf16.msra.mxu0 %v211
  %6818 = vmatmul.bf16.gmra.mxu0 %v6776
  %v6819 = vpop.f32.mrf.mxu0
  %v6820 = vadd.f32 %v6807, %v6819
  %v6821 = vpop.f32.mrf.mxu0
  %6822 = vdwg.mxu0
  %6823 = vmatpush.bf16.msra.mxu0 0
  %6824 = vmatpush.bf16.msra.mxu0 0
  %6825 = vmatpush.bf16.msra.mxu0 0
  %6826 = vmatpush.bf16.msra.mxu0 0
  %6827 = vmatpush.bf16.msra.mxu0 0
  %6828 = vmatpush.bf16.msra.mxu0 0
  %6829 = vmatpush.bf16.msra.mxu0 0
  %6830 = vmatpush.bf16.msra.mxu0 %v219
  %6831 = vmatmul.bf16.gmra.mxu0 %v6782
  %v6832 = vpop.f32.mrf.mxu0
  %v6833 = vadd.f32 %v6820, %v6832
  %v6834 = vpop.f32.mrf.mxu0
  %6835 = vdwg.mxu0
  %v6836 = vmax.f32 %v6833, 0.0
  %v6837 = vpack.c.bf16 %v6836, %v6836
  %s6838 = scalar_lea.vmem %s3, 2752
  %v6839 = vld [vmem:[%s6838] sm:$0xf]
  %v6840 = vld [vmem:[%s6838 + $0x4] sm:$0xf]
  %v6841 = vld [vmem:[%s6838 + $0x8] sm:$0xf]
  %v6842 = vld [vmem:[%s6838 + $0xc] sm:$0xf]
  %v6843 = vld [vmem:[%s6838 + $0x10] sm:$0xf]
  %v6844 = vld [vmem:[%s6838 + $0x14] sm:$0xf]
  %v6845 = vld [vmem:[%s6838 + $0x18] sm:$0xf]
  %v6846 = vld [vmem:[%s6838 + $0x1c] sm:$0xf]
  %v6847 = vld [vmem:[%s6838 + $0x20] sm:$0xf]
  %v6848 = vld [vmem:[%s6838 + $0x24] sm:$0xf]
  %v6849 = vld [vmem:[%s6838 + $0x28] sm:$0xf]
  %v6850 = vld [vmem:[%s6838 + $0x2c] sm:$0xf]
  %v6851 = vld [vmem:[%s6838 + $0x30] sm:$0xf]
  %v6852 = vld [vmem:[%s6838 + $0x34] sm:$0xf]
  %v6853 = vld [vmem:[%s6838 + $0x38] sm:$0xf]
  %v6854 = vld [vmem:[%s6838 + $0x3c] sm:$0xf]
  %v6871 = vunpack.c.l.b16 %v6839
  %v6872 = vunpack.c.l.b16 %v6840
  %v6873 = vunpack.c.l.b16 %v6841
  %v6874 = vunpack.c.l.b16 %v6842
  %v6875 = vunpack.c.l.b16 %v6843
  %v6876 = vunpack.c.l.b16 %v6844
  %v6877 = vunpack.c.l.b16 %v6845
  %v6878 = vunpack.c.l.b16 %v6846
  %v6879 = vunpack.c.l.b16 %v6847
  %v6880 = vunpack.c.l.b16 %v6848
  %v6881 = vunpack.c.l.b16 %v6849
  %v6882 = vunpack.c.l.b16 %v6850
  %v6883 = vunpack.c.l.b16 %v6851
  %v6884 = vunpack.c.l.b16 %v6852
  %v6885 = vunpack.c.l.b16 %v6853
  %v6886 = vunpack.c.l.b16 %v6854
  %v6887 = vpack.c.b16 %v6872, %v6871
  %v6888 = vpack.c.b16 %v6874, %v6873
  %v6889 = vpack.c.b16 %v6876, %v6875
  %v6890 = vpack.c.b16 %v6878, %v6877
  %v6891 = vpack.c.b16 %v6880, %v6879
  %v6892 = vpack.c.b16 %v6882, %v6881
  %v6893 = vpack.c.b16 %v6884, %v6883
  %v6894 = vpack.c.b16 %v6886, %v6885
  %6903 = vmatpush.bf16.msra.mxu0 %v6894
  %6904 = vmatpush.bf16.msra.mxu0 %v6893
  %6905 = vmatpush.bf16.msra.mxu0 %v6892
  %6906 = vmatpush.bf16.msra.mxu0 %v6891
  %6907 = vmatpush.bf16.msra.mxu0 %v6890
  %6908 = vmatpush.bf16.msra.mxu0 %v6889
  %6909 = vmatpush.bf16.msra.mxu0 %v6888
  %6910 = vmatpush.bf16.msra.mxu0 %v6887
  %6911 = vmatmul.bf16.gmra.mxu0 %v6837
  %v6912 = vpop.f32.mrf.mxu0
  %v6913 = vadd.f32 0.0, %v6912
  %v6914 = vpop.f32.mrf.mxu0
  %6915 = vdwg.mxu0
  %v6916 = vadd.f32 %v6764, %v6913
  %s6917 = scalar_lea.vmem %s0, 704
  %v6918 = vld [vmem:[%s6917] sm:$0xff]
  %v6919 = vld [vmem:[%s6917 + $0x8] sm:$0xff]
  %v6922 = vunpack.c.l.b16 %v6918
  %v6923 = vunpack.c.h.b16 %v6918
  %v6924 = vunpack.c.l.b16 %v6919
  %v6925 = vunpack.c.h.b16 %v6919
  %v6926 = vpack.c.b16 %v6922, %v6922
  %v6927 = vpack.c.b16 %v6923, %v6923
  %v6928 = vpack.c.b16 %v6924, %v6924
  %v6929 = vpack.c.b16 %v6925, %v6925
  %v6934 = vsel %vm245, %v6929, 0
  %6936 = vmatpush.bf16.msra.mxu0 %v202
  %6937 = vmatpush.bf16.msra.mxu0 %v201
  %6938 = vmatpush.bf16.msra.mxu0 %v200
  %6939 = vmatpush.bf16.msra.mxu0 %v199
  %6940 = vmatpush.bf16.msra.mxu0 %v198
  %6941 = vmatpush.bf16.msra.mxu0 %v197
  %6942 = vmatpush.bf16.msra.mxu0 %v196
  %6943 = vmatpush.bf16.msra.mxu0 %v195
  %6944 = vmatmul.bf16.gmra.mxu0 %v6926
  %v6945 = vpop.f32.mrf.mxu0
  %v6946 = vadd.f32 %v80, %v6945
  %v6947 = vpop.f32.mrf.mxu0
  %6948 = vdwg.mxu0
  %6949 = vmatpush.bf16.msra.mxu0 %v210
  %6950 = vmatpush.bf16.msra.mxu0 %v209
  %6951 = vmatpush.bf16.msra.mxu0 %v208
  %6952 = vmatpush.bf16.msra.mxu0 %v207
  %6953 = vmatpush.bf16.msra.mxu0 %v206
  %6954 = vmatpush.bf16.msra.mxu0 %v205
  %6955 = vmatpush.bf16.msra.mxu0 %v204
  %6956 = vmatpush.bf16.msra.mxu0 %v203
  %6957 = vmatmul.bf16.gmra.mxu0 %v6927
  %v6958 = vpop.f32.mrf.mxu0
  %v6959 = vadd.f32 %v6946, %v6958
  %v6960 = vpop.f32.mrf.mxu0
  %6961 = vdwg.mxu0
  %6962 = vmatpush.bf16.msra.mxu0 %v218
  %6963 = vmatpush.bf16.msra.mxu0 %v217
  %6964 = vmatpush.bf16.msra.mxu0 %v216
  %6965 = vmatpush.bf16.msra.mxu0 %v215
  %6966 = vmatpush.bf16.msra.mxu0 %v214
  %6967 = vmatpush.bf16.msra.mxu0 %v213
  %6968 = vmatpush.bf16.msra.mxu0 %v212
  %6969 = vmatpush.bf16.msra.mxu0 %v211
  %6970 = vmatmul.bf16.gmra.mxu0 %v6928
  %v6971 = vpop.f32.mrf.mxu0
  %v6972 = vadd.f32 %v6959, %v6971
  %v6973 = vpop.f32.mrf.mxu0
  %6974 = vdwg.mxu0
  %6975 = vmatpush.bf16.msra.mxu0 0
  %6976 = vmatpush.bf16.msra.mxu0 0
  %6977 = vmatpush.bf16.msra.mxu0 0
  %6978 = vmatpush.bf16.msra.mxu0 0
  %6979 = vmatpush.bf16.msra.mxu0 0
  %6980 = vmatpush.bf16.msra.mxu0 0
  %6981 = vmatpush.bf16.msra.mxu0 0
  %6982 = vmatpush.bf16.msra.mxu0 %v219
  %6983 = vmatmul.bf16.gmra.mxu0 %v6934
  %v6984 = vpop.f32.mrf.mxu0
  %v6985 = vadd.f32 %v6972, %v6984
  %v6986 = vpop.f32.mrf.mxu0
  %6987 = vdwg.mxu0
  %v6988 = vmax.f32 %v6985, 0.0
  %v6989 = vpack.c.bf16 %v6988, %v6988
  %s6990 = scalar_lea.vmem %s3, 2816
  %v6991 = vld [vmem:[%s6990] sm:$0xf]
  %v6992 = vld [vmem:[%s6990 + $0x4] sm:$0xf]
  %v6993 = vld [vmem:[%s6990 + $0x8] sm:$0xf]
  %v6994 = vld [vmem:[%s6990 + $0xc] sm:$0xf]
  %v6995 = vld [vmem:[%s6990 + $0x10] sm:$0xf]
  %v6996 = vld [vmem:[%s6990 + $0x14] sm:$0xf]
  %v6997 = vld [vmem:[%s6990 + $0x18] sm:$0xf]
  %v6998 = vld [vmem:[%s6990 + $0x1c] sm:$0xf]
  %v6999 = vld [vmem:[%s6990 + $0x20] sm:$0xf]
  %v7000 = vld [vmem:[%s6990 + $0x24] sm:$0xf]
  %v7001 = vld [vmem:[%s6990 + $0x28] sm:$0xf]
  %v7002 = vld [vmem:[%s6990 + $0x2c] sm:$0xf]
  %v7003 = vld [vmem:[%s6990 + $0x30] sm:$0xf]
  %v7004 = vld [vmem:[%s6990 + $0x34] sm:$0xf]
  %v7005 = vld [vmem:[%s6990 + $0x38] sm:$0xf]
  %v7006 = vld [vmem:[%s6990 + $0x3c] sm:$0xf]
  %v7023 = vunpack.c.l.b16 %v6991
  %v7024 = vunpack.c.l.b16 %v6992
  %v7025 = vunpack.c.l.b16 %v6993
  %v7026 = vunpack.c.l.b16 %v6994
  %v7027 = vunpack.c.l.b16 %v6995
  %v7028 = vunpack.c.l.b16 %v6996
  %v7029 = vunpack.c.l.b16 %v6997
  %v7030 = vunpack.c.l.b16 %v6998
  %v7031 = vunpack.c.l.b16 %v6999
  %v7032 = vunpack.c.l.b16 %v7000
  %v7033 = vunpack.c.l.b16 %v7001
  %v7034 = vunpack.c.l.b16 %v7002
  %v7035 = vunpack.c.l.b16 %v7003
  %v7036 = vunpack.c.l.b16 %v7004
  %v7037 = vunpack.c.l.b16 %v7005
  %v7038 = vunpack.c.l.b16 %v7006
  %v7039 = vpack.c.b16 %v7024, %v7023
  %v7040 = vpack.c.b16 %v7026, %v7025
  %v7041 = vpack.c.b16 %v7028, %v7027
  %v7042 = vpack.c.b16 %v7030, %v7029
  %v7043 = vpack.c.b16 %v7032, %v7031
  %v7044 = vpack.c.b16 %v7034, %v7033
  %v7045 = vpack.c.b16 %v7036, %v7035
  %v7046 = vpack.c.b16 %v7038, %v7037
  %7055 = vmatpush.bf16.msra.mxu0 %v7046
  %7056 = vmatpush.bf16.msra.mxu0 %v7045
  %7057 = vmatpush.bf16.msra.mxu0 %v7044
  %7058 = vmatpush.bf16.msra.mxu0 %v7043
  %7059 = vmatpush.bf16.msra.mxu0 %v7042
  %7060 = vmatpush.bf16.msra.mxu0 %v7041
  %7061 = vmatpush.bf16.msra.mxu0 %v7040
  %7062 = vmatpush.bf16.msra.mxu0 %v7039
  %7063 = vmatmul.bf16.gmra.mxu0 %v6989
  %v7064 = vpop.f32.mrf.mxu0
  %v7065 = vadd.f32 0.0, %v7064
  %v7066 = vpop.f32.mrf.mxu0
  %7067 = vdwg.mxu0
  %v7068 = vadd.f32 %v6916, %v7065
  %s7069 = scalar_lea.vmem %s0, 720
  %v7070 = vld [vmem:[%s7069] sm:$0xff]
  %v7071 = vld [vmem:[%s7069 + $0x8] sm:$0xff]
  %v7074 = vunpack.c.l.b16 %v7070
  %v7075 = vunpack.c.h.b16 %v7070
  %v7076 = vunpack.c.l.b16 %v7071
  %v7077 = vunpack.c.h.b16 %v7071
  %v7078 = vpack.c.b16 %v7074, %v7074
  %v7079 = vpack.c.b16 %v7075, %v7075
  %v7080 = vpack.c.b16 %v7076, %v7076
  %v7081 = vpack.c.b16 %v7077, %v7077
  %v7086 = vsel %vm245, %v7081, 0
  %7088 = vmatpush.bf16.msra.mxu0 %v202
  %7089 = vmatpush.bf16.msra.mxu0 %v201
  %7090 = vmatpush.bf16.msra.mxu0 %v200
  %7091 = vmatpush.bf16.msra.mxu0 %v199
  %7092 = vmatpush.bf16.msra.mxu0 %v198
  %7093 = vmatpush.bf16.msra.mxu0 %v197
  %7094 = vmatpush.bf16.msra.mxu0 %v196
  %7095 = vmatpush.bf16.msra.mxu0 %v195
  %7096 = vmatmul.bf16.gmra.mxu0 %v7078
  %v7097 = vpop.f32.mrf.mxu0
  %v7098 = vadd.f32 %v80, %v7097
  %v7099 = vpop.f32.mrf.mxu0
  %7100 = vdwg.mxu0
  %7101 = vmatpush.bf16.msra.mxu0 %v210
  %7102 = vmatpush.bf16.msra.mxu0 %v209
  %7103 = vmatpush.bf16.msra.mxu0 %v208
  %7104 = vmatpush.bf16.msra.mxu0 %v207
  %7105 = vmatpush.bf16.msra.mxu0 %v206
  %7106 = vmatpush.bf16.msra.mxu0 %v205
  %7107 = vmatpush.bf16.msra.mxu0 %v204
  %7108 = vmatpush.bf16.msra.mxu0 %v203
  %7109 = vmatmul.bf16.gmra.mxu0 %v7079
  %v7110 = vpop.f32.mrf.mxu0
  %v7111 = vadd.f32 %v7098, %v7110
  %v7112 = vpop.f32.mrf.mxu0
  %7113 = vdwg.mxu0
  %7114 = vmatpush.bf16.msra.mxu0 %v218
  %7115 = vmatpush.bf16.msra.mxu0 %v217
  %7116 = vmatpush.bf16.msra.mxu0 %v216
  %7117 = vmatpush.bf16.msra.mxu0 %v215
  %7118 = vmatpush.bf16.msra.mxu0 %v214
  %7119 = vmatpush.bf16.msra.mxu0 %v213
  %7120 = vmatpush.bf16.msra.mxu0 %v212
  %7121 = vmatpush.bf16.msra.mxu0 %v211
  %7122 = vmatmul.bf16.gmra.mxu0 %v7080
  %v7123 = vpop.f32.mrf.mxu0
  %v7124 = vadd.f32 %v7111, %v7123
  %v7125 = vpop.f32.mrf.mxu0
  %7126 = vdwg.mxu0
  %7127 = vmatpush.bf16.msra.mxu0 0
  %7128 = vmatpush.bf16.msra.mxu0 0
  %7129 = vmatpush.bf16.msra.mxu0 0
  %7130 = vmatpush.bf16.msra.mxu0 0
  %7131 = vmatpush.bf16.msra.mxu0 0
  %7132 = vmatpush.bf16.msra.mxu0 0
  %7133 = vmatpush.bf16.msra.mxu0 0
  %7134 = vmatpush.bf16.msra.mxu0 %v219
  %7135 = vmatmul.bf16.gmra.mxu0 %v7086
  %v7136 = vpop.f32.mrf.mxu0
  %v7137 = vadd.f32 %v7124, %v7136
  %v7138 = vpop.f32.mrf.mxu0
  %7139 = vdwg.mxu0
  %v7140 = vmax.f32 %v7137, 0.0
  %v7141 = vpack.c.bf16 %v7140, %v7140
  %s7142 = scalar_lea.vmem %s3, 2880
  %v7143 = vld [vmem:[%s7142] sm:$0xf]
  %v7144 = vld [vmem:[%s7142 + $0x4] sm:$0xf]
  %v7145 = vld [vmem:[%s7142 + $0x8] sm:$0xf]
  %v7146 = vld [vmem:[%s7142 + $0xc] sm:$0xf]
  %v7147 = vld [vmem:[%s7142 + $0x10] sm:$0xf]
  %v7148 = vld [vmem:[%s7142 + $0x14] sm:$0xf]
  %v7149 = vld [vmem:[%s7142 + $0x18] sm:$0xf]
  %v7150 = vld [vmem:[%s7142 + $0x1c] sm:$0xf]
  %v7151 = vld [vmem:[%s7142 + $0x20] sm:$0xf]
  %v7152 = vld [vmem:[%s7142 + $0x24] sm:$0xf]
  %v7153 = vld [vmem:[%s7142 + $0x28] sm:$0xf]
  %v7154 = vld [vmem:[%s7142 + $0x2c] sm:$0xf]
  %v7155 = vld [vmem:[%s7142 + $0x30] sm:$0xf]
  %v7156 = vld [vmem:[%s7142 + $0x34] sm:$0xf]
  %v7157 = vld [vmem:[%s7142 + $0x38] sm:$0xf]
  %v7158 = vld [vmem:[%s7142 + $0x3c] sm:$0xf]
  %v7175 = vunpack.c.l.b16 %v7143
  %v7176 = vunpack.c.l.b16 %v7144
  %v7177 = vunpack.c.l.b16 %v7145
  %v7178 = vunpack.c.l.b16 %v7146
  %v7179 = vunpack.c.l.b16 %v7147
  %v7180 = vunpack.c.l.b16 %v7148
  %v7181 = vunpack.c.l.b16 %v7149
  %v7182 = vunpack.c.l.b16 %v7150
  %v7183 = vunpack.c.l.b16 %v7151
  %v7184 = vunpack.c.l.b16 %v7152
  %v7185 = vunpack.c.l.b16 %v7153
  %v7186 = vunpack.c.l.b16 %v7154
  %v7187 = vunpack.c.l.b16 %v7155
  %v7188 = vunpack.c.l.b16 %v7156
  %v7189 = vunpack.c.l.b16 %v7157
  %v7190 = vunpack.c.l.b16 %v7158
  %v7191 = vpack.c.b16 %v7176, %v7175
  %v7192 = vpack.c.b16 %v7178, %v7177
  %v7193 = vpack.c.b16 %v7180, %v7179
  %v7194 = vpack.c.b16 %v7182, %v7181
  %v7195 = vpack.c.b16 %v7184, %v7183
  %v7196 = vpack.c.b16 %v7186, %v7185
  %v7197 = vpack.c.b16 %v7188, %v7187
  %v7198 = vpack.c.b16 %v7190, %v7189
  %7207 = vmatpush.bf16.msra.mxu0 %v7198
  %7208 = vmatpush.bf16.msra.mxu0 %v7197
  %7209 = vmatpush.bf16.msra.mxu0 %v7196
  %7210 = vmatpush.bf16.msra.mxu0 %v7195
  %7211 = vmatpush.bf16.msra.mxu0 %v7194
  %7212 = vmatpush.bf16.msra.mxu0 %v7193
  %7213 = vmatpush.bf16.msra.mxu0 %v7192
  %7214 = vmatpush.bf16.msra.mxu0 %v7191
  %7215 = vmatmul.bf16.gmra.mxu0 %v7141
  %v7216 = vpop.f32.mrf.mxu0
  %v7217 = vadd.f32 0.0, %v7216
  %v7218 = vpop.f32.mrf.mxu0
  %7219 = vdwg.mxu0
  %v7220 = vadd.f32 %v7068, %v7217
  %s7221 = scalar_lea.vmem %s0, 736
  %v7222 = vld [vmem:[%s7221] sm:$0xff]
  %v7223 = vld [vmem:[%s7221 + $0x8] sm:$0xff]
  %v7226 = vunpack.c.l.b16 %v7222
  %v7227 = vunpack.c.h.b16 %v7222
  %v7228 = vunpack.c.l.b16 %v7223
  %v7229 = vunpack.c.h.b16 %v7223
  %v7230 = vpack.c.b16 %v7226, %v7226
  %v7231 = vpack.c.b16 %v7227, %v7227
  %v7232 = vpack.c.b16 %v7228, %v7228
  %v7233 = vpack.c.b16 %v7229, %v7229
  %v7238 = vsel %vm245, %v7233, 0
  %7240 = vmatpush.bf16.msra.mxu0 %v202
  %7241 = vmatpush.bf16.msra.mxu0 %v201
  %7242 = vmatpush.bf16.msra.mxu0 %v200
  %7243 = vmatpush.bf16.msra.mxu0 %v199
  %7244 = vmatpush.bf16.msra.mxu0 %v198
  %7245 = vmatpush.bf16.msra.mxu0 %v197
  %7246 = vmatpush.bf16.msra.mxu0 %v196
  %7247 = vmatpush.bf16.msra.mxu0 %v195
  %7248 = vmatmul.bf16.gmra.mxu0 %v7230
  %v7249 = vpop.f32.mrf.mxu0
  %v7250 = vadd.f32 %v80, %v7249
  %v7251 = vpop.f32.mrf.mxu0
  %7252 = vdwg.mxu0
  %7253 = vmatpush.bf16.msra.mxu0 %v210
  %7254 = vmatpush.bf16.msra.mxu0 %v209
  %7255 = vmatpush.bf16.msra.mxu0 %v208
  %7256 = vmatpush.bf16.msra.mxu0 %v207
  %7257 = vmatpush.bf16.msra.mxu0 %v206
  %7258 = vmatpush.bf16.msra.mxu0 %v205
  %7259 = vmatpush.bf16.msra.mxu0 %v204
  %7260 = vmatpush.bf16.msra.mxu0 %v203
  %7261 = vmatmul.bf16.gmra.mxu0 %v7231
  %v7262 = vpop.f32.mrf.mxu0
  %v7263 = vadd.f32 %v7250, %v7262
  %v7264 = vpop.f32.mrf.mxu0
  %7265 = vdwg.mxu0
  %7266 = vmatpush.bf16.msra.mxu0 %v218
  %7267 = vmatpush.bf16.msra.mxu0 %v217
  %7268 = vmatpush.bf16.msra.mxu0 %v216
  %7269 = vmatpush.bf16.msra.mxu0 %v215
  %7270 = vmatpush.bf16.msra.mxu0 %v214
  %7271 = vmatpush.bf16.msra.mxu0 %v213
  %7272 = vmatpush.bf16.msra.mxu0 %v212
  %7273 = vmatpush.bf16.msra.mxu0 %v211
  %7274 = vmatmul.bf16.gmra.mxu0 %v7232
  %v7275 = vpop.f32.mrf.mxu0
  %v7276 = vadd.f32 %v7263, %v7275
  %v7277 = vpop.f32.mrf.mxu0
  %7278 = vdwg.mxu0
  %7279 = vmatpush.bf16.msra.mxu0 0
  %7280 = vmatpush.bf16.msra.mxu0 0
  %7281 = vmatpush.bf16.msra.mxu0 0
  %7282 = vmatpush.bf16.msra.mxu0 0
  %7283 = vmatpush.bf16.msra.mxu0 0
  %7284 = vmatpush.bf16.msra.mxu0 0
  %7285 = vmatpush.bf16.msra.mxu0 0
  %7286 = vmatpush.bf16.msra.mxu0 %v219
  %7287 = vmatmul.bf16.gmra.mxu0 %v7238
  %v7288 = vpop.f32.mrf.mxu0
  %v7289 = vadd.f32 %v7276, %v7288
  %v7290 = vpop.f32.mrf.mxu0
  %7291 = vdwg.mxu0
  %v7292 = vmax.f32 %v7289, 0.0
  %v7293 = vpack.c.bf16 %v7292, %v7292
  %s7294 = scalar_lea.vmem %s3, 2944
  %v7295 = vld [vmem:[%s7294] sm:$0xf]
  %v7296 = vld [vmem:[%s7294 + $0x4] sm:$0xf]
  %v7297 = vld [vmem:[%s7294 + $0x8] sm:$0xf]
  %v7298 = vld [vmem:[%s7294 + $0xc] sm:$0xf]
  %v7299 = vld [vmem:[%s7294 + $0x10] sm:$0xf]
  %v7300 = vld [vmem:[%s7294 + $0x14] sm:$0xf]
  %v7301 = vld [vmem:[%s7294 + $0x18] sm:$0xf]
  %v7302 = vld [vmem:[%s7294 + $0x1c] sm:$0xf]
  %v7303 = vld [vmem:[%s7294 + $0x20] sm:$0xf]
  %v7304 = vld [vmem:[%s7294 + $0x24] sm:$0xf]
  %v7305 = vld [vmem:[%s7294 + $0x28] sm:$0xf]
  %v7306 = vld [vmem:[%s7294 + $0x2c] sm:$0xf]
  %v7307 = vld [vmem:[%s7294 + $0x30] sm:$0xf]
  %v7308 = vld [vmem:[%s7294 + $0x34] sm:$0xf]
  %v7309 = vld [vmem:[%s7294 + $0x38] sm:$0xf]
  %v7310 = vld [vmem:[%s7294 + $0x3c] sm:$0xf]
  %v7327 = vunpack.c.l.b16 %v7295
  %v7328 = vunpack.c.l.b16 %v7296
  %v7329 = vunpack.c.l.b16 %v7297
  %v7330 = vunpack.c.l.b16 %v7298
  %v7331 = vunpack.c.l.b16 %v7299
  %v7332 = vunpack.c.l.b16 %v7300
  %v7333 = vunpack.c.l.b16 %v7301
  %v7334 = vunpack.c.l.b16 %v7302
  %v7335 = vunpack.c.l.b16 %v7303
  %v7336 = vunpack.c.l.b16 %v7304
  %v7337 = vunpack.c.l.b16 %v7305
  %v7338 = vunpack.c.l.b16 %v7306
  %v7339 = vunpack.c.l.b16 %v7307
  %v7340 = vunpack.c.l.b16 %v7308
  %v7341 = vunpack.c.l.b16 %v7309
  %v7342 = vunpack.c.l.b16 %v7310
  %v7343 = vpack.c.b16 %v7328, %v7327
  %v7344 = vpack.c.b16 %v7330, %v7329
  %v7345 = vpack.c.b16 %v7332, %v7331
  %v7346 = vpack.c.b16 %v7334, %v7333
  %v7347 = vpack.c.b16 %v7336, %v7335
  %v7348 = vpack.c.b16 %v7338, %v7337
  %v7349 = vpack.c.b16 %v7340, %v7339
  %v7350 = vpack.c.b16 %v7342, %v7341
  %7359 = vmatpush.bf16.msra.mxu0 %v7350
  %7360 = vmatpush.bf16.msra.mxu0 %v7349
  %7361 = vmatpush.bf16.msra.mxu0 %v7348
  %7362 = vmatpush.bf16.msra.mxu0 %v7347
  %7363 = vmatpush.bf16.msra.mxu0 %v7346
  %7364 = vmatpush.bf16.msra.mxu0 %v7345
  %7365 = vmatpush.bf16.msra.mxu0 %v7344
  %7366 = vmatpush.bf16.msra.mxu0 %v7343
  %7367 = vmatmul.bf16.gmra.mxu0 %v7293
  %v7368 = vpop.f32.mrf.mxu0
  %v7369 = vadd.f32 0.0, %v7368
  %v7370 = vpop.f32.mrf.mxu0
  %7371 = vdwg.mxu0
  %v7372 = vadd.f32 %v7220, %v7369
  %s7373 = scalar_lea.vmem %s0, 752
  %v7374 = vld [vmem:[%s7373] sm:$0xff]
  %v7375 = vld [vmem:[%s7373 + $0x8] sm:$0xff]
  %v7378 = vunpack.c.l.b16 %v7374
  %v7379 = vunpack.c.h.b16 %v7374
  %v7380 = vunpack.c.l.b16 %v7375
  %v7381 = vunpack.c.h.b16 %v7375
  %v7382 = vpack.c.b16 %v7378, %v7378
  %v7383 = vpack.c.b16 %v7379, %v7379
  %v7384 = vpack.c.b16 %v7380, %v7380
  %v7385 = vpack.c.b16 %v7381, %v7381
  %v7390 = vsel %vm245, %v7385, 0
  %7392 = vmatpush.bf16.msra.mxu0 %v202
  %7393 = vmatpush.bf16.msra.mxu0 %v201
  %7394 = vmatpush.bf16.msra.mxu0 %v200
  %7395 = vmatpush.bf16.msra.mxu0 %v199
  %7396 = vmatpush.bf16.msra.mxu0 %v198
  %7397 = vmatpush.bf16.msra.mxu0 %v197
  %7398 = vmatpush.bf16.msra.mxu0 %v196
  %7399 = vmatpush.bf16.msra.mxu0 %v195
  %7400 = vmatmul.bf16.gmra.mxu0 %v7382
  %v7401 = vpop.f32.mrf.mxu0
  %v7402 = vadd.f32 %v80, %v7401
  %v7403 = vpop.f32.mrf.mxu0
  %7404 = vdwg.mxu0
  %7405 = vmatpush.bf16.msra.mxu0 %v210
  %7406 = vmatpush.bf16.msra.mxu0 %v209
  %7407 = vmatpush.bf16.msra.mxu0 %v208
  %7408 = vmatpush.bf16.msra.mxu0 %v207
  %7409 = vmatpush.bf16.msra.mxu0 %v206
  %7410 = vmatpush.bf16.msra.mxu0 %v205
  %7411 = vmatpush.bf16.msra.mxu0 %v204
  %7412 = vmatpush.bf16.msra.mxu0 %v203
  %7413 = vmatmul.bf16.gmra.mxu0 %v7383
  %v7414 = vpop.f32.mrf.mxu0
  %v7415 = vadd.f32 %v7402, %v7414
  %v7416 = vpop.f32.mrf.mxu0
  %7417 = vdwg.mxu0
  %7418 = vmatpush.bf16.msra.mxu0 %v218
  %7419 = vmatpush.bf16.msra.mxu0 %v217
  %7420 = vmatpush.bf16.msra.mxu0 %v216
  %7421 = vmatpush.bf16.msra.mxu0 %v215
  %7422 = vmatpush.bf16.msra.mxu0 %v214
  %7423 = vmatpush.bf16.msra.mxu0 %v213
  %7424 = vmatpush.bf16.msra.mxu0 %v212
  %7425 = vmatpush.bf16.msra.mxu0 %v211
  %7426 = vmatmul.bf16.gmra.mxu0 %v7384
  %v7427 = vpop.f32.mrf.mxu0
  %v7428 = vadd.f32 %v7415, %v7427
  %v7429 = vpop.f32.mrf.mxu0
  %7430 = vdwg.mxu0
  %7431 = vmatpush.bf16.msra.mxu0 0
  %7432 = vmatpush.bf16.msra.mxu0 0
  %7433 = vmatpush.bf16.msra.mxu0 0
  %7434 = vmatpush.bf16.msra.mxu0 0
  %7435 = vmatpush.bf16.msra.mxu0 0
  %7436 = vmatpush.bf16.msra.mxu0 0
  %7437 = vmatpush.bf16.msra.mxu0 0
  %7438 = vmatpush.bf16.msra.mxu0 %v219
  %7439 = vmatmul.bf16.gmra.mxu0 %v7390
  %v7440 = vpop.f32.mrf.mxu0
  %v7441 = vadd.f32 %v7428, %v7440
  %v7442 = vpop.f32.mrf.mxu0
  %7443 = vdwg.mxu0
  %v7444 = vmax.f32 %v7441, 0.0
  %v7445 = vpack.c.bf16 %v7444, %v7444
  %s7446 = scalar_lea.vmem %s3, 3008
  %v7447 = vld [vmem:[%s7446] sm:$0xf]
  %v7448 = vld [vmem:[%s7446 + $0x4] sm:$0xf]
  %v7449 = vld [vmem:[%s7446 + $0x8] sm:$0xf]
  %v7450 = vld [vmem:[%s7446 + $0xc] sm:$0xf]
  %v7451 = vld [vmem:[%s7446 + $0x10] sm:$0xf]
  %v7452 = vld [vmem:[%s7446 + $0x14] sm:$0xf]
  %v7453 = vld [vmem:[%s7446 + $0x18] sm:$0xf]
  %v7454 = vld [vmem:[%s7446 + $0x1c] sm:$0xf]
  %v7455 = vld [vmem:[%s7446 + $0x20] sm:$0xf]
  %v7456 = vld [vmem:[%s7446 + $0x24] sm:$0xf]
  %v7457 = vld [vmem:[%s7446 + $0x28] sm:$0xf]
  %v7458 = vld [vmem:[%s7446 + $0x2c] sm:$0xf]
  %v7459 = vld [vmem:[%s7446 + $0x30] sm:$0xf]
  %v7460 = vld [vmem:[%s7446 + $0x34] sm:$0xf]
  %v7461 = vld [vmem:[%s7446 + $0x38] sm:$0xf]
  %v7462 = vld [vmem:[%s7446 + $0x3c] sm:$0xf]
  %v7479 = vunpack.c.l.b16 %v7447
  %v7480 = vunpack.c.l.b16 %v7448
  %v7481 = vunpack.c.l.b16 %v7449
  %v7482 = vunpack.c.l.b16 %v7450
  %v7483 = vunpack.c.l.b16 %v7451
  %v7484 = vunpack.c.l.b16 %v7452
  %v7485 = vunpack.c.l.b16 %v7453
  %v7486 = vunpack.c.l.b16 %v7454
  %v7487 = vunpack.c.l.b16 %v7455
  %v7488 = vunpack.c.l.b16 %v7456
  %v7489 = vunpack.c.l.b16 %v7457
  %v7490 = vunpack.c.l.b16 %v7458
  %v7491 = vunpack.c.l.b16 %v7459
  %v7492 = vunpack.c.l.b16 %v7460
  %v7493 = vunpack.c.l.b16 %v7461
  %v7494 = vunpack.c.l.b16 %v7462
  %v7495 = vpack.c.b16 %v7480, %v7479
  %v7496 = vpack.c.b16 %v7482, %v7481
  %v7497 = vpack.c.b16 %v7484, %v7483
  %v7498 = vpack.c.b16 %v7486, %v7485
  %v7499 = vpack.c.b16 %v7488, %v7487
  %v7500 = vpack.c.b16 %v7490, %v7489
  %v7501 = vpack.c.b16 %v7492, %v7491
  %v7502 = vpack.c.b16 %v7494, %v7493
  %7511 = vmatpush.bf16.msra.mxu0 %v7502
  %7512 = vmatpush.bf16.msra.mxu0 %v7501
  %7513 = vmatpush.bf16.msra.mxu0 %v7500
  %7514 = vmatpush.bf16.msra.mxu0 %v7499
  %7515 = vmatpush.bf16.msra.mxu0 %v7498
  %7516 = vmatpush.bf16.msra.mxu0 %v7497
  %7517 = vmatpush.bf16.msra.mxu0 %v7496
  %7518 = vmatpush.bf16.msra.mxu0 %v7495
  %7519 = vmatmul.bf16.gmra.mxu0 %v7445
  %v7520 = vpop.f32.mrf.mxu0
  %v7521 = vadd.f32 0.0, %v7520
  %v7522 = vpop.f32.mrf.mxu0
  %7523 = vdwg.mxu0
  %v7524 = vadd.f32 %v7372, %v7521
  %s7525 = scalar_lea.vmem %s0, 768
  %v7526 = vld [vmem:[%s7525] sm:$0xff]
  %v7527 = vld [vmem:[%s7525 + $0x8] sm:$0xff]
  %v7530 = vunpack.c.l.b16 %v7526
  %v7531 = vunpack.c.h.b16 %v7526
  %v7532 = vunpack.c.l.b16 %v7527
  %v7533 = vunpack.c.h.b16 %v7527
  %v7534 = vpack.c.b16 %v7530, %v7530
  %v7535 = vpack.c.b16 %v7531, %v7531
  %v7536 = vpack.c.b16 %v7532, %v7532
  %v7537 = vpack.c.b16 %v7533, %v7533
  %v7542 = vsel %vm245, %v7537, 0
  %7544 = vmatpush.bf16.msra.mxu0 %v202
  %7545 = vmatpush.bf16.msra.mxu0 %v201
  %7546 = vmatpush.bf16.msra.mxu0 %v200
  %7547 = vmatpush.bf16.msra.mxu0 %v199
  %7548 = vmatpush.bf16.msra.mxu0 %v198
  %7549 = vmatpush.bf16.msra.mxu0 %v197
  %7550 = vmatpush.bf16.msra.mxu0 %v196
  %7551 = vmatpush.bf16.msra.mxu0 %v195
  %7552 = vmatmul.bf16.gmra.mxu0 %v7534
  %v7553 = vpop.f32.mrf.mxu0
  %v7554 = vadd.f32 %v80, %v7553
  %v7555 = vpop.f32.mrf.mxu0
  %7556 = vdwg.mxu0
  %7557 = vmatpush.bf16.msra.mxu0 %v210
  %7558 = vmatpush.bf16.msra.mxu0 %v209
  %7559 = vmatpush.bf16.msra.mxu0 %v208
  %7560 = vmatpush.bf16.msra.mxu0 %v207
  %7561 = vmatpush.bf16.msra.mxu0 %v206
  %7562 = vmatpush.bf16.msra.mxu0 %v205
  %7563 = vmatpush.bf16.msra.mxu0 %v204
  %7564 = vmatpush.bf16.msra.mxu0 %v203
  %7565 = vmatmul.bf16.gmra.mxu0 %v7535
  %v7566 = vpop.f32.mrf.mxu0
  %v7567 = vadd.f32 %v7554, %v7566
  %v7568 = vpop.f32.mrf.mxu0
  %7569 = vdwg.mxu0
  %7570 = vmatpush.bf16.msra.mxu0 %v218
  %7571 = vmatpush.bf16.msra.mxu0 %v217
  %7572 = vmatpush.bf16.msra.mxu0 %v216
  %7573 = vmatpush.bf16.msra.mxu0 %v215
  %7574 = vmatpush.bf16.msra.mxu0 %v214
  %7575 = vmatpush.bf16.msra.mxu0 %v213
  %7576 = vmatpush.bf16.msra.mxu0 %v212
  %7577 = vmatpush.bf16.msra.mxu0 %v211
  %7578 = vmatmul.bf16.gmra.mxu0 %v7536
  %v7579 = vpop.f32.mrf.mxu0
  %v7580 = vadd.f32 %v7567, %v7579
  %v7581 = vpop.f32.mrf.mxu0
  %7582 = vdwg.mxu0
  %7583 = vmatpush.bf16.msra.mxu0 0
  %7584 = vmatpush.bf16.msra.mxu0 0
  %7585 = vmatpush.bf16.msra.mxu0 0
  %7586 = vmatpush.bf16.msra.mxu0 0
  %7587 = vmatpush.bf16.msra.mxu0 0
  %7588 = vmatpush.bf16.msra.mxu0 0
  %7589 = vmatpush.bf16.msra.mxu0 0
  %7590 = vmatpush.bf16.msra.mxu0 %v219
  %7591 = vmatmul.bf16.gmra.mxu0 %v7542
  %v7592 = vpop.f32.mrf.mxu0
  %v7593 = vadd.f32 %v7580, %v7592
  %v7594 = vpop.f32.mrf.mxu0
  %7595 = vdwg.mxu0
  %v7596 = vmax.f32 %v7593, 0.0
  %v7597 = vpack.c.bf16 %v7596, %v7596
  %s7598 = scalar_lea.vmem %s3, 3072
  %v7599 = vld [vmem:[%s7598] sm:$0xf]
  %v7600 = vld [vmem:[%s7598 + $0x4] sm:$0xf]
  %v7601 = vld [vmem:[%s7598 + $0x8] sm:$0xf]
  %v7602 = vld [vmem:[%s7598 + $0xc] sm:$0xf]
  %v7603 = vld [vmem:[%s7598 + $0x10] sm:$0xf]
  %v7604 = vld [vmem:[%s7598 + $0x14] sm:$0xf]
  %v7605 = vld [vmem:[%s7598 + $0x18] sm:$0xf]
  %v7606 = vld [vmem:[%s7598 + $0x1c] sm:$0xf]
  %v7607 = vld [vmem:[%s7598 + $0x20] sm:$0xf]
  %v7608 = vld [vmem:[%s7598 + $0x24] sm:$0xf]
  %v7609 = vld [vmem:[%s7598 + $0x28] sm:$0xf]
  %v7610 = vld [vmem:[%s7598 + $0x2c] sm:$0xf]
  %v7611 = vld [vmem:[%s7598 + $0x30] sm:$0xf]
  %v7612 = vld [vmem:[%s7598 + $0x34] sm:$0xf]
  %v7613 = vld [vmem:[%s7598 + $0x38] sm:$0xf]
  %v7614 = vld [vmem:[%s7598 + $0x3c] sm:$0xf]
  %v7631 = vunpack.c.l.b16 %v7599
  %v7632 = vunpack.c.l.b16 %v7600
  %v7633 = vunpack.c.l.b16 %v7601
  %v7634 = vunpack.c.l.b16 %v7602
  %v7635 = vunpack.c.l.b16 %v7603
  %v7636 = vunpack.c.l.b16 %v7604
  %v7637 = vunpack.c.l.b16 %v7605
  %v7638 = vunpack.c.l.b16 %v7606
  %v7639 = vunpack.c.l.b16 %v7607
  %v7640 = vunpack.c.l.b16 %v7608
  %v7641 = vunpack.c.l.b16 %v7609
  %v7642 = vunpack.c.l.b16 %v7610
  %v7643 = vunpack.c.l.b16 %v7611
  %v7644 = vunpack.c.l.b16 %v7612
  %v7645 = vunpack.c.l.b16 %v7613
  %v7646 = vunpack.c.l.b16 %v7614
  %v7647 = vpack.c.b16 %v7632, %v7631
  %v7648 = vpack.c.b16 %v7634, %v7633
  %v7649 = vpack.c.b16 %v7636, %v7635
  %v7650 = vpack.c.b16 %v7638, %v7637
  %v7651 = vpack.c.b16 %v7640, %v7639
  %v7652 = vpack.c.b16 %v7642, %v7641
  %v7653 = vpack.c.b16 %v7644, %v7643
  %v7654 = vpack.c.b16 %v7646, %v7645
  %7663 = vmatpush.bf16.msra.mxu0 %v7654
  %7664 = vmatpush.bf16.msra.mxu0 %v7653
  %7665 = vmatpush.bf16.msra.mxu0 %v7652
  %7666 = vmatpush.bf16.msra.mxu0 %v7651
  %7667 = vmatpush.bf16.msra.mxu0 %v7650
  %7668 = vmatpush.bf16.msra.mxu0 %v7649
  %7669 = vmatpush.bf16.msra.mxu0 %v7648
  %7670 = vmatpush.bf16.msra.mxu0 %v7647
  %7671 = vmatmul.bf16.gmra.mxu0 %v7597
  %v7672 = vpop.f32.mrf.mxu0
  %v7673 = vadd.f32 0.0, %v7672
  %v7674 = vpop.f32.mrf.mxu0
  %7675 = vdwg.mxu0
  %v7676 = vadd.f32 %v7524, %v7673
  %7677 = vst [vmem:[%s5] sm:$0xff] %v7676
  // Predicated region
  $region22: #{cnn_forward.5} parent=0 // pred_check
    _
  $region23: #{cnn_forward.5} parent=0 // pred_check_branch
    %7679 = sbr.rel (0) target = $region25
  $region24: #{cnn_forward.5} parent=0 // pred_region
    _
  $region25: #{cnn_forward.5} parent=0 // pred_fallthru
    _
  // Predicated region
  $region26: #{cnn_forward.5} parent=0 // pred_check
    _
  $region27: #{cnn_forward.5} parent=0 // pred_check_branch
    %7681 = sbr.rel (0) target = $region29
  $region28: #{cnn_forward.5} parent=0 // pred_region
    _
  $region29: #{cnn_forward.5} parent=0 // pred_fallthru
    _

</llo_original>
